<compile_context>
chip_gen: v7x
topology: tpu7x:2x2x1
jax: 0.10.0
libtpu: 0.0.40
codegen_flags: <defaults>
</compile_context>

<pallas_src>
import functools

import jax
import jax.numpy as jnp
import numpy as np
from jax import lax
from jax.experimental import pallas as pl
from jax.experimental.pallas import tpu as pltpu

BN_EPS = 1e-5


# ------------------------------- activations --------------------------------
def _mish_exact(x):
    # reference form: x * tanh(softplus(x)) with stable softplus
    sp = jnp.maximum(x, 0.0) + jnp.log1p(jnp.exp(-jnp.abs(x)))
    return x * jnp.tanh(sp)


def _mish_fast(x):
    # mish(x) = x * n / (n + 2),  n = e * (e + 2),  e = exp(x)
    # single transcendental (EUP); mathematically exact identity, the clamp
    # only guards overflow (for x > 20 the result equals x in f32).
    e = jnp.exp(jnp.minimum(x, 20.0))
    n = e * (e + 2.0)
    return x * n / (n + 2.0)


# ----------------------------- Pallas kernel --------------------------------
def _gsconv_kernel(x_ref, w1_ref, b1_ref, w5e_ref, w5o_ref, b5_ref,
                   w3e_ref, w3o_ref, b3_ref, o_ref, *, H, W, ch):
    c_ = 2 * ch
    S = H * W

    # ---- 1x1 conv (+BN folded) + Mish, channel-major / lane-dense ----
    # w1 rows are pre-permuted (even|odd channels), so x1 rows come out already
    # in channel-shuffled order.  f32 x f32 dot, f32 accumulation.
    x = x_ref[0]                                                    # (C1, S)
    x1 = jnp.dot(w1_ref[...], x,
                 preferred_element_type=jnp.float32) + b1_ref[...]  # (c_, S)
    x1 = _mish_fast(x1)

    # ---- zero-padded (pad=2) spatial view for the grouped convs ----
    xhw = x1.reshape(c_, H, W)
    zc = jnp.zeros((c_, H, 2), jnp.float32)
    zr = jnp.zeros((c_, 2, W + 4), jnp.float32)
    xp = jnp.concatenate(
        [zr, jnp.concatenate([zc, xhw, zc], axis=2), zr], axis=1)   # (c_,H+4,W+4)

    xe = xp[:ch]      # group g input 0  (original even channel 2g)
    xo = xp[ch:]      # group g input 1  (original odd channel 2g+1)

    # per-tap, per-output-channel weights (BN scale already folded in)
    w5e = w5e_ref[...].reshape(25, ch, 1, 1)
    w5o = w5o_ref[...].reshape(25, ch, 1, 1)
    w3e = w3e_ref[...].reshape(9, ch, 1, 1)
    w3o = w3o_ref[...].reshape(9, ch, 1, 1)

    # ---- grouped 5x5 conv (cv1): shift-and-accumulate, VPU FMAs ----
    y5 = jnp.zeros((ch, H, W), jnp.float32)
    for ky in range(5):
        for kx in range(5):
            t = ky * 5 + kx
            y5 = (y5 + w5e[t] * xe[:, ky:ky + H, kx:kx + W]
                      + w5o[t] * xo[:, ky:ky + H, kx:kx + W])
    y5f = _mish_fast(y5.reshape(ch, S) + b5_ref[...])               # (ch, S)

    # ---- grouped 3x3 conv (cv2): taps at the center of the pad-2 window ----
    y3 = jnp.zeros((ch, H, W), jnp.float32)
    for ky in range(3):
        for kx in range(3):
            t = ky * 3 + kx
            y3 = (y3 + w3e[t] * xe[:, ky + 1:ky + 1 + H, kx + 1:kx + 1 + W]
                      + w3o[t] * xo[:, ky + 1:ky + 1 + H, kx + 1:kx + 1 + W])
    y3f = _mish_fast(y3.reshape(ch, S) + b3_ref[...])               # (ch, S)

    # ---- channel shuffle via four contiguous sublane-range stores ----
    # out rows = [x1 even ch | cv even ch | x1 odd ch | cv odd ch], cv=[y5;y3]
    def pick(q):                     # row q of cv = concat([y5f, y3f]), kept 2-D
        return y5f[q:q + 1] if q < ch else y3f[q - ch:q - ch + 1]

    mid_lo = jnp.concatenate([pick(q) for q in range(0, c_, 2)], axis=0)
    mid_hi = jnp.concatenate([pick(q) for q in range(1, c_, 2)], axis=0)

    o_ref[0, 0:ch, :] = x1[0:ch]
    o_ref[0, ch:c_, :] = mid_lo
    o_ref[0, c_:c_ + ch, :] = x1[ch:]
    o_ref[0, c_ + ch:, :] = mid_hi


# ------------------------------ JAX wrapper ----------------------------------
@jax.jit
def gsconv_pallas(x_nchw, kp):
    B, C1, H, W = x_nchw.shape
    c_ = kp["w1"].shape[0]
    ch = c_ // 2
    C2 = 2 * c_
    S = H * W
    x_flat = x_nchw.reshape(B, C1, S)          # free reshape, NCHW-major

    # TODO(synk): for very large feature maps (c_*H*W*f32 approaching the VMEM
    # budget, esp. v7x's 64 MiB) add a spatial grid axis with a 2-row halo; at
    # typical GSConv sizes one whole image fits comfortably per grid step.
    out = pl.pallas_call(
        functools.partial(_gsconv_kernel, H=H, W=W, ch=ch),
        out_shape=jax.ShapeDtypeStruct((B, C2, S), jnp.float32),
        grid=(B,),
        in_specs=[
            pl.BlockSpec((1, C1, S), lambda b: (b, 0, 0)),
            pl.BlockSpec((c_, C1), lambda b: (0, 0)),
            pl.BlockSpec((c_, 1), lambda b: (0, 0)),
            pl.BlockSpec((25, ch), lambda b: (0, 0)),
            pl.BlockSpec((25, ch), lambda b: (0, 0)),
            pl.BlockSpec((ch, 1), lambda b: (0, 0)),
            pl.BlockSpec((9, ch), lambda b: (0, 0)),
            pl.BlockSpec((9, ch), lambda b: (0, 0)),
            pl.BlockSpec((ch, 1), lambda b: (0, 0)),
        ],
        out_specs=pl.BlockSpec((1, C2, S), lambda b: (b, 0, 0)),
        compiler_params=pltpu.CompilerParams(
            dimension_semantics=("parallel",),
            vmem_limit_bytes=64 * 1024 * 1024),
    )(x_flat, kp["w1"], kp["b1"], kp["w5e"], kp["w5o"], kp["b5"],
      kp["w3e"], kp["w3o"], kp["b3"])

    return out.reshape(B, C2, H, W)            # free reshape back to NCHW


# -------------------------- parameter construction ---------------------------
def _fold_bn(gamma, beta, mean, var):
    scale = gamma / jnp.sqrt(var + BN_EPS)
    bias = beta - mean * scale
    return scale, bias


def make_params(key, c1, c2):
    assert c2 % 4 == 0, "GSConv channel shuffle requires c2 % 4 == 0"
    c_ = c2 // 2
    ch = c_ // 2
    ks = jax.random.split(key, 15)

    def nrm(k, shape, s=0.1):
        return jax.random.normal(k, shape, jnp.float32) * s

    def unif(k, shape):
        return jax.random.uniform(k, shape, jnp.float32, minval=0.5, maxval=1.5)

    # torch-shaped parameters (eval-mode BatchNorm running stats)
    w1_t = nrm(ks[0], (c_, c1, 1, 1))
    bn1 = (unif(ks[1], (c_,)), nrm(ks[2], (c_,)), nrm(ks[3], (c_,)), unif(ks[4], (c_,)))
    w5_t = nrm(ks[5], (ch, 2, 5, 5))
    bn5 = (unif(ks[6], (ch,)), nrm(ks[7], (ch,)), nrm(ks[8], (ch,)), unif(ks[9], (ch,)))
    w3_t = nrm(ks[10], (ch, 2, 3, 3))
    bn3 = (unif(ks[11], (ch,)), nrm(ks[12], (ch,)), nrm(ks[13], (ch,)), unif(ks[14], (ch,)))
    torch_params = {"w1_t": w1_t, "bn1": bn1, "w5_t": w5_t, "bn5": bn5,
                    "w3_t": w3_t, "bn3": bn3}

    # kernel-shaped parameters: BN folded; channel shuffle baked into the 1x1
    # weight row order (even|odd), grouped-conv weights laid out (taps, ch).
    s1, b1 = _fold_bn(*bn1)
    s5, b5 = _fold_bn(*bn5)
    s3, b3 = _fold_bn(*bn3)
    perm = np.concatenate([np.arange(0, c_, 2), np.arange(1, c_, 2)])  # even|odd

    w1_np = np.asarray(w1_t[:, :, 0, 0]) * np.asarray(s1)[:, None]     # (c_, c1)
    w5 = np.asarray(w5_t) * np.asarray(s5)[:, None, None, None]        # (ch,2,5,5)
    w3 = np.asarray(w3_t) * np.asarray(s3)[:, None, None, None]        # (ch,2,3,3)

    kernel_params = {
        "w1": jnp.asarray(w1_np[perm, :], jnp.float32),                         # (c_, c1)
        "b1": jnp.asarray(np.asarray(b1)[perm].reshape(c_, 1), jnp.float32),    # (c_, 1)
        "w5e": jnp.asarray(w5[:, 0].reshape(ch, 25).T, jnp.float32),            # (25, ch)
        "w5o": jnp.asarray(w5[:, 1].reshape(ch, 25).T, jnp.float32),            # (25, ch)
        "b5": jnp.asarray(np.asarray(b5).reshape(ch, 1), jnp.float32),          # (ch, 1)
        "w3e": jnp.asarray(w3[:, 0].reshape(ch, 9).T, jnp.float32),             # (9, ch)
        "w3o": jnp.asarray(w3[:, 1].reshape(ch, 9).T, jnp.float32),             # (9, ch)
        "b3": jnp.asarray(np.asarray(b3).reshape(ch, 1), jnp.float32),          # (ch, 1)
    }
    return torch_params, kernel_params


# ---------------------------- pure-JAX reference ------------------------------
def _channel_shuffle(y3):
    # mirrors the torch reshape/permute/reshape/cat exactly (NCHW input)
    b, n, h, w = y3.shape
    z = y3.reshape(b * n // 2, 2, h * w)
    z = jnp.transpose(z, (1, 0, 2))
    z = z.reshape(2, -1, n // 2, h, w)
    return jnp.concatenate([z[0], z[1]], axis=1)


def _conv_bn_mish_ref(x, w_t, bn, groups, pad):
    y = lax.conv_general_dilated(
        x, w_t, (1, 1), [(pad, pad), (pad, pad)],
        feature_group_count=groups,
        dimension_numbers=("NCHW", "OIHW", "NCHW"),
        precision=lax.Precision.HIGHEST)
    gamma, beta, mean, var = bn
    scale = gamma / jnp.sqrt(var + BN_EPS)
    y = y * scale[None, :, None, None] + (beta - mean * scale)[None, :, None, None]
    return _mish_exact(y)


def gsconv_ref(x, tp):
    groups = tp["w5_t"].shape[0]
    x1 = _conv_bn_mish_ref(x, tp["w1_t"], tp["bn1"], 1, 0)
    x2_3 = _conv_bn_mish_ref(x1, tp["w5_t"], tp["bn5"], groups, 2)   # cv1, k=5
    x2_5 = _conv_bn_mish_ref(x1, tp["w3_t"], tp["bn3"], groups, 1)   # cv2, k=3
    x3 = jnp.concatenate([x1, x2_3, x2_5], axis=1)
    return _channel_shuffle(x3)


if __name__ == "__main__":
    key = jax.random.PRNGKey(0)
    kx, kp_key = jax.random.split(key)
    B, C1, C2, H, W = 2, 8, 16, 16, 16          # GSConv(c1=8, c2=16, k=1, s=1)
    x = jax.random.normal(kx, (B, C1, H, W), jnp.float32)

    torch_params, kernel_params = make_params(kp_key, C1, C2)

    y = gsconv_pallas(x, kernel_params)
    y = jax.block_until_ready(y)

    y_ref = gsconv_ref(x, torch_params)
    # On TPU the 1x1 matmul runs at default MXU precision (bf16 mantissas);
    # the reference uses f32 HIGHEST, so tolerance is loosened accordingly.
    np.testing.assert_allclose(np.asarray(y), np.asarray(y_ref),
                               rtol=5e-2, atol=5e-2)
    print("KERNEL_OK")
</pallas_src>

<mosaic_0001>
module attributes {stable_mosaic.version = 11 : i64} {
  func.func @_gsconv_kernel(%arg0: i32, %arg1: memref<1x8x256xf32, #tpu.memory_space<vmem>>, %arg2: memref<8x8xf32, #tpu.memory_space<vmem>>, %arg3: memref<8x1xf32, #tpu.memory_space<vmem>>, %arg4: memref<25x4xf32, #tpu.memory_space<vmem>>, %arg5: memref<25x4xf32, #tpu.memory_space<vmem>>, %arg6: memref<4x1xf32, #tpu.memory_space<vmem>>, %arg7: memref<9x4xf32, #tpu.memory_space<vmem>>, %arg8: memref<9x4xf32, #tpu.memory_space<vmem>>, %arg9: memref<4x1xf32, #tpu.memory_space<vmem>>, %arg10: memref<1x16x256xf32, #tpu.memory_space<vmem>>) attributes {dimension_semantics = [#tpu.dimension_semantics<parallel>], iteration_bounds = array<i64: 2>, scalar_prefetch = 0 : i64, scratch_operands = 0 : i64, tpu.core_type = #tpu.core_type<tc>, window_params = [{transform_indices = @transform_0, window_bounds = array<i64: 1, 8, 256>}, {pipeline_mode = #tpu.pipeline_mode<synchronous>, transform_indices = @transform_1, window_bounds = array<i64: 8, 8>}, {pipeline_mode = #tpu.pipeline_mode<synchronous>, transform_indices = @transform_2, window_bounds = array<i64: 8, 1>}, {pipeline_mode = #tpu.pipeline_mode<synchronous>, transform_indices = @transform_3, window_bounds = array<i64: 25, 4>}, {pipeline_mode = #tpu.pipeline_mode<synchronous>, transform_indices = @transform_4, window_bounds = array<i64: 25, 4>}, {pipeline_mode = #tpu.pipeline_mode<synchronous>, transform_indices = @transform_5, window_bounds = array<i64: 4, 1>}, {pipeline_mode = #tpu.pipeline_mode<synchronous>, transform_indices = @transform_6, window_bounds = array<i64: 9, 4>}, {pipeline_mode = #tpu.pipeline_mode<synchronous>, transform_indices = @transform_7, window_bounds = array<i64: 9, 4>}, {pipeline_mode = #tpu.pipeline_mode<synchronous>, transform_indices = @transform_8, window_bounds = array<i64: 4, 1>}, {transform_indices = @transform_9, window_bounds = array<i64: 1, 16, 256>}]} {
    %c0 = arith.constant 0 : index
    %c0_0 = arith.constant 0 : index
    %c0_1 = arith.constant 0 : index
    %0 = vector.load %arg1[%c0, %c0_0, %c0_1] : memref<1x8x256xf32, #tpu.memory_space<vmem>>, vector<1x8x256xf32>
    %1 = vector.shape_cast %0 : vector<1x8x256xf32> to vector<8x256xf32>
    %c0_2 = arith.constant 0 : index
    %c0_3 = arith.constant 0 : index
    %2 = vector.load %arg2[%c0_2, %c0_3] : memref<8x8xf32, #tpu.memory_space<vmem>>, vector<8x8xf32>
    %cst = arith.constant dense<0.000000e+00> : vector<8x256xf32>
    %3 = tpu.matmul %2, %1, %cst {dimension_numbers = #tpu.dot_dimension_numbers<[1], [0], [0], [1], [0, 0, 1, 1], [], []>} : vector<8x8xf32>, vector<8x256xf32>, vector<8x256xf32> -> vector<8x256xf32>
    %c0_4 = arith.constant 0 : index
    %c0_5 = arith.constant 0 : index
    %4 = vector.load %arg3[%c0_4, %c0_5] : memref<8x1xf32, #tpu.memory_space<vmem>>, vector<8x1xf32>
    %5 = vector.broadcast %4 : vector<8x1xf32> to vector<8x256xf32>
    %6 = arith.addf %3, %5 : vector<8x256xf32>
    %cst_6 = arith.constant 2.000000e+01 : f32
    %7 = vector.broadcast %cst_6 : f32 to vector<8x256xf32>
    %8 = arith.minimumf %6, %7 : vector<8x256xf32>
    %9 = math.exp %8 : vector<8x256xf32>
    %cst_7 = arith.constant 2.000000e+00 : f32
    %10 = vector.broadcast %cst_7 : f32 to vector<8x256xf32>
    %11 = arith.addf %9, %10 : vector<8x256xf32>
    %12 = arith.mulf %9, %11 : vector<8x256xf32>
    %13 = arith.mulf %6, %12 : vector<8x256xf32>
    %cst_8 = arith.constant 2.000000e+00 : f32
    %14 = vector.broadcast %cst_8 : f32 to vector<8x256xf32>
    %15 = arith.addf %12, %14 : vector<8x256xf32>
    %16 = arith.divf %13, %15 : vector<8x256xf32>
    %17 = vector.shape_cast %16 : vector<8x256xf32> to vector<8x16x16xf32>
    %cst_9 = arith.constant 0.000000e+00 : f32
    %18 = vector.broadcast %cst_9 : f32 to vector<8x16x2xf32>
    %cst_10 = arith.constant 0.000000e+00 : f32
    %19 = vector.broadcast %cst_10 : f32 to vector<8x2x20xf32>
    %20 = tpu.concatenate %18, %17, %18 in 2 : vector<8x16x2xf32>, vector<8x16x16xf32>, vector<8x16x2xf32> -> vector<8x16x20xf32>
    %21 = tpu.concatenate %19, %20, %19 in 1 : vector<8x2x20xf32>, vector<8x16x20xf32>, vector<8x2x20xf32> -> vector<8x20x20xf32>
    %22 = vector.extract_strided_slice %21 {offsets = [0, 0, 0], sizes = [4, 20, 20], strides = [1, 1, 1]} : vector<8x20x20xf32> to vector<4x20x20xf32>
    %23 = vector.extract_strided_slice %21 {offsets = [4, 0, 0], sizes = [4, 20, 20], strides = [1, 1, 1]} : vector<8x20x20xf32> to vector<4x20x20xf32>
    %c0_11 = arith.constant 0 : index
    %c0_12 = arith.constant 0 : index
    %24 = vector.load %arg4[%c0_11, %c0_12] : memref<25x4xf32, #tpu.memory_space<vmem>>, vector<25x4xf32>
    %25 = vector.shape_cast %24 : vector<25x4xf32> to vector<25x4x1x1xf32>
    %c0_13 = arith.constant 0 : index
    %c0_14 = arith.constant 0 : index
    %26 = vector.load %arg5[%c0_13, %c0_14] : memref<25x4xf32, #tpu.memory_space<vmem>>, vector<25x4xf32>
    %27 = vector.shape_cast %26 : vector<25x4xf32> to vector<25x4x1x1xf32>
    %c0_15 = arith.constant 0 : index
    %c0_16 = arith.constant 0 : index
    %28 = vector.load %arg7[%c0_15, %c0_16] : memref<9x4xf32, #tpu.memory_space<vmem>>, vector<9x4xf32>
    %29 = vector.shape_cast %28 : vector<9x4xf32> to vector<9x4x1x1xf32>
    %c0_17 = arith.constant 0 : index
    %c0_18 = arith.constant 0 : index
    %30 = vector.load %arg8[%c0_17, %c0_18] : memref<9x4xf32, #tpu.memory_space<vmem>>, vector<9x4xf32>
    %31 = vector.shape_cast %30 : vector<9x4xf32> to vector<9x4x1x1xf32>
    %cst_19 = arith.constant 0.000000e+00 : f32
    %32 = vector.broadcast %cst_19 : f32 to vector<4x16x16xf32>
    %33 = vector.extract_strided_slice %25 {offsets = [0, 0, 0, 0], sizes = [1, 4, 1, 1], strides = [1, 1, 1, 1]} : vector<25x4x1x1xf32> to vector<1x4x1x1xf32>
    %34 = vector.shape_cast %33 : vector<1x4x1x1xf32> to vector<4x1x1xf32>
    %35 = vector.extract_strided_slice %22 {offsets = [0, 0, 0], sizes = [4, 16, 16], strides = [1, 1, 1]} : vector<4x20x20xf32> to vector<4x16x16xf32>
    %36 = vector.broadcast %34 : vector<4x1x1xf32> to vector<4x16x16xf32>
    %37 = arith.mulf %36, %35 : vector<4x16x16xf32>
    %38 = arith.addf %32, %37 : vector<4x16x16xf32>
    %39 = vector.extract_strided_slice %27 {offsets = [0, 0, 0, 0], sizes = [1, 4, 1, 1], strides = [1, 1, 1, 1]} : vector<25x4x1x1xf32> to vector<1x4x1x1xf32>
    %40 = vector.shape_cast %39 : vector<1x4x1x1xf32> to vector<4x1x1xf32>
    %41 = vector.extract_strided_slice %23 {offsets = [0, 0, 0], sizes = [4, 16, 16], strides = [1, 1, 1]} : vector<4x20x20xf32> to vector<4x16x16xf32>
    %42 = vector.broadcast %40 : vector<4x1x1xf32> to vector<4x16x16xf32>
    %43 = arith.mulf %42, %41 : vector<4x16x16xf32>
    %44 = arith.addf %38, %43 : vector<4x16x16xf32>
    %45 = vector.extract_strided_slice %25 {offsets = [1, 0, 0, 0], sizes = [1, 4, 1, 1], strides = [1, 1, 1, 1]} : vector<25x4x1x1xf32> to vector<1x4x1x1xf32>
    %46 = vector.shape_cast %45 : vector<1x4x1x1xf32> to vector<4x1x1xf32>
    %47 = vector.extract_strided_slice %22 {offsets = [0, 0, 1], sizes = [4, 16, 16], strides = [1, 1, 1]} : vector<4x20x20xf32> to vector<4x16x16xf32>
    %48 = vector.broadcast %46 : vector<4x1x1xf32> to vector<4x16x16xf32>
    %49 = arith.mulf %48, %47 : vector<4x16x16xf32>
    %50 = arith.addf %44, %49 : vector<4x16x16xf32>
    %51 = vector.extract_strided_slice %27 {offsets = [1, 0, 0, 0], sizes = [1, 4, 1, 1], strides = [1, 1, 1, 1]} : vector<25x4x1x1xf32> to vector<1x4x1x1xf32>
    %52 = vector.shape_cast %51 : vector<1x4x1x1xf32> to vector<4x1x1xf32>
    %53 = vector.extract_strided_slice %23 {offsets = [0, 0, 1], sizes = [4, 16, 16], strides = [1, 1, 1]} : vector<4x20x20xf32> to vector<4x16x16xf32>
    %54 = vector.broadcast %52 : vector<4x1x1xf32> to vector<4x16x16xf32>
    %55 = arith.mulf %54, %53 : vector<4x16x16xf32>
    %56 = arith.addf %50, %55 : vector<4x16x16xf32>
    %57 = vector.extract_strided_slice %25 {offsets = [2, 0, 0, 0], sizes = [1, 4, 1, 1], strides = [1, 1, 1, 1]} : vector<25x4x1x1xf32> to vector<1x4x1x1xf32>
    %58 = vector.shape_cast %57 : vector<1x4x1x1xf32> to vector<4x1x1xf32>
    %59 = vector.extract_strided_slice %22 {offsets = [0, 0, 2], sizes = [4, 16, 16], strides = [1, 1, 1]} : vector<4x20x20xf32> to vector<4x16x16xf32>
    %60 = vector.broadcast %58 : vector<4x1x1xf32> to vector<4x16x16xf32>
    %61 = arith.mulf %60, %59 : vector<4x16x16xf32>
    %62 = arith.addf %56, %61 : vector<4x16x16xf32>
    %63 = vector.extract_strided_slice %27 {offsets = [2, 0, 0, 0], sizes = [1, 4, 1, 1], strides = [1, 1, 1, 1]} : vector<25x4x1x1xf32> to vector<1x4x1x1xf32>
    %64 = vector.shape_cast %63 : vector<1x4x1x1xf32> to vector<4x1x1xf32>
    %65 = vector.extract_strided_slice %23 {offsets = [0, 0, 2], sizes = [4, 16, 16], strides = [1, 1, 1]} : vector<4x20x20xf32> to vector<4x16x16xf32>
    %66 = vector.broadcast %64 : vector<4x1x1xf32> to vector<4x16x16xf32>
    %67 = arith.mulf %66, %65 : vector<4x16x16xf32>
    %68 = arith.addf %62, %67 : vector<4x16x16xf32>
    %69 = vector.extract_strided_slice %25 {offsets = [3, 0, 0, 0], sizes = [1, 4, 1, 1], strides = [1, 1, 1, 1]} : vector<25x4x1x1xf32> to vector<1x4x1x1xf32>
    %70 = vector.shape_cast %69 : vector<1x4x1x1xf32> to vector<4x1x1xf32>
    %71 = vector.extract_strided_slice %22 {offsets = [0, 0, 3], sizes = [4, 16, 16], strides = [1, 1, 1]} : vector<4x20x20xf32> to vector<4x16x16xf32>
    %72 = vector.broadcast %70 : vector<4x1x1xf32> to vector<4x16x16xf32>
    %73 = arith.mulf %72, %71 : vector<4x16x16xf32>
    %74 = arith.addf %68, %73 : vector<4x16x16xf32>
    %75 = vector.extract_strided_slice %27 {offsets = [3, 0, 0, 0], sizes = [1, 4, 1, 1], strides = [1, 1, 1, 1]} : vector<25x4x1x1xf32> to vector<1x4x1x1xf32>
    %76 = vector.shape_cast %75 : vector<1x4x1x1xf32> to vector<4x1x1xf32>
    %77 = vector.extract_strided_slice %23 {offsets = [0, 0, 3], sizes = [4, 16, 16], strides = [1, 1, 1]} : vector<4x20x20xf32> to vector<4x16x16xf32>
    %78 = vector.broadcast %76 : vector<4x1x1xf32> to vector<4x16x16xf32>
    %79 = arith.mulf %78, %77 : vector<4x16x16xf32>
    %80 = arith.addf %74, %79 : vector<4x16x16xf32>
    %81 = vector.extract_strided_slice %25 {offsets = [4, 0, 0, 0], sizes = [1, 4, 1, 1], strides = [1, 1, 1, 1]} : vector<25x4x1x1xf32> to vector<1x4x1x1xf32>
    %82 = vector.shape_cast %81 : vector<1x4x1x1xf32> to vector<4x1x1xf32>
    %83 = vector.extract_strided_slice %22 {offsets = [0, 0, 4], sizes = [4, 16, 16], strides = [1, 1, 1]} : vector<4x20x20xf32> to vector<4x16x16xf32>
    %84 = vector.broadcast %82 : vector<4x1x1xf32> to vector<4x16x16xf32>
    %85 = arith.mulf %84, %83 : vector<4x16x16xf32>
    %86 = arith.addf %80, %85 : vector<4x16x16xf32>
    %87 = vector.extract_strided_slice %27 {offsets = [4, 0, 0, 0], sizes = [1, 4, 1, 1], strides = [1, 1, 1, 1]} : vector<25x4x1x1xf32> to vector<1x4x1x1xf32>
    %88 = vector.shape_cast %87 : vector<1x4x1x1xf32> to vector<4x1x1xf32>
    %89 = vector.extract_strided_slice %23 {offsets = [0, 0, 4], sizes = [4, 16, 16], strides = [1, 1, 1]} : vector<4x20x20xf32> to vector<4x16x16xf32>
    %90 = vector.broadcast %88 : vector<4x1x1xf32> to vector<4x16x16xf32>
    %91 = arith.mulf %90, %89 : vector<4x16x16xf32>
    %92 = arith.addf %86, %91 : vector<4x16x16xf32>
    %93 = vector.extract_strided_slice %25 {offsets = [5, 0, 0, 0], sizes = [1, 4, 1, 1], strides = [1, 1, 1, 1]} : vector<25x4x1x1xf32> to vector<1x4x1x1xf32>
    %94 = vector.shape_cast %93 : vector<1x4x1x1xf32> to vector<4x1x1xf32>
    %95 = vector.extract_strided_slice %22 {offsets = [0, 1, 0], sizes = [4, 16, 16], strides = [1, 1, 1]} : vector<4x20x20xf32> to vector<4x16x16xf32>
    %96 = vector.broadcast %94 : vector<4x1x1xf32> to vector<4x16x16xf32>
    %97 = arith.mulf %96, %95 : vector<4x16x16xf32>
    %98 = arith.addf %92, %97 : vector<4x16x16xf32>
    %99 = vector.extract_strided_slice %27 {offsets = [5, 0, 0, 0], sizes = [1, 4, 1, 1], strides = [1, 1, 1, 1]} : vector<25x4x1x1xf32> to vector<1x4x1x1xf32>
    %100 = vector.shape_cast %99 : vector<1x4x1x1xf32> to vector<4x1x1xf32>
    %101 = vector.extract_strided_slice %23 {offsets = [0, 1, 0], sizes = [4, 16, 16], strides = [1, 1, 1]} : vector<4x20x20xf32> to vector<4x16x16xf32>
    %102 = vector.broadcast %100 : vector<4x1x1xf32> to vector<4x16x16xf32>
    %103 = arith.mulf %102, %101 : vector<4x16x16xf32>
    %104 = arith.addf %98, %103 : vector<4x16x16xf32>
    %105 = vector.extract_strided_slice %25 {offsets = [6, 0, 0, 0], sizes = [1, 4, 1, 1], strides = [1, 1, 1, 1]} : vector<25x4x1x1xf32> to vector<1x4x1x1xf32>
    %106 = vector.shape_cast %105 : vector<1x4x1x1xf32> to vector<4x1x1xf32>
    %107 = vector.extract_strided_slice %22 {offsets = [0, 1, 1], sizes = [4, 16, 16], strides = [1, 1, 1]} : vector<4x20x20xf32> to vector<4x16x16xf32>
    %108 = vector.broadcast %106 : vector<4x1x1xf32> to vector<4x16x16xf32>
    %109 = arith.mulf %108, %107 : vector<4x16x16xf32>
    %110 = arith.addf %104, %109 : vector<4x16x16xf32>
    %111 = vector.extract_strided_slice %27 {offsets = [6, 0, 0, 0], sizes = [1, 4, 1, 1], strides = [1, 1, 1, 1]} : vector<25x4x1x1xf32> to vector<1x4x1x1xf32>
    %112 = vector.shape_cast %111 : vector<1x4x1x1xf32> to vector<4x1x1xf32>
    %113 = vector.extract_strided_slice %23 {offsets = [0, 1, 1], sizes = [4, 16, 16], strides = [1, 1, 1]} : vector<4x20x20xf32> to vector<4x16x16xf32>
    %114 = vector.broadcast %112 : vector<4x1x1xf32> to vector<4x16x16xf32>
    %115 = arith.mulf %114, %113 : vector<4x16x16xf32>
    %116 = arith.addf %110, %115 : vector<4x16x16xf32>
    %117 = vector.extract_strided_slice %25 {offsets = [7, 0, 0, 0], sizes = [1, 4, 1, 1], strides = [1, 1, 1, 1]} : vector<25x4x1x1xf32> to vector<1x4x1x1xf32>
    %118 = vector.shape_cast %117 : vector<1x4x1x1xf32> to vector<4x1x1xf32>
    %119 = vector.extract_strided_slice %22 {offsets = [0, 1, 2], sizes = [4, 16, 16], strides = [1, 1, 1]} : vector<4x20x20xf32> to vector<4x16x16xf32>
    %120 = vector.broadcast %118 : vector<4x1x1xf32> to vector<4x16x16xf32>
    %121 = arith.mulf %120, %119 : vector<4x16x16xf32>
    %122 = arith.addf %116, %121 : vector<4x16x16xf32>
    %123 = vector.extract_strided_slice %27 {offsets = [7, 0, 0, 0], sizes = [1, 4, 1, 1], strides = [1, 1, 1, 1]} : vector<25x4x1x1xf32> to vector<1x4x1x1xf32>
    %124 = vector.shape_cast %123 : vector<1x4x1x1xf32> to vector<4x1x1xf32>
    %125 = vector.extract_strided_slice %23 {offsets = [0, 1, 2], sizes = [4, 16, 16], strides = [1, 1, 1]} : vector<4x20x20xf32> to vector<4x16x16xf32>
    %126 = vector.broadcast %124 : vector<4x1x1xf32> to vector<4x16x16xf32>
    %127 = arith.mulf %126, %125 : vector<4x16x16xf32>
    %128 = arith.addf %122, %127 : vector<4x16x16xf32>
    %129 = vector.extract_strided_slice %25 {offsets = [8, 0, 0, 0], sizes = [1, 4, 1, 1], strides = [1, 1, 1, 1]} : vector<25x4x1x1xf32> to vector<1x4x1x1xf32>
    %130 = vector.shape_cast %129 : vector<1x4x1x1xf32> to vector<4x1x1xf32>
    %131 = vector.extract_strided_slice %22 {offsets = [0, 1, 3], sizes = [4, 16, 16], strides = [1, 1, 1]} : vector<4x20x20xf32> to vector<4x16x16xf32>
    %132 = vector.broadcast %130 : vector<4x1x1xf32> to vector<4x16x16xf32>
    %133 = arith.mulf %132, %131 : vector<4x16x16xf32>
    %134 = arith.addf %128, %133 : vector<4x16x16xf32>
    %135 = vector.extract_strided_slice %27 {offsets = [8, 0, 0, 0], sizes = [1, 4, 1, 1], strides = [1, 1, 1, 1]} : vector<25x4x1x1xf32> to vector<1x4x1x1xf32>
    %136 = vector.shape_cast %135 : vector<1x4x1x1xf32> to vector<4x1x1xf32>
    %137 = vector.extract_strided_slice %23 {offsets = [0, 1, 3], sizes = [4, 16, 16], strides = [1, 1, 1]} : vector<4x20x20xf32> to vector<4x16x16xf32>
    %138 = vector.broadcast %136 : vector<4x1x1xf32> to vector<4x16x16xf32>
    %139 = arith.mulf %138, %137 : vector<4x16x16xf32>
    %140 = arith.addf %134, %139 : vector<4x16x16xf32>
    %141 = vector.extract_strided_slice %25 {offsets = [9, 0, 0, 0], sizes = [1, 4, 1, 1], strides = [1, 1, 1, 1]} : vector<25x4x1x1xf32> to vector<1x4x1x1xf32>
    %142 = vector.shape_cast %141 : vector<1x4x1x1xf32> to vector<4x1x1xf32>
    %143 = vector.extract_strided_slice %22 {offsets = [0, 1, 4], sizes = [4, 16, 16], strides = [1, 1, 1]} : vector<4x20x20xf32> to vector<4x16x16xf32>
    %144 = vector.broadcast %142 : vector<4x1x1xf32> to vector<4x16x16xf32>
    %145 = arith.mulf %144, %143 : vector<4x16x16xf32>
    %146 = arith.addf %140, %145 : vector<4x16x16xf32>
    %147 = vector.extract_strided_slice %27 {offsets = [9, 0, 0, 0], sizes = [1, 4, 1, 1], strides = [1, 1, 1, 1]} : vector<25x4x1x1xf32> to vector<1x4x1x1xf32>
    %148 = vector.shape_cast %147 : vector<1x4x1x1xf32> to vector<4x1x1xf32>
    %149 = vector.extract_strided_slice %23 {offsets = [0, 1, 4], sizes = [4, 16, 16], strides = [1, 1, 1]} : vector<4x20x20xf32> to vector<4x16x16xf32>
    %150 = vector.broadcast %148 : vector<4x1x1xf32> to vector<4x16x16xf32>
    %151 = arith.mulf %150, %149 : vector<4x16x16xf32>
    %152 = arith.addf %146, %151 : vector<4x16x16xf32>
    %153 = vector.extract_strided_slice %25 {offsets = [10, 0, 0, 0], sizes = [1, 4, 1, 1], strides = [1, 1, 1, 1]} : vector<25x4x1x1xf32> to vector<1x4x1x1xf32>
    %154 = vector.shape_cast %153 : vector<1x4x1x1xf32> to vector<4x1x1xf32>
    %155 = vector.extract_strided_slice %22 {offsets = [0, 2, 0], sizes = [4, 16, 16], strides = [1, 1, 1]} : vector<4x20x20xf32> to vector<4x16x16xf32>
    %156 = vector.broadcast %154 : vector<4x1x1xf32> to vector<4x16x16xf32>
    %157 = arith.mulf %156, %155 : vector<4x16x16xf32>
    %158 = arith.addf %152, %157 : vector<4x16x16xf32>
    %159 = vector.extract_strided_slice %27 {offsets = [10, 0, 0, 0], sizes = [1, 4, 1, 1], strides = [1, 1, 1, 1]} : vector<25x4x1x1xf32> to vector<1x4x1x1xf32>
    %160 = vector.shape_cast %159 : vector<1x4x1x1xf32> to vector<4x1x1xf32>
    %161 = vector.extract_strided_slice %23 {offsets = [0, 2, 0], sizes = [4, 16, 16], strides = [1, 1, 1]} : vector<4x20x20xf32> to vector<4x16x16xf32>
    %162 = vector.broadcast %160 : vector<4x1x1xf32> to vector<4x16x16xf32>
    %163 = arith.mulf %162, %161 : vector<4x16x16xf32>
    %164 = arith.addf %158, %163 : vector<4x16x16xf32>
    %165 = vector.extract_strided_slice %25 {offsets = [11, 0, 0, 0], sizes = [1, 4, 1, 1], strides = [1, 1, 1, 1]} : vector<25x4x1x1xf32> to vector<1x4x1x1xf32>
    %166 = vector.shape_cast %165 : vector<1x4x1x1xf32> to vector<4x1x1xf32>
    %167 = vector.extract_strided_slice %22 {offsets = [0, 2, 1], sizes = [4, 16, 16], strides = [1, 1, 1]} : vector<4x20x20xf32> to vector<4x16x16xf32>
    %168 = vector.broadcast %166 : vector<4x1x1xf32> to vector<4x16x16xf32>
    %169 = arith.mulf %168, %167 : vector<4x16x16xf32>
    %170 = arith.addf %164, %169 : vector<4x16x16xf32>
    %171 = vector.extract_strided_slice %27 {offsets = [11, 0, 0, 0], sizes = [1, 4, 1, 1], strides = [1, 1, 1, 1]} : vector<25x4x1x1xf32> to vector<1x4x1x1xf32>
    %172 = vector.shape_cast %171 : vector<1x4x1x1xf32> to vector<4x1x1xf32>
    %173 = vector.extract_strided_slice %23 {offsets = [0, 2, 1], sizes = [4, 16, 16], strides = [1, 1, 1]} : vector<4x20x20xf32> to vector<4x16x16xf32>
    %174 = vector.broadcast %172 : vector<4x1x1xf32> to vector<4x16x16xf32>
    %175 = arith.mulf %174, %173 : vector<4x16x16xf32>
    %176 = arith.addf %170, %175 : vector<4x16x16xf32>
    %177 = vector.extract_strided_slice %25 {offsets = [12, 0, 0, 0], sizes = [1, 4, 1, 1], strides = [1, 1, 1, 1]} : vector<25x4x1x1xf32> to vector<1x4x1x1xf32>
    %178 = vector.shape_cast %177 : vector<1x4x1x1xf32> to vector<4x1x1xf32>
    %179 = vector.extract_strided_slice %22 {offsets = [0, 2, 2], sizes = [4, 16, 16], strides = [1, 1, 1]} : vector<4x20x20xf32> to vector<4x16x16xf32>
    %180 = vector.broadcast %178 : vector<4x1x1xf32> to vector<4x16x16xf32>
    %181 = arith.mulf %180, %179 : vector<4x16x16xf32>
    %182 = arith.addf %176, %181 : vector<4x16x16xf32>
    %183 = vector.extract_strided_slice %27 {offsets = [12, 0, 0, 0], sizes = [1, 4, 1, 1], strides = [1, 1, 1, 1]} : vector<25x4x1x1xf32> to vector<1x4x1x1xf32>
    %184 = vector.shape_cast %183 : vector<1x4x1x1xf32> to vector<4x1x1xf32>
    %185 = vector.extract_strided_slice %23 {offsets = [0, 2, 2], sizes = [4, 16, 16], strides = [1, 1, 1]} : vector<4x20x20xf32> to vector<4x16x16xf32>
    %186 = vector.broadcast %184 : vector<4x1x1xf32> to vector<4x16x16xf32>
    %187 = arith.mulf %186, %185 : vector<4x16x16xf32>
    %188 = arith.addf %182, %187 : vector<4x16x16xf32>
    %189 = vector.extract_strided_slice %25 {offsets = [13, 0, 0, 0], sizes = [1, 4, 1, 1], strides = [1, 1, 1, 1]} : vector<25x4x1x1xf32> to vector<1x4x1x1xf32>
    %190 = vector.shape_cast %189 : vector<1x4x1x1xf32> to vector<4x1x1xf32>
    %191 = vector.extract_strided_slice %22 {offsets = [0, 2, 3], sizes = [4, 16, 16], strides = [1, 1, 1]} : vector<4x20x20xf32> to vector<4x16x16xf32>
    %192 = vector.broadcast %190 : vector<4x1x1xf32> to vector<4x16x16xf32>
    %193 = arith.mulf %192, %191 : vector<4x16x16xf32>
    %194 = arith.addf %188, %193 : vector<4x16x16xf32>
    %195 = vector.extract_strided_slice %27 {offsets = [13, 0, 0, 0], sizes = [1, 4, 1, 1], strides = [1, 1, 1, 1]} : vector<25x4x1x1xf32> to vector<1x4x1x1xf32>
    %196 = vector.shape_cast %195 : vector<1x4x1x1xf32> to vector<4x1x1xf32>
    %197 = vector.extract_strided_slice %23 {offsets = [0, 2, 3], sizes = [4, 16, 16], strides = [1, 1, 1]} : vector<4x20x20xf32> to vector<4x16x16xf32>
    %198 = vector.broadcast %196 : vector<4x1x1xf32> to vector<4x16x16xf32>
    %199 = arith.mulf %198, %197 : vector<4x16x16xf32>
    %200 = arith.addf %194, %199 : vector<4x16x16xf32>
    %201 = vector.extract_strided_slice %25 {offsets = [14, 0, 0, 0], sizes = [1, 4, 1, 1], strides = [1, 1, 1, 1]} : vector<25x4x1x1xf32> to vector<1x4x1x1xf32>
    %202 = vector.shape_cast %201 : vector<1x4x1x1xf32> to vector<4x1x1xf32>
    %203 = vector.extract_strided_slice %22 {offsets = [0, 2, 4], sizes = [4, 16, 16], strides = [1, 1, 1]} : vector<4x20x20xf32> to vector<4x16x16xf32>
    %204 = vector.broadcast %202 : vector<4x1x1xf32> to vector<4x16x16xf32>
    %205 = arith.mulf %204, %203 : vector<4x16x16xf32>
    %206 = arith.addf %200, %205 : vector<4x16x16xf32>
    %207 = vector.extract_strided_slice %27 {offsets = [14, 0, 0, 0], sizes = [1, 4, 1, 1], strides = [1, 1, 1, 1]} : vector<25x4x1x1xf32> to vector<1x4x1x1xf32>
    %208 = vector.shape_cast %207 : vector<1x4x1x1xf32> to vector<4x1x1xf32>
    %209 = vector.extract_strided_slice %23 {offsets = [0, 2, 4], sizes = [4, 16, 16], strides = [1, 1, 1]} : vector<4x20x20xf32> to vector<4x16x16xf32>
    %210 = vector.broadcast %208 : vector<4x1x1xf32> to vector<4x16x16xf32>
    %211 = arith.mulf %210, %209 : vector<4x16x16xf32>
    %212 = arith.addf %206, %211 : vector<4x16x16xf32>
    %213 = vector.extract_strided_slice %25 {offsets = [15, 0, 0, 0], sizes = [1, 4, 1, 1], strides = [1, 1, 1, 1]} : vector<25x4x1x1xf32> to vector<1x4x1x1xf32>
    %214 = vector.shape_cast %213 : vector<1x4x1x1xf32> to vector<4x1x1xf32>
    %215 = vector.extract_strided_slice %22 {offsets = [0, 3, 0], sizes = [4, 16, 16], strides = [1, 1, 1]} : vector<4x20x20xf32> to vector<4x16x16xf32>
    %216 = vector.broadcast %214 : vector<4x1x1xf32> to vector<4x16x16xf32>
    %217 = arith.mulf %216, %215 : vector<4x16x16xf32>
    %218 = arith.addf %212, %217 : vector<4x16x16xf32>
    %219 = vector.extract_strided_slice %27 {offsets = [15, 0, 0, 0], sizes = [1, 4, 1, 1], strides = [1, 1, 1, 1]} : vector<25x4x1x1xf32> to vector<1x4x1x1xf32>
    %220 = vector.shape_cast %219 : vector<1x4x1x1xf32> to vector<4x1x1xf32>
    %221 = vector.extract_strided_slice %23 {offsets = [0, 3, 0], sizes = [4, 16, 16], strides = [1, 1, 1]} : vector<4x20x20xf32> to vector<4x16x16xf32>
    %222 = vector.broadcast %220 : vector<4x1x1xf32> to vector<4x16x16xf32>
    %223 = arith.mulf %222, %221 : vector<4x16x16xf32>
    %224 = arith.addf %218, %223 : vector<4x16x16xf32>
    %225 = vector.extract_strided_slice %25 {offsets = [16, 0, 0, 0], sizes = [1, 4, 1, 1], strides = [1, 1, 1, 1]} : vector<25x4x1x1xf32> to vector<1x4x1x1xf32>
    %226 = vector.shape_cast %225 : vector<1x4x1x1xf32> to vector<4x1x1xf32>
    %227 = vector.extract_strided_slice %22 {offsets = [0, 3, 1], sizes = [4, 16, 16], strides = [1, 1, 1]} : vector<4x20x20xf32> to vector<4x16x16xf32>
    %228 = vector.broadcast %226 : vector<4x1x1xf32> to vector<4x16x16xf32>
    %229 = arith.mulf %228, %227 : vector<4x16x16xf32>
    %230 = arith.addf %224, %229 : vector<4x16x16xf32>
    %231 = vector.extract_strided_slice %27 {offsets = [16, 0, 0, 0], sizes = [1, 4, 1, 1], strides = [1, 1, 1, 1]} : vector<25x4x1x1xf32> to vector<1x4x1x1xf32>
    %232 = vector.shape_cast %231 : vector<1x4x1x1xf32> to vector<4x1x1xf32>
    %233 = vector.extract_strided_slice %23 {offsets = [0, 3, 1], sizes = [4, 16, 16], strides = [1, 1, 1]} : vector<4x20x20xf32> to vector<4x16x16xf32>
    %234 = vector.broadcast %232 : vector<4x1x1xf32> to vector<4x16x16xf32>
    %235 = arith.mulf %234, %233 : vector<4x16x16xf32>
    %236 = arith.addf %230, %235 : vector<4x16x16xf32>
    %237 = vector.extract_strided_slice %25 {offsets = [17, 0, 0, 0], sizes = [1, 4, 1, 1], strides = [1, 1, 1, 1]} : vector<25x4x1x1xf32> to vector<1x4x1x1xf32>
    %238 = vector.shape_cast %237 : vector<1x4x1x1xf32> to vector<4x1x1xf32>
    %239 = vector.extract_strided_slice %22 {offsets = [0, 3, 2], sizes = [4, 16, 16], strides = [1, 1, 1]} : vector<4x20x20xf32> to vector<4x16x16xf32>
    %240 = vector.broadcast %238 : vector<4x1x1xf32> to vector<4x16x16xf32>
    %241 = arith.mulf %240, %239 : vector<4x16x16xf32>
    %242 = arith.addf %236, %241 : vector<4x16x16xf32>
    %243 = vector.extract_strided_slice %27 {offsets = [17, 0, 0, 0], sizes = [1, 4, 1, 1], strides = [1, 1, 1, 1]} : vector<25x4x1x1xf32> to vector<1x4x1x1xf32>
    %244 = vector.shape_cast %243 : vector<1x4x1x1xf32> to vector<4x1x1xf32>
    %245 = vector.extract_strided_slice %23 {offsets = [0, 3, 2], sizes = [4, 16, 16], strides = [1, 1, 1]} : vector<4x20x20xf32> to vector<4x16x16xf32>
    %246 = vector.broadcast %244 : vector<4x1x1xf32> to vector<4x16x16xf32>
    %247 = arith.mulf %246, %245 : vector<4x16x16xf32>
    %248 = arith.addf %242, %247 : vector<4x16x16xf32>
    %249 = vector.extract_strided_slice %25 {offsets = [18, 0, 0, 0], sizes = [1, 4, 1, 1], strides = [1, 1, 1, 1]} : vector<25x4x1x1xf32> to vector<1x4x1x1xf32>
    %250 = vector.shape_cast %249 : vector<1x4x1x1xf32> to vector<4x1x1xf32>
    %251 = vector.extract_strided_slice %22 {offsets = [0, 3, 3], sizes = [4, 16, 16], strides = [1, 1, 1]} : vector<4x20x20xf32> to vector<4x16x16xf32>
    %252 = vector.broadcast %250 : vector<4x1x1xf32> to vector<4x16x16xf32>
    %253 = arith.mulf %252, %251 : vector<4x16x16xf32>
    %254 = arith.addf %248, %253 : vector<4x16x16xf32>
    %255 = vector.extract_strided_slice %27 {offsets = [18, 0, 0, 0], sizes = [1, 4, 1, 1], strides = [1, 1, 1, 1]} : vector<25x4x1x1xf32> to vector<1x4x1x1xf32>
    %256 = vector.shape_cast %255 : vector<1x4x1x1xf32> to vector<4x1x1xf32>
    %257 = vector.extract_strided_slice %23 {offsets = [0, 3, 3], sizes = [4, 16, 16], strides = [1, 1, 1]} : vector<4x20x20xf32> to vector<4x16x16xf32>
    %258 = vector.broadcast %256 : vector<4x1x1xf32> to vector<4x16x16xf32>
    %259 = arith.mulf %258, %257 : vector<4x16x16xf32>
    %260 = arith.addf %254, %259 : vector<4x16x16xf32>
    %261 = vector.extract_strided_slice %25 {offsets = [19, 0, 0, 0], sizes = [1, 4, 1, 1], strides = [1, 1, 1, 1]} : vector<25x4x1x1xf32> to vector<1x4x1x1xf32>
    %262 = vector.shape_cast %261 : vector<1x4x1x1xf32> to vector<4x1x1xf32>
    %263 = vector.extract_strided_slice %22 {offsets = [0, 3, 4], sizes = [4, 16, 16], strides = [1, 1, 1]} : vector<4x20x20xf32> to vector<4x16x16xf32>
    %264 = vector.broadcast %262 : vector<4x1x1xf32> to vector<4x16x16xf32>
    %265 = arith.mulf %264, %263 : vector<4x16x16xf32>
    %266 = arith.addf %260, %265 : vector<4x16x16xf32>
    %267 = vector.extract_strided_slice %27 {offsets = [19, 0, 0, 0], sizes = [1, 4, 1, 1], strides = [1, 1, 1, 1]} : vector<25x4x1x1xf32> to vector<1x4x1x1xf32>
    %268 = vector.shape_cast %267 : vector<1x4x1x1xf32> to vector<4x1x1xf32>
    %269 = vector.extract_strided_slice %23 {offsets = [0, 3, 4], sizes = [4, 16, 16], strides = [1, 1, 1]} : vector<4x20x20xf32> to vector<4x16x16xf32>
    %270 = vector.broadcast %268 : vector<4x1x1xf32> to vector<4x16x16xf32>
    %271 = arith.mulf %270, %269 : vector<4x16x16xf32>
    %272 = arith.addf %266, %271 : vector<4x16x16xf32>
    %273 = vector.extract_strided_slice %25 {offsets = [20, 0, 0, 0], sizes = [1, 4, 1, 1], strides = [1, 1, 1, 1]} : vector<25x4x1x1xf32> to vector<1x4x1x1xf32>
    %274 = vector.shape_cast %273 : vector<1x4x1x1xf32> to vector<4x1x1xf32>
    %275 = vector.extract_strided_slice %22 {offsets = [0, 4, 0], sizes = [4, 16, 16], strides = [1, 1, 1]} : vector<4x20x20xf32> to vector<4x16x16xf32>
    %276 = vector.broadcast %274 : vector<4x1x1xf32> to vector<4x16x16xf32>
    %277 = arith.mulf %276, %275 : vector<4x16x16xf32>
    %278 = arith.addf %272, %277 : vector<4x16x16xf32>
    %279 = vector.extract_strided_slice %27 {offsets = [20, 0, 0, 0], sizes = [1, 4, 1, 1], strides = [1, 1, 1, 1]} : vector<25x4x1x1xf32> to vector<1x4x1x1xf32>
    %280 = vector.shape_cast %279 : vector<1x4x1x1xf32> to vector<4x1x1xf32>
    %281 = vector.extract_strided_slice %23 {offsets = [0, 4, 0], sizes = [4, 16, 16], strides = [1, 1, 1]} : vector<4x20x20xf32> to vector<4x16x16xf32>
    %282 = vector.broadcast %280 : vector<4x1x1xf32> to vector<4x16x16xf32>
    %283 = arith.mulf %282, %281 : vector<4x16x16xf32>
    %284 = arith.addf %278, %283 : vector<4x16x16xf32>
    %285 = vector.extract_strided_slice %25 {offsets = [21, 0, 0, 0], sizes = [1, 4, 1, 1], strides = [1, 1, 1, 1]} : vector<25x4x1x1xf32> to vector<1x4x1x1xf32>
    %286 = vector.shape_cast %285 : vector<1x4x1x1xf32> to vector<4x1x1xf32>
    %287 = vector.extract_strided_slice %22 {offsets = [0, 4, 1], sizes = [4, 16, 16], strides = [1, 1, 1]} : vector<4x20x20xf32> to vector<4x16x16xf32>
    %288 = vector.broadcast %286 : vector<4x1x1xf32> to vector<4x16x16xf32>
    %289 = arith.mulf %288, %287 : vector<4x16x16xf32>
    %290 = arith.addf %284, %289 : vector<4x16x16xf32>
    %291 = vector.extract_strided_slice %27 {offsets = [21, 0, 0, 0], sizes = [1, 4, 1, 1], strides = [1, 1, 1, 1]} : vector<25x4x1x1xf32> to vector<1x4x1x1xf32>
    %292 = vector.shape_cast %291 : vector<1x4x1x1xf32> to vector<4x1x1xf32>
    %293 = vector.extract_strided_slice %23 {offsets = [0, 4, 1], sizes = [4, 16, 16], strides = [1, 1, 1]} : vector<4x20x20xf32> to vector<4x16x16xf32>
    %294 = vector.broadcast %292 : vector<4x1x1xf32> to vector<4x16x16xf32>
    %295 = arith.mulf %294, %293 : vector<4x16x16xf32>
    %296 = arith.addf %290, %295 : vector<4x16x16xf32>
    %297 = vector.extract_strided_slice %25 {offsets = [22, 0, 0, 0], sizes = [1, 4, 1, 1], strides = [1, 1, 1, 1]} : vector<25x4x1x1xf32> to vector<1x4x1x1xf32>
    %298 = vector.shape_cast %297 : vector<1x4x1x1xf32> to vector<4x1x1xf32>
    %299 = vector.extract_strided_slice %22 {offsets = [0, 4, 2], sizes = [4, 16, 16], strides = [1, 1, 1]} : vector<4x20x20xf32> to vector<4x16x16xf32>
    %300 = vector.broadcast %298 : vector<4x1x1xf32> to vector<4x16x16xf32>
    %301 = arith.mulf %300, %299 : vector<4x16x16xf32>
    %302 = arith.addf %296, %301 : vector<4x16x16xf32>
    %303 = vector.extract_strided_slice %27 {offsets = [22, 0, 0, 0], sizes = [1, 4, 1, 1], strides = [1, 1, 1, 1]} : vector<25x4x1x1xf32> to vector<1x4x1x1xf32>
    %304 = vector.shape_cast %303 : vector<1x4x1x1xf32> to vector<4x1x1xf32>
    %305 = vector.extract_strided_slice %23 {offsets = [0, 4, 2], sizes = [4, 16, 16], strides = [1, 1, 1]} : vector<4x20x20xf32> to vector<4x16x16xf32>
    %306 = vector.broadcast %304 : vector<4x1x1xf32> to vector<4x16x16xf32>
    %307 = arith.mulf %306, %305 : vector<4x16x16xf32>
    %308 = arith.addf %302, %307 : vector<4x16x16xf32>
    %309 = vector.extract_strided_slice %25 {offsets = [23, 0, 0, 0], sizes = [1, 4, 1, 1], strides = [1, 1, 1, 1]} : vector<25x4x1x1xf32> to vector<1x4x1x1xf32>
    %310 = vector.shape_cast %309 : vector<1x4x1x1xf32> to vector<4x1x1xf32>
    %311 = vector.extract_strided_slice %22 {offsets = [0, 4, 3], sizes = [4, 16, 16], strides = [1, 1, 1]} : vector<4x20x20xf32> to vector<4x16x16xf32>
    %312 = vector.broadcast %310 : vector<4x1x1xf32> to vector<4x16x16xf32>
    %313 = arith.mulf %312, %311 : vector<4x16x16xf32>
    %314 = arith.addf %308, %313 : vector<4x16x16xf32>
    %315 = vector.extract_strided_slice %27 {offsets = [23, 0, 0, 0], sizes = [1, 4, 1, 1], strides = [1, 1, 1, 1]} : vector<25x4x1x1xf32> to vector<1x4x1x1xf32>
    %316 = vector.shape_cast %315 : vector<1x4x1x1xf32> to vector<4x1x1xf32>
    %317 = vector.extract_strided_slice %23 {offsets = [0, 4, 3], sizes = [4, 16, 16], strides = [1, 1, 1]} : vector<4x20x20xf32> to vector<4x16x16xf32>
    %318 = vector.broadcast %316 : vector<4x1x1xf32> to vector<4x16x16xf32>
    %319 = arith.mulf %318, %317 : vector<4x16x16xf32>
    %320 = arith.addf %314, %319 : vector<4x16x16xf32>
    %321 = vector.extract_strided_slice %25 {offsets = [24, 0, 0, 0], sizes = [1, 4, 1, 1], strides = [1, 1, 1, 1]} : vector<25x4x1x1xf32> to vector<1x4x1x1xf32>
    %322 = vector.shape_cast %321 : vector<1x4x1x1xf32> to vector<4x1x1xf32>
    %323 = vector.extract_strided_slice %22 {offsets = [0, 4, 4], sizes = [4, 16, 16], strides = [1, 1, 1]} : vector<4x20x20xf32> to vector<4x16x16xf32>
    %324 = vector.broadcast %322 : vector<4x1x1xf32> to vector<4x16x16xf32>
    %325 = arith.mulf %324, %323 : vector<4x16x16xf32>
    %326 = arith.addf %320, %325 : vector<4x16x16xf32>
    %327 = vector.extract_strided_slice %27 {offsets = [24, 0, 0, 0], sizes = [1, 4, 1, 1], strides = [1, 1, 1, 1]} : vector<25x4x1x1xf32> to vector<1x4x1x1xf32>
    %328 = vector.shape_cast %327 : vector<1x4x1x1xf32> to vector<4x1x1xf32>
    %329 = vector.extract_strided_slice %23 {offsets = [0, 4, 4], sizes = [4, 16, 16], strides = [1, 1, 1]} : vector<4x20x20xf32> to vector<4x16x16xf32>
    %330 = vector.broadcast %328 : vector<4x1x1xf32> to vector<4x16x16xf32>
    %331 = arith.mulf %330, %329 : vector<4x16x16xf32>
    %332 = arith.addf %326, %331 : vector<4x16x16xf32>
    %333 = vector.shape_cast %332 : vector<4x16x16xf32> to vector<4x256xf32>
    %c0_20 = arith.constant 0 : index
    %c0_21 = arith.constant 0 : index
    %334 = vector.load %arg6[%c0_20, %c0_21] : memref<4x1xf32, #tpu.memory_space<vmem>>, vector<4x1xf32>
    %335 = vector.broadcast %334 : vector<4x1xf32> to vector<4x256xf32>
    %336 = arith.addf %333, %335 : vector<4x256xf32>
    %cst_22 = arith.constant 2.000000e+01 : f32
    %337 = vector.broadcast %cst_22 : f32 to vector<4x256xf32>
    %338 = arith.minimumf %336, %337 : vector<4x256xf32>
    %339 = math.exp %338 : vector<4x256xf32>
    %cst_23 = arith.constant 2.000000e+00 : f32
    %340 = vector.broadcast %cst_23 : f32 to vector<4x256xf32>
    %341 = arith.addf %339, %340 : vector<4x256xf32>
    %342 = arith.mulf %339, %341 : vector<4x256xf32>
    %343 = arith.mulf %336, %342 : vector<4x256xf32>
    %cst_24 = arith.constant 2.000000e+00 : f32
    %344 = vector.broadcast %cst_24 : f32 to vector<4x256xf32>
    %345 = arith.addf %342, %344 : vector<4x256xf32>
    %346 = arith.divf %343, %345 : vector<4x256xf32>
    %cst_25 = arith.constant 0.000000e+00 : f32
    %347 = vector.broadcast %cst_25 : f32 to vector<4x16x16xf32>
    %348 = vector.extract_strided_slice %29 {offsets = [0, 0, 0, 0], sizes = [1, 4, 1, 1], strides = [1, 1, 1, 1]} : vector<9x4x1x1xf32> to vector<1x4x1x1xf32>
    %349 = vector.shape_cast %348 : vector<1x4x1x1xf32> to vector<4x1x1xf32>
    %350 = vector.extract_strided_slice %22 {offsets = [0, 1, 1], sizes = [4, 16, 16], strides = [1, 1, 1]} : vector<4x20x20xf32> to vector<4x16x16xf32>
    %351 = vector.broadcast %349 : vector<4x1x1xf32> to vector<4x16x16xf32>
    %352 = arith.mulf %351, %350 : vector<4x16x16xf32>
    %353 = arith.addf %347, %352 : vector<4x16x16xf32>
    %354 = vector.extract_strided_slice %31 {offsets = [0, 0, 0, 0], sizes = [1, 4, 1, 1], strides = [1, 1, 1, 1]} : vector<9x4x1x1xf32> to vector<1x4x1x1xf32>
    %355 = vector.shape_cast %354 : vector<1x4x1x1xf32> to vector<4x1x1xf32>
    %356 = vector.extract_strided_slice %23 {offsets = [0, 1, 1], sizes = [4, 16, 16], strides = [1, 1, 1]} : vector<4x20x20xf32> to vector<4x16x16xf32>
    %357 = vector.broadcast %355 : vector<4x1x1xf32> to vector<4x16x16xf32>
    %358 = arith.mulf %357, %356 : vector<4x16x16xf32>
    %359 = arith.addf %353, %358 : vector<4x16x16xf32>
    %360 = vector.extract_strided_slice %29 {offsets = [1, 0, 0, 0], sizes = [1, 4, 1, 1], strides = [1, 1, 1, 1]} : vector<9x4x1x1xf32> to vector<1x4x1x1xf32>
    %361 = vector.shape_cast %360 : vector<1x4x1x1xf32> to vector<4x1x1xf32>
    %362 = vector.extract_strided_slice %22 {offsets = [0, 1, 2], sizes = [4, 16, 16], strides = [1, 1, 1]} : vector<4x20x20xf32> to vector<4x16x16xf32>
    %363 = vector.broadcast %361 : vector<4x1x1xf32> to vector<4x16x16xf32>
    %364 = arith.mulf %363, %362 : vector<4x16x16xf32>
    %365 = arith.addf %359, %364 : vector<4x16x16xf32>
    %366 = vector.extract_strided_slice %31 {offsets = [1, 0, 0, 0], sizes = [1, 4, 1, 1], strides = [1, 1, 1, 1]} : vector<9x4x1x1xf32> to vector<1x4x1x1xf32>
    %367 = vector.shape_cast %366 : vector<1x4x1x1xf32> to vector<4x1x1xf32>
    %368 = vector.extract_strided_slice %23 {offsets = [0, 1, 2], sizes = [4, 16, 16], strides = [1, 1, 1]} : vector<4x20x20xf32> to vector<4x16x16xf32>
    %369 = vector.broadcast %367 : vector<4x1x1xf32> to vector<4x16x16xf32>
    %370 = arith.mulf %369, %368 : vector<4x16x16xf32>
    %371 = arith.addf %365, %370 : vector<4x16x16xf32>
    %372 = vector.extract_strided_slice %29 {offsets = [2, 0, 0, 0], sizes = [1, 4, 1, 1], strides = [1, 1, 1, 1]} : vector<9x4x1x1xf32> to vector<1x4x1x1xf32>
    %373 = vector.shape_cast %372 : vector<1x4x1x1xf32> to vector<4x1x1xf32>
    %374 = vector.extract_strided_slice %22 {offsets = [0, 1, 3], sizes = [4, 16, 16], strides = [1, 1, 1]} : vector<4x20x20xf32> to vector<4x16x16xf32>
    %375 = vector.broadcast %373 : vector<4x1x1xf32> to vector<4x16x16xf32>
    %376 = arith.mulf %375, %374 : vector<4x16x16xf32>
    %377 = arith.addf %371, %376 : vector<4x16x16xf32>
    %378 = vector.extract_strided_slice %31 {offsets = [2, 0, 0, 0], sizes = [1, 4, 1, 1], strides = [1, 1, 1, 1]} : vector<9x4x1x1xf32> to vector<1x4x1x1xf32>
    %379 = vector.shape_cast %378 : vector<1x4x1x1xf32> to vector<4x1x1xf32>
    %380 = vector.extract_strided_slice %23 {offsets = [0, 1, 3], sizes = [4, 16, 16], strides = [1, 1, 1]} : vector<4x20x20xf32> to vector<4x16x16xf32>
    %381 = vector.broadcast %379 : vector<4x1x1xf32> to vector<4x16x16xf32>
    %382 = arith.mulf %381, %380 : vector<4x16x16xf32>
    %383 = arith.addf %377, %382 : vector<4x16x16xf32>
    %384 = vector.extract_strided_slice %29 {offsets = [3, 0, 0, 0], sizes = [1, 4, 1, 1], strides = [1, 1, 1, 1]} : vector<9x4x1x1xf32> to vector<1x4x1x1xf32>
    %385 = vector.shape_cast %384 : vector<1x4x1x1xf32> to vector<4x1x1xf32>
    %386 = vector.extract_strided_slice %22 {offsets = [0, 2, 1], sizes = [4, 16, 16], strides = [1, 1, 1]} : vector<4x20x20xf32> to vector<4x16x16xf32>
    %387 = vector.broadcast %385 : vector<4x1x1xf32> to vector<4x16x16xf32>
    %388 = arith.mulf %387, %386 : vector<4x16x16xf32>
    %389 = arith.addf %383, %388 : vector<4x16x16xf32>
    %390 = vector.extract_strided_slice %31 {offsets = [3, 0, 0, 0], sizes = [1, 4, 1, 1], strides = [1, 1, 1, 1]} : vector<9x4x1x1xf32> to vector<1x4x1x1xf32>
    %391 = vector.shape_cast %390 : vector<1x4x1x1xf32> to vector<4x1x1xf32>
    %392 = vector.extract_strided_slice %23 {offsets = [0, 2, 1], sizes = [4, 16, 16], strides = [1, 1, 1]} : vector<4x20x20xf32> to vector<4x16x16xf32>
    %393 = vector.broadcast %391 : vector<4x1x1xf32> to vector<4x16x16xf32>
    %394 = arith.mulf %393, %392 : vector<4x16x16xf32>
    %395 = arith.addf %389, %394 : vector<4x16x16xf32>
    %396 = vector.extract_strided_slice %29 {offsets = [4, 0, 0, 0], sizes = [1, 4, 1, 1], strides = [1, 1, 1, 1]} : vector<9x4x1x1xf32> to vector<1x4x1x1xf32>
    %397 = vector.shape_cast %396 : vector<1x4x1x1xf32> to vector<4x1x1xf32>
    %398 = vector.extract_strided_slice %22 {offsets = [0, 2, 2], sizes = [4, 16, 16], strides = [1, 1, 1]} : vector<4x20x20xf32> to vector<4x16x16xf32>
    %399 = vector.broadcast %397 : vector<4x1x1xf32> to vector<4x16x16xf32>
    %400 = arith.mulf %399, %398 : vector<4x16x16xf32>
    %401 = arith.addf %395, %400 : vector<4x16x16xf32>
    %402 = vector.extract_strided_slice %31 {offsets = [4, 0, 0, 0], sizes = [1, 4, 1, 1], strides = [1, 1, 1, 1]} : vector<9x4x1x1xf32> to vector<1x4x1x1xf32>
    %403 = vector.shape_cast %402 : vector<1x4x1x1xf32> to vector<4x1x1xf32>
    %404 = vector.extract_strided_slice %23 {offsets = [0, 2, 2], sizes = [4, 16, 16], strides = [1, 1, 1]} : vector<4x20x20xf32> to vector<4x16x16xf32>
    %405 = vector.broadcast %403 : vector<4x1x1xf32> to vector<4x16x16xf32>
    %406 = arith.mulf %405, %404 : vector<4x16x16xf32>
    %407 = arith.addf %401, %406 : vector<4x16x16xf32>
    %408 = vector.extract_strided_slice %29 {offsets = [5, 0, 0, 0], sizes = [1, 4, 1, 1], strides = [1, 1, 1, 1]} : vector<9x4x1x1xf32> to vector<1x4x1x1xf32>
    %409 = vector.shape_cast %408 : vector<1x4x1x1xf32> to vector<4x1x1xf32>
    %410 = vector.extract_strided_slice %22 {offsets = [0, 2, 3], sizes = [4, 16, 16], strides = [1, 1, 1]} : vector<4x20x20xf32> to vector<4x16x16xf32>
    %411 = vector.broadcast %409 : vector<4x1x1xf32> to vector<4x16x16xf32>
    %412 = arith.mulf %411, %410 : vector<4x16x16xf32>
    %413 = arith.addf %407, %412 : vector<4x16x16xf32>
    %414 = vector.extract_strided_slice %31 {offsets = [5, 0, 0, 0], sizes = [1, 4, 1, 1], strides = [1, 1, 1, 1]} : vector<9x4x1x1xf32> to vector<1x4x1x1xf32>
    %415 = vector.shape_cast %414 : vector<1x4x1x1xf32> to vector<4x1x1xf32>
    %416 = vector.extract_strided_slice %23 {offsets = [0, 2, 3], sizes = [4, 16, 16], strides = [1, 1, 1]} : vector<4x20x20xf32> to vector<4x16x16xf32>
    %417 = vector.broadcast %415 : vector<4x1x1xf32> to vector<4x16x16xf32>
    %418 = arith.mulf %417, %416 : vector<4x16x16xf32>
    %419 = arith.addf %413, %418 : vector<4x16x16xf32>
    %420 = vector.extract_strided_slice %29 {offsets = [6, 0, 0, 0], sizes = [1, 4, 1, 1], strides = [1, 1, 1, 1]} : vector<9x4x1x1xf32> to vector<1x4x1x1xf32>
    %421 = vector.shape_cast %420 : vector<1x4x1x1xf32> to vector<4x1x1xf32>
    %422 = vector.extract_strided_slice %22 {offsets = [0, 3, 1], sizes = [4, 16, 16], strides = [1, 1, 1]} : vector<4x20x20xf32> to vector<4x16x16xf32>
    %423 = vector.broadcast %421 : vector<4x1x1xf32> to vector<4x16x16xf32>
    %424 = arith.mulf %423, %422 : vector<4x16x16xf32>
    %425 = arith.addf %419, %424 : vector<4x16x16xf32>
    %426 = vector.extract_strided_slice %31 {offsets = [6, 0, 0, 0], sizes = [1, 4, 1, 1], strides = [1, 1, 1, 1]} : vector<9x4x1x1xf32> to vector<1x4x1x1xf32>
    %427 = vector.shape_cast %426 : vector<1x4x1x1xf32> to vector<4x1x1xf32>
    %428 = vector.extract_strided_slice %23 {offsets = [0, 3, 1], sizes = [4, 16, 16], strides = [1, 1, 1]} : vector<4x20x20xf32> to vector<4x16x16xf32>
    %429 = vector.broadcast %427 : vector<4x1x1xf32> to vector<4x16x16xf32>
    %430 = arith.mulf %429, %428 : vector<4x16x16xf32>
    %431 = arith.addf %425, %430 : vector<4x16x16xf32>
    %432 = vector.extract_strided_slice %29 {offsets = [7, 0, 0, 0], sizes = [1, 4, 1, 1], strides = [1, 1, 1, 1]} : vector<9x4x1x1xf32> to vector<1x4x1x1xf32>
    %433 = vector.shape_cast %432 : vector<1x4x1x1xf32> to vector<4x1x1xf32>
    %434 = vector.extract_strided_slice %22 {offsets = [0, 3, 2], sizes = [4, 16, 16], strides = [1, 1, 1]} : vector<4x20x20xf32> to vector<4x16x16xf32>
    %435 = vector.broadcast %433 : vector<4x1x1xf32> to vector<4x16x16xf32>
    %436 = arith.mulf %435, %434 : vector<4x16x16xf32>
    %437 = arith.addf %431, %436 : vector<4x16x16xf32>
    %438 = vector.extract_strided_slice %31 {offsets = [7, 0, 0, 0], sizes = [1, 4, 1, 1], strides = [1, 1, 1, 1]} : vector<9x4x1x1xf32> to vector<1x4x1x1xf32>
    %439 = vector.shape_cast %438 : vector<1x4x1x1xf32> to vector<4x1x1xf32>
    %440 = vector.extract_strided_slice %23 {offsets = [0, 3, 2], sizes = [4, 16, 16], strides = [1, 1, 1]} : vector<4x20x20xf32> to vector<4x16x16xf32>
    %441 = vector.broadcast %439 : vector<4x1x1xf32> to vector<4x16x16xf32>
    %442 = arith.mulf %441, %440 : vector<4x16x16xf32>
    %443 = arith.addf %437, %442 : vector<4x16x16xf32>
    %444 = vector.extract_strided_slice %29 {offsets = [8, 0, 0, 0], sizes = [1, 4, 1, 1], strides = [1, 1, 1, 1]} : vector<9x4x1x1xf32> to vector<1x4x1x1xf32>
    %445 = vector.shape_cast %444 : vector<1x4x1x1xf32> to vector<4x1x1xf32>
    %446 = vector.extract_strided_slice %22 {offsets = [0, 3, 3], sizes = [4, 16, 16], strides = [1, 1, 1]} : vector<4x20x20xf32> to vector<4x16x16xf32>
    %447 = vector.broadcast %445 : vector<4x1x1xf32> to vector<4x16x16xf32>
    %448 = arith.mulf %447, %446 : vector<4x16x16xf32>
    %449 = arith.addf %443, %448 : vector<4x16x16xf32>
    %450 = vector.extract_strided_slice %31 {offsets = [8, 0, 0, 0], sizes = [1, 4, 1, 1], strides = [1, 1, 1, 1]} : vector<9x4x1x1xf32> to vector<1x4x1x1xf32>
    %451 = vector.shape_cast %450 : vector<1x4x1x1xf32> to vector<4x1x1xf32>
    %452 = vector.extract_strided_slice %23 {offsets = [0, 3, 3], sizes = [4, 16, 16], strides = [1, 1, 1]} : vector<4x20x20xf32> to vector<4x16x16xf32>
    %453 = vector.broadcast %451 : vector<4x1x1xf32> to vector<4x16x16xf32>
    %454 = arith.mulf %453, %452 : vector<4x16x16xf32>
    %455 = arith.addf %449, %454 : vector<4x16x16xf32>
    %456 = vector.shape_cast %455 : vector<4x16x16xf32> to vector<4x256xf32>
    %c0_26 = arith.constant 0 : index
    %c0_27 = arith.constant 0 : index
    %457 = vector.load %arg9[%c0_26, %c0_27] : memref<4x1xf32, #tpu.memory_space<vmem>>, vector<4x1xf32>
    %458 = vector.broadcast %457 : vector<4x1xf32> to vector<4x256xf32>
    %459 = arith.addf %456, %458 : vector<4x256xf32>
    %cst_28 = arith.constant 2.000000e+01 : f32
    %460 = vector.broadcast %cst_28 : f32 to vector<4x256xf32>
    %461 = arith.minimumf %459, %460 : vector<4x256xf32>
    %462 = math.exp %461 : vector<4x256xf32>
    %cst_29 = arith.constant 2.000000e+00 : f32
    %463 = vector.broadcast %cst_29 : f32 to vector<4x256xf32>
    %464 = arith.addf %462, %463 : vector<4x256xf32>
    %465 = arith.mulf %462, %464 : vector<4x256xf32>
    %466 = arith.mulf %459, %465 : vector<4x256xf32>
    %cst_30 = arith.constant 2.000000e+00 : f32
    %467 = vector.broadcast %cst_30 : f32 to vector<4x256xf32>
    %468 = arith.addf %465, %467 : vector<4x256xf32>
    %469 = arith.divf %466, %468 : vector<4x256xf32>
    %470 = vector.extract_strided_slice %346 {offsets = [0, 0], sizes = [1, 256], strides = [1, 1]} : vector<4x256xf32> to vector<1x256xf32>
    %471 = vector.extract_strided_slice %346 {offsets = [2, 0], sizes = [1, 256], strides = [1, 1]} : vector<4x256xf32> to vector<1x256xf32>
    %472 = vector.extract_strided_slice %469 {offsets = [0, 0], sizes = [1, 256], strides = [1, 1]} : vector<4x256xf32> to vector<1x256xf32>
    %473 = vector.extract_strided_slice %469 {offsets = [2, 0], sizes = [1, 256], strides = [1, 1]} : vector<4x256xf32> to vector<1x256xf32>
    %474 = tpu.concatenate %470, %471, %472, %473 in 0 : vector<1x256xf32>, vector<1x256xf32>, vector<1x256xf32>, vector<1x256xf32> -> vector<4x256xf32>
    %475 = vector.extract_strided_slice %346 {offsets = [1, 0], sizes = [1, 256], strides = [1, 1]} : vector<4x256xf32> to vector<1x256xf32>
    %476 = vector.extract_strided_slice %346 {offsets = [3, 0], sizes = [1, 256], strides = [1, 1]} : vector<4x256xf32> to vector<1x256xf32>
    %477 = vector.extract_strided_slice %469 {offsets = [1, 0], sizes = [1, 256], strides = [1, 1]} : vector<4x256xf32> to vector<1x256xf32>
    %478 = vector.extract_strided_slice %469 {offsets = [3, 0], sizes = [1, 256], strides = [1, 1]} : vector<4x256xf32> to vector<1x256xf32>
    %479 = tpu.concatenate %475, %476, %477, %478 in 0 : vector<1x256xf32>, vector<1x256xf32>, vector<1x256xf32>, vector<1x256xf32> -> vector<4x256xf32>
    %480 = vector.extract_strided_slice %16 {offsets = [0, 0], sizes = [4, 256], strides = [1, 1]} : vector<8x256xf32> to vector<4x256xf32>
    %c0_31 = arith.constant 0 : index
    %c0_32 = arith.constant 0 : index
    %c0_33 = arith.constant 0 : index
    %481 = vector.load %arg10[%c0_31, %c0_32, %c0_33] : memref<1x16x256xf32, #tpu.memory_space<vmem>>, vector<1x4x256xf32>
    %482 = vector.shape_cast %481 : vector<1x4x256xf32> to vector<4x256xf32>
    %483 = vector.shape_cast %480 : vector<4x256xf32> to vector<1x4x256xf32>
    tpu.vector_store %arg10[%c0_31, %c0_32, %c0_33], %483 {strides = array<i32>} : memref<1x16x256xf32, #tpu.memory_space<vmem>>, vector<1x4x256xf32>,
    %c0_34 = arith.constant 0 : index
    %c4 = arith.constant 4 : index
    %c0_35 = arith.constant 0 : index
    %484 = vector.load %arg10[%c0_34, %c4, %c0_35] : memref<1x16x256xf32, #tpu.memory_space<vmem>>, vector<1x4x256xf32>
    %485 = vector.shape_cast %484 : vector<1x4x256xf32> to vector<4x256xf32>
    %486 = vector.shape_cast %474 : vector<4x256xf32> to vector<1x4x256xf32>
    tpu.vector_store %arg10[%c0_34, %c4, %c0_35], %486 {strides = array<i32>} : memref<1x16x256xf32, #tpu.memory_space<vmem>>, vector<1x4x256xf32>,
    %487 = vector.extract_strided_slice %16 {offsets = [4, 0], sizes = [4, 256], strides = [1, 1]} : vector<8x256xf32> to vector<4x256xf32>
    %c0_36 = arith.constant 0 : index
    %c8 = arith.constant 8 : index
    %c0_37 = arith.constant 0 : index
    %488 = vector.load %arg10[%c0_36, %c8, %c0_37] : memref<1x16x256xf32, #tpu.memory_space<vmem>>, vector<1x4x256xf32>
    %489 = vector.shape_cast %488 : vector<1x4x256xf32> to vector<4x256xf32>
    %490 = vector.shape_cast %487 : vector<4x256xf32> to vector<1x4x256xf32>
    tpu.vector_store %arg10[%c0_36, %c8, %c0_37], %490 {strides = array<i32>} : memref<1x16x256xf32, #tpu.memory_space<vmem>>, vector<1x4x256xf32>,
    %c0_38 = arith.constant 0 : index
    %c12 = arith.constant 12 : index
    %c0_39 = arith.constant 0 : index
    %491 = vector.load %arg10[%c0_38, %c12, %c0_39] : memref<1x16x256xf32, #tpu.memory_space<vmem>>, vector<1x4x256xf32>
    %492 = vector.shape_cast %491 : vector<1x4x256xf32> to vector<4x256xf32>
    %493 = vector.shape_cast %479 : vector<4x256xf32> to vector<1x4x256xf32>
    tpu.vector_store %arg10[%c0_38, %c12, %c0_39], %493 {strides = array<i32>} : memref<1x16x256xf32, #tpu.memory_space<vmem>>, vector<1x4x256xf32>,
    return
  }
  func.func @transform_0(%arg0: i32) -> (i32, i32, i32) {
    %c0_i32 = arith.constant 0 : i32
    %c0_i32_0 = arith.constant 0 : i32
    %c0_i32_1 = arith.constant 0 : i32
    return %arg0, %c0_i32, %c0_i32_0 : i32, i32, i32
  }
  func.func @transform_1(%arg0: i32) -> (i32, i32) {
    %c0_i32 = arith.constant 0 : i32
    %c0_i32_0 = arith.constant 0 : i32
    %c0_i32_1 = arith.constant 0 : i32
    return %c0_i32, %c0_i32_0 : i32, i32
  }
  func.func @transform_2(%arg0: i32) -> (i32, i32) {
    %c0_i32 = arith.constant 0 : i32
    %c0_i32_0 = arith.constant 0 : i32
    %c0_i32_1 = arith.constant 0 : i32
    return %c0_i32, %c0_i32_0 : i32, i32
  }
  func.func @transform_3(%arg0: i32) -> (i32, i32) {
    %c0_i32 = arith.constant 0 : i32
    %c0_i32_0 = arith.constant 0 : i32
    %c0_i32_1 = arith.constant 0 : i32
    return %c0_i32, %c0_i32_0 : i32, i32
  }
  func.func @transform_4(%arg0: i32) -> (i32, i32) {
    %c0_i32 = arith.constant 0 : i32
    %c0_i32_0 = arith.constant 0 : i32
    %c0_i32_1 = arith.constant 0 : i32
    return %c0_i32, %c0_i32_0 : i32, i32
  }
  func.func @transform_5(%arg0: i32) -> (i32, i32) {
    %c0_i32 = arith.constant 0 : i32
    %c0_i32_0 = arith.constant 0 : i32
    %c0_i32_1 = arith.constant 0 : i32
    return %c0_i32, %c0_i32_0 : i32, i32
  }
  func.func @transform_6(%arg0: i32) -> (i32, i32) {
    %c0_i32 = arith.constant 0 : i32
    %c0_i32_0 = arith.constant 0 : i32
    %c0_i32_1 = arith.constant 0 : i32
    return %c0_i32, %c0_i32_0 : i32, i32
  }
  func.func @transform_7(%arg0: i32) -> (i32, i32) {
    %c0_i32 = arith.constant 0 : i32
    %c0_i32_0 = arith.constant 0 : i32
    %c0_i32_1 = arith.constant 0 : i32
    return %c0_i32, %c0_i32_0 : i32, i32
  }
  func.func @transform_8(%arg0: i32) -> (i32, i32) {
    %c0_i32 = arith.constant 0 : i32
    %c0_i32_0 = arith.constant 0 : i32
    %c0_i32_1 = arith.constant 0 : i32
    return %c0_i32, %c0_i32_0 : i32, i32
  }
  func.func @transform_9(%arg0: i32) -> (i32, i32, i32) {
    %c0_i32 = arith.constant 0 : i32
    %c0_i32_0 = arith.constant 0 : i32
    %c0_i32_1 = arith.constant 0 : i32
    return %arg0, %c0_i32, %c0_i32_0 : i32, i32, i32
  }
}

</mosaic_0001>

<llo_original>
// kernel: gsconv_pallas.1
$region0: #{gsconv_pallas.1}
  #allocation0 [shape = 'u32[]', space=smem, size = 0x4, offset = 0x4, fixed_abs, tag = 'smem constant byte address 0x4 - core index']
  #allocation1 [shape = 'u32[144,128]{1,0:T(1,128)}', space=vmem, size = 0x12000, scoped, tag = 'internal scratch']
  %s0 = inlined_call_operand.hbm [shape: f32[2,8,256], index: 0, kind: input, shape index: {}]
  %s1 = inlined_call_operand.hbm [shape: f32[8,8], index: 1, kind: input, shape index: {}]
  %s2 = inlined_call_operand.hbm [shape: f32[8,1], index: 2, kind: input, shape index: {}]
  %s3 = inlined_call_operand.hbm [shape: f32[25,4], index: 3, kind: input, shape index: {}]
  %s4 = inlined_call_operand.hbm [shape: f32[25,4], index: 4, kind: input, shape index: {}]
  %s5 = inlined_call_operand.hbm [shape: f32[4,1], index: 5, kind: input, shape index: {}]
  %s6 = inlined_call_operand.hbm [shape: f32[9,4], index: 6, kind: input, shape index: {}]
  %s7 = inlined_call_operand.hbm [shape: f32[9,4], index: 7, kind: input, shape index: {}]
  %s8 = inlined_call_operand.hbm [shape: f32[4,1], index: 8, kind: input, shape index: {}]
  %s9 = inlined_call_operand.hbm [shape: f32[2,16,256], index: 9, kind: output, shape index: {}]
  %s10 = sld [smem:[#allocation0]]
  $region105: #{gsconv_pallas.1} parent=0
    _
  %s12 = ssub.s32 1, %s10
  %s13 = scalar_select 0, %s12, %s10
  $region1: #{gsconv_pallas.1} parent=0
    #allocation2 [shape = 'u8[16384]{0}', space=vmem, size = 0x4000, scoped, tag = 'input window, operand 0']
    #allocation3 [shape = 's32[2]{0}', space=sflag, size = 0x8, scoped, tag = 'scoped memory for gsconv_pallas.1']
    #allocation4 [shape = 's32[2]{0}', space=sflag, size = 0x8, scoped, tag = 'scoped memory for gsconv_pallas.1']
    #allocation5 [shape = 'u8[4096]{0}', space=vmem, size = 0x1000, scoped, tag = 'input window, operand 1, single buffered']
    #allocation6 [shape = 's32[1]{0}', space=sflag, size = 0x4, scoped, tag = 'scoped memory for gsconv_pallas.1']
    #allocation7 [shape = 'u8[4096]{0}', space=vmem, size = 0x1000, scoped, tag = 'input window, operand 2, single buffered']
    #allocation8 [shape = 'u8[16384]{0}', space=vmem, size = 0x4000, scoped, tag = 'input window, operand 3, single buffered']
    #allocation9 [shape = 's32[1]{0}', space=sflag, size = 0x4, scoped, tag = 'scoped memory for gsconv_pallas.1']
    #allocation10 [shape = 'u8[16384]{0}', space=vmem, size = 0x4000, scoped, tag = 'input window, operand 4, single buffered']
    #allocation11 [shape = 'u8[2048]{0}', space=vmem, size = 0x800, scoped, tag = 'input window, operand 5, single buffered']
    #allocation12 [shape = 's32[1]{0}', space=sflag, size = 0x4, scoped, tag = 'scoped memory for gsconv_pallas.1']
    #allocation13 [shape = 'u8[8192]{0}', space=vmem, size = 0x2000, scoped, tag = 'input window, operand 6, single buffered']
    #allocation14 [shape = 'u8[8192]{0}', space=vmem, size = 0x2000, scoped, tag = 'input window, operand 7, single buffered']
    #allocation15 [shape = 's32[1]{0}', space=sflag, size = 0x4, scoped, tag = 'scoped memory for gsconv_pallas.1']
    #allocation16 [shape = 'u8[2048]{0}', space=vmem, size = 0x800, scoped, tag = 'input window, operand 8, single buffered']
    #allocation17 [shape = 'u8[32768]{0}', space=vmem, size = 0x8000, scoped, tag = 'output window, operand 0']
    %14 = vsyncpa [#allocation3], 0
    %s15 = scalar_lea.sflag [#allocation3], 1
    %16 = vsyncpa %s15, 0
    %17 = vsyncpa [#allocation6], 0
    %18 = vsyncpa [#allocation9], 0
    %19 = vsyncpa [#allocation12], 0
    %20 = vsyncpa [#allocation15], 0
    %21 = vsyncpa [#allocation4], 0
    %s22 = scalar_lea.sflag [#allocation4], 1
    %23 = vsyncpa %s22, 0
    loop: start=0, step=1, limit=4
    $region2: #{gsconv_pallas.1} parent=1 // loop_pre_header
      _
    $region3: #{gsconv_pallas.1} parent=1 // loop_header
      %s25 = sphi 0, %s29
      %p26 = scmp.ge.s32.totalorder %s25, 4
      %s35 = sphi 0, %s37
      %s38 = sphi 0, %s35
      %s39 = sphi 0, %s38
      %s55 = sphi 0, %s39
      %s59 = sphi 0, %s59
      %s61 = sphi 0, %s59
      %s62 = sphi 0, %s61
      %s76 = sphi 0, %s62
      %s80 = sphi 0, %s80
      %s82 = sphi 0, %s80
      %s83 = sphi 0, %s82
      %s97 = sphi 0, %s83
      %s101 = sphi 0, %s101
      %s103 = sphi 0, %s101
      %s104 = sphi 0, %s103
      %s118 = sphi 0, %s104
      %s122 = sphi 0, %s122
      %s124 = sphi 0, %s122
      %s125 = sphi 0, %s124
      %s139 = sphi 0, %s125
      %s143 = sphi 0, %s143
      %s145 = sphi 0, %s143
      %s146 = sphi 0, %s145
      %s160 = sphi 0, %s146
      %s164 = sphi 0, %s164
      %s166 = sphi 0, %s164
      %s167 = sphi 0, %s166
      %s181 = sphi 0, %s167
      %s185 = sphi 0, %s185
      %s187 = sphi 0, %s185
      %s188 = sphi 0, %s187
      %s202 = sphi 0, %s188
      %s206 = sphi 0, %s206
      %s208 = sphi 0, %s206
      %s209 = sphi 0, %s208
      %s223 = sphi 0, %s209
      %s229 = sphi 0, %s231
      %s232 = sphi 0, %s229
      %s233 = sphi 0, %s232
      %s249 = sphi 0, %s233
    $region4: #{gsconv_pallas.1} parent=1 // loop_header_branch
      %28 = sbr.rel (%p26) target = $region8
    $region5: #{gsconv_pallas.1} parent=1 // loop_body
      %s30 = ssub.s32 %s25, 1
      %s31 = ssub.s32 %s25, 2
      %s32 = sadd.s32 %s25, 1
      %s33 = ssub.s32 %s25, %s32
      %p34 = scmp.eq.s32.totalorder %s33, 0
      %s36 = sadd.s32 %s35, 1
      %s37 = scalar_select %p34, %s35, %s36
      %p40 = pneg %p34
      %p41 = scmp.eq.s32.totalorder %s25, 1
      %p42 = por %p40, %p41
      %p43 = scmp.ne.s32.totalorder %s35, %s38
      %p44 = scmp.eq.s32.totalorder %s25, 0
      %p45 = por %p43, %p44
      %p46 = scmp.ne.s32.totalorder %s35, %s38
      %p47 = scmp.eq.s32.totalorder %s30, 1
      %p48 = por %p46, %p47
      %p49 = scmp.ne.s32.totalorder %s38, %s39
      %p50 = scmp.eq.s32.totalorder %s30, 0
      %p51 = por %p49, %p50
      %p52 = scmp.ne.s32.totalorder %s38, %s39
      %p53 = scmp.eq.s32.totalorder %s31, 1
      %p54 = por %p52, %p53
      %p56 = scmp.ne.s32.totalorder %s39, %s55
      %p57 = scmp.eq.s32.totalorder %s31, 0
      %p58 = por %p56, %p57
      %s60 = sadd.s32 %s59, 1
      %p63 = scmp.eq.s32.totalorder %s25, 1
      %p64 = scmp.ne.s32.totalorder %s59, %s61
      %p65 = scmp.eq.s32.totalorder %s25, 0
      %p66 = por %p64, %p65
      %p67 = scmp.ne.s32.totalorder %s59, %s61
      %p68 = scmp.eq.s32.totalorder %s30, 1
      %p69 = por %p67, %p68
      %p70 = scmp.ne.s32.totalorder %s61, %s62
      %p71 = scmp.eq.s32.totalorder %s30, 0
      %p72 = por %p70, %p71
      %p73 = scmp.ne.s32.totalorder %s61, %s62
      %p74 = scmp.eq.s32.totalorder %s31, 1
      %p75 = por %p73, %p74
      %p77 = scmp.ne.s32.totalorder %s62, %s76
      %p78 = scmp.eq.s32.totalorder %s31, 0
      %p79 = por %p77, %p78
      %s81 = sadd.s32 %s80, 1
      %p84 = scmp.eq.s32.totalorder %s25, 1
      %p85 = scmp.ne.s32.totalorder %s80, %s82
      %p86 = scmp.eq.s32.totalorder %s25, 0
      %p87 = por %p85, %p86
      %p88 = scmp.ne.s32.totalorder %s80, %s82
      %p89 = scmp.eq.s32.totalorder %s30, 1
      %p90 = por %p88, %p89
      %p91 = scmp.ne.s32.totalorder %s82, %s83
      %p92 = scmp.eq.s32.totalorder %s30, 0
      %p93 = por %p91, %p92
      %p94 = scmp.ne.s32.totalorder %s82, %s83
      %p95 = scmp.eq.s32.totalorder %s31, 1
      %p96 = por %p94, %p95
      %p98 = scmp.ne.s32.totalorder %s83, %s97
      %p99 = scmp.eq.s32.totalorder %s31, 0
      %p100 = por %p98, %p99
      %s102 = sadd.s32 %s101, 1
      %p105 = scmp.eq.s32.totalorder %s25, 1
      %p106 = scmp.ne.s32.totalorder %s101, %s103
      %p107 = scmp.eq.s32.totalorder %s25, 0
      %p108 = por %p106, %p107
      %p109 = scmp.ne.s32.totalorder %s101, %s103
      %p110 = scmp.eq.s32.totalorder %s30, 1
      %p111 = por %p109, %p110
      %p112 = scmp.ne.s32.totalorder %s103, %s104
      %p113 = scmp.eq.s32.totalorder %s30, 0
      %p114 = por %p112, %p113
      %p115 = scmp.ne.s32.totalorder %s103, %s104
      %p116 = scmp.eq.s32.totalorder %s31, 1
      %p117 = por %p115, %p116
      %p119 = scmp.ne.s32.totalorder %s104, %s118
      %p120 = scmp.eq.s32.totalorder %s31, 0
      %p121 = por %p119, %p120
      %s123 = sadd.s32 %s122, 1
      %p126 = scmp.eq.s32.totalorder %s25, 1
      %p127 = scmp.ne.s32.totalorder %s122, %s124
      %p128 = scmp.eq.s32.totalorder %s25, 0
      %p129 = por %p127, %p128
      %p130 = scmp.ne.s32.totalorder %s122, %s124
      %p131 = scmp.eq.s32.totalorder %s30, 1
      %p132 = por %p130, %p131
      %p133 = scmp.ne.s32.totalorder %s124, %s125
      %p134 = scmp.eq.s32.totalorder %s30, 0
      %p135 = por %p133, %p134
      %p136 = scmp.ne.s32.totalorder %s124, %s125
      %p137 = scmp.eq.s32.totalorder %s31, 1
      %p138 = por %p136, %p137
      %p140 = scmp.ne.s32.totalorder %s125, %s139
      %p141 = scmp.eq.s32.totalorder %s31, 0
      %p142 = por %p140, %p141
      %s144 = sadd.s32 %s143, 1
      %p147 = scmp.eq.s32.totalorder %s25, 1
      %p148 = scmp.ne.s32.totalorder %s143, %s145
      %p149 = scmp.eq.s32.totalorder %s25, 0
      %p150 = por %p148, %p149
      %p151 = scmp.ne.s32.totalorder %s143, %s145
      %p152 = scmp.eq.s32.totalorder %s30, 1
      %p153 = por %p151, %p152
      %p154 = scmp.ne.s32.totalorder %s145, %s146
      %p155 = scmp.eq.s32.totalorder %s30, 0
      %p156 = por %p154, %p155
      %p157 = scmp.ne.s32.totalorder %s145, %s146
      %p158 = scmp.eq.s32.totalorder %s31, 1
      %p159 = por %p157, %p158
      %p161 = scmp.ne.s32.totalorder %s146, %s160
      %p162 = scmp.eq.s32.totalorder %s31, 0
      %p163 = por %p161, %p162
      %s165 = sadd.s32 %s164, 1
      %p168 = scmp.eq.s32.totalorder %s25, 1
      %p169 = scmp.ne.s32.totalorder %s164, %s166
      %p170 = scmp.eq.s32.totalorder %s25, 0
      %p171 = por %p169, %p170
      %p172 = scmp.ne.s32.totalorder %s164, %s166
      %p173 = scmp.eq.s32.totalorder %s30, 1
      %p174 = por %p172, %p173
      %p175 = scmp.ne.s32.totalorder %s166, %s167
      %p176 = scmp.eq.s32.totalorder %s30, 0
      %p177 = por %p175, %p176
      %p178 = scmp.ne.s32.totalorder %s166, %s167
      %p179 = scmp.eq.s32.totalorder %s31, 1
      %p180 = por %p178, %p179
      %p182 = scmp.ne.s32.totalorder %s167, %s181
      %p183 = scmp.eq.s32.totalorder %s31, 0
      %p184 = por %p182, %p183
      %s186 = sadd.s32 %s185, 1
      %p189 = scmp.eq.s32.totalorder %s25, 1
      %p190 = scmp.ne.s32.totalorder %s185, %s187
      %p191 = scmp.eq.s32.totalorder %s25, 0
      %p192 = por %p190, %p191
      %p193 = scmp.ne.s32.totalorder %s185, %s187
      %p194 = scmp.eq.s32.totalorder %s30, 1
      %p195 = por %p193, %p194
      %p196 = scmp.ne.s32.totalorder %s187, %s188
      %p197 = scmp.eq.s32.totalorder %s30, 0
      %p198 = por %p196, %p197
      %p199 = scmp.ne.s32.totalorder %s187, %s188
      %p200 = scmp.eq.s32.totalorder %s31, 1
      %p201 = por %p199, %p200
      %p203 = scmp.ne.s32.totalorder %s188, %s202
      %p204 = scmp.eq.s32.totalorder %s31, 0
      %p205 = por %p203, %p204
      %s207 = sadd.s32 %s206, 1
      %p210 = scmp.eq.s32.totalorder %s25, 1
      %p211 = scmp.ne.s32.totalorder %s206, %s208
      %p212 = scmp.eq.s32.totalorder %s25, 0
      %p213 = por %p211, %p212
      %p214 = scmp.ne.s32.totalorder %s206, %s208
      %p215 = scmp.eq.s32.totalorder %s30, 1
      %p216 = por %p214, %p215
      %p217 = scmp.ne.s32.totalorder %s208, %s209
      %p218 = scmp.eq.s32.totalorder %s30, 0
      %p219 = por %p217, %p218
      %p220 = scmp.ne.s32.totalorder %s208, %s209
      %p221 = scmp.eq.s32.totalorder %s31, 1
      %p222 = por %p220, %p221
      %p224 = scmp.ne.s32.totalorder %s209, %s223
      %p225 = scmp.eq.s32.totalorder %s31, 0
      %p226 = por %p224, %p225
      %s227 = ssub.s32 %s25, %s32
      %p228 = scmp.eq.s32.totalorder %s227, 0
      %s230 = sadd.s32 %s229, 1
      %s231 = scalar_select %p228, %s229, %s230
      %p234 = pneg %p228
      %p235 = scmp.eq.s32.totalorder %s25, 1
      %p236 = por %p234, %p235
      %p237 = scmp.ne.s32.totalorder %s229, %s232
      %p238 = scmp.eq.s32.totalorder %s25, 0
      %p239 = por %p237, %p238
      %p240 = scmp.ne.s32.totalorder %s229, %s232
      %p241 = scmp.eq.s32.totalorder %s30, 1
      %p242 = por %p240, %p241
      %p243 = scmp.ne.s32.totalorder %s232, %s233
      %p244 = scmp.eq.s32.totalorder %s30, 0
      %p245 = por %p243, %p244
      %p246 = scmp.ne.s32.totalorder %s232, %s233
      %p247 = scmp.eq.s32.totalorder %s31, 1
      %p248 = por %p246, %p247
      %p250 = scmp.ne.s32.totalorder %s233, %s249
      %p251 = scmp.eq.s32.totalorder %s31, 0
      %p252 = por %p250, %p251
      %p253 = scmp.le.s32.totalorder 1, %s25
      %p254 = scmp.lt.s32.totalorder %s25, 3
      %p255 = pnand %p253, %p254
      %p256 = pneg %p255
      // Predicated region
      $region9: #{gsconv_pallas.1} parent=5 // pred_check
        _
      $region10: #{gsconv_pallas.1} parent=5 // pred_check_branch
        %258 = sbr.rel (%p255) target = $region12
      $region11: #{gsconv_pallas.1} parent=5 // pred_region
        %s259 = ssub.s32 %s25, 1
        // Predicated region
        $region13: #{gsconv_pallas.1} parent=11 // pred_check
          %p260 = pneg %p72
        $region14: #{gsconv_pallas.1} parent=11 // pred_check_branch
          %262 = sbr.rel (%p260) target = $region16
        $region15: #{gsconv_pallas.1} parent=11 // pred_region
          %s264 = ssub.s32 128, 128
          %265 = vsyncadd [#allocation6], %s264
          %s267 = sshll.u32 [#allocation5], 4
          %s268 = int_to_ptr.vmem [resolvable:$true] %s267
          %270 = dma.hbm_to_vmem [thread:$0]  %s1, 128, %s268, [#allocation6]
        $region16: #{gsconv_pallas.1} parent=11 // pred_fallthru
          _
        // Predicated region
        $region17: #{gsconv_pallas.1} parent=11 // pred_check
          %p271 = pneg %p93
        $region18: #{gsconv_pallas.1} parent=11 // pred_check_branch
          %273 = sbr.rel (%p271) target = $region20
        $region19: #{gsconv_pallas.1} parent=11 // pred_region
          %s275 = ssub.s32 128, 128
          %276 = vsyncadd [#allocation6], %s275
          %s278 = sshll.u32 [#allocation7], 4
          %s279 = int_to_ptr.vmem [resolvable:$true] %s278
          %281 = dma.hbm_to_vmem [thread:$0]  %s2, 128, %s279, [#allocation6]
        $region20: #{gsconv_pallas.1} parent=11 // pred_fallthru
          _
        // Predicated region
        $region21: #{gsconv_pallas.1} parent=11 // pred_check
          %p282 = pneg %p114
        $region22: #{gsconv_pallas.1} parent=11 // pred_check_branch
          %284 = sbr.rel (%p282) target = $region24
        $region23: #{gsconv_pallas.1} parent=11 // pred_region
          %s286 = ssub.s32 512, 512
          %287 = vsyncadd [#allocation9], %s286
          %s288 = sshll.u32 [#allocation8], 4
          %s289 = int_to_ptr.vmem [resolvable:$true] %s288
          %294 = dma.hbm_to_vmem [thread:$0]  %s3, 512, %s289, [#allocation9], 128, 128, 8
        $region24: #{gsconv_pallas.1} parent=11 // pred_fallthru
          _
        // Predicated region
        $region25: #{gsconv_pallas.1} parent=11 // pred_check
          %p295 = pneg %p135
        $region26: #{gsconv_pallas.1} parent=11 // pred_check_branch
          %297 = sbr.rel (%p295) target = $region28
        $region27: #{gsconv_pallas.1} parent=11 // pred_region
          %s299 = ssub.s32 512, 512
          %300 = vsyncadd [#allocation9], %s299
          %s301 = sshll.u32 [#allocation10], 4
          %s302 = int_to_ptr.vmem [resolvable:$true] %s301
          %307 = dma.hbm_to_vmem [thread:$0]  %s4, 512, %s302, [#allocation9], 128, 128, 8
        $region28: #{gsconv_pallas.1} parent=11 // pred_fallthru
          _
        // Predicated region
        $region29: #{gsconv_pallas.1} parent=11 // pred_check
          %p308 = pneg %p156
        $region30: #{gsconv_pallas.1} parent=11 // pred_check_branch
          %310 = sbr.rel (%p308) target = $region32
        $region31: #{gsconv_pallas.1} parent=11 // pred_region
          %s312 = ssub.s32 64, 64
          %313 = vsyncadd [#allocation12], %s312
          %s315 = sshll.u32 [#allocation11], 4
          %s316 = int_to_ptr.vmem [resolvable:$true] %s315
          %318 = dma.hbm_to_vmem [thread:$0]  %s5, 64, %s316, [#allocation12]
        $region32: #{gsconv_pallas.1} parent=11 // pred_fallthru
          _
        // Predicated region
        $region33: #{gsconv_pallas.1} parent=11 // pred_check
          %p319 = pneg %p177
        $region34: #{gsconv_pallas.1} parent=11 // pred_check_branch
          %321 = sbr.rel (%p319) target = $region36
        $region35: #{gsconv_pallas.1} parent=11 // pred_region
          %s323 = ssub.s32 256, 256
          %324 = vsyncadd [#allocation12], %s323
          %s325 = sshll.u32 [#allocation13], 4
          %s326 = int_to_ptr.vmem [resolvable:$true] %s325
          %331 = dma.hbm_to_vmem [thread:$0]  %s6, 256, %s326, [#allocation12], 128, 128, 8
        $region36: #{gsconv_pallas.1} parent=11 // pred_fallthru
          _
        // Predicated region
        $region37: #{gsconv_pallas.1} parent=11 // pred_check
          %p332 = pneg %p198
        $region38: #{gsconv_pallas.1} parent=11 // pred_check_branch
          %334 = sbr.rel (%p332) target = $region40
        $region39: #{gsconv_pallas.1} parent=11 // pred_region
          %s336 = ssub.s32 256, 256
          %337 = vsyncadd [#allocation15], %s336
          %s338 = sshll.u32 [#allocation14], 4
          %s339 = int_to_ptr.vmem [resolvable:$true] %s338
          %344 = dma.hbm_to_vmem [thread:$0]  %s7, 256, %s339, [#allocation15], 128, 128, 8
        $region40: #{gsconv_pallas.1} parent=11 // pred_fallthru
          _
        // Predicated region
        $region41: #{gsconv_pallas.1} parent=11 // pred_check
          %p345 = pneg %p219
        $region42: #{gsconv_pallas.1} parent=11 // pred_check_branch
          %347 = sbr.rel (%p345) target = $region44
        $region43: #{gsconv_pallas.1} parent=11 // pred_region
          %s349 = ssub.s32 64, 64
          %350 = vsyncadd [#allocation15], %s349
          %s352 = sshll.u32 [#allocation16], 4
          %s353 = int_to_ptr.vmem [resolvable:$true] %s352
          %355 = dma.hbm_to_vmem [thread:$0]  %s8, 64, %s353, [#allocation15]
        $region44: #{gsconv_pallas.1} parent=11 // pred_fallthru
          _
      $region12: #{gsconv_pallas.1} parent=5 // pred_fallthru
        _
      %p356 = scmp.lt.s32.totalorder %s25, 2
      // Predicated region
      $region45: #{gsconv_pallas.1} parent=5 // pred_check
        %p357 = pneg %p356
      $region46: #{gsconv_pallas.1} parent=5 // pred_check_branch
        %359 = sbr.rel (%p357) target = $region48
      $region47: #{gsconv_pallas.1} parent=5 // pred_region
        // Predicated region
        $region49: #{gsconv_pallas.1} parent=47 // pred_check
          %p360 = pneg %p45
        $region50: #{gsconv_pallas.1} parent=47 // pred_check_branch
          %362 = sbr.rel (%p360) target = $region52
        $region51: #{gsconv_pallas.1} parent=47 // pred_region
          %s363 = sand.u32 %s35, 1
          %s364 = scalar_lea.sflag [#allocation3], %s363
          %s365 = sand.u32 %s35, 1
          %s366 = smul.addr %s365, 16
          %s367 = scalar_lea.vmem [#allocation2], %s366
          %s369 = ssub.s32 256, 256
          %370 = vsyncadd %s364, %s369
          %s371 = smul.addr %s25, 2
          %s372 = smul.addr %s371, 128
          %s373 = scalar_lea.hbm %s0, %s372
          %s375 = sshll.u32 %s367, 4
          %s376 = int_to_ptr.vmem [resolvable:$true] %s375
          %378 = dma.hbm_to_vmem [thread:$0]  %s373, 256, %s376, %s364
        $region52: #{gsconv_pallas.1} parent=47 // pred_fallthru
          _
      $region48: #{gsconv_pallas.1} parent=5 // pred_fallthru
        _
      %p379 = scmp.le.s32.totalorder 1, %s25
      %p380 = scmp.lt.s32.totalorder %s25, 3
      %p381 = pnand %p379, %p380
      %p382 = pneg %p381
      // Predicated region
      $region53: #{gsconv_pallas.1} parent=5 // pred_check
        _
      $region54: #{gsconv_pallas.1} parent=5 // pred_check_branch
        %384 = sbr.rel (%p381) target = $region56
      $region55: #{gsconv_pallas.1} parent=5 // pred_region
        %s385 = ssub.s32 %s25, 1
        %s386 = sand.u32 %s38, 1
        %s387 = scalar_lea.sflag [#allocation3], %s386
        %s388 = sand.u32 %s38, 1
        %s389 = smul.addr %s388, 16
        %s390 = scalar_lea.vmem [#allocation2], %s389
        // Predicated region
        $region57: #{gsconv_pallas.1} parent=55 // pred_check
          %p391 = pneg %p51
        $region58: #{gsconv_pallas.1} parent=55 // pred_check_branch
          %393 = sbr.rel (%p391) target = $region60
        $region59: #{gsconv_pallas.1} parent=55 // pred_region
          %394 = dma.done %s387, 256
        $region60: #{gsconv_pallas.1} parent=55 // pred_fallthru
          _
        // Predicated region
        $region61: #{gsconv_pallas.1} parent=55 // pred_check
          %p395 = pneg %p72
        $region62: #{gsconv_pallas.1} parent=55 // pred_check_branch
          %397 = sbr.rel (%p395) target = $region64
        $region63: #{gsconv_pallas.1} parent=55 // pred_region
          %398 = dma.done [#allocation6], 128
        $region64: #{gsconv_pallas.1} parent=55 // pred_fallthru
          _
        // Predicated region
        $region65: #{gsconv_pallas.1} parent=55 // pred_check
          %p399 = pneg %p93
        $region66: #{gsconv_pallas.1} parent=55 // pred_check_branch
          %401 = sbr.rel (%p399) target = $region68
        $region67: #{gsconv_pallas.1} parent=55 // pred_region
          %402 = dma.done [#allocation6], 128
        $region68: #{gsconv_pallas.1} parent=55 // pred_fallthru
          _
        // Predicated region
        $region69: #{gsconv_pallas.1} parent=55 // pred_check
          %p403 = pneg %p114
        $region70: #{gsconv_pallas.1} parent=55 // pred_check_branch
          %405 = sbr.rel (%p403) target = $region72
        $region71: #{gsconv_pallas.1} parent=55 // pred_region
          %406 = dma.done [#allocation9], 512
        $region72: #{gsconv_pallas.1} parent=55 // pred_fallthru
          _
        // Predicated region
        $region73: #{gsconv_pallas.1} parent=55 // pred_check
          %p407 = pneg %p135
        $region74: #{gsconv_pallas.1} parent=55 // pred_check_branch
          %409 = sbr.rel (%p407) target = $region76
        $region75: #{gsconv_pallas.1} parent=55 // pred_region
          %410 = dma.done [#allocation9], 512
        $region76: #{gsconv_pallas.1} parent=55 // pred_fallthru
          _
        // Predicated region
        $region77: #{gsconv_pallas.1} parent=55 // pred_check
          %p411 = pneg %p156
        $region78: #{gsconv_pallas.1} parent=55 // pred_check_branch
          %413 = sbr.rel (%p411) target = $region80
        $region79: #{gsconv_pallas.1} parent=55 // pred_region
          %414 = dma.done [#allocation12], 64
        $region80: #{gsconv_pallas.1} parent=55 // pred_fallthru
          _
        // Predicated region
        $region81: #{gsconv_pallas.1} parent=55 // pred_check
          %p415 = pneg %p177
        $region82: #{gsconv_pallas.1} parent=55 // pred_check_branch
          %417 = sbr.rel (%p415) target = $region84
        $region83: #{gsconv_pallas.1} parent=55 // pred_region
          %418 = dma.done [#allocation12], 256
        $region84: #{gsconv_pallas.1} parent=55 // pred_fallthru
          _
        // Predicated region
        $region85: #{gsconv_pallas.1} parent=55 // pred_check
          %p419 = pneg %p198
        $region86: #{gsconv_pallas.1} parent=55 // pred_check_branch
          %421 = sbr.rel (%p419) target = $region88
        $region87: #{gsconv_pallas.1} parent=55 // pred_region
          %422 = dma.done [#allocation15], 256
        $region88: #{gsconv_pallas.1} parent=55 // pred_fallthru
          _
        // Predicated region
        $region89: #{gsconv_pallas.1} parent=55 // pred_check
          %p423 = pneg %p219
        $region90: #{gsconv_pallas.1} parent=55 // pred_check_branch
          %425 = sbr.rel (%p423) target = $region92
        $region91: #{gsconv_pallas.1} parent=55 // pred_region
          %426 = dma.done [#allocation15], 64
        $region92: #{gsconv_pallas.1} parent=55 // pred_fallthru
          _
        %s427 = sand.u32 %s38, 1
        %s428 = scalar_lea.sflag [#allocation3], %s427
        %s429 = sand.u32 %s38, 1
        %s430 = smul.addr %s429, 16
        %s431 = scalar_lea.vmem [#allocation2], %s430
        %p432 = pneg %p51
        %p433 = pneg %p48
        %p434 = pneg %p72
        %p435 = pneg %p69
        %p436 = pneg %p93
        %p437 = pneg %p90
        %p438 = pneg %p114
        %p439 = pneg %p111
        %p440 = pneg %p135
        %p441 = pneg %p132
        %p442 = pneg %p156
        %p443 = pneg %p153
        %p444 = pneg %p177
        %p445 = pneg %p174
        %p446 = pneg %p198
        %p447 = pneg %p195
        %p448 = pneg %p219
        %p449 = pneg %p216
        %p450 = pneg %p245
        %p451 = pneg %p242
        %s452 = sand.u32 %s232, 1
        %s453 = scalar_lea.sflag [#allocation4], %s452
        %s454 = sand.u32 %s232, 1
        %s455 = smul.addr %s454, 32
        %s456 = scalar_lea.vmem [#allocation17], %s455
        %v457 = vld [vmem:[%s390] sm:$0xff]
        %v458 = vld [vmem:[%s390 + $0x8] sm:$0xff]
        %v459 = vld [vmem:[#allocation5] sm:$0xff]
        %v460 = vld [vmem:[#allocation7] sm:$0xff]
        %462 = vset.pattern.permute.xlu0 0
        %463 = vperm.xlu0 %462, %v460
        %v464 = vpop.permute.xlu0 %463
        %vm466 = vcmask 64512
        %v468 = vsel %vm466, %v459, 0
        %470 = vmatprep.subr.mxu0 %v458
        %471 = vmatpush1.msra.mxu0 %v457
        %472 = vmatprep.subr.mxu0 0.0
        %473 = vmatpush1.msra.mxu0 0.0
        %474 = vmatprep.subr.mxu0 0.0
        %475 = vmatpush1.msra.mxu0 0.0
        %476 = vmatprep.subr.mxu0 0.0
        %477 = vmatpush1.msra.mxu0 0.0
        %478 = vmatprep.subr.mxu0 0.0
        %479 = vmatpush1.msra.mxu0 0.0
        %480 = vmatprep.subr.mxu0 0.0
        %481 = vmatpush1.msra.mxu0 0.0
        %482 = vmatprep.subr.mxu0 0.0
        %483 = vmatpush1.msra.mxu0 0.0
        %484 = vmatprep.subr.mxu0 0.0
        %485 = vmatpush1.msra.mxu0 0.0
        %486 = vmatprep.subr.mxu0 0.0
        %487 = vmatpush1.msra.mxu0 0.0
        %488 = vmatprep.subr.mxu0 0.0
        %489 = vmatpush1.msra.mxu0 0.0
        %490 = vmatprep.subr.mxu0 0.0
        %491 = vmatpush1.msra.mxu0 0.0
        %492 = vmatprep.subr.mxu0 0.0
        %493 = vmatpush1.msra.mxu0 0.0
        %494 = vmatprep.subr.mxu0 0.0
        %495 = vmatpush1.msra.mxu0 0.0
        %496 = vmatprep.subr.mxu0 0.0
        %497 = vmatpush1.msra.mxu0 0.0
        %498 = vmatprep.subr.mxu0 0.0
        %499 = vmatpush1.msra.mxu0 0.0
        %500 = vmatprep.subr.mxu0 0.0
        %501 = vmatpush1.msra.mxu0 0.0
        %502 = vmatprep.subr.mxu0 0.0
        %503 = vmatpush1.msra.mxu0 0.0
        %504 = vmatprep.subr.mxu0 0.0
        %505 = vmatpush1.msra.mxu0 0.0
        %506 = vmatprep.subr.mxu0 0.0
        %507 = vmatpush1.msra.mxu0 0.0
        %508 = vmatprep.subr.mxu0 0.0
        %509 = vmatpush1.msra.mxu0 0.0
        %510 = vmatprep.subr.mxu0 0.0
        %511 = vmatpush1.msra.mxu0 0.0
        %512 = vmatprep.subr.mxu0 0.0
        %513 = vmatpush1.msra.mxu0 0.0
        %514 = vmatprep.subr.mxu0 0.0
        %515 = vmatpush1.msra.mxu0 0.0
        %516 = vmatprep.subr.mxu0 0.0
        %517 = vmatpush1.msra.mxu0 0.0
        %518 = vmatprep.subr.mxu0 0.0
        %519 = vmatpush1.msra.mxu0 0.0
        %520 = vmatprep.subr.mxu0 0.0
        %521 = vmatpush1.msra.mxu0 0.0
        %522 = vmatprep.subr.mxu0 0.0
        %523 = vmatpush1.msra.mxu0 0.0
        %524 = vmatprep.subr.mxu0 0.0
        %525 = vmatpush1.msra.mxu0 0.0
        %526 = vmatprep.subr.mxu0 0.0
        %527 = vmatpush1.msra.mxu0 0.0
        %528 = vmatprep.subr.mxu0 0.0
        %529 = vmatpush1.msra.mxu0 0.0
        %530 = vmatprep.subr.mxu0 0.0
        %531 = vmatpush1.msra.mxu0 0.0
        %532 = vmatprep.subr.mxu0 0.0
        %533 = vmatpush1.msra.mxu0 0.0
        %534 = vmatprep.mubr.f32.mxu0 0.0
        %535 = vmatmul.mubr.f32.gmra.mrb[0].mxu0 %v468
        %v536 = vpop.f32.mrb[0].mxu0
        %v537 = vadd.f32 %v464, %v536
        %v538 = vpop.f32.mrb[0].mxu0
        %v539 = vadd.f32 %v464, %v538
        %540 = vdwg.mxu0
        %v541 = vmin.f32 %v537, 20.0
        %v542 = vmin.f32 %v539, 20.0
        %v543 = vmul.f32 %v541, 1.442695
        %v544 = vpow.pop %v543
        %v545 = vmul.f32 %v542, 1.442695
        %v546 = vpow.pop %v545
        %v547 = vadd.f32 %v544, 2.0
        %v548 = vadd.f32 %v546, 2.0
        %v549 = vmul.f32 %v544, %v547
        %v550 = vmul.f32 %v546, %v548
        %v551 = vmul.f32 %v537, %v549
        %v552 = vmul.f32 %v539, %v550
        %v553 = vadd.f32 %v549, 2.0
        %v554 = vadd.f32 %v550, 2.0
        %v555 = vrcp.pop %v553
        %v556 = vmul.f32 %v551, %v555
        %v557 = vrcp.pop %v554
        %v558 = vmul.f32 %v552, %v557
        %560 = vrot.lane.b32.xlu0 %v556, 112
        %v561 = vpop.permute.xlu0 %560
        %563 = vrot.lane.b32.xlu0 %v556, 96
        %v564 = vpop.permute.xlu0 %563
        %566 = vrot.lane.b32.xlu0 %v556, 80
        %v567 = vpop.permute.xlu0 %566
        %569 = vrot.lane.b32.xlu0 %v556, 64
        %v570 = vpop.permute.xlu0 %569
        %572 = vrot.lane.b32.xlu0 %v556, 48
        %v573 = vpop.permute.xlu0 %572
        %575 = vrot.lane.b32.xlu0 %v556, 32
        %v576 = vpop.permute.xlu0 %575
        %578 = vrot.lane.b32.xlu0 %v556, 16
        %v579 = vpop.permute.xlu0 %578
        %582 = vrot.lane.b32.xlu0 %v558, 112
        %v583 = vpop.permute.xlu0 %582
        %585 = vrot.lane.b32.xlu0 %v558, 96
        %v586 = vpop.permute.xlu0 %585
        %588 = vrot.lane.b32.xlu0 %v558, 80
        %v589 = vpop.permute.xlu0 %588
        %591 = vrot.lane.b32.xlu0 %v558, 64
        %v592 = vpop.permute.xlu0 %591
        %594 = vrot.lane.b32.xlu0 %v558, 48
        %v595 = vpop.permute.xlu0 %594
        %597 = vrot.lane.b32.xlu0 %v558, 32
        %v598 = vpop.permute.xlu0 %597
        %600 = vrot.lane.b32.xlu0 %v558, 16
        %v601 = vpop.permute.xlu0 %600
        %v603 = vcombine.low %v556, %v564
        %v604 = vcombine.high %v556, %v564
        %v606 = vunpack.c.l.s4 1983009808
        %v607 = vunpack.c.0.s8 %v606
        %v608 = vlaneseq
        %v609 = vshrl.u32 %v608, 7
        %v610 = vsub.s32 %v607, %v609
        %v611 = vrot.slane %v603, %v610
        %v613 = vunpack.c.l.s4 1983009808
        %v614 = vunpack.c.0.s8 %v613
        %v615 = vlaneseq
        %v616 = vshrl.u32 %v615, 7
        %v617 = vsub.s32 %v614, %v616
        %v618 = vrot.slane %v604, %v617
        %v619 = vcombine.low %v561, %v567
        %v620 = vcombine.high %v561, %v567
        %v622 = vunpack.c.l.s4 1983009808
        %v623 = vunpack.c.0.s8 %v622
        %v624 = vlaneseq
        %v625 = vshrl.u32 %v624, 7
        %v626 = vsub.s32 %v623, %v625
        %v627 = vrot.slane %v619, %v626
        %v629 = vunpack.c.l.s4 1983009808
        %v630 = vunpack.c.0.s8 %v629
        %v631 = vlaneseq
        %v632 = vshrl.u32 %v631, 7
        %v633 = vsub.s32 %v630, %v632
        %v634 = vrot.slane %v620, %v633
        %v635 = vcombine.low %v570, %v576
        %v636 = vcombine.high %v570, %v576
        %v638 = vunpack.c.l.s4 1983009808
        %v639 = vunpack.c.0.s8 %v638
        %v640 = vlaneseq
        %v641 = vshrl.u32 %v640, 7
        %v642 = vsub.s32 %v639, %v641
        %v643 = vrot.slane %v635, %v642
        %v645 = vunpack.c.l.s4 1983009808
        %v646 = vunpack.c.0.s8 %v645
        %v647 = vlaneseq
        %v648 = vshrl.u32 %v647, 7
        %v649 = vsub.s32 %v646, %v648
        %v650 = vrot.slane %v636, %v649
        %v651 = vcombine.low %v573, %v579
        %v652 = vcombine.high %v573, %v579
        %v654 = vunpack.c.l.s4 1983009808
        %v655 = vunpack.c.0.s8 %v654
        %v656 = vlaneseq
        %v657 = vshrl.u32 %v656, 7
        %v658 = vsub.s32 %v655, %v657
        %v659 = vrot.slane %v651, %v658
        %v661 = vunpack.c.l.s4 1983009808
        %v662 = vunpack.c.0.s8 %v661
        %v663 = vlaneseq
        %v664 = vshrl.u32 %v663, 7
        %v665 = vsub.s32 %v662, %v664
        %v666 = vrot.slane %v652, %v665
        %v667 = vcombine.low %v611, %v627
        %v668 = vcombine.high %v611, %v627
        %v670 = vunpack.c.l.s4 1934713408
        %v671 = vunpack.c.0.s8 %v670
        %v672 = vlaneseq
        %v673 = vshrl.u32 %v672, 7
        %v674 = vsub.s32 %v671, %v673
        %v675 = vrot.slane %v667, %v674
        %v677 = vunpack.c.l.s4 1934713408
        %v678 = vunpack.c.0.s8 %v677
        %v679 = vlaneseq
        %v680 = vshrl.u32 %v679, 7
        %v681 = vsub.s32 %v678, %v680
        %v682 = vrot.slane %v668, %v681
        %v683 = vcombine.low %v618, %v634
        %v684 = vcombine.high %v618, %v634
        %v686 = vunpack.c.l.s4 1934713408
        %v687 = vunpack.c.0.s8 %v686
        %v688 = vlaneseq
        %v689 = vshrl.u32 %v688, 7
        %v690 = vsub.s32 %v687, %v689
        %v691 = vrot.slane %v683, %v690
        %v693 = vunpack.c.l.s4 1934713408
        %v694 = vunpack.c.0.s8 %v693
        %v695 = vlaneseq
        %v696 = vshrl.u32 %v695, 7
        %v697 = vsub.s32 %v694, %v696
        %v698 = vrot.slane %v684, %v697
        %v699 = vcombine.low %v643, %v659
        %v700 = vcombine.high %v643, %v659
        %v702 = vunpack.c.l.s4 1934713408
        %v703 = vunpack.c.0.s8 %v702
        %v704 = vlaneseq
        %v705 = vshrl.u32 %v704, 7
        %v706 = vsub.s32 %v703, %v705
        %v707 = vrot.slane %v699, %v706
        %v709 = vunpack.c.l.s4 1934713408
        %v710 = vunpack.c.0.s8 %v709
        %v711 = vlaneseq
        %v712 = vshrl.u32 %v711, 7
        %v713 = vsub.s32 %v710, %v712
        %v714 = vrot.slane %v700, %v713
        %v715 = vcombine.low %v650, %v666
        %v716 = vcombine.high %v650, %v666
        %v718 = vunpack.c.l.s4 1934713408
        %v719 = vunpack.c.0.s8 %v718
        %v720 = vlaneseq
        %v721 = vshrl.u32 %v720, 7
        %v722 = vsub.s32 %v719, %v721
        %v723 = vrot.slane %v715, %v722
        %v725 = vunpack.c.l.s4 1934713408
        %v726 = vunpack.c.0.s8 %v725
        %v727 = vlaneseq
        %v728 = vshrl.u32 %v727, 7
        %v729 = vsub.s32 %v726, %v728
        %v730 = vrot.slane %v716, %v729
        %v731 = vcombine.low %v675, %v707
        %v732 = vcombine.high %v675, %v707
        %v733 = vcombine.low %v682, %v714
        %v734 = vcombine.high %v682, %v714
        %v735 = vcombine.low %v691, %v723
        %v736 = vcombine.high %v691, %v723
        %v737 = vcombine.low %v698, %v730
        %v738 = vcombine.high %v698, %v730
        %v739 = vcombine.low %v558, %v586
        %v740 = vcombine.high %v558, %v586
        %v742 = vunpack.c.l.s4 1983009808
        %v743 = vunpack.c.0.s8 %v742
        %v744 = vlaneseq
        %v745 = vshrl.u32 %v744, 7
        %v746 = vsub.s32 %v743, %v745
        %v747 = vrot.slane %v739, %v746
        %v749 = vunpack.c.l.s4 1983009808
        %v750 = vunpack.c.0.s8 %v749
        %v751 = vlaneseq
        %v752 = vshrl.u32 %v751, 7
        %v753 = vsub.s32 %v750, %v752
        %v754 = vrot.slane %v740, %v753
        %v755 = vcombine.low %v583, %v589
        %v756 = vcombine.high %v583, %v589
        %v758 = vunpack.c.l.s4 1983009808
        %v759 = vunpack.c.0.s8 %v758
        %v760 = vlaneseq
        %v761 = vshrl.u32 %v760, 7
        %v762 = vsub.s32 %v759, %v761
        %v763 = vrot.slane %v755, %v762
        %v765 = vunpack.c.l.s4 1983009808
        %v766 = vunpack.c.0.s8 %v765
        %v767 = vlaneseq
        %v768 = vshrl.u32 %v767, 7
        %v769 = vsub.s32 %v766, %v768
        %v770 = vrot.slane %v756, %v769
        %v771 = vcombine.low %v592, %v598
        %v772 = vcombine.high %v592, %v598
        %v774 = vunpack.c.l.s4 1983009808
        %v775 = vunpack.c.0.s8 %v774
        %v776 = vlaneseq
        %v777 = vshrl.u32 %v776, 7
        %v778 = vsub.s32 %v775, %v777
        %v779 = vrot.slane %v771, %v778
        %v781 = vunpack.c.l.s4 1983009808
        %v782 = vunpack.c.0.s8 %v781
        %v783 = vlaneseq
        %v784 = vshrl.u32 %v783, 7
        %v785 = vsub.s32 %v782, %v784
        %v786 = vrot.slane %v772, %v785
        %v787 = vcombine.low %v595, %v601
        %v788 = vcombine.high %v595, %v601
        %v790 = vunpack.c.l.s4 1983009808
        %v791 = vunpack.c.0.s8 %v790
        %v792 = vlaneseq
        %v793 = vshrl.u32 %v792, 7
        %v794 = vsub.s32 %v791, %v793
        %v795 = vrot.slane %v787, %v794
        %v797 = vunpack.c.l.s4 1983009808
        %v798 = vunpack.c.0.s8 %v797
        %v799 = vlaneseq
        %v800 = vshrl.u32 %v799, 7
        %v801 = vsub.s32 %v798, %v800
        %v802 = vrot.slane %v788, %v801
        %v803 = vcombine.low %v747, %v763
        %v804 = vcombine.high %v747, %v763
        %v806 = vunpack.c.l.s4 1934713408
        %v807 = vunpack.c.0.s8 %v806
        %v808 = vlaneseq
        %v809 = vshrl.u32 %v808, 7
        %v810 = vsub.s32 %v807, %v809
        %v811 = vrot.slane %v803, %v810
        %v813 = vunpack.c.l.s4 1934713408
        %v814 = vunpack.c.0.s8 %v813
        %v815 = vlaneseq
        %v816 = vshrl.u32 %v815, 7
        %v817 = vsub.s32 %v814, %v816
        %v818 = vrot.slane %v804, %v817
        %v819 = vcombine.low %v754, %v770
        %v820 = vcombine.high %v754, %v770
        %v822 = vunpack.c.l.s4 1934713408
        %v823 = vunpack.c.0.s8 %v822
        %v824 = vlaneseq
        %v825 = vshrl.u32 %v824, 7
        %v826 = vsub.s32 %v823, %v825
        %v827 = vrot.slane %v819, %v826
        %v829 = vunpack.c.l.s4 1934713408
        %v830 = vunpack.c.0.s8 %v829
        %v831 = vlaneseq
        %v832 = vshrl.u32 %v831, 7
        %v833 = vsub.s32 %v830, %v832
        %v834 = vrot.slane %v820, %v833
        %v835 = vcombine.low %v779, %v795
        %v836 = vcombine.high %v779, %v795
        %v838 = vunpack.c.l.s4 1934713408
        %v839 = vunpack.c.0.s8 %v838
        %v840 = vlaneseq
        %v841 = vshrl.u32 %v840, 7
        %v842 = vsub.s32 %v839, %v841
        %v843 = vrot.slane %v835, %v842
        %v845 = vunpack.c.l.s4 1934713408
        %v846 = vunpack.c.0.s8 %v845
        %v847 = vlaneseq
        %v848 = vshrl.u32 %v847, 7
        %v849 = vsub.s32 %v846, %v848
        %v850 = vrot.slane %v836, %v849
        %v851 = vcombine.low %v786, %v802
        %v852 = vcombine.high %v786, %v802
        %v854 = vunpack.c.l.s4 1934713408
        %v855 = vunpack.c.0.s8 %v854
        %v856 = vlaneseq
        %v857 = vshrl.u32 %v856, 7
        %v858 = vsub.s32 %v855, %v857
        %v859 = vrot.slane %v851, %v858
        %v861 = vunpack.c.l.s4 1934713408
        %v862 = vunpack.c.0.s8 %v861
        %v863 = vlaneseq
        %v864 = vshrl.u32 %v863, 7
        %v865 = vsub.s32 %v862, %v864
        %v866 = vrot.slane %v852, %v865
        %v867 = vcombine.low %v811, %v843
        %v868 = vcombine.high %v811, %v843
        %v869 = vcombine.low %v818, %v850
        %v870 = vcombine.high %v818, %v850
        %v871 = vcombine.low %v827, %v859
        %v872 = vcombine.high %v827, %v859
        %v873 = vcombine.low %v834, %v866
        %v874 = vcombine.high %v834, %v866
        %891 = vrot.lane.b32.xlu0 %v731, 2
        %v892 = vpop.permute.xlu0 %891
        %893 = vrot.lane.b32.xlu0 %v867, 2
        %v894 = vpop.permute.xlu0 %893
        %895 = vrot.lane.b32.xlu0 %v732, 2
        %v896 = vpop.permute.xlu0 %895
        %897 = vrot.lane.b32.xlu0 %v868, 2
        %v898 = vpop.permute.xlu0 %897
        %899 = vrot.lane.b32.xlu0 %v733, 2
        %v900 = vpop.permute.xlu0 %899
        %901 = vrot.lane.b32.xlu0 %v869, 2
        %v902 = vpop.permute.xlu0 %901
        %903 = vrot.lane.b32.xlu0 %v734, 2
        %v904 = vpop.permute.xlu0 %903
        %905 = vrot.lane.b32.xlu0 %v870, 2
        %v906 = vpop.permute.xlu0 %905
        %907 = vrot.lane.b32.xlu0 %v735, 2
        %v908 = vpop.permute.xlu0 %907
        %909 = vrot.lane.b32.xlu0 %v871, 2
        %v910 = vpop.permute.xlu0 %909
        %911 = vrot.lane.b32.xlu0 %v736, 2
        %v912 = vpop.permute.xlu0 %911
        %913 = vrot.lane.b32.xlu0 %v872, 2
        %v914 = vpop.permute.xlu0 %913
        %915 = vrot.lane.b32.xlu0 %v737, 2
        %v916 = vpop.permute.xlu0 %915
        %917 = vrot.lane.b32.xlu0 %v873, 2
        %v918 = vpop.permute.xlu0 %917
        %919 = vrot.lane.b32.xlu0 %v738, 2
        %v920 = vpop.permute.xlu0 %919
        %921 = vrot.lane.b32.xlu0 %v874, 2
        %v922 = vpop.permute.xlu0 %921
        %vm939 = vcmask 15360
        %v940 = vsel %vm939, 0.0, %v892
        %v941 = vsel %vm939, 0.0, %v894
        %v942 = vsel %vm939, 0.0, %v896
        %v943 = vsel %vm939, 0.0, %v898
        %v944 = vsel %vm939, 0.0, %v900
        %v945 = vsel %vm939, 0.0, %v902
        %v946 = vsel %vm939, 0.0, %v904
        %v947 = vsel %vm939, 0.0, %v906
        %v948 = vsel %vm939, 0.0, %v908
        %v949 = vsel %vm939, 0.0, %v910
        %v950 = vsel %vm939, 0.0, %v912
        %v951 = vsel %vm939, 0.0, %v914
        %v952 = vsel %vm939, 0.0, %v916
        %v953 = vsel %vm939, 0.0, %v918
        %v954 = vsel %vm939, 0.0, %v920
        %v955 = vsel %vm939, 0.0, %v922
        %vm956 = vcmask 146432
        %v957 = vsel %vm956, %v940, 0.0
        %v958 = vsel %vm956, %v941, 0.0
        %v959 = vsel %vm956, %v942, 0.0
        %v960 = vsel %vm956, %v943, 0.0
        %v961 = vsel %vm956, %v944, 0.0
        %v962 = vsel %vm956, %v945, 0.0
        %v963 = vsel %vm956, %v946, 0.0
        %v964 = vsel %vm956, %v947, 0.0
        %v965 = vsel %vm956, %v948, 0.0
        %v966 = vsel %vm956, %v949, 0.0
        %v967 = vsel %vm956, %v950, 0.0
        %v968 = vsel %vm956, %v951, 0.0
        %v969 = vsel %vm956, %v952, 0.0
        %v970 = vsel %vm956, %v953, 0.0
        %v971 = vsel %vm956, %v954, 0.0
        %v972 = vsel %vm956, %v955, 0.0
        %vm989 = vcmask 1041408
        %v990 = vrot.slane %v957, 6
        %v991 = vrot.slane %v958, 6
        %v992 = vsel %vm989, %v990, %v991
        %v993 = vrot.slane %v959, 6
        %v994 = vrot.slane %v960, 6
        %v995 = vsel %vm989, %v993, %v994
        %v996 = vrot.slane %v961, 6
        %v997 = vrot.slane %v962, 6
        %v998 = vsel %vm989, %v996, %v997
        %v999 = vrot.slane %v963, 6
        %v1000 = vrot.slane %v964, 6
        %v1001 = vsel %vm989, %v999, %v1000
        %v1002 = vrot.slane %v965, 6
        %v1003 = vrot.slane %v966, 6
        %v1004 = vsel %vm989, %v1002, %v1003
        %v1005 = vrot.slane %v967, 6
        %v1006 = vrot.slane %v968, 6
        %v1007 = vsel %vm989, %v1005, %v1006
        %v1008 = vrot.slane %v969, 6
        %v1009 = vrot.slane %v970, 6
        %v1010 = vsel %vm989, %v1008, %v1009
        %v1011 = vrot.slane %v971, 6
        %v1012 = vrot.slane %v972, 6
        %v1013 = vsel %vm989, %v1011, %v1012
        %v1038 = vsel %vm989, 0.0, %v990
        %v1039 = vsel %vm989, 0.0, %v993
        %v1040 = vsel %vm989, 0.0, %v996
        %v1041 = vsel %vm989, 0.0, %v999
        %v1042 = vsel %vm989, 0.0, %v1002
        %v1043 = vsel %vm989, 0.0, %v1005
        %v1044 = vsel %vm989, 0.0, %v1008
        %v1045 = vsel %vm989, 0.0, %v1011
        %v1046 = vsel %vm989, %v991, 0.0
        %v1047 = vsel %vm989, %v994, 0.0
        %v1048 = vsel %vm989, %v997, 0.0
        %v1049 = vsel %vm989, %v1000, 0.0
        %v1050 = vsel %vm989, %v1003, 0.0
        %v1051 = vsel %vm989, %v1006, 0.0
        %v1052 = vsel %vm989, %v1009, 0.0
        %v1053 = vsel %vm989, %v1012, 0.0
        %v1054 = vld [vmem:[#allocation8] sm:$0xff]
        %v1055 = vld [vmem:[#allocation8 + $0x8] sm:$0xff]
        %v1056 = vld [vmem:[#allocation8 + $0x10] sm:$0xff]
        %v1057 = vld [vmem:[#allocation8 + $0x18] sm:$0x1]
        %v1058 = vlaneseq
        %v1059 = vshrl.u32 %v1058, 7
        %v1060 = vsub.s32 0, %v1059
        %v1061 = vrot.slane %v1054, %v1060
        %1063 = vbcast.lane.b32.xlu0 %v1061, 256
        %v1064 = vpop.permute.xlu0 %1063
        %v1065 = vlaneseq
        %v1066 = vshrl.u32 %v1065, 7
        %v1067 = vsub.s32 1, %v1066
        %v1068 = vrot.slane %v1054, %v1067
        %1070 = vbcast.lane.b32.xlu0 %v1068, 256
        %v1071 = vpop.permute.xlu0 %1070
        %v1072 = vlaneseq
        %v1073 = vshrl.u32 %v1072, 7
        %v1074 = vsub.s32 2, %v1073
        %v1075 = vrot.slane %v1054, %v1074
        %1077 = vbcast.lane.b32.xlu0 %v1075, 256
        %v1078 = vpop.permute.xlu0 %1077
        %v1079 = vlaneseq
        %v1080 = vshrl.u32 %v1079, 7
        %v1081 = vsub.s32 3, %v1080
        %v1082 = vrot.slane %v1054, %v1081
        %1084 = vbcast.lane.b32.xlu0 %v1082, 256
        %v1085 = vpop.permute.xlu0 %1084
        %v1086 = vlaneseq
        %v1087 = vshrl.u32 %v1086, 7
        %v1088 = vsub.s32 4, %v1087
        %v1089 = vrot.slane %v1054, %v1088
        %1091 = vbcast.lane.b32.xlu0 %v1089, 256
        %v1092 = vpop.permute.xlu0 %1091
        %v1093 = vlaneseq
        %v1094 = vshrl.u32 %v1093, 7
        %v1095 = vsub.s32 5, %v1094
        %v1096 = vrot.slane %v1054, %v1095
        %1098 = vbcast.lane.b32.xlu0 %v1096, 256
        %v1099 = vpop.permute.xlu0 %1098
        %v1100 = vlaneseq
        %v1101 = vshrl.u32 %v1100, 7
        %v1102 = vsub.s32 6, %v1101
        %v1103 = vrot.slane %v1054, %v1102
        %1105 = vbcast.lane.b32.xlu0 %v1103, 256
        %v1106 = vpop.permute.xlu0 %1105
        %v1107 = vlaneseq
        %v1108 = vshrl.u32 %v1107, 7
        %v1109 = vsub.s32 7, %v1108
        %v1110 = vrot.slane %v1054, %v1109
        %1112 = vbcast.lane.b32.xlu0 %v1110, 256
        %v1113 = vpop.permute.xlu0 %1112
        %v1114 = vlaneseq
        %v1115 = vshrl.u32 %v1114, 7
        %v1116 = vsub.s32 0, %v1115
        %v1117 = vrot.slane %v1055, %v1116
        %1119 = vbcast.lane.b32.xlu0 %v1117, 256
        %v1120 = vpop.permute.xlu0 %1119
        %v1121 = vlaneseq
        %v1122 = vshrl.u32 %v1121, 7
        %v1123 = vsub.s32 1, %v1122
        %v1124 = vrot.slane %v1055, %v1123
        %1126 = vbcast.lane.b32.xlu0 %v1124, 256
        %v1127 = vpop.permute.xlu0 %1126
        %v1128 = vlaneseq
        %v1129 = vshrl.u32 %v1128, 7
        %v1130 = vsub.s32 2, %v1129
        %v1131 = vrot.slane %v1055, %v1130
        %1133 = vbcast.lane.b32.xlu0 %v1131, 256
        %v1134 = vpop.permute.xlu0 %1133
        %v1135 = vlaneseq
        %v1136 = vshrl.u32 %v1135, 7
        %v1137 = vsub.s32 3, %v1136
        %v1138 = vrot.slane %v1055, %v1137
        %1140 = vbcast.lane.b32.xlu0 %v1138, 256
        %v1141 = vpop.permute.xlu0 %1140
        %v1142 = vlaneseq
        %v1143 = vshrl.u32 %v1142, 7
        %v1144 = vsub.s32 4, %v1143
        %v1145 = vrot.slane %v1055, %v1144
        %1147 = vbcast.lane.b32.xlu0 %v1145, 256
        %v1148 = vpop.permute.xlu0 %1147
        %v1149 = vlaneseq
        %v1150 = vshrl.u32 %v1149, 7
        %v1151 = vsub.s32 5, %v1150
        %v1152 = vrot.slane %v1055, %v1151
        %1154 = vbcast.lane.b32.xlu0 %v1152, 256
        %v1155 = vpop.permute.xlu0 %1154
        %v1156 = vlaneseq
        %v1157 = vshrl.u32 %v1156, 7
        %v1158 = vsub.s32 6, %v1157
        %v1159 = vrot.slane %v1055, %v1158
        %1161 = vbcast.lane.b32.xlu0 %v1159, 256
        %v1162 = vpop.permute.xlu0 %1161
        %v1163 = vlaneseq
        %v1164 = vshrl.u32 %v1163, 7
        %v1165 = vsub.s32 7, %v1164
        %v1166 = vrot.slane %v1055, %v1165
        %1168 = vbcast.lane.b32.xlu0 %v1166, 256
        %v1169 = vpop.permute.xlu0 %1168
        %v1170 = vlaneseq
        %v1171 = vshrl.u32 %v1170, 7
        %v1172 = vsub.s32 0, %v1171
        %v1173 = vrot.slane %v1056, %v1172
        %1175 = vbcast.lane.b32.xlu0 %v1173, 256
        %v1176 = vpop.permute.xlu0 %1175
        %v1177 = vlaneseq
        %v1178 = vshrl.u32 %v1177, 7
        %v1179 = vsub.s32 1, %v1178
        %v1180 = vrot.slane %v1056, %v1179
        %1182 = vbcast.lane.b32.xlu0 %v1180, 256
        %v1183 = vpop.permute.xlu0 %1182
        %v1184 = vlaneseq
        %v1185 = vshrl.u32 %v1184, 7
        %v1186 = vsub.s32 2, %v1185
        %v1187 = vrot.slane %v1056, %v1186
        %1189 = vbcast.lane.b32.xlu0 %v1187, 256
        %v1190 = vpop.permute.xlu0 %1189
        %v1191 = vlaneseq
        %v1192 = vshrl.u32 %v1191, 7
        %v1193 = vsub.s32 3, %v1192
        %v1194 = vrot.slane %v1056, %v1193
        %1196 = vbcast.lane.b32.xlu0 %v1194, 256
        %v1197 = vpop.permute.xlu0 %1196
        %v1198 = vlaneseq
        %v1199 = vshrl.u32 %v1198, 7
        %v1200 = vsub.s32 4, %v1199
        %v1201 = vrot.slane %v1056, %v1200
        %1203 = vbcast.lane.b32.xlu0 %v1201, 256
        %v1204 = vpop.permute.xlu0 %1203
        %v1205 = vlaneseq
        %v1206 = vshrl.u32 %v1205, 7
        %v1207 = vsub.s32 5, %v1206
        %v1208 = vrot.slane %v1056, %v1207
        %1210 = vbcast.lane.b32.xlu0 %v1208, 256
        %v1211 = vpop.permute.xlu0 %1210
        %v1212 = vlaneseq
        %v1213 = vshrl.u32 %v1212, 7
        %v1214 = vsub.s32 6, %v1213
        %v1215 = vrot.slane %v1056, %v1214
        %1217 = vbcast.lane.b32.xlu0 %v1215, 256
        %v1218 = vpop.permute.xlu0 %1217
        %v1219 = vlaneseq
        %v1220 = vshrl.u32 %v1219, 7
        %v1221 = vsub.s32 7, %v1220
        %v1222 = vrot.slane %v1056, %v1221
        %1224 = vbcast.lane.b32.xlu0 %v1222, 256
        %v1225 = vpop.permute.xlu0 %1224
        %v1226 = vlaneseq
        %v1227 = vshrl.u32 %v1226, 7
        %v1228 = vsub.s32 0, %v1227
        %v1229 = vrot.slane %v1057, %v1228
        %1231 = vbcast.lane.b32.xlu0 %v1229, 256
        %v1232 = vpop.permute.xlu0 %1231
        %v1233 = vlaneseq
        %v1234 = vshrl.u32 %v1233, 7
        %v1235 = vsub.s32 0, %v1234
        %v1236 = vrot.slane %v1064, %v1235
        %v1237 = vlaneseq
        %v1238 = vshrl.u32 %v1237, 7
        %v1239 = vsub.s32 1, %v1238
        %v1240 = vrot.slane %v1064, %v1239
        %v1241 = vlaneseq
        %v1242 = vshrl.u32 %v1241, 7
        %v1243 = vsub.s32 2, %v1242
        %v1244 = vrot.slane %v1064, %v1243
        %v1245 = vlaneseq
        %v1246 = vshrl.u32 %v1245, 7
        %v1247 = vsub.s32 3, %v1246
        %v1248 = vrot.slane %v1064, %v1247
        %v1249 = vlaneseq
        %v1250 = vshrl.u32 %v1249, 7
        %v1251 = vsub.s32 0, %v1250
        %v1252 = vrot.slane %v1071, %v1251
        %v1253 = vlaneseq
        %v1254 = vshrl.u32 %v1253, 7
        %v1255 = vsub.s32 1, %v1254
        %v1256 = vrot.slane %v1071, %v1255
        %v1257 = vlaneseq
        %v1258 = vshrl.u32 %v1257, 7
        %v1259 = vsub.s32 2, %v1258
        %v1260 = vrot.slane %v1071, %v1259
        %v1261 = vlaneseq
        %v1262 = vshrl.u32 %v1261, 7
        %v1263 = vsub.s32 3, %v1262
        %v1264 = vrot.slane %v1071, %v1263
        %v1265 = vlaneseq
        %v1266 = vshrl.u32 %v1265, 7
        %v1267 = vsub.s32 0, %v1266
        %v1268 = vrot.slane %v1078, %v1267
        %v1269 = vlaneseq
        %v1270 = vshrl.u32 %v1269, 7
        %v1271 = vsub.s32 1, %v1270
        %v1272 = vrot.slane %v1078, %v1271
        %v1273 = vlaneseq
        %v1274 = vshrl.u32 %v1273, 7
        %v1275 = vsub.s32 2, %v1274
        %v1276 = vrot.slane %v1078, %v1275
        %v1277 = vlaneseq
        %v1278 = vshrl.u32 %v1277, 7
        %v1279 = vsub.s32 3, %v1278
        %v1280 = vrot.slane %v1078, %v1279
        %v1281 = vlaneseq
        %v1282 = vshrl.u32 %v1281, 7
        %v1283 = vsub.s32 0, %v1282
        %v1284 = vrot.slane %v1085, %v1283
        %v1285 = vlaneseq
        %v1286 = vshrl.u32 %v1285, 7
        %v1287 = vsub.s32 1, %v1286
        %v1288 = vrot.slane %v1085, %v1287
        %v1289 = vlaneseq
        %v1290 = vshrl.u32 %v1289, 7
        %v1291 = vsub.s32 2, %v1290
        %v1292 = vrot.slane %v1085, %v1291
        %v1293 = vlaneseq
        %v1294 = vshrl.u32 %v1293, 7
        %v1295 = vsub.s32 3, %v1294
        %v1296 = vrot.slane %v1085, %v1295
        %v1297 = vlaneseq
        %v1298 = vshrl.u32 %v1297, 7
        %v1299 = vsub.s32 0, %v1298
        %v1300 = vrot.slane %v1092, %v1299
        %v1301 = vlaneseq
        %v1302 = vshrl.u32 %v1301, 7
        %v1303 = vsub.s32 1, %v1302
        %v1304 = vrot.slane %v1092, %v1303
        %v1305 = vlaneseq
        %v1306 = vshrl.u32 %v1305, 7
        %v1307 = vsub.s32 2, %v1306
        %v1308 = vrot.slane %v1092, %v1307
        %v1309 = vlaneseq
        %v1310 = vshrl.u32 %v1309, 7
        %v1311 = vsub.s32 3, %v1310
        %v1312 = vrot.slane %v1092, %v1311
        %v1313 = vlaneseq
        %v1314 = vshrl.u32 %v1313, 7
        %v1315 = vsub.s32 0, %v1314
        %v1316 = vrot.slane %v1099, %v1315
        %v1317 = vlaneseq
        %v1318 = vshrl.u32 %v1317, 7
        %v1319 = vsub.s32 1, %v1318
        %v1320 = vrot.slane %v1099, %v1319
        %v1321 = vlaneseq
        %v1322 = vshrl.u32 %v1321, 7
        %v1323 = vsub.s32 2, %v1322
        %v1324 = vrot.slane %v1099, %v1323
        %v1325 = vlaneseq
        %v1326 = vshrl.u32 %v1325, 7
        %v1327 = vsub.s32 3, %v1326
        %v1328 = vrot.slane %v1099, %v1327
        %v1329 = vlaneseq
        %v1330 = vshrl.u32 %v1329, 7
        %v1331 = vsub.s32 0, %v1330
        %v1332 = vrot.slane %v1106, %v1331
        %v1333 = vlaneseq
        %v1334 = vshrl.u32 %v1333, 7
        %v1335 = vsub.s32 1, %v1334
        %v1336 = vrot.slane %v1106, %v1335
        %v1337 = vlaneseq
        %v1338 = vshrl.u32 %v1337, 7
        %v1339 = vsub.s32 2, %v1338
        %v1340 = vrot.slane %v1106, %v1339
        %v1341 = vlaneseq
        %v1342 = vshrl.u32 %v1341, 7
        %v1343 = vsub.s32 3, %v1342
        %v1344 = vrot.slane %v1106, %v1343
        %v1345 = vlaneseq
        %v1346 = vshrl.u32 %v1345, 7
        %v1347 = vsub.s32 0, %v1346
        %v1348 = vrot.slane %v1113, %v1347
        %v1349 = vlaneseq
        %v1350 = vshrl.u32 %v1349, 7
        %v1351 = vsub.s32 1, %v1350
        %v1352 = vrot.slane %v1113, %v1351
        %v1353 = vlaneseq
        %v1354 = vshrl.u32 %v1353, 7
        %v1355 = vsub.s32 2, %v1354
        %v1356 = vrot.slane %v1113, %v1355
        %v1357 = vlaneseq
        %v1358 = vshrl.u32 %v1357, 7
        %v1359 = vsub.s32 3, %v1358
        %v1360 = vrot.slane %v1113, %v1359
        %v1361 = vlaneseq
        %v1362 = vshrl.u32 %v1361, 7
        %v1363 = vsub.s32 0, %v1362
        %v1364 = vrot.slane %v1120, %v1363
        %v1365 = vlaneseq
        %v1366 = vshrl.u32 %v1365, 7
        %v1367 = vsub.s32 1, %v1366
        %v1368 = vrot.slane %v1120, %v1367
        %v1369 = vlaneseq
        %v1370 = vshrl.u32 %v1369, 7
        %v1371 = vsub.s32 2, %v1370
        %v1372 = vrot.slane %v1120, %v1371
        %v1373 = vlaneseq
        %v1374 = vshrl.u32 %v1373, 7
        %v1375 = vsub.s32 3, %v1374
        %v1376 = vrot.slane %v1120, %v1375
        %v1377 = vlaneseq
        %v1378 = vshrl.u32 %v1377, 7
        %v1379 = vsub.s32 0, %v1378
        %v1380 = vrot.slane %v1127, %v1379
        %v1381 = vlaneseq
        %v1382 = vshrl.u32 %v1381, 7
        %v1383 = vsub.s32 1, %v1382
        %v1384 = vrot.slane %v1127, %v1383
        %v1385 = vlaneseq
        %v1386 = vshrl.u32 %v1385, 7
        %v1387 = vsub.s32 2, %v1386
        %v1388 = vrot.slane %v1127, %v1387
        %v1389 = vlaneseq
        %v1390 = vshrl.u32 %v1389, 7
        %v1391 = vsub.s32 3, %v1390
        %v1392 = vrot.slane %v1127, %v1391
        %v1393 = vlaneseq
        %v1394 = vshrl.u32 %v1393, 7
        %v1395 = vsub.s32 0, %v1394
        %v1396 = vrot.slane %v1134, %v1395
        %v1397 = vlaneseq
        %v1398 = vshrl.u32 %v1397, 7
        %v1399 = vsub.s32 1, %v1398
        %v1400 = vrot.slane %v1134, %v1399
        %v1401 = vlaneseq
        %v1402 = vshrl.u32 %v1401, 7
        %v1403 = vsub.s32 2, %v1402
        %v1404 = vrot.slane %v1134, %v1403
        %v1405 = vlaneseq
        %v1406 = vshrl.u32 %v1405, 7
        %v1407 = vsub.s32 3, %v1406
        %v1408 = vrot.slane %v1134, %v1407
        %v1409 = vlaneseq
        %v1410 = vshrl.u32 %v1409, 7
        %v1411 = vsub.s32 0, %v1410
        %v1412 = vrot.slane %v1141, %v1411
        %v1413 = vlaneseq
        %v1414 = vshrl.u32 %v1413, 7
        %v1415 = vsub.s32 1, %v1414
        %v1416 = vrot.slane %v1141, %v1415
        %v1417 = vlaneseq
        %v1418 = vshrl.u32 %v1417, 7
        %v1419 = vsub.s32 2, %v1418
        %v1420 = vrot.slane %v1141, %v1419
        %v1421 = vlaneseq
        %v1422 = vshrl.u32 %v1421, 7
        %v1423 = vsub.s32 3, %v1422
        %v1424 = vrot.slane %v1141, %v1423
        %v1425 = vlaneseq
        %v1426 = vshrl.u32 %v1425, 7
        %v1427 = vsub.s32 0, %v1426
        %v1428 = vrot.slane %v1148, %v1427
        %v1429 = vlaneseq
        %v1430 = vshrl.u32 %v1429, 7
        %v1431 = vsub.s32 1, %v1430
        %v1432 = vrot.slane %v1148, %v1431
        %v1433 = vlaneseq
        %v1434 = vshrl.u32 %v1433, 7
        %v1435 = vsub.s32 2, %v1434
        %v1436 = vrot.slane %v1148, %v1435
        %v1437 = vlaneseq
        %v1438 = vshrl.u32 %v1437, 7
        %v1439 = vsub.s32 3, %v1438
        %v1440 = vrot.slane %v1148, %v1439
        %v1441 = vlaneseq
        %v1442 = vshrl.u32 %v1441, 7
        %v1443 = vsub.s32 0, %v1442
        %v1444 = vrot.slane %v1155, %v1443
        %v1445 = vlaneseq
        %v1446 = vshrl.u32 %v1445, 7
        %v1447 = vsub.s32 1, %v1446
        %v1448 = vrot.slane %v1155, %v1447
        %v1449 = vlaneseq
        %v1450 = vshrl.u32 %v1449, 7
        %v1451 = vsub.s32 2, %v1450
        %v1452 = vrot.slane %v1155, %v1451
        %v1453 = vlaneseq
        %v1454 = vshrl.u32 %v1453, 7
        %v1455 = vsub.s32 3, %v1454
        %v1456 = vrot.slane %v1155, %v1455
        %v1457 = vlaneseq
        %v1458 = vshrl.u32 %v1457, 7
        %v1459 = vsub.s32 0, %v1458
        %v1460 = vrot.slane %v1162, %v1459
        %v1461 = vlaneseq
        %v1462 = vshrl.u32 %v1461, 7
        %v1463 = vsub.s32 1, %v1462
        %v1464 = vrot.slane %v1162, %v1463
        %v1465 = vlaneseq
        %v1466 = vshrl.u32 %v1465, 7
        %v1467 = vsub.s32 2, %v1466
        %v1468 = vrot.slane %v1162, %v1467
        %v1469 = vlaneseq
        %v1470 = vshrl.u32 %v1469, 7
        %v1471 = vsub.s32 3, %v1470
        %v1472 = vrot.slane %v1162, %v1471
        %v1473 = vlaneseq
        %v1474 = vshrl.u32 %v1473, 7
        %v1475 = vsub.s32 0, %v1474
        %v1476 = vrot.slane %v1169, %v1475
        %v1477 = vlaneseq
        %v1478 = vshrl.u32 %v1477, 7
        %v1479 = vsub.s32 1, %v1478
        %v1480 = vrot.slane %v1169, %v1479
        %v1481 = vlaneseq
        %v1482 = vshrl.u32 %v1481, 7
        %v1483 = vsub.s32 2, %v1482
        %v1484 = vrot.slane %v1169, %v1483
        %v1485 = vlaneseq
        %v1486 = vshrl.u32 %v1485, 7
        %v1487 = vsub.s32 3, %v1486
        %v1488 = vrot.slane %v1169, %v1487
        %v1489 = vlaneseq
        %v1490 = vshrl.u32 %v1489, 7
        %v1491 = vsub.s32 0, %v1490
        %v1492 = vrot.slane %v1176, %v1491
        %v1493 = vlaneseq
        %v1494 = vshrl.u32 %v1493, 7
        %v1495 = vsub.s32 1, %v1494
        %v1496 = vrot.slane %v1176, %v1495
        %v1497 = vlaneseq
        %v1498 = vshrl.u32 %v1497, 7
        %v1499 = vsub.s32 2, %v1498
        %v1500 = vrot.slane %v1176, %v1499
        %v1501 = vlaneseq
        %v1502 = vshrl.u32 %v1501, 7
        %v1503 = vsub.s32 3, %v1502
        %v1504 = vrot.slane %v1176, %v1503
        %v1505 = vlaneseq
        %v1506 = vshrl.u32 %v1505, 7
        %v1507 = vsub.s32 0, %v1506
        %v1508 = vrot.slane %v1183, %v1507
        %v1509 = vlaneseq
        %v1510 = vshrl.u32 %v1509, 7
        %v1511 = vsub.s32 1, %v1510
        %v1512 = vrot.slane %v1183, %v1511
        %v1513 = vlaneseq
        %v1514 = vshrl.u32 %v1513, 7
        %v1515 = vsub.s32 2, %v1514
        %v1516 = vrot.slane %v1183, %v1515
        %v1517 = vlaneseq
        %v1518 = vshrl.u32 %v1517, 7
        %v1519 = vsub.s32 3, %v1518
        %v1520 = vrot.slane %v1183, %v1519
        %v1521 = vlaneseq
        %v1522 = vshrl.u32 %v1521, 7
        %v1523 = vsub.s32 0, %v1522
        %v1524 = vrot.slane %v1190, %v1523
        %v1525 = vlaneseq
        %v1526 = vshrl.u32 %v1525, 7
        %v1527 = vsub.s32 1, %v1526
        %v1528 = vrot.slane %v1190, %v1527
        %v1529 = vlaneseq
        %v1530 = vshrl.u32 %v1529, 7
        %v1531 = vsub.s32 2, %v1530
        %v1532 = vrot.slane %v1190, %v1531
        %v1533 = vlaneseq
        %v1534 = vshrl.u32 %v1533, 7
        %v1535 = vsub.s32 3, %v1534
        %v1536 = vrot.slane %v1190, %v1535
        %v1537 = vlaneseq
        %v1538 = vshrl.u32 %v1537, 7
        %v1539 = vsub.s32 0, %v1538
        %v1540 = vrot.slane %v1197, %v1539
        %v1541 = vlaneseq
        %v1542 = vshrl.u32 %v1541, 7
        %v1543 = vsub.s32 1, %v1542
        %v1544 = vrot.slane %v1197, %v1543
        %v1545 = vlaneseq
        %v1546 = vshrl.u32 %v1545, 7
        %v1547 = vsub.s32 2, %v1546
        %v1548 = vrot.slane %v1197, %v1547
        %v1549 = vlaneseq
        %v1550 = vshrl.u32 %v1549, 7
        %v1551 = vsub.s32 3, %v1550
        %v1552 = vrot.slane %v1197, %v1551
        %v1553 = vlaneseq
        %v1554 = vshrl.u32 %v1553, 7
        %v1555 = vsub.s32 0, %v1554
        %v1556 = vrot.slane %v1204, %v1555
        %v1557 = vlaneseq
        %v1558 = vshrl.u32 %v1557, 7
        %v1559 = vsub.s32 1, %v1558
        %v1560 = vrot.slane %v1204, %v1559
        %v1561 = vlaneseq
        %v1562 = vshrl.u32 %v1561, 7
        %v1563 = vsub.s32 2, %v1562
        %v1564 = vrot.slane %v1204, %v1563
        %v1565 = vlaneseq
        %v1566 = vshrl.u32 %v1565, 7
        %v1567 = vsub.s32 3, %v1566
        %v1568 = vrot.slane %v1204, %v1567
        %v1569 = vlaneseq
        %v1570 = vshrl.u32 %v1569, 7
        %v1571 = vsub.s32 0, %v1570
        %v1572 = vrot.slane %v1211, %v1571
        %v1573 = vlaneseq
        %v1574 = vshrl.u32 %v1573, 7
        %v1575 = vsub.s32 1, %v1574
        %v1576 = vrot.slane %v1211, %v1575
        %v1577 = vlaneseq
        %v1578 = vshrl.u32 %v1577, 7
        %v1579 = vsub.s32 2, %v1578
        %v1580 = vrot.slane %v1211, %v1579
        %v1581 = vlaneseq
        %v1582 = vshrl.u32 %v1581, 7
        %v1583 = vsub.s32 3, %v1582
        %v1584 = vrot.slane %v1211, %v1583
        %v1585 = vlaneseq
        %v1586 = vshrl.u32 %v1585, 7
        %v1587 = vsub.s32 0, %v1586
        %v1588 = vrot.slane %v1218, %v1587
        %v1589 = vlaneseq
        %v1590 = vshrl.u32 %v1589, 7
        %v1591 = vsub.s32 1, %v1590
        %v1592 = vrot.slane %v1218, %v1591
        %v1593 = vlaneseq
        %v1594 = vshrl.u32 %v1593, 7
        %v1595 = vsub.s32 2, %v1594
        %v1596 = vrot.slane %v1218, %v1595
        %v1597 = vlaneseq
        %v1598 = vshrl.u32 %v1597, 7
        %v1599 = vsub.s32 3, %v1598
        %v1600 = vrot.slane %v1218, %v1599
        %v1601 = vlaneseq
        %v1602 = vshrl.u32 %v1601, 7
        %v1603 = vsub.s32 0, %v1602
        %v1604 = vrot.slane %v1225, %v1603
        %v1605 = vlaneseq
        %v1606 = vshrl.u32 %v1605, 7
        %v1607 = vsub.s32 1, %v1606
        %v1608 = vrot.slane %v1225, %v1607
        %v1609 = vlaneseq
        %v1610 = vshrl.u32 %v1609, 7
        %v1611 = vsub.s32 2, %v1610
        %v1612 = vrot.slane %v1225, %v1611
        %v1613 = vlaneseq
        %v1614 = vshrl.u32 %v1613, 7
        %v1615 = vsub.s32 3, %v1614
        %v1616 = vrot.slane %v1225, %v1615
        %v1617 = vlaneseq
        %v1618 = vshrl.u32 %v1617, 7
        %v1619 = vsub.s32 0, %v1618
        %v1620 = vrot.slane %v1232, %v1619
        %v1621 = vlaneseq
        %v1622 = vshrl.u32 %v1621, 7
        %v1623 = vsub.s32 1, %v1622
        %v1624 = vrot.slane %v1232, %v1623
        %v1625 = vlaneseq
        %v1626 = vshrl.u32 %v1625, 7
        %v1627 = vsub.s32 2, %v1626
        %v1628 = vrot.slane %v1232, %v1627
        %v1629 = vlaneseq
        %v1630 = vshrl.u32 %v1629, 7
        %v1631 = vsub.s32 3, %v1630
        %v1632 = vrot.slane %v1232, %v1631
        %v1633 = vld [vmem:[#allocation10] sm:$0xff]
        %v1634 = vld [vmem:[#allocation10 + $0x8] sm:$0xff]
        %v1635 = vld [vmem:[#allocation10 + $0x10] sm:$0xff]
        %v1636 = vld [vmem:[#allocation10 + $0x18] sm:$0x1]
        %v1637 = vlaneseq
        %v1638 = vshrl.u32 %v1637, 7
        %v1639 = vsub.s32 0, %v1638
        %v1640 = vrot.slane %v1633, %v1639
        %1642 = vbcast.lane.b32.xlu0 %v1640, 256
        %v1643 = vpop.permute.xlu0 %1642
        %v1644 = vlaneseq
        %v1645 = vshrl.u32 %v1644, 7
        %v1646 = vsub.s32 1, %v1645
        %v1647 = vrot.slane %v1633, %v1646
        %1649 = vbcast.lane.b32.xlu0 %v1647, 256
        %v1650 = vpop.permute.xlu0 %1649
        %v1651 = vlaneseq
        %v1652 = vshrl.u32 %v1651, 7
        %v1653 = vsub.s32 2, %v1652
        %v1654 = vrot.slane %v1633, %v1653
        %1656 = vbcast.lane.b32.xlu0 %v1654, 256
        %v1657 = vpop.permute.xlu0 %1656
        %v1658 = vlaneseq
        %v1659 = vshrl.u32 %v1658, 7
        %v1660 = vsub.s32 3, %v1659
        %v1661 = vrot.slane %v1633, %v1660
        %1663 = vbcast.lane.b32.xlu0 %v1661, 256
        %v1664 = vpop.permute.xlu0 %1663
        %v1665 = vlaneseq
        %v1666 = vshrl.u32 %v1665, 7
        %v1667 = vsub.s32 4, %v1666
        %v1668 = vrot.slane %v1633, %v1667
        %1670 = vbcast.lane.b32.xlu0 %v1668, 256
        %v1671 = vpop.permute.xlu0 %1670
        %v1672 = vlaneseq
        %v1673 = vshrl.u32 %v1672, 7
        %v1674 = vsub.s32 5, %v1673
        %v1675 = vrot.slane %v1633, %v1674
        %1677 = vbcast.lane.b32.xlu0 %v1675, 256
        %v1678 = vpop.permute.xlu0 %1677
        %v1679 = vlaneseq
        %v1680 = vshrl.u32 %v1679, 7
        %v1681 = vsub.s32 6, %v1680
        %v1682 = vrot.slane %v1633, %v1681
        %1684 = vbcast.lane.b32.xlu0 %v1682, 256
        %v1685 = vpop.permute.xlu0 %1684
        %v1686 = vlaneseq
        %v1687 = vshrl.u32 %v1686, 7
        %v1688 = vsub.s32 7, %v1687
        %v1689 = vrot.slane %v1633, %v1688
        %1691 = vbcast.lane.b32.xlu0 %v1689, 256
        %v1692 = vpop.permute.xlu0 %1691
        %v1693 = vlaneseq
        %v1694 = vshrl.u32 %v1693, 7
        %v1695 = vsub.s32 0, %v1694
        %v1696 = vrot.slane %v1634, %v1695
        %1698 = vbcast.lane.b32.xlu0 %v1696, 256
        %v1699 = vpop.permute.xlu0 %1698
        %v1700 = vlaneseq
        %v1701 = vshrl.u32 %v1700, 7
        %v1702 = vsub.s32 1, %v1701
        %v1703 = vrot.slane %v1634, %v1702
        %1705 = vbcast.lane.b32.xlu0 %v1703, 256
        %v1706 = vpop.permute.xlu0 %1705
        %v1707 = vlaneseq
        %v1708 = vshrl.u32 %v1707, 7
        %v1709 = vsub.s32 2, %v1708
        %v1710 = vrot.slane %v1634, %v1709
        %1712 = vbcast.lane.b32.xlu0 %v1710, 256
        %v1713 = vpop.permute.xlu0 %1712
        %v1714 = vlaneseq
        %v1715 = vshrl.u32 %v1714, 7
        %v1716 = vsub.s32 3, %v1715
        %v1717 = vrot.slane %v1634, %v1716
        %1719 = vbcast.lane.b32.xlu0 %v1717, 256
        %v1720 = vpop.permute.xlu0 %1719
        %v1721 = vlaneseq
        %v1722 = vshrl.u32 %v1721, 7
        %v1723 = vsub.s32 4, %v1722
        %v1724 = vrot.slane %v1634, %v1723
        %1726 = vbcast.lane.b32.xlu0 %v1724, 256
        %v1727 = vpop.permute.xlu0 %1726
        %v1728 = vlaneseq
        %v1729 = vshrl.u32 %v1728, 7
        %v1730 = vsub.s32 5, %v1729
        %v1731 = vrot.slane %v1634, %v1730
        %1733 = vbcast.lane.b32.xlu0 %v1731, 256
        %v1734 = vpop.permute.xlu0 %1733
        %v1735 = vlaneseq
        %v1736 = vshrl.u32 %v1735, 7
        %v1737 = vsub.s32 6, %v1736
        %v1738 = vrot.slane %v1634, %v1737
        %1740 = vbcast.lane.b32.xlu0 %v1738, 256
        %v1741 = vpop.permute.xlu0 %1740
        %v1742 = vlaneseq
        %v1743 = vshrl.u32 %v1742, 7
        %v1744 = vsub.s32 7, %v1743
        %v1745 = vrot.slane %v1634, %v1744
        %1747 = vbcast.lane.b32.xlu0 %v1745, 256
        %v1748 = vpop.permute.xlu0 %1747
        %v1749 = vlaneseq
        %v1750 = vshrl.u32 %v1749, 7
        %v1751 = vsub.s32 0, %v1750
        %v1752 = vrot.slane %v1635, %v1751
        %1754 = vbcast.lane.b32.xlu0 %v1752, 256
        %v1755 = vpop.permute.xlu0 %1754
        %v1756 = vlaneseq
        %v1757 = vshrl.u32 %v1756, 7
        %v1758 = vsub.s32 1, %v1757
        %v1759 = vrot.slane %v1635, %v1758
        %1761 = vbcast.lane.b32.xlu0 %v1759, 256
        %v1762 = vpop.permute.xlu0 %1761
        %v1763 = vlaneseq
        %v1764 = vshrl.u32 %v1763, 7
        %v1765 = vsub.s32 2, %v1764
        %v1766 = vrot.slane %v1635, %v1765
        %1768 = vbcast.lane.b32.xlu0 %v1766, 256
        %v1769 = vpop.permute.xlu0 %1768
        %v1770 = vlaneseq
        %v1771 = vshrl.u32 %v1770, 7
        %v1772 = vsub.s32 3, %v1771
        %v1773 = vrot.slane %v1635, %v1772
        %1775 = vbcast.lane.b32.xlu0 %v1773, 256
        %v1776 = vpop.permute.xlu0 %1775
        %v1777 = vlaneseq
        %v1778 = vshrl.u32 %v1777, 7
        %v1779 = vsub.s32 4, %v1778
        %v1780 = vrot.slane %v1635, %v1779
        %1782 = vbcast.lane.b32.xlu0 %v1780, 256
        %v1783 = vpop.permute.xlu0 %1782
        %v1784 = vlaneseq
        %v1785 = vshrl.u32 %v1784, 7
        %v1786 = vsub.s32 5, %v1785
        %v1787 = vrot.slane %v1635, %v1786
        %1789 = vbcast.lane.b32.xlu0 %v1787, 256
        %v1790 = vpop.permute.xlu0 %1789
        %v1791 = vlaneseq
        %v1792 = vshrl.u32 %v1791, 7
        %v1793 = vsub.s32 6, %v1792
        %v1794 = vrot.slane %v1635, %v1793
        %1796 = vbcast.lane.b32.xlu0 %v1794, 256
        %v1797 = vpop.permute.xlu0 %1796
        %v1798 = vlaneseq
        %v1799 = vshrl.u32 %v1798, 7
        %v1800 = vsub.s32 7, %v1799
        %v1801 = vrot.slane %v1635, %v1800
        %1803 = vbcast.lane.b32.xlu0 %v1801, 256
        %v1804 = vpop.permute.xlu0 %1803
        %v1805 = vlaneseq
        %v1806 = vshrl.u32 %v1805, 7
        %v1807 = vsub.s32 0, %v1806
        %v1808 = vrot.slane %v1636, %v1807
        %1810 = vbcast.lane.b32.xlu0 %v1808, 256
        %v1811 = vpop.permute.xlu0 %1810
        %v1812 = vlaneseq
        %v1813 = vshrl.u32 %v1812, 7
        %v1814 = vsub.s32 0, %v1813
        %v1815 = vrot.slane %v1643, %v1814
        %v1816 = vlaneseq
        %v1817 = vshrl.u32 %v1816, 7
        %v1818 = vsub.s32 1, %v1817
        %v1819 = vrot.slane %v1643, %v1818
        %v1820 = vlaneseq
        %v1821 = vshrl.u32 %v1820, 7
        %v1822 = vsub.s32 2, %v1821
        %v1823 = vrot.slane %v1643, %v1822
        %v1824 = vlaneseq
        %v1825 = vshrl.u32 %v1824, 7
        %v1826 = vsub.s32 3, %v1825
        %v1827 = vrot.slane %v1643, %v1826
        %v1828 = vlaneseq
        %v1829 = vshrl.u32 %v1828, 7
        %v1830 = vsub.s32 0, %v1829
        %v1831 = vrot.slane %v1650, %v1830
        %v1832 = vlaneseq
        %v1833 = vshrl.u32 %v1832, 7
        %v1834 = vsub.s32 1, %v1833
        %v1835 = vrot.slane %v1650, %v1834
        %v1836 = vlaneseq
        %v1837 = vshrl.u32 %v1836, 7
        %v1838 = vsub.s32 2, %v1837
        %v1839 = vrot.slane %v1650, %v1838
        %v1840 = vlaneseq
        %v1841 = vshrl.u32 %v1840, 7
        %v1842 = vsub.s32 3, %v1841
        %v1843 = vrot.slane %v1650, %v1842
        %v1844 = vlaneseq
        %v1845 = vshrl.u32 %v1844, 7
        %v1846 = vsub.s32 0, %v1845
        %v1847 = vrot.slane %v1657, %v1846
        %v1848 = vlaneseq
        %v1849 = vshrl.u32 %v1848, 7
        %v1850 = vsub.s32 1, %v1849
        %v1851 = vrot.slane %v1657, %v1850
        %v1852 = vlaneseq
        %v1853 = vshrl.u32 %v1852, 7
        %v1854 = vsub.s32 2, %v1853
        %v1855 = vrot.slane %v1657, %v1854
        %v1856 = vlaneseq
        %v1857 = vshrl.u32 %v1856, 7
        %v1858 = vsub.s32 3, %v1857
        %v1859 = vrot.slane %v1657, %v1858
        %v1860 = vlaneseq
        %v1861 = vshrl.u32 %v1860, 7
        %v1862 = vsub.s32 0, %v1861
        %v1863 = vrot.slane %v1664, %v1862
        %v1864 = vlaneseq
        %v1865 = vshrl.u32 %v1864, 7
        %v1866 = vsub.s32 1, %v1865
        %v1867 = vrot.slane %v1664, %v1866
        %v1868 = vlaneseq
        %v1869 = vshrl.u32 %v1868, 7
        %v1870 = vsub.s32 2, %v1869
        %v1871 = vrot.slane %v1664, %v1870
        %v1872 = vlaneseq
        %v1873 = vshrl.u32 %v1872, 7
        %v1874 = vsub.s32 3, %v1873
        %v1875 = vrot.slane %v1664, %v1874
        %v1876 = vlaneseq
        %v1877 = vshrl.u32 %v1876, 7
        %v1878 = vsub.s32 0, %v1877
        %v1879 = vrot.slane %v1671, %v1878
        %v1880 = vlaneseq
        %v1881 = vshrl.u32 %v1880, 7
        %v1882 = vsub.s32 1, %v1881
        %v1883 = vrot.slane %v1671, %v1882
        %v1884 = vlaneseq
        %v1885 = vshrl.u32 %v1884, 7
        %v1886 = vsub.s32 2, %v1885
        %v1887 = vrot.slane %v1671, %v1886
        %v1888 = vlaneseq
        %v1889 = vshrl.u32 %v1888, 7
        %v1890 = vsub.s32 3, %v1889
        %v1891 = vrot.slane %v1671, %v1890
        %v1892 = vlaneseq
        %v1893 = vshrl.u32 %v1892, 7
        %v1894 = vsub.s32 0, %v1893
        %v1895 = vrot.slane %v1678, %v1894
        %v1896 = vlaneseq
        %v1897 = vshrl.u32 %v1896, 7
        %v1898 = vsub.s32 1, %v1897
        %v1899 = vrot.slane %v1678, %v1898
        %v1900 = vlaneseq
        %v1901 = vshrl.u32 %v1900, 7
        %v1902 = vsub.s32 2, %v1901
        %v1903 = vrot.slane %v1678, %v1902
        %v1904 = vlaneseq
        %v1905 = vshrl.u32 %v1904, 7
        %v1906 = vsub.s32 3, %v1905
        %v1907 = vrot.slane %v1678, %v1906
        %v1908 = vlaneseq
        %v1909 = vshrl.u32 %v1908, 7
        %v1910 = vsub.s32 0, %v1909
        %v1911 = vrot.slane %v1685, %v1910
        %v1912 = vlaneseq
        %v1913 = vshrl.u32 %v1912, 7
        %v1914 = vsub.s32 1, %v1913
        %v1915 = vrot.slane %v1685, %v1914
        %v1916 = vlaneseq
        %v1917 = vshrl.u32 %v1916, 7
        %v1918 = vsub.s32 2, %v1917
        %v1919 = vrot.slane %v1685, %v1918
        %v1920 = vlaneseq
        %v1921 = vshrl.u32 %v1920, 7
        %v1922 = vsub.s32 3, %v1921
        %v1923 = vrot.slane %v1685, %v1922
        %v1924 = vlaneseq
        %v1925 = vshrl.u32 %v1924, 7
        %v1926 = vsub.s32 0, %v1925
        %v1927 = vrot.slane %v1692, %v1926
        %v1928 = vlaneseq
        %v1929 = vshrl.u32 %v1928, 7
        %v1930 = vsub.s32 1, %v1929
        %v1931 = vrot.slane %v1692, %v1930
        %v1932 = vlaneseq
        %v1933 = vshrl.u32 %v1932, 7
        %v1934 = vsub.s32 2, %v1933
        %v1935 = vrot.slane %v1692, %v1934
        %v1936 = vlaneseq
        %v1937 = vshrl.u32 %v1936, 7
        %v1938 = vsub.s32 3, %v1937
        %v1939 = vrot.slane %v1692, %v1938
        %v1940 = vlaneseq
        %v1941 = vshrl.u32 %v1940, 7
        %v1942 = vsub.s32 0, %v1941
        %v1943 = vrot.slane %v1699, %v1942
        %v1944 = vlaneseq
        %v1945 = vshrl.u32 %v1944, 7
        %v1946 = vsub.s32 1, %v1945
        %v1947 = vrot.slane %v1699, %v1946
        %v1948 = vlaneseq
        %v1949 = vshrl.u32 %v1948, 7
        %v1950 = vsub.s32 2, %v1949
        %v1951 = vrot.slane %v1699, %v1950
        %v1952 = vlaneseq
        %v1953 = vshrl.u32 %v1952, 7
        %v1954 = vsub.s32 3, %v1953
        %v1955 = vrot.slane %v1699, %v1954
        %v1956 = vlaneseq
        %v1957 = vshrl.u32 %v1956, 7
        %v1958 = vsub.s32 0, %v1957
        %v1959 = vrot.slane %v1706, %v1958
        %v1960 = vlaneseq
        %v1961 = vshrl.u32 %v1960, 7
        %v1962 = vsub.s32 1, %v1961
        %v1963 = vrot.slane %v1706, %v1962
        %v1964 = vlaneseq
        %v1965 = vshrl.u32 %v1964, 7
        %v1966 = vsub.s32 2, %v1965
        %v1967 = vrot.slane %v1706, %v1966
        %v1968 = vlaneseq
        %v1969 = vshrl.u32 %v1968, 7
        %v1970 = vsub.s32 3, %v1969
        %v1971 = vrot.slane %v1706, %v1970
        %v1972 = vlaneseq
        %v1973 = vshrl.u32 %v1972, 7
        %v1974 = vsub.s32 0, %v1973
        %v1975 = vrot.slane %v1713, %v1974
        %v1976 = vlaneseq
        %v1977 = vshrl.u32 %v1976, 7
        %v1978 = vsub.s32 1, %v1977
        %v1979 = vrot.slane %v1713, %v1978
        %v1980 = vlaneseq
        %v1981 = vshrl.u32 %v1980, 7
        %v1982 = vsub.s32 2, %v1981
        %v1983 = vrot.slane %v1713, %v1982
        %v1984 = vlaneseq
        %v1985 = vshrl.u32 %v1984, 7
        %v1986 = vsub.s32 3, %v1985
        %v1987 = vrot.slane %v1713, %v1986
        %v1988 = vlaneseq
        %v1989 = vshrl.u32 %v1988, 7
        %v1990 = vsub.s32 0, %v1989
        %v1991 = vrot.slane %v1720, %v1990
        %v1992 = vlaneseq
        %v1993 = vshrl.u32 %v1992, 7
        %v1994 = vsub.s32 1, %v1993
        %v1995 = vrot.slane %v1720, %v1994
        %v1996 = vlaneseq
        %v1997 = vshrl.u32 %v1996, 7
        %v1998 = vsub.s32 2, %v1997
        %v1999 = vrot.slane %v1720, %v1998
        %v2000 = vlaneseq
        %v2001 = vshrl.u32 %v2000, 7
        %v2002 = vsub.s32 3, %v2001
        %v2003 = vrot.slane %v1720, %v2002
        %v2004 = vlaneseq
        %v2005 = vshrl.u32 %v2004, 7
        %v2006 = vsub.s32 0, %v2005
        %v2007 = vrot.slane %v1727, %v2006
        %v2008 = vlaneseq
        %v2009 = vshrl.u32 %v2008, 7
        %v2010 = vsub.s32 1, %v2009
        %v2011 = vrot.slane %v1727, %v2010
        %v2012 = vlaneseq
        %v2013 = vshrl.u32 %v2012, 7
        %v2014 = vsub.s32 2, %v2013
        %v2015 = vrot.slane %v1727, %v2014
        %v2016 = vlaneseq
        %v2017 = vshrl.u32 %v2016, 7
        %v2018 = vsub.s32 3, %v2017
        %v2019 = vrot.slane %v1727, %v2018
        %v2020 = vlaneseq
        %v2021 = vshrl.u32 %v2020, 7
        %v2022 = vsub.s32 0, %v2021
        %v2023 = vrot.slane %v1734, %v2022
        %v2024 = vlaneseq
        %v2025 = vshrl.u32 %v2024, 7
        %v2026 = vsub.s32 1, %v2025
        %v2027 = vrot.slane %v1734, %v2026
        %v2028 = vlaneseq
        %v2029 = vshrl.u32 %v2028, 7
        %v2030 = vsub.s32 2, %v2029
        %v2031 = vrot.slane %v1734, %v2030
        %v2032 = vlaneseq
        %v2033 = vshrl.u32 %v2032, 7
        %v2034 = vsub.s32 3, %v2033
        %v2035 = vrot.slane %v1734, %v2034
        %v2036 = vlaneseq
        %v2037 = vshrl.u32 %v2036, 7
        %v2038 = vsub.s32 0, %v2037
        %v2039 = vrot.slane %v1741, %v2038
        %v2040 = vlaneseq
        %v2041 = vshrl.u32 %v2040, 7
        %v2042 = vsub.s32 1, %v2041
        %v2043 = vrot.slane %v1741, %v2042
        %v2044 = vlaneseq
        %v2045 = vshrl.u32 %v2044, 7
        %v2046 = vsub.s32 2, %v2045
        %v2047 = vrot.slane %v1741, %v2046
        %v2048 = vlaneseq
        %v2049 = vshrl.u32 %v2048, 7
        %v2050 = vsub.s32 3, %v2049
        %v2051 = vrot.slane %v1741, %v2050
        %v2052 = vlaneseq
        %v2053 = vshrl.u32 %v2052, 7
        %v2054 = vsub.s32 0, %v2053
        %v2055 = vrot.slane %v1748, %v2054
        %v2056 = vlaneseq
        %v2057 = vshrl.u32 %v2056, 7
        %v2058 = vsub.s32 1, %v2057
        %v2059 = vrot.slane %v1748, %v2058
        %v2060 = vlaneseq
        %v2061 = vshrl.u32 %v2060, 7
        %v2062 = vsub.s32 2, %v2061
        %v2063 = vrot.slane %v1748, %v2062
        %v2064 = vlaneseq
        %v2065 = vshrl.u32 %v2064, 7
        %v2066 = vsub.s32 3, %v2065
        %v2067 = vrot.slane %v1748, %v2066
        %v2068 = vlaneseq
        %v2069 = vshrl.u32 %v2068, 7
        %v2070 = vsub.s32 0, %v2069
        %v2071 = vrot.slane %v1755, %v2070
        %v2072 = vlaneseq
        %v2073 = vshrl.u32 %v2072, 7
        %v2074 = vsub.s32 1, %v2073
        %v2075 = vrot.slane %v1755, %v2074
        %v2076 = vlaneseq
        %v2077 = vshrl.u32 %v2076, 7
        %v2078 = vsub.s32 2, %v2077
        %v2079 = vrot.slane %v1755, %v2078
        %v2080 = vlaneseq
        %v2081 = vshrl.u32 %v2080, 7
        %v2082 = vsub.s32 3, %v2081
        %v2083 = vrot.slane %v1755, %v2082
        %v2084 = vlaneseq
        %v2085 = vshrl.u32 %v2084, 7
        %v2086 = vsub.s32 0, %v2085
        %v2087 = vrot.slane %v1762, %v2086
        %v2088 = vlaneseq
        %v2089 = vshrl.u32 %v2088, 7
        %v2090 = vsub.s32 1, %v2089
        %v2091 = vrot.slane %v1762, %v2090
        %v2092 = vlaneseq
        %v2093 = vshrl.u32 %v2092, 7
        %v2094 = vsub.s32 2, %v2093
        %v2095 = vrot.slane %v1762, %v2094
        %v2096 = vlaneseq
        %v2097 = vshrl.u32 %v2096, 7
        %v2098 = vsub.s32 3, %v2097
        %v2099 = vrot.slane %v1762, %v2098
        %v2100 = vlaneseq
        %v2101 = vshrl.u32 %v2100, 7
        %v2102 = vsub.s32 0, %v2101
        %v2103 = vrot.slane %v1769, %v2102
        %v2104 = vlaneseq
        %v2105 = vshrl.u32 %v2104, 7
        %v2106 = vsub.s32 1, %v2105
        %v2107 = vrot.slane %v1769, %v2106
        %v2108 = vlaneseq
        %v2109 = vshrl.u32 %v2108, 7
        %v2110 = vsub.s32 2, %v2109
        %v2111 = vrot.slane %v1769, %v2110
        %v2112 = vlaneseq
        %v2113 = vshrl.u32 %v2112, 7
        %v2114 = vsub.s32 3, %v2113
        %v2115 = vrot.slane %v1769, %v2114
        %v2116 = vlaneseq
        %v2117 = vshrl.u32 %v2116, 7
        %v2118 = vsub.s32 0, %v2117
        %v2119 = vrot.slane %v1776, %v2118
        %v2120 = vlaneseq
        %v2121 = vshrl.u32 %v2120, 7
        %v2122 = vsub.s32 1, %v2121
        %v2123 = vrot.slane %v1776, %v2122
        %v2124 = vlaneseq
        %v2125 = vshrl.u32 %v2124, 7
        %v2126 = vsub.s32 2, %v2125
        %v2127 = vrot.slane %v1776, %v2126
        %v2128 = vlaneseq
        %v2129 = vshrl.u32 %v2128, 7
        %v2130 = vsub.s32 3, %v2129
        %v2131 = vrot.slane %v1776, %v2130
        %v2132 = vlaneseq
        %v2133 = vshrl.u32 %v2132, 7
        %v2134 = vsub.s32 0, %v2133
        %v2135 = vrot.slane %v1783, %v2134
        %v2136 = vlaneseq
        %v2137 = vshrl.u32 %v2136, 7
        %v2138 = vsub.s32 1, %v2137
        %v2139 = vrot.slane %v1783, %v2138
        %v2140 = vlaneseq
        %v2141 = vshrl.u32 %v2140, 7
        %v2142 = vsub.s32 2, %v2141
        %v2143 = vrot.slane %v1783, %v2142
        %v2144 = vlaneseq
        %v2145 = vshrl.u32 %v2144, 7
        %v2146 = vsub.s32 3, %v2145
        %v2147 = vrot.slane %v1783, %v2146
        %v2148 = vlaneseq
        %v2149 = vshrl.u32 %v2148, 7
        %v2150 = vsub.s32 0, %v2149
        %v2151 = vrot.slane %v1790, %v2150
        %v2152 = vlaneseq
        %v2153 = vshrl.u32 %v2152, 7
        %v2154 = vsub.s32 1, %v2153
        %v2155 = vrot.slane %v1790, %v2154
        %v2156 = vlaneseq
        %v2157 = vshrl.u32 %v2156, 7
        %v2158 = vsub.s32 2, %v2157
        %v2159 = vrot.slane %v1790, %v2158
        %v2160 = vlaneseq
        %v2161 = vshrl.u32 %v2160, 7
        %v2162 = vsub.s32 3, %v2161
        %v2163 = vrot.slane %v1790, %v2162
        %v2164 = vlaneseq
        %v2165 = vshrl.u32 %v2164, 7
        %v2166 = vsub.s32 0, %v2165
        %v2167 = vrot.slane %v1797, %v2166
        %v2168 = vlaneseq
        %v2169 = vshrl.u32 %v2168, 7
        %v2170 = vsub.s32 1, %v2169
        %v2171 = vrot.slane %v1797, %v2170
        %v2172 = vlaneseq
        %v2173 = vshrl.u32 %v2172, 7
        %v2174 = vsub.s32 2, %v2173
        %v2175 = vrot.slane %v1797, %v2174
        %v2176 = vlaneseq
        %v2177 = vshrl.u32 %v2176, 7
        %v2178 = vsub.s32 3, %v2177
        %v2179 = vrot.slane %v1797, %v2178
        %v2180 = vlaneseq
        %v2181 = vshrl.u32 %v2180, 7
        %v2182 = vsub.s32 0, %v2181
        %v2183 = vrot.slane %v1804, %v2182
        %v2184 = vlaneseq
        %v2185 = vshrl.u32 %v2184, 7
        %v2186 = vsub.s32 1, %v2185
        %v2187 = vrot.slane %v1804, %v2186
        %v2188 = vlaneseq
        %v2189 = vshrl.u32 %v2188, 7
        %v2190 = vsub.s32 2, %v2189
        %v2191 = vrot.slane %v1804, %v2190
        %v2192 = vlaneseq
        %v2193 = vshrl.u32 %v2192, 7
        %v2194 = vsub.s32 3, %v2193
        %v2195 = vrot.slane %v1804, %v2194
        %v2196 = vlaneseq
        %v2197 = vshrl.u32 %v2196, 7
        %v2198 = vsub.s32 0, %v2197
        %v2199 = vrot.slane %v1811, %v2198
        %v2200 = vlaneseq
        %v2201 = vshrl.u32 %v2200, 7
        %v2202 = vsub.s32 1, %v2201
        %v2203 = vrot.slane %v1811, %v2202
        %v2204 = vlaneseq
        %v2205 = vshrl.u32 %v2204, 7
        %v2206 = vsub.s32 2, %v2205
        %v2207 = vrot.slane %v1811, %v2206
        %v2208 = vlaneseq
        %v2209 = vshrl.u32 %v2208, 7
        %v2210 = vsub.s32 3, %v2209
        %v2211 = vrot.slane %v1811, %v2210
        %v2212 = vld [vmem:[#allocation13] sm:$0xff]
        %v2213 = vld [vmem:[#allocation13 + $0x8] sm:$0x1]
        %v2214 = vlaneseq
        %v2215 = vshrl.u32 %v2214, 7
        %v2216 = vsub.s32 0, %v2215
        %v2217 = vrot.slane %v2212, %v2216
        %2219 = vbcast.lane.b32.xlu0 %v2217, 256
        %v2220 = vpop.permute.xlu0 %2219
        %v2221 = vlaneseq
        %v2222 = vshrl.u32 %v2221, 7
        %v2223 = vsub.s32 1, %v2222
        %v2224 = vrot.slane %v2212, %v2223
        %2226 = vbcast.lane.b32.xlu0 %v2224, 256
        %v2227 = vpop.permute.xlu0 %2226
        %v2228 = vlaneseq
        %v2229 = vshrl.u32 %v2228, 7
        %v2230 = vsub.s32 2, %v2229
        %v2231 = vrot.slane %v2212, %v2230
        %2233 = vbcast.lane.b32.xlu0 %v2231, 256
        %v2234 = vpop.permute.xlu0 %2233
        %v2235 = vlaneseq
        %v2236 = vshrl.u32 %v2235, 7
        %v2237 = vsub.s32 3, %v2236
        %v2238 = vrot.slane %v2212, %v2237
        %2240 = vbcast.lane.b32.xlu0 %v2238, 256
        %v2241 = vpop.permute.xlu0 %2240
        %v2242 = vlaneseq
        %v2243 = vshrl.u32 %v2242, 7
        %v2244 = vsub.s32 4, %v2243
        %v2245 = vrot.slane %v2212, %v2244
        %2247 = vbcast.lane.b32.xlu0 %v2245, 256
        %v2248 = vpop.permute.xlu0 %2247
        %v2249 = vlaneseq
        %v2250 = vshrl.u32 %v2249, 7
        %v2251 = vsub.s32 5, %v2250
        %v2252 = vrot.slane %v2212, %v2251
        %2254 = vbcast.lane.b32.xlu0 %v2252, 256
        %v2255 = vpop.permute.xlu0 %2254
        %v2256 = vlaneseq
        %v2257 = vshrl.u32 %v2256, 7
        %v2258 = vsub.s32 6, %v2257
        %v2259 = vrot.slane %v2212, %v2258
        %2261 = vbcast.lane.b32.xlu0 %v2259, 256
        %v2262 = vpop.permute.xlu0 %2261
        %v2263 = vlaneseq
        %v2264 = vshrl.u32 %v2263, 7
        %v2265 = vsub.s32 7, %v2264
        %v2266 = vrot.slane %v2212, %v2265
        %2268 = vbcast.lane.b32.xlu0 %v2266, 256
        %v2269 = vpop.permute.xlu0 %2268
        %v2270 = vlaneseq
        %v2271 = vshrl.u32 %v2270, 7
        %v2272 = vsub.s32 0, %v2271
        %v2273 = vrot.slane %v2213, %v2272
        %2275 = vbcast.lane.b32.xlu0 %v2273, 256
        %v2276 = vpop.permute.xlu0 %2275
        %v2277 = vlaneseq
        %v2278 = vshrl.u32 %v2277, 7
        %v2279 = vsub.s32 0, %v2278
        %v2280 = vrot.slane %v2220, %v2279
        %v2281 = vlaneseq
        %v2282 = vshrl.u32 %v2281, 7
        %v2283 = vsub.s32 1, %v2282
        %v2284 = vrot.slane %v2220, %v2283
        %v2285 = vlaneseq
        %v2286 = vshrl.u32 %v2285, 7
        %v2287 = vsub.s32 2, %v2286
        %v2288 = vrot.slane %v2220, %v2287
        %v2289 = vlaneseq
        %v2290 = vshrl.u32 %v2289, 7
        %v2291 = vsub.s32 3, %v2290
        %v2292 = vrot.slane %v2220, %v2291
        %v2293 = vlaneseq
        %v2294 = vshrl.u32 %v2293, 7
        %v2295 = vsub.s32 0, %v2294
        %v2296 = vrot.slane %v2227, %v2295
        %v2297 = vlaneseq
        %v2298 = vshrl.u32 %v2297, 7
        %v2299 = vsub.s32 1, %v2298
        %v2300 = vrot.slane %v2227, %v2299
        %v2301 = vlaneseq
        %v2302 = vshrl.u32 %v2301, 7
        %v2303 = vsub.s32 2, %v2302
        %v2304 = vrot.slane %v2227, %v2303
        %v2305 = vlaneseq
        %v2306 = vshrl.u32 %v2305, 7
        %v2307 = vsub.s32 3, %v2306
        %v2308 = vrot.slane %v2227, %v2307
        %v2309 = vlaneseq
        %v2310 = vshrl.u32 %v2309, 7
        %v2311 = vsub.s32 0, %v2310
        %v2312 = vrot.slane %v2234, %v2311
        %v2313 = vlaneseq
        %v2314 = vshrl.u32 %v2313, 7
        %v2315 = vsub.s32 1, %v2314
        %v2316 = vrot.slane %v2234, %v2315
        %v2317 = vlaneseq
        %v2318 = vshrl.u32 %v2317, 7
        %v2319 = vsub.s32 2, %v2318
        %v2320 = vrot.slane %v2234, %v2319
        %v2321 = vlaneseq
        %v2322 = vshrl.u32 %v2321, 7
        %v2323 = vsub.s32 3, %v2322
        %v2324 = vrot.slane %v2234, %v2323
        %v2325 = vlaneseq
        %v2326 = vshrl.u32 %v2325, 7
        %v2327 = vsub.s32 0, %v2326
        %v2328 = vrot.slane %v2241, %v2327
        %v2329 = vlaneseq
        %v2330 = vshrl.u32 %v2329, 7
        %v2331 = vsub.s32 1, %v2330
        %v2332 = vrot.slane %v2241, %v2331
        %v2333 = vlaneseq
        %v2334 = vshrl.u32 %v2333, 7
        %v2335 = vsub.s32 2, %v2334
        %v2336 = vrot.slane %v2241, %v2335
        %v2337 = vlaneseq
        %v2338 = vshrl.u32 %v2337, 7
        %v2339 = vsub.s32 3, %v2338
        %v2340 = vrot.slane %v2241, %v2339
        %v2341 = vlaneseq
        %v2342 = vshrl.u32 %v2341, 7
        %v2343 = vsub.s32 0, %v2342
        %v2344 = vrot.slane %v2248, %v2343
        %v2345 = vlaneseq
        %v2346 = vshrl.u32 %v2345, 7
        %v2347 = vsub.s32 1, %v2346
        %v2348 = vrot.slane %v2248, %v2347
        %v2349 = vlaneseq
        %v2350 = vshrl.u32 %v2349, 7
        %v2351 = vsub.s32 2, %v2350
        %v2352 = vrot.slane %v2248, %v2351
        %v2353 = vlaneseq
        %v2354 = vshrl.u32 %v2353, 7
        %v2355 = vsub.s32 3, %v2354
        %v2356 = vrot.slane %v2248, %v2355
        %v2357 = vlaneseq
        %v2358 = vshrl.u32 %v2357, 7
        %v2359 = vsub.s32 0, %v2358
        %v2360 = vrot.slane %v2255, %v2359
        %v2361 = vlaneseq
        %v2362 = vshrl.u32 %v2361, 7
        %v2363 = vsub.s32 1, %v2362
        %v2364 = vrot.slane %v2255, %v2363
        %v2365 = vlaneseq
        %v2366 = vshrl.u32 %v2365, 7
        %v2367 = vsub.s32 2, %v2366
        %v2368 = vrot.slane %v2255, %v2367
        %v2369 = vlaneseq
        %v2370 = vshrl.u32 %v2369, 7
        %v2371 = vsub.s32 3, %v2370
        %v2372 = vrot.slane %v2255, %v2371
        %v2373 = vlaneseq
        %v2374 = vshrl.u32 %v2373, 7
        %v2375 = vsub.s32 0, %v2374
        %v2376 = vrot.slane %v2262, %v2375
        %v2377 = vlaneseq
        %v2378 = vshrl.u32 %v2377, 7
        %v2379 = vsub.s32 1, %v2378
        %v2380 = vrot.slane %v2262, %v2379
        %v2381 = vlaneseq
        %v2382 = vshrl.u32 %v2381, 7
        %v2383 = vsub.s32 2, %v2382
        %v2384 = vrot.slane %v2262, %v2383
        %v2385 = vlaneseq
        %v2386 = vshrl.u32 %v2385, 7
        %v2387 = vsub.s32 3, %v2386
        %v2388 = vrot.slane %v2262, %v2387
        %v2389 = vlaneseq
        %v2390 = vshrl.u32 %v2389, 7
        %v2391 = vsub.s32 0, %v2390
        %v2392 = vrot.slane %v2269, %v2391
        %v2393 = vlaneseq
        %v2394 = vshrl.u32 %v2393, 7
        %v2395 = vsub.s32 1, %v2394
        %v2396 = vrot.slane %v2269, %v2395
        %v2397 = vlaneseq
        %v2398 = vshrl.u32 %v2397, 7
        %v2399 = vsub.s32 2, %v2398
        %v2400 = vrot.slane %v2269, %v2399
        %v2401 = vlaneseq
        %v2402 = vshrl.u32 %v2401, 7
        %v2403 = vsub.s32 3, %v2402
        %v2404 = vrot.slane %v2269, %v2403
        %v2405 = vlaneseq
        %v2406 = vshrl.u32 %v2405, 7
        %v2407 = vsub.s32 0, %v2406
        %v2408 = vrot.slane %v2276, %v2407
        %v2409 = vlaneseq
        %v2410 = vshrl.u32 %v2409, 7
        %v2411 = vsub.s32 1, %v2410
        %v2412 = vrot.slane %v2276, %v2411
        %v2413 = vlaneseq
        %v2414 = vshrl.u32 %v2413, 7
        %v2415 = vsub.s32 2, %v2414
        %v2416 = vrot.slane %v2276, %v2415
        %v2417 = vlaneseq
        %v2418 = vshrl.u32 %v2417, 7
        %v2419 = vsub.s32 3, %v2418
        %v2420 = vrot.slane %v2276, %v2419
        %v2421 = vld [vmem:[#allocation14] sm:$0xff]
        %v2422 = vld [vmem:[#allocation14 + $0x8] sm:$0x1]
        %v2423 = vlaneseq
        %v2424 = vshrl.u32 %v2423, 7
        %v2425 = vsub.s32 0, %v2424
        %v2426 = vrot.slane %v2421, %v2425
        %2428 = vbcast.lane.b32.xlu0 %v2426, 256
        %v2429 = vpop.permute.xlu0 %2428
        %v2430 = vlaneseq
        %v2431 = vshrl.u32 %v2430, 7
        %v2432 = vsub.s32 1, %v2431
        %v2433 = vrot.slane %v2421, %v2432
        %2435 = vbcast.lane.b32.xlu0 %v2433, 256
        %v2436 = vpop.permute.xlu0 %2435
        %v2437 = vlaneseq
        %v2438 = vshrl.u32 %v2437, 7
        %v2439 = vsub.s32 2, %v2438
        %v2440 = vrot.slane %v2421, %v2439
        %2442 = vbcast.lane.b32.xlu0 %v2440, 256
        %v2443 = vpop.permute.xlu0 %2442
        %v2444 = vlaneseq
        %v2445 = vshrl.u32 %v2444, 7
        %v2446 = vsub.s32 3, %v2445
        %v2447 = vrot.slane %v2421, %v2446
        %2449 = vbcast.lane.b32.xlu0 %v2447, 256
        %v2450 = vpop.permute.xlu0 %2449
        %v2451 = vlaneseq
        %v2452 = vshrl.u32 %v2451, 7
        %v2453 = vsub.s32 4, %v2452
        %v2454 = vrot.slane %v2421, %v2453
        %2456 = vbcast.lane.b32.xlu0 %v2454, 256
        %v2457 = vpop.permute.xlu0 %2456
        %v2458 = vlaneseq
        %v2459 = vshrl.u32 %v2458, 7
        %v2460 = vsub.s32 5, %v2459
        %v2461 = vrot.slane %v2421, %v2460
        %2463 = vbcast.lane.b32.xlu0 %v2461, 256
        %v2464 = vpop.permute.xlu0 %2463
        %v2465 = vlaneseq
        %v2466 = vshrl.u32 %v2465, 7
        %v2467 = vsub.s32 6, %v2466
        %v2468 = vrot.slane %v2421, %v2467
        %2470 = vbcast.lane.b32.xlu0 %v2468, 256
        %v2471 = vpop.permute.xlu0 %2470
        %v2472 = vlaneseq
        %v2473 = vshrl.u32 %v2472, 7
        %v2474 = vsub.s32 7, %v2473
        %v2475 = vrot.slane %v2421, %v2474
        %2477 = vbcast.lane.b32.xlu0 %v2475, 256
        %v2478 = vpop.permute.xlu0 %2477
        %v2479 = vlaneseq
        %v2480 = vshrl.u32 %v2479, 7
        %v2481 = vsub.s32 0, %v2480
        %v2482 = vrot.slane %v2422, %v2481
        %2484 = vbcast.lane.b32.xlu0 %v2482, 256
        %v2485 = vpop.permute.xlu0 %2484
        %v2486 = vlaneseq
        %v2487 = vshrl.u32 %v2486, 7
        %v2488 = vsub.s32 0, %v2487
        %v2489 = vrot.slane %v2429, %v2488
        %v2490 = vlaneseq
        %v2491 = vshrl.u32 %v2490, 7
        %v2492 = vsub.s32 1, %v2491
        %v2493 = vrot.slane %v2429, %v2492
        %v2494 = vlaneseq
        %v2495 = vshrl.u32 %v2494, 7
        %v2496 = vsub.s32 2, %v2495
        %v2497 = vrot.slane %v2429, %v2496
        %v2498 = vlaneseq
        %v2499 = vshrl.u32 %v2498, 7
        %v2500 = vsub.s32 3, %v2499
        %v2501 = vrot.slane %v2429, %v2500
        %v2502 = vlaneseq
        %v2503 = vshrl.u32 %v2502, 7
        %v2504 = vsub.s32 0, %v2503
        %v2505 = vrot.slane %v2436, %v2504
        %v2506 = vlaneseq
        %v2507 = vshrl.u32 %v2506, 7
        %v2508 = vsub.s32 1, %v2507
        %v2509 = vrot.slane %v2436, %v2508
        %v2510 = vlaneseq
        %v2511 = vshrl.u32 %v2510, 7
        %v2512 = vsub.s32 2, %v2511
        %v2513 = vrot.slane %v2436, %v2512
        %v2514 = vlaneseq
        %v2515 = vshrl.u32 %v2514, 7
        %v2516 = vsub.s32 3, %v2515
        %v2517 = vrot.slane %v2436, %v2516
        %v2518 = vlaneseq
        %v2519 = vshrl.u32 %v2518, 7
        %v2520 = vsub.s32 0, %v2519
        %v2521 = vrot.slane %v2443, %v2520
        %v2522 = vlaneseq
        %v2523 = vshrl.u32 %v2522, 7
        %v2524 = vsub.s32 1, %v2523
        %v2525 = vrot.slane %v2443, %v2524
        %v2526 = vlaneseq
        %v2527 = vshrl.u32 %v2526, 7
        %v2528 = vsub.s32 2, %v2527
        %v2529 = vrot.slane %v2443, %v2528
        %v2530 = vlaneseq
        %v2531 = vshrl.u32 %v2530, 7
        %v2532 = vsub.s32 3, %v2531
        %v2533 = vrot.slane %v2443, %v2532
        %v2534 = vlaneseq
        %v2535 = vshrl.u32 %v2534, 7
        %v2536 = vsub.s32 0, %v2535
        %v2537 = vrot.slane %v2450, %v2536
        %v2538 = vlaneseq
        %v2539 = vshrl.u32 %v2538, 7
        %v2540 = vsub.s32 1, %v2539
        %v2541 = vrot.slane %v2450, %v2540
        %v2542 = vlaneseq
        %v2543 = vshrl.u32 %v2542, 7
        %v2544 = vsub.s32 2, %v2543
        %v2545 = vrot.slane %v2450, %v2544
        %v2546 = vlaneseq
        %v2547 = vshrl.u32 %v2546, 7
        %v2548 = vsub.s32 3, %v2547
        %v2549 = vrot.slane %v2450, %v2548
        %v2550 = vlaneseq
        %v2551 = vshrl.u32 %v2550, 7
        %v2552 = vsub.s32 0, %v2551
        %v2553 = vrot.slane %v2457, %v2552
        %v2554 = vlaneseq
        %v2555 = vshrl.u32 %v2554, 7
        %v2556 = vsub.s32 1, %v2555
        %v2557 = vrot.slane %v2457, %v2556
        %v2558 = vlaneseq
        %v2559 = vshrl.u32 %v2558, 7
        %v2560 = vsub.s32 2, %v2559
        %v2561 = vrot.slane %v2457, %v2560
        %v2562 = vlaneseq
        %v2563 = vshrl.u32 %v2562, 7
        %v2564 = vsub.s32 3, %v2563
        %v2565 = vrot.slane %v2457, %v2564
        %v2566 = vlaneseq
        %v2567 = vshrl.u32 %v2566, 7
        %v2568 = vsub.s32 0, %v2567
        %v2569 = vrot.slane %v2464, %v2568
        %v2570 = vlaneseq
        %v2571 = vshrl.u32 %v2570, 7
        %v2572 = vsub.s32 1, %v2571
        %v2573 = vrot.slane %v2464, %v2572
        %v2574 = vlaneseq
        %v2575 = vshrl.u32 %v2574, 7
        %v2576 = vsub.s32 2, %v2575
        %v2577 = vrot.slane %v2464, %v2576
        %v2578 = vlaneseq
        %v2579 = vshrl.u32 %v2578, 7
        %v2580 = vsub.s32 3, %v2579
        %v2581 = vrot.slane %v2464, %v2580
        %v2582 = vlaneseq
        %v2583 = vshrl.u32 %v2582, 7
        %v2584 = vsub.s32 0, %v2583
        %v2585 = vrot.slane %v2471, %v2584
        %v2586 = vlaneseq
        %v2587 = vshrl.u32 %v2586, 7
        %v2588 = vsub.s32 1, %v2587
        %v2589 = vrot.slane %v2471, %v2588
        %v2590 = vlaneseq
        %v2591 = vshrl.u32 %v2590, 7
        %v2592 = vsub.s32 2, %v2591
        %v2593 = vrot.slane %v2471, %v2592
        %v2594 = vlaneseq
        %v2595 = vshrl.u32 %v2594, 7
        %v2596 = vsub.s32 3, %v2595
        %v2597 = vrot.slane %v2471, %v2596
        %v2598 = vlaneseq
        %v2599 = vshrl.u32 %v2598, 7
        %v2600 = vsub.s32 0, %v2599
        %v2601 = vrot.slane %v2478, %v2600
        %v2602 = vlaneseq
        %v2603 = vshrl.u32 %v2602, 7
        %v2604 = vsub.s32 1, %v2603
        %v2605 = vrot.slane %v2478, %v2604
        %v2606 = vlaneseq
        %v2607 = vshrl.u32 %v2606, 7
        %v2608 = vsub.s32 2, %v2607
        %v2609 = vrot.slane %v2478, %v2608
        %v2610 = vlaneseq
        %v2611 = vshrl.u32 %v2610, 7
        %v2612 = vsub.s32 3, %v2611
        %v2613 = vrot.slane %v2478, %v2612
        %v2614 = vlaneseq
        %v2615 = vshrl.u32 %v2614, 7
        %v2616 = vsub.s32 0, %v2615
        %v2617 = vrot.slane %v2485, %v2616
        %v2618 = vlaneseq
        %v2619 = vshrl.u32 %v2618, 7
        %v2620 = vsub.s32 1, %v2619
        %v2621 = vrot.slane %v2485, %v2620
        %v2622 = vlaneseq
        %v2623 = vshrl.u32 %v2622, 7
        %v2624 = vsub.s32 2, %v2623
        %v2625 = vrot.slane %v2485, %v2624
        %v2626 = vlaneseq
        %v2627 = vshrl.u32 %v2626, 7
        %v2628 = vsub.s32 3, %v2627
        %v2629 = vrot.slane %v2485, %v2628
        %v2630 = vmul.f32 %v1236, %v1038
        %v2631 = vmul.f32 %v1236, %v992
        %v2632 = vmul.f32 %v1240, %v1039
        %v2633 = vmul.f32 %v1240, %v995
        %v2634 = vmul.f32 %v1244, %v1040
        %v2635 = vmul.f32 %v1244, %v998
        %v2636 = vmul.f32 %v1248, %v1041
        %v2637 = vmul.f32 %v1248, %v1001
        %v2638 = vadd.f32 %v2630, 0.0
        %v2639 = vadd.f32 %v2631, 0.0
        %v2640 = vadd.f32 %v2632, 0.0
        %v2641 = vadd.f32 %v2633, 0.0
        %v2642 = vadd.f32 %v2634, 0.0
        %v2643 = vadd.f32 %v2635, 0.0
        %v2644 = vadd.f32 %v2636, 0.0
        %v2645 = vadd.f32 %v2637, 0.0
        %v2646 = vmul.f32 %v1815, %v1042
        %v2647 = vmul.f32 %v1815, %v1004
        %v2648 = vmul.f32 %v1819, %v1043
        %v2649 = vmul.f32 %v1819, %v1007
        %v2650 = vmul.f32 %v1823, %v1044
        %v2651 = vmul.f32 %v1823, %v1010
        %v2652 = vmul.f32 %v1827, %v1045
        %v2653 = vmul.f32 %v1827, %v1013
        %v2654 = vadd.f32 %v2638, %v2646
        %v2655 = vadd.f32 %v2639, %v2647
        %v2656 = vadd.f32 %v2640, %v2648
        %v2657 = vadd.f32 %v2641, %v2649
        %v2658 = vadd.f32 %v2642, %v2650
        %v2659 = vadd.f32 %v2643, %v2651
        %v2660 = vadd.f32 %v2644, %v2652
        %v2661 = vadd.f32 %v2645, %v2653
        %v2662 = vmul.f32 %v1252, %v1038
        %v2663 = vmul.f32 %v1252, %v992
        %v2664 = vmul.f32 %v1256, %v1039
        %v2665 = vmul.f32 %v1256, %v995
        %v2666 = vmul.f32 %v1260, %v1040
        %v2667 = vmul.f32 %v1260, %v998
        %v2668 = vmul.f32 %v1264, %v1041
        %v2669 = vmul.f32 %v1264, %v1001
        %2678 = vrot.lane.b32.xlu0 %v2662, 127
        %v2679 = vpop.permute.xlu0 %2678
        %2680 = vrot.lane.b32.xlu0 %v2663, 127
        %v2681 = vpop.permute.xlu0 %2680
        %2682 = vrot.lane.b32.xlu0 %v2664, 127
        %v2683 = vpop.permute.xlu0 %2682
        %2684 = vrot.lane.b32.xlu0 %v2665, 127
        %v2685 = vpop.permute.xlu0 %2684
        %2686 = vrot.lane.b32.xlu0 %v2666, 127
        %v2687 = vpop.permute.xlu0 %2686
        %2688 = vrot.lane.b32.xlu0 %v2667, 127
        %v2689 = vpop.permute.xlu0 %2688
        %2690 = vrot.lane.b32.xlu0 %v2668, 127
        %v2691 = vpop.permute.xlu0 %2690
        %2692 = vrot.lane.b32.xlu0 %v2669, 127
        %v2693 = vpop.permute.xlu0 %2692
        %v2702 = vadd.f32 %v2654, %v2679
        %v2703 = vadd.f32 %v2655, %v2681
        %v2704 = vadd.f32 %v2656, %v2683
        %v2705 = vadd.f32 %v2657, %v2685
        %v2706 = vadd.f32 %v2658, %v2687
        %v2707 = vadd.f32 %v2659, %v2689
        %v2708 = vadd.f32 %v2660, %v2691
        %v2709 = vadd.f32 %v2661, %v2693
        %v2710 = vmul.f32 %v1831, %v1042
        %v2711 = vmul.f32 %v1831, %v1004
        %v2712 = vmul.f32 %v1835, %v1043
        %v2713 = vmul.f32 %v1835, %v1007
        %v2714 = vmul.f32 %v1839, %v1044
        %v2715 = vmul.f32 %v1839, %v1010
        %v2716 = vmul.f32 %v1843, %v1045
        %v2717 = vmul.f32 %v1843, %v1013
        %2726 = vrot.lane.b32.xlu0 %v2710, 127
        %v2727 = vpop.permute.xlu0 %2726
        %2728 = vrot.lane.b32.xlu0 %v2711, 127
        %v2729 = vpop.permute.xlu0 %2728
        %2730 = vrot.lane.b32.xlu0 %v2712, 127
        %v2731 = vpop.permute.xlu0 %2730
        %2732 = vrot.lane.b32.xlu0 %v2713, 127
        %v2733 = vpop.permute.xlu0 %2732
        %2734 = vrot.lane.b32.xlu0 %v2714, 127
        %v2735 = vpop.permute.xlu0 %2734
        %2736 = vrot.lane.b32.xlu0 %v2715, 127
        %v2737 = vpop.permute.xlu0 %2736
        %2738 = vrot.lane.b32.xlu0 %v2716, 127
        %v2739 = vpop.permute.xlu0 %2738
        %2740 = vrot.lane.b32.xlu0 %v2717, 127
        %v2741 = vpop.permute.xlu0 %2740
        %v2750 = vadd.f32 %v2702, %v2727
        %v2751 = vadd.f32 %v2703, %v2729
        %v2752 = vadd.f32 %v2704, %v2731
        %v2753 = vadd.f32 %v2705, %v2733
        %v2754 = vadd.f32 %v2706, %v2735
        %v2755 = vadd.f32 %v2707, %v2737
        %v2756 = vadd.f32 %v2708, %v2739
        %v2757 = vadd.f32 %v2709, %v2741
        %v2758 = vmul.f32 %v1268, %v1038
        %v2759 = vmul.f32 %v1268, %v992
        %v2760 = vmul.f32 %v1272, %v1039
        %v2761 = vmul.f32 %v1272, %v995
        %v2762 = vmul.f32 %v1276, %v1040
        %v2763 = vmul.f32 %v1276, %v998
        %v2764 = vmul.f32 %v1280, %v1041
        %v2765 = vmul.f32 %v1280, %v1001
        %2774 = vrot.lane.b32.xlu0 %v2758, 126
        %v2775 = vpop.permute.xlu0 %2774
        %2776 = vrot.lane.b32.xlu0 %v2759, 126
        %v2777 = vpop.permute.xlu0 %2776
        %2778 = vrot.lane.b32.xlu0 %v2760, 126
        %v2779 = vpop.permute.xlu0 %2778
        %2780 = vrot.lane.b32.xlu0 %v2761, 126
        %v2781 = vpop.permute.xlu0 %2780
        %2782 = vrot.lane.b32.xlu0 %v2762, 126
        %v2783 = vpop.permute.xlu0 %2782
        %2784 = vrot.lane.b32.xlu0 %v2763, 126
        %v2785 = vpop.permute.xlu0 %2784
        %2786 = vrot.lane.b32.xlu0 %v2764, 126
        %v2787 = vpop.permute.xlu0 %2786
        %2788 = vrot.lane.b32.xlu0 %v2765, 126
        %v2789 = vpop.permute.xlu0 %2788
        %v2798 = vadd.f32 %v2750, %v2775
        %v2799 = vadd.f32 %v2751, %v2777
        %v2800 = vadd.f32 %v2752, %v2779
        %v2801 = vadd.f32 %v2753, %v2781
        %v2802 = vadd.f32 %v2754, %v2783
        %v2803 = vadd.f32 %v2755, %v2785
        %v2804 = vadd.f32 %v2756, %v2787
        %v2805 = vadd.f32 %v2757, %v2789
        %v2806 = vmul.f32 %v1847, %v1042
        %v2807 = vmul.f32 %v1847, %v1004
        %v2808 = vmul.f32 %v1851, %v1043
        %v2809 = vmul.f32 %v1851, %v1007
        %v2810 = vmul.f32 %v1855, %v1044
        %v2811 = vmul.f32 %v1855, %v1010
        %v2812 = vmul.f32 %v1859, %v1045
        %v2813 = vmul.f32 %v1859, %v1013
        %2822 = vrot.lane.b32.xlu0 %v2806, 126
        %v2823 = vpop.permute.xlu0 %2822
        %2824 = vrot.lane.b32.xlu0 %v2807, 126
        %v2825 = vpop.permute.xlu0 %2824
        %2826 = vrot.lane.b32.xlu0 %v2808, 126
        %v2827 = vpop.permute.xlu0 %2826
        %2828 = vrot.lane.b32.xlu0 %v2809, 126
        %v2829 = vpop.permute.xlu0 %2828
        %2830 = vrot.lane.b32.xlu0 %v2810, 126
        %v2831 = vpop.permute.xlu0 %2830
        %2832 = vrot.lane.b32.xlu0 %v2811, 126
        %v2833 = vpop.permute.xlu0 %2832
        %2834 = vrot.lane.b32.xlu0 %v2812, 126
        %v2835 = vpop.permute.xlu0 %2834
        %2836 = vrot.lane.b32.xlu0 %v2813, 126
        %v2837 = vpop.permute.xlu0 %2836
        %v2846 = vadd.f32 %v2798, %v2823
        %v2847 = vadd.f32 %v2799, %v2825
        %v2848 = vadd.f32 %v2800, %v2827
        %v2849 = vadd.f32 %v2801, %v2829
        %v2850 = vadd.f32 %v2802, %v2831
        %v2851 = vadd.f32 %v2803, %v2833
        %v2852 = vadd.f32 %v2804, %v2835
        %v2853 = vadd.f32 %v2805, %v2837
        %v2854 = vmul.f32 %v1284, %v1038
        %v2855 = vmul.f32 %v1284, %v992
        %v2856 = vmul.f32 %v1288, %v1039
        %v2857 = vmul.f32 %v1288, %v995
        %v2858 = vmul.f32 %v1292, %v1040
        %v2859 = vmul.f32 %v1292, %v998
        %v2860 = vmul.f32 %v1296, %v1041
        %v2861 = vmul.f32 %v1296, %v1001
        %2870 = vrot.lane.b32.xlu0 %v2854, 125
        %v2871 = vpop.permute.xlu0 %2870
        %2872 = vrot.lane.b32.xlu0 %v2855, 125
        %v2873 = vpop.permute.xlu0 %2872
        %2874 = vrot.lane.b32.xlu0 %v2856, 125
        %v2875 = vpop.permute.xlu0 %2874
        %2876 = vrot.lane.b32.xlu0 %v2857, 125
        %v2877 = vpop.permute.xlu0 %2876
        %2878 = vrot.lane.b32.xlu0 %v2858, 125
        %v2879 = vpop.permute.xlu0 %2878
        %2880 = vrot.lane.b32.xlu0 %v2859, 125
        %v2881 = vpop.permute.xlu0 %2880
        %2882 = vrot.lane.b32.xlu0 %v2860, 125
        %v2883 = vpop.permute.xlu0 %2882
        %2884 = vrot.lane.b32.xlu0 %v2861, 125
        %v2885 = vpop.permute.xlu0 %2884
        %v2894 = vadd.f32 %v2846, %v2871
        %v2895 = vadd.f32 %v2847, %v2873
        %v2896 = vadd.f32 %v2848, %v2875
        %v2897 = vadd.f32 %v2849, %v2877
        %v2898 = vadd.f32 %v2850, %v2879
        %v2899 = vadd.f32 %v2851, %v2881
        %v2900 = vadd.f32 %v2852, %v2883
        %v2901 = vadd.f32 %v2853, %v2885
        %v2902 = vmul.f32 %v1863, %v1042
        %v2903 = vmul.f32 %v1863, %v1004
        %v2904 = vmul.f32 %v1867, %v1043
        %v2905 = vmul.f32 %v1867, %v1007
        %v2906 = vmul.f32 %v1871, %v1044
        %v2907 = vmul.f32 %v1871, %v1010
        %v2908 = vmul.f32 %v1875, %v1045
        %v2909 = vmul.f32 %v1875, %v1013
        %2918 = vrot.lane.b32.xlu0 %v2902, 125
        %v2919 = vpop.permute.xlu0 %2918
        %2920 = vrot.lane.b32.xlu0 %v2903, 125
        %v2921 = vpop.permute.xlu0 %2920
        %2922 = vrot.lane.b32.xlu0 %v2904, 125
        %v2923 = vpop.permute.xlu0 %2922
        %2924 = vrot.lane.b32.xlu0 %v2905, 125
        %v2925 = vpop.permute.xlu0 %2924
        %2926 = vrot.lane.b32.xlu0 %v2906, 125
        %v2927 = vpop.permute.xlu0 %2926
        %2928 = vrot.lane.b32.xlu0 %v2907, 125
        %v2929 = vpop.permute.xlu0 %2928
        %2930 = vrot.lane.b32.xlu0 %v2908, 125
        %v2931 = vpop.permute.xlu0 %2930
        %2932 = vrot.lane.b32.xlu0 %v2909, 125
        %v2933 = vpop.permute.xlu0 %2932
        %v2942 = vadd.f32 %v2894, %v2919
        %v2943 = vadd.f32 %v2895, %v2921
        %v2944 = vadd.f32 %v2896, %v2923
        %v2945 = vadd.f32 %v2897, %v2925
        %v2946 = vadd.f32 %v2898, %v2927
        %v2947 = vadd.f32 %v2899, %v2929
        %v2948 = vadd.f32 %v2900, %v2931
        %v2949 = vadd.f32 %v2901, %v2933
        %v2950 = vmul.f32 %v1300, %v1038
        %v2951 = vmul.f32 %v1300, %v992
        %v2952 = vmul.f32 %v1304, %v1039
        %v2953 = vmul.f32 %v1304, %v995
        %v2954 = vmul.f32 %v1308, %v1040
        %v2955 = vmul.f32 %v1308, %v998
        %v2956 = vmul.f32 %v1312, %v1041
        %v2957 = vmul.f32 %v1312, %v1001
        %2966 = vrot.lane.b32.xlu0 %v2950, 124
        %v2967 = vpop.permute.xlu0 %2966
        %2968 = vrot.lane.b32.xlu0 %v2951, 124
        %v2969 = vpop.permute.xlu0 %2968
        %2970 = vrot.lane.b32.xlu0 %v2952, 124
        %v2971 = vpop.permute.xlu0 %2970
        %2972 = vrot.lane.b32.xlu0 %v2953, 124
        %v2973 = vpop.permute.xlu0 %2972
        %2974 = vrot.lane.b32.xlu0 %v2954, 124
        %v2975 = vpop.permute.xlu0 %2974
        %2976 = vrot.lane.b32.xlu0 %v2955, 124
        %v2977 = vpop.permute.xlu0 %2976
        %2978 = vrot.lane.b32.xlu0 %v2956, 124
        %v2979 = vpop.permute.xlu0 %2978
        %2980 = vrot.lane.b32.xlu0 %v2957, 124
        %v2981 = vpop.permute.xlu0 %2980
        %v2990 = vadd.f32 %v2942, %v2967
        %v2991 = vadd.f32 %v2943, %v2969
        %v2992 = vadd.f32 %v2944, %v2971
        %v2993 = vadd.f32 %v2945, %v2973
        %v2994 = vadd.f32 %v2946, %v2975
        %v2995 = vadd.f32 %v2947, %v2977
        %v2996 = vadd.f32 %v2948, %v2979
        %v2997 = vadd.f32 %v2949, %v2981
        %v2998 = vmul.f32 %v1879, %v1042
        %v2999 = vmul.f32 %v1879, %v1004
        %v3000 = vmul.f32 %v1883, %v1043
        %v3001 = vmul.f32 %v1883, %v1007
        %v3002 = vmul.f32 %v1887, %v1044
        %v3003 = vmul.f32 %v1887, %v1010
        %v3004 = vmul.f32 %v1891, %v1045
        %v3005 = vmul.f32 %v1891, %v1013
        %3014 = vrot.lane.b32.xlu0 %v2998, 124
        %v3015 = vpop.permute.xlu0 %3014
        %3016 = vrot.lane.b32.xlu0 %v2999, 124
        %v3017 = vpop.permute.xlu0 %3016
        %3018 = vrot.lane.b32.xlu0 %v3000, 124
        %v3019 = vpop.permute.xlu0 %3018
        %3020 = vrot.lane.b32.xlu0 %v3001, 124
        %v3021 = vpop.permute.xlu0 %3020
        %3022 = vrot.lane.b32.xlu0 %v3002, 124
        %v3023 = vpop.permute.xlu0 %3022
        %3024 = vrot.lane.b32.xlu0 %v3003, 124
        %v3025 = vpop.permute.xlu0 %3024
        %3026 = vrot.lane.b32.xlu0 %v3004, 124
        %v3027 = vpop.permute.xlu0 %3026
        %3028 = vrot.lane.b32.xlu0 %v3005, 124
        %v3029 = vpop.permute.xlu0 %3028
        %v3038 = vadd.f32 %v2990, %v3015
        %v3039 = vadd.f32 %v2991, %v3017
        %v3040 = vadd.f32 %v2992, %v3019
        %v3041 = vadd.f32 %v2993, %v3021
        %v3042 = vadd.f32 %v2994, %v3023
        %v3043 = vadd.f32 %v2995, %v3025
        %v3044 = vadd.f32 %v2996, %v3027
        %v3045 = vadd.f32 %v2997, %v3029
        %v3046 = vmul.f32 %v1316, %v1038
        %v3047 = vmul.f32 %v1316, %v992
        %v3048 = vmul.f32 %v1316, %v1046
        %v3049 = vmul.f32 %v1320, %v1039
        %v3050 = vmul.f32 %v1320, %v995
        %v3051 = vmul.f32 %v1320, %v1047
        %v3052 = vmul.f32 %v1324, %v1040
        %v3053 = vmul.f32 %v1324, %v998
        %v3054 = vmul.f32 %v1324, %v1048
        %v3055 = vmul.f32 %v1328, %v1041
        %v3056 = vmul.f32 %v1328, %v1001
        %v3057 = vmul.f32 %v1328, %v1049
        %vm3070 = vcmask 1046528
        %v3071 = vrot.slane %v3046, 1
        %v3072 = vrot.slane %v3047, 1
        %v3073 = vsel %vm3070, %v3071, %v3072
        %v3074 = vrot.slane %v3048, 1
        %v3075 = vsel %vm3070, %v3072, %v3074
        %v3076 = vrot.slane %v3049, 1
        %v3077 = vrot.slane %v3050, 1
        %v3078 = vsel %vm3070, %v3076, %v3077
        %v3079 = vrot.slane %v3051, 1
        %v3080 = vsel %vm3070, %v3077, %v3079
        %v3081 = vrot.slane %v3052, 1
        %v3082 = vrot.slane %v3053, 1
        %v3083 = vsel %vm3070, %v3081, %v3082
        %v3084 = vrot.slane %v3054, 1
        %v3085 = vsel %vm3070, %v3082, %v3084
        %v3086 = vrot.slane %v3055, 1
        %v3087 = vrot.slane %v3056, 1
        %v3088 = vsel %vm3070, %v3086, %v3087
        %v3089 = vrot.slane %v3057, 1
        %v3090 = vsel %vm3070, %v3087, %v3089
        %v3099 = vadd.f32 %v3038, %v3073
        %v3100 = vadd.f32 %v3039, %v3075
        %v3101 = vadd.f32 %v3040, %v3078
        %v3102 = vadd.f32 %v3041, %v3080
        %v3103 = vadd.f32 %v3042, %v3083
        %v3104 = vadd.f32 %v3043, %v3085
        %v3105 = vadd.f32 %v3044, %v3088
        %v3106 = vadd.f32 %v3045, %v3090
        %v3107 = vmul.f32 %v1895, %v1042
        %v3108 = vmul.f32 %v1895, %v1004
        %v3109 = vmul.f32 %v1895, %v1050
        %v3110 = vmul.f32 %v1899, %v1043
        %v3111 = vmul.f32 %v1899, %v1007
        %v3112 = vmul.f32 %v1899, %v1051
        %v3113 = vmul.f32 %v1903, %v1044
        %v3114 = vmul.f32 %v1903, %v1010
        %v3115 = vmul.f32 %v1903, %v1052
        %v3116 = vmul.f32 %v1907, %v1045
        %v3117 = vmul.f32 %v1907, %v1013
        %v3118 = vmul.f32 %v1907, %v1053
        %v3131 = vrot.slane %v3107, 1
        %v3132 = vrot.slane %v3108, 1
        %v3133 = vsel %vm3070, %v3131, %v3132
        %v3134 = vrot.slane %v3109, 1
        %v3135 = vsel %vm3070, %v3132, %v3134
        %v3136 = vrot.slane %v3110, 1
        %v3137 = vrot.slane %v3111, 1
        %v3138 = vsel %vm3070, %v3136, %v3137
        %v3139 = vrot.slane %v3112, 1
        %v3140 = vsel %vm3070, %v3137, %v3139
        %v3141 = vrot.slane %v3113, 1
        %v3142 = vrot.slane %v3114, 1
        %v3143 = vsel %vm3070, %v3141, %v3142
        %v3144 = vrot.slane %v3115, 1
        %v3145 = vsel %vm3070, %v3142, %v3144
        %v3146 = vrot.slane %v3116, 1
        %v3147 = vrot.slane %v3117, 1
        %v3148 = vsel %vm3070, %v3146, %v3147
        %v3149 = vrot.slane %v3118, 1
        %v3150 = vsel %vm3070, %v3147, %v3149
        %v3159 = vadd.f32 %v3099, %v3133
        %v3160 = vadd.f32 %v3100, %v3135
        %v3161 = vadd.f32 %v3101, %v3138
        %v3162 = vadd.f32 %v3102, %v3140
        %v3163 = vadd.f32 %v3103, %v3143
        %v3164 = vadd.f32 %v3104, %v3145
        %v3165 = vadd.f32 %v3105, %v3148
        %v3166 = vadd.f32 %v3106, %v3150
        %v3167 = vmul.f32 %v1332, %v1038
        %v3168 = vmul.f32 %v1332, %v992
        %v3169 = vmul.f32 %v1332, %v1046
        %v3170 = vmul.f32 %v1336, %v1039
        %v3171 = vmul.f32 %v1336, %v995
        %v3172 = vmul.f32 %v1336, %v1047
        %v3173 = vmul.f32 %v1340, %v1040
        %v3174 = vmul.f32 %v1340, %v998
        %v3175 = vmul.f32 %v1340, %v1048
        %v3176 = vmul.f32 %v1344, %v1041
        %v3177 = vmul.f32 %v1344, %v1001
        %v3178 = vmul.f32 %v1344, %v1049
        %v3191 = vrot.slane %v3167, 1
        %v3192 = vrot.slane %v3168, 1
        %v3193 = vsel %vm3070, %v3191, %v3192
        %v3194 = vrot.slane %v3169, 1
        %v3195 = vsel %vm3070, %v3192, %v3194
        %v3196 = vrot.slane %v3170, 1
        %v3197 = vrot.slane %v3171, 1
        %v3198 = vsel %vm3070, %v3196, %v3197
        %v3199 = vrot.slane %v3172, 1
        %v3200 = vsel %vm3070, %v3197, %v3199
        %v3201 = vrot.slane %v3173, 1
        %v3202 = vrot.slane %v3174, 1
        %v3203 = vsel %vm3070, %v3201, %v3202
        %v3204 = vrot.slane %v3175, 1
        %v3205 = vsel %vm3070, %v3202, %v3204
        %v3206 = vrot.slane %v3176, 1
        %v3207 = vrot.slane %v3177, 1
        %v3208 = vsel %vm3070, %v3206, %v3207
        %v3209 = vrot.slane %v3178, 1
        %v3210 = vsel %vm3070, %v3207, %v3209
        %3211 = vrot.lane.b32.xlu0 %v3193, 127
        %v3212 = vpop.permute.xlu0 %3211
        %3213 = vrot.lane.b32.xlu0 %v3195, 127
        %v3214 = vpop.permute.xlu0 %3213
        %3215 = vrot.lane.b32.xlu0 %v3198, 127
        %v3216 = vpop.permute.xlu0 %3215
        %3217 = vrot.lane.b32.xlu0 %v3200, 127
        %v3218 = vpop.permute.xlu0 %3217
        %3219 = vrot.lane.b32.xlu0 %v3203, 127
        %v3220 = vpop.permute.xlu0 %3219
        %3221 = vrot.lane.b32.xlu0 %v3205, 127
        %v3222 = vpop.permute.xlu0 %3221
        %3223 = vrot.lane.b32.xlu0 %v3208, 127
        %v3224 = vpop.permute.xlu0 %3223
        %3225 = vrot.lane.b32.xlu0 %v3210, 127
        %v3226 = vpop.permute.xlu0 %3225
        %v3235 = vadd.f32 %v3159, %v3212
        %v3236 = vadd.f32 %v3160, %v3214
        %v3237 = vadd.f32 %v3161, %v3216
        %v3238 = vadd.f32 %v3162, %v3218
        %v3239 = vadd.f32 %v3163, %v3220
        %v3240 = vadd.f32 %v3164, %v3222
        %v3241 = vadd.f32 %v3165, %v3224
        %v3242 = vadd.f32 %v3166, %v3226
        %v3243 = vmul.f32 %v1911, %v1042
        %v3244 = vmul.f32 %v1911, %v1004
        %v3245 = vmul.f32 %v1911, %v1050
        %v3246 = vmul.f32 %v1915, %v1043
        %v3247 = vmul.f32 %v1915, %v1007
        %v3248 = vmul.f32 %v1915, %v1051
        %v3249 = vmul.f32 %v1919, %v1044
        %v3250 = vmul.f32 %v1919, %v1010
        %v3251 = vmul.f32 %v1919, %v1052
        %v3252 = vmul.f32 %v1923, %v1045
        %v3253 = vmul.f32 %v1923, %v1013
        %v3254 = vmul.f32 %v1923, %v1053
        %v3267 = vrot.slane %v3243, 1
        %v3268 = vrot.slane %v3244, 1
        %v3269 = vsel %vm3070, %v3267, %v3268
        %v3270 = vrot.slane %v3245, 1
        %v3271 = vsel %vm3070, %v3268, %v3270
        %v3272 = vrot.slane %v3246, 1
        %v3273 = vrot.slane %v3247, 1
        %v3274 = vsel %vm3070, %v3272, %v3273
        %v3275 = vrot.slane %v3248, 1
        %v3276 = vsel %vm3070, %v3273, %v3275
        %v3277 = vrot.slane %v3249, 1
        %v3278 = vrot.slane %v3250, 1
        %v3279 = vsel %vm3070, %v3277, %v3278
        %v3280 = vrot.slane %v3251, 1
        %v3281 = vsel %vm3070, %v3278, %v3280
        %v3282 = vrot.slane %v3252, 1
        %v3283 = vrot.slane %v3253, 1
        %v3284 = vsel %vm3070, %v3282, %v3283
        %v3285 = vrot.slane %v3254, 1
        %v3286 = vsel %vm3070, %v3283, %v3285
        %3287 = vrot.lane.b32.xlu0 %v3269, 127
        %v3288 = vpop.permute.xlu0 %3287
        %3289 = vrot.lane.b32.xlu0 %v3271, 127
        %v3290 = vpop.permute.xlu0 %3289
        %3291 = vrot.lane.b32.xlu0 %v3274, 127
        %v3292 = vpop.permute.xlu0 %3291
        %3293 = vrot.lane.b32.xlu0 %v3276, 127
        %v3294 = vpop.permute.xlu0 %3293
        %3295 = vrot.lane.b32.xlu0 %v3279, 127
        %v3296 = vpop.permute.xlu0 %3295
        %3297 = vrot.lane.b32.xlu0 %v3281, 127
        %v3298 = vpop.permute.xlu0 %3297
        %3299 = vrot.lane.b32.xlu0 %v3284, 127
        %v3300 = vpop.permute.xlu0 %3299
        %3301 = vrot.lane.b32.xlu0 %v3286, 127
        %v3302 = vpop.permute.xlu0 %3301
        %v3311 = vadd.f32 %v3235, %v3288
        %v3312 = vadd.f32 %v3236, %v3290
        %v3313 = vadd.f32 %v3237, %v3292
        %v3314 = vadd.f32 %v3238, %v3294
        %v3315 = vadd.f32 %v3239, %v3296
        %v3316 = vadd.f32 %v3240, %v3298
        %v3317 = vadd.f32 %v3241, %v3300
        %v3318 = vadd.f32 %v3242, %v3302
        %v3319 = vmul.f32 %v1348, %v1038
        %v3320 = vmul.f32 %v1348, %v992
        %v3321 = vmul.f32 %v1348, %v1046
        %v3322 = vmul.f32 %v1352, %v1039
        %v3323 = vmul.f32 %v1352, %v995
        %v3324 = vmul.f32 %v1352, %v1047
        %v3325 = vmul.f32 %v1356, %v1040
        %v3326 = vmul.f32 %v1356, %v998
        %v3327 = vmul.f32 %v1356, %v1048
        %v3328 = vmul.f32 %v1360, %v1041
        %v3329 = vmul.f32 %v1360, %v1001
        %v3330 = vmul.f32 %v1360, %v1049
        %v3343 = vrot.slane %v3319, 1
        %v3344 = vrot.slane %v3320, 1
        %v3345 = vsel %vm3070, %v3343, %v3344
        %v3346 = vrot.slane %v3321, 1
        %v3347 = vsel %vm3070, %v3344, %v3346
        %v3348 = vrot.slane %v3322, 1
        %v3349 = vrot.slane %v3323, 1
        %v3350 = vsel %vm3070, %v3348, %v3349
        %v3351 = vrot.slane %v3324, 1
        %v3352 = vsel %vm3070, %v3349, %v3351
        %v3353 = vrot.slane %v3325, 1
        %v3354 = vrot.slane %v3326, 1
        %v3355 = vsel %vm3070, %v3353, %v3354
        %v3356 = vrot.slane %v3327, 1
        %v3357 = vsel %vm3070, %v3354, %v3356
        %v3358 = vrot.slane %v3328, 1
        %v3359 = vrot.slane %v3329, 1
        %v3360 = vsel %vm3070, %v3358, %v3359
        %v3361 = vrot.slane %v3330, 1
        %v3362 = vsel %vm3070, %v3359, %v3361
        %3363 = vrot.lane.b32.xlu0 %v3345, 126
        %v3364 = vpop.permute.xlu0 %3363
        %3365 = vrot.lane.b32.xlu0 %v3347, 126
        %v3366 = vpop.permute.xlu0 %3365
        %3367 = vrot.lane.b32.xlu0 %v3350, 126
        %v3368 = vpop.permute.xlu0 %3367
        %3369 = vrot.lane.b32.xlu0 %v3352, 126
        %v3370 = vpop.permute.xlu0 %3369
        %3371 = vrot.lane.b32.xlu0 %v3355, 126
        %v3372 = vpop.permute.xlu0 %3371
        %3373 = vrot.lane.b32.xlu0 %v3357, 126
        %v3374 = vpop.permute.xlu0 %3373
        %3375 = vrot.lane.b32.xlu0 %v3360, 126
        %v3376 = vpop.permute.xlu0 %3375
        %3377 = vrot.lane.b32.xlu0 %v3362, 126
        %v3378 = vpop.permute.xlu0 %3377
        %v3387 = vadd.f32 %v3311, %v3364
        %v3388 = vadd.f32 %v3312, %v3366
        %v3389 = vadd.f32 %v3313, %v3368
        %v3390 = vadd.f32 %v3314, %v3370
        %v3391 = vadd.f32 %v3315, %v3372
        %v3392 = vadd.f32 %v3316, %v3374
        %v3393 = vadd.f32 %v3317, %v3376
        %v3394 = vadd.f32 %v3318, %v3378
        %v3395 = vmul.f32 %v1927, %v1042
        %v3396 = vmul.f32 %v1927, %v1004
        %v3397 = vmul.f32 %v1927, %v1050
        %v3398 = vmul.f32 %v1931, %v1043
        %v3399 = vmul.f32 %v1931, %v1007
        %v3400 = vmul.f32 %v1931, %v1051
        %v3401 = vmul.f32 %v1935, %v1044
        %v3402 = vmul.f32 %v1935, %v1010
        %v3403 = vmul.f32 %v1935, %v1052
        %v3404 = vmul.f32 %v1939, %v1045
        %v3405 = vmul.f32 %v1939, %v1013
        %v3406 = vmul.f32 %v1939, %v1053
        %v3419 = vrot.slane %v3395, 1
        %v3420 = vrot.slane %v3396, 1
        %v3421 = vsel %vm3070, %v3419, %v3420
        %v3422 = vrot.slane %v3397, 1
        %v3423 = vsel %vm3070, %v3420, %v3422
        %v3424 = vrot.slane %v3398, 1
        %v3425 = vrot.slane %v3399, 1
        %v3426 = vsel %vm3070, %v3424, %v3425
        %v3427 = vrot.slane %v3400, 1
        %v3428 = vsel %vm3070, %v3425, %v3427
        %v3429 = vrot.slane %v3401, 1
        %v3430 = vrot.slane %v3402, 1
        %v3431 = vsel %vm3070, %v3429, %v3430
        %v3432 = vrot.slane %v3403, 1
        %v3433 = vsel %vm3070, %v3430, %v3432
        %v3434 = vrot.slane %v3404, 1
        %v3435 = vrot.slane %v3405, 1
        %v3436 = vsel %vm3070, %v3434, %v3435
        %v3437 = vrot.slane %v3406, 1
        %v3438 = vsel %vm3070, %v3435, %v3437
        %3439 = vrot.lane.b32.xlu0 %v3421, 126
        %v3440 = vpop.permute.xlu0 %3439
        %3441 = vrot.lane.b32.xlu0 %v3423, 126
        %v3442 = vpop.permute.xlu0 %3441
        %3443 = vrot.lane.b32.xlu0 %v3426, 126
        %v3444 = vpop.permute.xlu0 %3443
        %3445 = vrot.lane.b32.xlu0 %v3428, 126
        %v3446 = vpop.permute.xlu0 %3445
        %3447 = vrot.lane.b32.xlu0 %v3431, 126
        %v3448 = vpop.permute.xlu0 %3447
        %3449 = vrot.lane.b32.xlu0 %v3433, 126
        %v3450 = vpop.permute.xlu0 %3449
        %3451 = vrot.lane.b32.xlu0 %v3436, 126
        %v3452 = vpop.permute.xlu0 %3451
        %3453 = vrot.lane.b32.xlu0 %v3438, 126
        %v3454 = vpop.permute.xlu0 %3453
        %v3463 = vadd.f32 %v3387, %v3440
        %v3464 = vadd.f32 %v3388, %v3442
        %v3465 = vadd.f32 %v3389, %v3444
        %v3466 = vadd.f32 %v3390, %v3446
        %v3467 = vadd.f32 %v3391, %v3448
        %v3468 = vadd.f32 %v3392, %v3450
        %v3469 = vadd.f32 %v3393, %v3452
        %v3470 = vadd.f32 %v3394, %v3454
        %v3471 = vmul.f32 %v1364, %v1038
        %v3472 = vmul.f32 %v1364, %v992
        %v3473 = vmul.f32 %v1364, %v1046
        %v3474 = vmul.f32 %v1368, %v1039
        %v3475 = vmul.f32 %v1368, %v995
        %v3476 = vmul.f32 %v1368, %v1047
        %v3477 = vmul.f32 %v1372, %v1040
        %v3478 = vmul.f32 %v1372, %v998
        %v3479 = vmul.f32 %v1372, %v1048
        %v3480 = vmul.f32 %v1376, %v1041
        %v3481 = vmul.f32 %v1376, %v1001
        %v3482 = vmul.f32 %v1376, %v1049
        %v3495 = vrot.slane %v3471, 1
        %v3496 = vrot.slane %v3472, 1
        %v3497 = vsel %vm3070, %v3495, %v3496
        %v3498 = vrot.slane %v3473, 1
        %v3499 = vsel %vm3070, %v3496, %v3498
        %v3500 = vrot.slane %v3474, 1
        %v3501 = vrot.slane %v3475, 1
        %v3502 = vsel %vm3070, %v3500, %v3501
        %v3503 = vrot.slane %v3476, 1
        %v3504 = vsel %vm3070, %v3501, %v3503
        %v3505 = vrot.slane %v3477, 1
        %v3506 = vrot.slane %v3478, 1
        %v3507 = vsel %vm3070, %v3505, %v3506
        %v3508 = vrot.slane %v3479, 1
        %v3509 = vsel %vm3070, %v3506, %v3508
        %v3510 = vrot.slane %v3480, 1
        %v3511 = vrot.slane %v3481, 1
        %v3512 = vsel %vm3070, %v3510, %v3511
        %v3513 = vrot.slane %v3482, 1
        %v3514 = vsel %vm3070, %v3511, %v3513
        %3515 = vrot.lane.b32.xlu0 %v3497, 125
        %v3516 = vpop.permute.xlu0 %3515
        %3517 = vrot.lane.b32.xlu0 %v3499, 125
        %v3518 = vpop.permute.xlu0 %3517
        %3519 = vrot.lane.b32.xlu0 %v3502, 125
        %v3520 = vpop.permute.xlu0 %3519
        %3521 = vrot.lane.b32.xlu0 %v3504, 125
        %v3522 = vpop.permute.xlu0 %3521
        %3523 = vrot.lane.b32.xlu0 %v3507, 125
        %v3524 = vpop.permute.xlu0 %3523
        %3525 = vrot.lane.b32.xlu0 %v3509, 125
        %v3526 = vpop.permute.xlu0 %3525
        %3527 = vrot.lane.b32.xlu0 %v3512, 125
        %v3528 = vpop.permute.xlu0 %3527
        %3529 = vrot.lane.b32.xlu0 %v3514, 125
        %v3530 = vpop.permute.xlu0 %3529
        %v3539 = vadd.f32 %v3463, %v3516
        %v3540 = vadd.f32 %v3464, %v3518
        %v3541 = vadd.f32 %v3465, %v3520
        %v3542 = vadd.f32 %v3466, %v3522
        %v3543 = vadd.f32 %v3467, %v3524
        %v3544 = vadd.f32 %v3468, %v3526
        %v3545 = vadd.f32 %v3469, %v3528
        %v3546 = vadd.f32 %v3470, %v3530
        %v3547 = vmul.f32 %v1943, %v1042
        %v3548 = vmul.f32 %v1943, %v1004
        %v3549 = vmul.f32 %v1943, %v1050
        %v3550 = vmul.f32 %v1947, %v1043
        %v3551 = vmul.f32 %v1947, %v1007
        %v3552 = vmul.f32 %v1947, %v1051
        %v3553 = vmul.f32 %v1951, %v1044
        %v3554 = vmul.f32 %v1951, %v1010
        %v3555 = vmul.f32 %v1951, %v1052
        %v3556 = vmul.f32 %v1955, %v1045
        %v3557 = vmul.f32 %v1955, %v1013
        %v3558 = vmul.f32 %v1955, %v1053
        %v3571 = vrot.slane %v3547, 1
        %v3572 = vrot.slane %v3548, 1
        %v3573 = vsel %vm3070, %v3571, %v3572
        %v3574 = vrot.slane %v3549, 1
        %v3575 = vsel %vm3070, %v3572, %v3574
        %v3576 = vrot.slane %v3550, 1
        %v3577 = vrot.slane %v3551, 1
        %v3578 = vsel %vm3070, %v3576, %v3577
        %v3579 = vrot.slane %v3552, 1
        %v3580 = vsel %vm3070, %v3577, %v3579
        %v3581 = vrot.slane %v3553, 1
        %v3582 = vrot.slane %v3554, 1
        %v3583 = vsel %vm3070, %v3581, %v3582
        %v3584 = vrot.slane %v3555, 1
        %v3585 = vsel %vm3070, %v3582, %v3584
        %v3586 = vrot.slane %v3556, 1
        %v3587 = vrot.slane %v3557, 1
        %v3588 = vsel %vm3070, %v3586, %v3587
        %v3589 = vrot.slane %v3558, 1
        %v3590 = vsel %vm3070, %v3587, %v3589
        %3591 = vrot.lane.b32.xlu0 %v3573, 125
        %v3592 = vpop.permute.xlu0 %3591
        %3593 = vrot.lane.b32.xlu0 %v3575, 125
        %v3594 = vpop.permute.xlu0 %3593
        %3595 = vrot.lane.b32.xlu0 %v3578, 125
        %v3596 = vpop.permute.xlu0 %3595
        %3597 = vrot.lane.b32.xlu0 %v3580, 125
        %v3598 = vpop.permute.xlu0 %3597
        %3599 = vrot.lane.b32.xlu0 %v3583, 125
        %v3600 = vpop.permute.xlu0 %3599
        %3601 = vrot.lane.b32.xlu0 %v3585, 125
        %v3602 = vpop.permute.xlu0 %3601
        %3603 = vrot.lane.b32.xlu0 %v3588, 125
        %v3604 = vpop.permute.xlu0 %3603
        %3605 = vrot.lane.b32.xlu0 %v3590, 125
        %v3606 = vpop.permute.xlu0 %3605
        %v3615 = vadd.f32 %v3539, %v3592
        %v3616 = vadd.f32 %v3540, %v3594
        %v3617 = vadd.f32 %v3541, %v3596
        %v3618 = vadd.f32 %v3542, %v3598
        %v3619 = vadd.f32 %v3543, %v3600
        %v3620 = vadd.f32 %v3544, %v3602
        %v3621 = vadd.f32 %v3545, %v3604
        %v3622 = vadd.f32 %v3546, %v3606
        %v3623 = vmul.f32 %v1380, %v1038
        %v3624 = vmul.f32 %v1380, %v992
        %v3625 = vmul.f32 %v1380, %v1046
        %v3626 = vmul.f32 %v1384, %v1039
        %v3627 = vmul.f32 %v1384, %v995
        %v3628 = vmul.f32 %v1384, %v1047
        %v3629 = vmul.f32 %v1388, %v1040
        %v3630 = vmul.f32 %v1388, %v998
        %v3631 = vmul.f32 %v1388, %v1048
        %v3632 = vmul.f32 %v1392, %v1041
        %v3633 = vmul.f32 %v1392, %v1001
        %v3634 = vmul.f32 %v1392, %v1049
        %v3647 = vrot.slane %v3623, 1
        %v3648 = vrot.slane %v3624, 1
        %v3649 = vsel %vm3070, %v3647, %v3648
        %v3650 = vrot.slane %v3625, 1
        %v3651 = vsel %vm3070, %v3648, %v3650
        %v3652 = vrot.slane %v3626, 1
        %v3653 = vrot.slane %v3627, 1
        %v3654 = vsel %vm3070, %v3652, %v3653
        %v3655 = vrot.slane %v3628, 1
        %v3656 = vsel %vm3070, %v3653, %v3655
        %v3657 = vrot.slane %v3629, 1
        %v3658 = vrot.slane %v3630, 1
        %v3659 = vsel %vm3070, %v3657, %v3658
        %v3660 = vrot.slane %v3631, 1
        %v3661 = vsel %vm3070, %v3658, %v3660
        %v3662 = vrot.slane %v3632, 1
        %v3663 = vrot.slane %v3633, 1
        %v3664 = vsel %vm3070, %v3662, %v3663
        %v3665 = vrot.slane %v3634, 1
        %v3666 = vsel %vm3070, %v3663, %v3665
        %3667 = vrot.lane.b32.xlu0 %v3649, 124
        %v3668 = vpop.permute.xlu0 %3667
        %3669 = vrot.lane.b32.xlu0 %v3651, 124
        %v3670 = vpop.permute.xlu0 %3669
        %3671 = vrot.lane.b32.xlu0 %v3654, 124
        %v3672 = vpop.permute.xlu0 %3671
        %3673 = vrot.lane.b32.xlu0 %v3656, 124
        %v3674 = vpop.permute.xlu0 %3673
        %3675 = vrot.lane.b32.xlu0 %v3659, 124
        %v3676 = vpop.permute.xlu0 %3675
        %3677 = vrot.lane.b32.xlu0 %v3661, 124
        %v3678 = vpop.permute.xlu0 %3677
        %3679 = vrot.lane.b32.xlu0 %v3664, 124
        %v3680 = vpop.permute.xlu0 %3679
        %3681 = vrot.lane.b32.xlu0 %v3666, 124
        %v3682 = vpop.permute.xlu0 %3681
        %v3691 = vadd.f32 %v3615, %v3668
        %v3692 = vadd.f32 %v3616, %v3670
        %v3693 = vadd.f32 %v3617, %v3672
        %v3694 = vadd.f32 %v3618, %v3674
        %v3695 = vadd.f32 %v3619, %v3676
        %v3696 = vadd.f32 %v3620, %v3678
        %v3697 = vadd.f32 %v3621, %v3680
        %v3698 = vadd.f32 %v3622, %v3682
        %v3699 = vmul.f32 %v1959, %v1042
        %v3700 = vmul.f32 %v1959, %v1004
        %v3701 = vmul.f32 %v1959, %v1050
        %v3702 = vmul.f32 %v1963, %v1043
        %v3703 = vmul.f32 %v1963, %v1007
        %v3704 = vmul.f32 %v1963, %v1051
        %v3705 = vmul.f32 %v1967, %v1044
        %v3706 = vmul.f32 %v1967, %v1010
        %v3707 = vmul.f32 %v1967, %v1052
        %v3708 = vmul.f32 %v1971, %v1045
        %v3709 = vmul.f32 %v1971, %v1013
        %v3710 = vmul.f32 %v1971, %v1053
        %v3723 = vrot.slane %v3699, 1
        %v3724 = vrot.slane %v3700, 1
        %v3725 = vsel %vm3070, %v3723, %v3724
        %v3726 = vrot.slane %v3701, 1
        %v3727 = vsel %vm3070, %v3724, %v3726
        %v3728 = vrot.slane %v3702, 1
        %v3729 = vrot.slane %v3703, 1
        %v3730 = vsel %vm3070, %v3728, %v3729
        %v3731 = vrot.slane %v3704, 1
        %v3732 = vsel %vm3070, %v3729, %v3731
        %v3733 = vrot.slane %v3705, 1
        %v3734 = vrot.slane %v3706, 1
        %v3735 = vsel %vm3070, %v3733, %v3734
        %v3736 = vrot.slane %v3707, 1
        %v3737 = vsel %vm3070, %v3734, %v3736
        %v3738 = vrot.slane %v3708, 1
        %v3739 = vrot.slane %v3709, 1
        %v3740 = vsel %vm3070, %v3738, %v3739
        %v3741 = vrot.slane %v3710, 1
        %v3742 = vsel %vm3070, %v3739, %v3741
        %3743 = vrot.lane.b32.xlu0 %v3725, 124
        %v3744 = vpop.permute.xlu0 %3743
        %3745 = vrot.lane.b32.xlu0 %v3727, 124
        %v3746 = vpop.permute.xlu0 %3745
        %3747 = vrot.lane.b32.xlu0 %v3730, 124
        %v3748 = vpop.permute.xlu0 %3747
        %3749 = vrot.lane.b32.xlu0 %v3732, 124
        %v3750 = vpop.permute.xlu0 %3749
        %3751 = vrot.lane.b32.xlu0 %v3735, 124
        %v3752 = vpop.permute.xlu0 %3751
        %3753 = vrot.lane.b32.xlu0 %v3737, 124
        %v3754 = vpop.permute.xlu0 %3753
        %3755 = vrot.lane.b32.xlu0 %v3740, 124
        %v3756 = vpop.permute.xlu0 %3755
        %3757 = vrot.lane.b32.xlu0 %v3742, 124
        %v3758 = vpop.permute.xlu0 %3757
        %v3767 = vadd.f32 %v3691, %v3744
        %v3768 = vadd.f32 %v3692, %v3746
        %v3769 = vadd.f32 %v3693, %v3748
        %v3770 = vadd.f32 %v3694, %v3750
        %v3771 = vadd.f32 %v3695, %v3752
        %v3772 = vadd.f32 %v3696, %v3754
        %v3773 = vadd.f32 %v3697, %v3756
        %v3774 = vadd.f32 %v3698, %v3758
        %v3775 = vmul.f32 %v1396, %v1038
        %v3776 = vmul.f32 %v1396, %v992
        %v3777 = vmul.f32 %v1396, %v1046
        %v3778 = vmul.f32 %v1400, %v1039
        %v3779 = vmul.f32 %v1400, %v995
        %v3780 = vmul.f32 %v1400, %v1047
        %v3781 = vmul.f32 %v1404, %v1040
        %v3782 = vmul.f32 %v1404, %v998
        %v3783 = vmul.f32 %v1404, %v1048
        %v3784 = vmul.f32 %v1408, %v1041
        %v3785 = vmul.f32 %v1408, %v1001
        %v3786 = vmul.f32 %v1408, %v1049
        %vm3799 = vcmask 1045504
        %v3800 = vrot.slane %v3775, 2
        %v3801 = vrot.slane %v3776, 2
        %v3802 = vsel %vm3799, %v3800, %v3801
        %v3803 = vrot.slane %v3777, 2
        %v3804 = vsel %vm3799, %v3801, %v3803
        %v3805 = vrot.slane %v3778, 2
        %v3806 = vrot.slane %v3779, 2
        %v3807 = vsel %vm3799, %v3805, %v3806
        %v3808 = vrot.slane %v3780, 2
        %v3809 = vsel %vm3799, %v3806, %v3808
        %v3810 = vrot.slane %v3781, 2
        %v3811 = vrot.slane %v3782, 2
        %v3812 = vsel %vm3799, %v3810, %v3811
        %v3813 = vrot.slane %v3783, 2
        %v3814 = vsel %vm3799, %v3811, %v3813
        %v3815 = vrot.slane %v3784, 2
        %v3816 = vrot.slane %v3785, 2
        %v3817 = vsel %vm3799, %v3815, %v3816
        %v3818 = vrot.slane %v3786, 2
        %v3819 = vsel %vm3799, %v3816, %v3818
        %v3828 = vadd.f32 %v3767, %v3802
        %v3829 = vadd.f32 %v3768, %v3804
        %v3830 = vadd.f32 %v3769, %v3807
        %v3831 = vadd.f32 %v3770, %v3809
        %v3832 = vadd.f32 %v3771, %v3812
        %v3833 = vadd.f32 %v3772, %v3814
        %v3834 = vadd.f32 %v3773, %v3817
        %v3835 = vadd.f32 %v3774, %v3819
        %v3836 = vmul.f32 %v1975, %v1042
        %v3837 = vmul.f32 %v1975, %v1004
        %v3838 = vmul.f32 %v1975, %v1050
        %v3839 = vmul.f32 %v1979, %v1043
        %v3840 = vmul.f32 %v1979, %v1007
        %v3841 = vmul.f32 %v1979, %v1051
        %v3842 = vmul.f32 %v1983, %v1044
        %v3843 = vmul.f32 %v1983, %v1010
        %v3844 = vmul.f32 %v1983, %v1052
        %v3845 = vmul.f32 %v1987, %v1045
        %v3846 = vmul.f32 %v1987, %v1013
        %v3847 = vmul.f32 %v1987, %v1053
        %v3860 = vrot.slane %v3836, 2
        %v3861 = vrot.slane %v3837, 2
        %v3862 = vsel %vm3799, %v3860, %v3861
        %v3863 = vrot.slane %v3838, 2
        %v3864 = vsel %vm3799, %v3861, %v3863
        %v3865 = vrot.slane %v3839, 2
        %v3866 = vrot.slane %v3840, 2
        %v3867 = vsel %vm3799, %v3865, %v3866
        %v3868 = vrot.slane %v3841, 2
        %v3869 = vsel %vm3799, %v3866, %v3868
        %v3870 = vrot.slane %v3842, 2
        %v3871 = vrot.slane %v3843, 2
        %v3872 = vsel %vm3799, %v3870, %v3871
        %v3873 = vrot.slane %v3844, 2
        %v3874 = vsel %vm3799, %v3871, %v3873
        %v3875 = vrot.slane %v3845, 2
        %v3876 = vrot.slane %v3846, 2
        %v3877 = vsel %vm3799, %v3875, %v3876
        %v3878 = vrot.slane %v3847, 2
        %v3879 = vsel %vm3799, %v3876, %v3878
        %v3888 = vadd.f32 %v3828, %v3862
        %v3889 = vadd.f32 %v3829, %v3864
        %v3890 = vadd.f32 %v3830, %v3867
        %v3891 = vadd.f32 %v3831, %v3869
        %v3892 = vadd.f32 %v3832, %v3872
        %v3893 = vadd.f32 %v3833, %v3874
        %v3894 = vadd.f32 %v3834, %v3877
        %v3895 = vadd.f32 %v3835, %v3879
        %v3896 = vmul.f32 %v1412, %v1038
        %v3897 = vmul.f32 %v1412, %v992
        %v3898 = vmul.f32 %v1412, %v1046
        %v3899 = vmul.f32 %v1416, %v1039
        %v3900 = vmul.f32 %v1416, %v995
        %v3901 = vmul.f32 %v1416, %v1047
        %v3902 = vmul.f32 %v1420, %v1040
        %v3903 = vmul.f32 %v1420, %v998
        %v3904 = vmul.f32 %v1420, %v1048
        %v3905 = vmul.f32 %v1424, %v1041
        %v3906 = vmul.f32 %v1424, %v1001
        %v3907 = vmul.f32 %v1424, %v1049
        %v3920 = vrot.slane %v3896, 2
        %v3921 = vrot.slane %v3897, 2
        %v3922 = vsel %vm3799, %v3920, %v3921
        %v3923 = vrot.slane %v3898, 2
        %v3924 = vsel %vm3799, %v3921, %v3923
        %v3925 = vrot.slane %v3899, 2
        %v3926 = vrot.slane %v3900, 2
        %v3927 = vsel %vm3799, %v3925, %v3926
        %v3928 = vrot.slane %v3901, 2
        %v3929 = vsel %vm3799, %v3926, %v3928
        %v3930 = vrot.slane %v3902, 2
        %v3931 = vrot.slane %v3903, 2
        %v3932 = vsel %vm3799, %v3930, %v3931
        %v3933 = vrot.slane %v3904, 2
        %v3934 = vsel %vm3799, %v3931, %v3933
        %v3935 = vrot.slane %v3905, 2
        %v3936 = vrot.slane %v3906, 2
        %v3937 = vsel %vm3799, %v3935, %v3936
        %v3938 = vrot.slane %v3907, 2
        %v3939 = vsel %vm3799, %v3936, %v3938
        %3940 = vrot.lane.b32.xlu0 %v3922, 127
        %v3941 = vpop.permute.xlu0 %3940
        %3942 = vrot.lane.b32.xlu0 %v3924, 127
        %v3943 = vpop.permute.xlu0 %3942
        %3944 = vrot.lane.b32.xlu0 %v3927, 127
        %v3945 = vpop.permute.xlu0 %3944
        %3946 = vrot.lane.b32.xlu0 %v3929, 127
        %v3947 = vpop.permute.xlu0 %3946
        %3948 = vrot.lane.b32.xlu0 %v3932, 127
        %v3949 = vpop.permute.xlu0 %3948
        %3950 = vrot.lane.b32.xlu0 %v3934, 127
        %v3951 = vpop.permute.xlu0 %3950
        %3952 = vrot.lane.b32.xlu0 %v3937, 127
        %v3953 = vpop.permute.xlu0 %3952
        %3954 = vrot.lane.b32.xlu0 %v3939, 127
        %v3955 = vpop.permute.xlu0 %3954
        %v3964 = vadd.f32 %v3888, %v3941
        %v3965 = vadd.f32 %v3889, %v3943
        %v3966 = vadd.f32 %v3890, %v3945
        %v3967 = vadd.f32 %v3891, %v3947
        %v3968 = vadd.f32 %v3892, %v3949
        %v3969 = vadd.f32 %v3893, %v3951
        %v3970 = vadd.f32 %v3894, %v3953
        %v3971 = vadd.f32 %v3895, %v3955
        %v3972 = vmul.f32 %v1991, %v1042
        %v3973 = vmul.f32 %v1991, %v1004
        %v3974 = vmul.f32 %v1991, %v1050
        %v3975 = vmul.f32 %v1995, %v1043
        %v3976 = vmul.f32 %v1995, %v1007
        %v3977 = vmul.f32 %v1995, %v1051
        %v3978 = vmul.f32 %v1999, %v1044
        %v3979 = vmul.f32 %v1999, %v1010
        %v3980 = vmul.f32 %v1999, %v1052
        %v3981 = vmul.f32 %v2003, %v1045
        %v3982 = vmul.f32 %v2003, %v1013
        %v3983 = vmul.f32 %v2003, %v1053
        %v3996 = vrot.slane %v3972, 2
        %v3997 = vrot.slane %v3973, 2
        %v3998 = vsel %vm3799, %v3996, %v3997
        %v3999 = vrot.slane %v3974, 2
        %v4000 = vsel %vm3799, %v3997, %v3999
        %v4001 = vrot.slane %v3975, 2
        %v4002 = vrot.slane %v3976, 2
        %v4003 = vsel %vm3799, %v4001, %v4002
        %v4004 = vrot.slane %v3977, 2
        %v4005 = vsel %vm3799, %v4002, %v4004
        %v4006 = vrot.slane %v3978, 2
        %v4007 = vrot.slane %v3979, 2
        %v4008 = vsel %vm3799, %v4006, %v4007
        %v4009 = vrot.slane %v3980, 2
        %v4010 = vsel %vm3799, %v4007, %v4009
        %v4011 = vrot.slane %v3981, 2
        %v4012 = vrot.slane %v3982, 2
        %v4013 = vsel %vm3799, %v4011, %v4012
        %v4014 = vrot.slane %v3983, 2
        %v4015 = vsel %vm3799, %v4012, %v4014
        %4016 = vrot.lane.b32.xlu0 %v3998, 127
        %v4017 = vpop.permute.xlu0 %4016
        %4018 = vrot.lane.b32.xlu0 %v4000, 127
        %v4019 = vpop.permute.xlu0 %4018
        %4020 = vrot.lane.b32.xlu0 %v4003, 127
        %v4021 = vpop.permute.xlu0 %4020
        %4022 = vrot.lane.b32.xlu0 %v4005, 127
        %v4023 = vpop.permute.xlu0 %4022
        %4024 = vrot.lane.b32.xlu0 %v4008, 127
        %v4025 = vpop.permute.xlu0 %4024
        %4026 = vrot.lane.b32.xlu0 %v4010, 127
        %v4027 = vpop.permute.xlu0 %4026
        %4028 = vrot.lane.b32.xlu0 %v4013, 127
        %v4029 = vpop.permute.xlu0 %4028
        %4030 = vrot.lane.b32.xlu0 %v4015, 127
        %v4031 = vpop.permute.xlu0 %4030
        %v4040 = vadd.f32 %v3964, %v4017
        %v4041 = vadd.f32 %v3965, %v4019
        %v4042 = vadd.f32 %v3966, %v4021
        %v4043 = vadd.f32 %v3967, %v4023
        %v4044 = vadd.f32 %v3968, %v4025
        %v4045 = vadd.f32 %v3969, %v4027
        %v4046 = vadd.f32 %v3970, %v4029
        %v4047 = vadd.f32 %v3971, %v4031
        %v4048 = vmul.f32 %v1428, %v1038
        %v4049 = vmul.f32 %v1428, %v992
        %v4050 = vmul.f32 %v1428, %v1046
        %v4051 = vmul.f32 %v1432, %v1039
        %v4052 = vmul.f32 %v1432, %v995
        %v4053 = vmul.f32 %v1432, %v1047
        %v4054 = vmul.f32 %v1436, %v1040
        %v4055 = vmul.f32 %v1436, %v998
        %v4056 = vmul.f32 %v1436, %v1048
        %v4057 = vmul.f32 %v1440, %v1041
        %v4058 = vmul.f32 %v1440, %v1001
        %v4059 = vmul.f32 %v1440, %v1049
        %v4072 = vrot.slane %v4048, 2
        %v4073 = vrot.slane %v4049, 2
        %v4074 = vsel %vm3799, %v4072, %v4073
        %v4075 = vrot.slane %v4050, 2
        %v4076 = vsel %vm3799, %v4073, %v4075
        %v4077 = vrot.slane %v4051, 2
        %v4078 = vrot.slane %v4052, 2
        %v4079 = vsel %vm3799, %v4077, %v4078
        %v4080 = vrot.slane %v4053, 2
        %v4081 = vsel %vm3799, %v4078, %v4080
        %v4082 = vrot.slane %v4054, 2
        %v4083 = vrot.slane %v4055, 2
        %v4084 = vsel %vm3799, %v4082, %v4083
        %v4085 = vrot.slane %v4056, 2
        %v4086 = vsel %vm3799, %v4083, %v4085
        %v4087 = vrot.slane %v4057, 2
        %v4088 = vrot.slane %v4058, 2
        %v4089 = vsel %vm3799, %v4087, %v4088
        %v4090 = vrot.slane %v4059, 2
        %v4091 = vsel %vm3799, %v4088, %v4090
        %4092 = vrot.lane.b32.xlu0 %v4074, 126
        %v4093 = vpop.permute.xlu0 %4092
        %4094 = vrot.lane.b32.xlu0 %v4076, 126
        %v4095 = vpop.permute.xlu0 %4094
        %4096 = vrot.lane.b32.xlu0 %v4079, 126
        %v4097 = vpop.permute.xlu0 %4096
        %4098 = vrot.lane.b32.xlu0 %v4081, 126
        %v4099 = vpop.permute.xlu0 %4098
        %4100 = vrot.lane.b32.xlu0 %v4084, 126
        %v4101 = vpop.permute.xlu0 %4100
        %4102 = vrot.lane.b32.xlu0 %v4086, 126
        %v4103 = vpop.permute.xlu0 %4102
        %4104 = vrot.lane.b32.xlu0 %v4089, 126
        %v4105 = vpop.permute.xlu0 %4104
        %4106 = vrot.lane.b32.xlu0 %v4091, 126
        %v4107 = vpop.permute.xlu0 %4106
        %v4116 = vadd.f32 %v4040, %v4093
        %v4117 = vadd.f32 %v4041, %v4095
        %v4118 = vadd.f32 %v4042, %v4097
        %v4119 = vadd.f32 %v4043, %v4099
        %v4120 = vadd.f32 %v4044, %v4101
        %v4121 = vadd.f32 %v4045, %v4103
        %v4122 = vadd.f32 %v4046, %v4105
        %v4123 = vadd.f32 %v4047, %v4107
        %v4124 = vmul.f32 %v2007, %v1042
        %v4125 = vmul.f32 %v2007, %v1004
        %v4126 = vmul.f32 %v2007, %v1050
        %v4127 = vmul.f32 %v2011, %v1043
        %v4128 = vmul.f32 %v2011, %v1007
        %v4129 = vmul.f32 %v2011, %v1051
        %v4130 = vmul.f32 %v2015, %v1044
        %v4131 = vmul.f32 %v2015, %v1010
        %v4132 = vmul.f32 %v2015, %v1052
        %v4133 = vmul.f32 %v2019, %v1045
        %v4134 = vmul.f32 %v2019, %v1013
        %v4135 = vmul.f32 %v2019, %v1053
        %v4148 = vrot.slane %v4124, 2
        %v4149 = vrot.slane %v4125, 2
        %v4150 = vsel %vm3799, %v4148, %v4149
        %v4151 = vrot.slane %v4126, 2
        %v4152 = vsel %vm3799, %v4149, %v4151
        %v4153 = vrot.slane %v4127, 2
        %v4154 = vrot.slane %v4128, 2
        %v4155 = vsel %vm3799, %v4153, %v4154
        %v4156 = vrot.slane %v4129, 2
        %v4157 = vsel %vm3799, %v4154, %v4156
        %v4158 = vrot.slane %v4130, 2
        %v4159 = vrot.slane %v4131, 2
        %v4160 = vsel %vm3799, %v4158, %v4159
        %v4161 = vrot.slane %v4132, 2
        %v4162 = vsel %vm3799, %v4159, %v4161
        %v4163 = vrot.slane %v4133, 2
        %v4164 = vrot.slane %v4134, 2
        %v4165 = vsel %vm3799, %v4163, %v4164
        %v4166 = vrot.slane %v4135, 2
        %v4167 = vsel %vm3799, %v4164, %v4166
        %4168 = vrot.lane.b32.xlu0 %v4150, 126
        %v4169 = vpop.permute.xlu0 %4168
        %4170 = vrot.lane.b32.xlu0 %v4152, 126
        %v4171 = vpop.permute.xlu0 %4170
        %4172 = vrot.lane.b32.xlu0 %v4155, 126
        %v4173 = vpop.permute.xlu0 %4172
        %4174 = vrot.lane.b32.xlu0 %v4157, 126
        %v4175 = vpop.permute.xlu0 %4174
        %4176 = vrot.lane.b32.xlu0 %v4160, 126
        %v4177 = vpop.permute.xlu0 %4176
        %4178 = vrot.lane.b32.xlu0 %v4162, 126
        %v4179 = vpop.permute.xlu0 %4178
        %4180 = vrot.lane.b32.xlu0 %v4165, 126
        %v4181 = vpop.permute.xlu0 %4180
        %4182 = vrot.lane.b32.xlu0 %v4167, 126
        %v4183 = vpop.permute.xlu0 %4182
        %v4192 = vadd.f32 %v4116, %v4169
        %v4193 = vadd.f32 %v4117, %v4171
        %v4194 = vadd.f32 %v4118, %v4173
        %v4195 = vadd.f32 %v4119, %v4175
        %v4196 = vadd.f32 %v4120, %v4177
        %v4197 = vadd.f32 %v4121, %v4179
        %v4198 = vadd.f32 %v4122, %v4181
        %v4199 = vadd.f32 %v4123, %v4183
        %v4200 = vmul.f32 %v1444, %v1038
        %v4201 = vmul.f32 %v1444, %v992
        %v4202 = vmul.f32 %v1444, %v1046
        %v4203 = vmul.f32 %v1448, %v1039
        %v4204 = vmul.f32 %v1448, %v995
        %v4205 = vmul.f32 %v1448, %v1047
        %v4206 = vmul.f32 %v1452, %v1040
        %v4207 = vmul.f32 %v1452, %v998
        %v4208 = vmul.f32 %v1452, %v1048
        %v4209 = vmul.f32 %v1456, %v1041
        %v4210 = vmul.f32 %v1456, %v1001
        %v4211 = vmul.f32 %v1456, %v1049
        %v4224 = vrot.slane %v4200, 2
        %v4225 = vrot.slane %v4201, 2
        %v4226 = vsel %vm3799, %v4224, %v4225
        %v4227 = vrot.slane %v4202, 2
        %v4228 = vsel %vm3799, %v4225, %v4227
        %v4229 = vrot.slane %v4203, 2
        %v4230 = vrot.slane %v4204, 2
        %v4231 = vsel %vm3799, %v4229, %v4230
        %v4232 = vrot.slane %v4205, 2
        %v4233 = vsel %vm3799, %v4230, %v4232
        %v4234 = vrot.slane %v4206, 2
        %v4235 = vrot.slane %v4207, 2
        %v4236 = vsel %vm3799, %v4234, %v4235
        %v4237 = vrot.slane %v4208, 2
        %v4238 = vsel %vm3799, %v4235, %v4237
        %v4239 = vrot.slane %v4209, 2
        %v4240 = vrot.slane %v4210, 2
        %v4241 = vsel %vm3799, %v4239, %v4240
        %v4242 = vrot.slane %v4211, 2
        %v4243 = vsel %vm3799, %v4240, %v4242
        %4244 = vrot.lane.b32.xlu0 %v4226, 125
        %v4245 = vpop.permute.xlu0 %4244
        %4246 = vrot.lane.b32.xlu0 %v4228, 125
        %v4247 = vpop.permute.xlu0 %4246
        %4248 = vrot.lane.b32.xlu0 %v4231, 125
        %v4249 = vpop.permute.xlu0 %4248
        %4250 = vrot.lane.b32.xlu0 %v4233, 125
        %v4251 = vpop.permute.xlu0 %4250
        %4252 = vrot.lane.b32.xlu0 %v4236, 125
        %v4253 = vpop.permute.xlu0 %4252
        %4254 = vrot.lane.b32.xlu0 %v4238, 125
        %v4255 = vpop.permute.xlu0 %4254
        %4256 = vrot.lane.b32.xlu0 %v4241, 125
        %v4257 = vpop.permute.xlu0 %4256
        %4258 = vrot.lane.b32.xlu0 %v4243, 125
        %v4259 = vpop.permute.xlu0 %4258
        %v4268 = vadd.f32 %v4192, %v4245
        %v4269 = vadd.f32 %v4193, %v4247
        %v4270 = vadd.f32 %v4194, %v4249
        %v4271 = vadd.f32 %v4195, %v4251
        %v4272 = vadd.f32 %v4196, %v4253
        %v4273 = vadd.f32 %v4197, %v4255
        %v4274 = vadd.f32 %v4198, %v4257
        %v4275 = vadd.f32 %v4199, %v4259
        %v4276 = vmul.f32 %v2023, %v1042
        %v4277 = vmul.f32 %v2023, %v1004
        %v4278 = vmul.f32 %v2023, %v1050
        %v4279 = vmul.f32 %v2027, %v1043
        %v4280 = vmul.f32 %v2027, %v1007
        %v4281 = vmul.f32 %v2027, %v1051
        %v4282 = vmul.f32 %v2031, %v1044
        %v4283 = vmul.f32 %v2031, %v1010
        %v4284 = vmul.f32 %v2031, %v1052
        %v4285 = vmul.f32 %v2035, %v1045
        %v4286 = vmul.f32 %v2035, %v1013
        %v4287 = vmul.f32 %v2035, %v1053
        %v4300 = vrot.slane %v4276, 2
        %v4301 = vrot.slane %v4277, 2
        %v4302 = vsel %vm3799, %v4300, %v4301
        %v4303 = vrot.slane %v4278, 2
        %v4304 = vsel %vm3799, %v4301, %v4303
        %v4305 = vrot.slane %v4279, 2
        %v4306 = vrot.slane %v4280, 2
        %v4307 = vsel %vm3799, %v4305, %v4306
        %v4308 = vrot.slane %v4281, 2
        %v4309 = vsel %vm3799, %v4306, %v4308
        %v4310 = vrot.slane %v4282, 2
        %v4311 = vrot.slane %v4283, 2
        %v4312 = vsel %vm3799, %v4310, %v4311
        %v4313 = vrot.slane %v4284, 2
        %v4314 = vsel %vm3799, %v4311, %v4313
        %v4315 = vrot.slane %v4285, 2
        %v4316 = vrot.slane %v4286, 2
        %v4317 = vsel %vm3799, %v4315, %v4316
        %v4318 = vrot.slane %v4287, 2
        %v4319 = vsel %vm3799, %v4316, %v4318
        %4320 = vrot.lane.b32.xlu0 %v4302, 125
        %v4321 = vpop.permute.xlu0 %4320
        %4322 = vrot.lane.b32.xlu0 %v4304, 125
        %v4323 = vpop.permute.xlu0 %4322
        %4324 = vrot.lane.b32.xlu0 %v4307, 125
        %v4325 = vpop.permute.xlu0 %4324
        %4326 = vrot.lane.b32.xlu0 %v4309, 125
        %v4327 = vpop.permute.xlu0 %4326
        %4328 = vrot.lane.b32.xlu0 %v4312, 125
        %v4329 = vpop.permute.xlu0 %4328
        %4330 = vrot.lane.b32.xlu0 %v4314, 125
        %v4331 = vpop.permute.xlu0 %4330
        %4332 = vrot.lane.b32.xlu0 %v4317, 125
        %v4333 = vpop.permute.xlu0 %4332
        %4334 = vrot.lane.b32.xlu0 %v4319, 125
        %v4335 = vpop.permute.xlu0 %4334
        %v4344 = vadd.f32 %v4268, %v4321
        %v4345 = vadd.f32 %v4269, %v4323
        %v4346 = vadd.f32 %v4270, %v4325
        %v4347 = vadd.f32 %v4271, %v4327
        %v4348 = vadd.f32 %v4272, %v4329
        %v4349 = vadd.f32 %v4273, %v4331
        %v4350 = vadd.f32 %v4274, %v4333
        %v4351 = vadd.f32 %v4275, %v4335
        %v4352 = vmul.f32 %v1460, %v1038
        %v4353 = vmul.f32 %v1460, %v992
        %v4354 = vmul.f32 %v1460, %v1046
        %v4355 = vmul.f32 %v1464, %v1039
        %v4356 = vmul.f32 %v1464, %v995
        %v4357 = vmul.f32 %v1464, %v1047
        %v4358 = vmul.f32 %v1468, %v1040
        %v4359 = vmul.f32 %v1468, %v998
        %v4360 = vmul.f32 %v1468, %v1048
        %v4361 = vmul.f32 %v1472, %v1041
        %v4362 = vmul.f32 %v1472, %v1001
        %v4363 = vmul.f32 %v1472, %v1049
        %v4376 = vrot.slane %v4352, 2
        %v4377 = vrot.slane %v4353, 2
        %v4378 = vsel %vm3799, %v4376, %v4377
        %v4379 = vrot.slane %v4354, 2
        %v4380 = vsel %vm3799, %v4377, %v4379
        %v4381 = vrot.slane %v4355, 2
        %v4382 = vrot.slane %v4356, 2
        %v4383 = vsel %vm3799, %v4381, %v4382
        %v4384 = vrot.slane %v4357, 2
        %v4385 = vsel %vm3799, %v4382, %v4384
        %v4386 = vrot.slane %v4358, 2
        %v4387 = vrot.slane %v4359, 2
        %v4388 = vsel %vm3799, %v4386, %v4387
        %v4389 = vrot.slane %v4360, 2
        %v4390 = vsel %vm3799, %v4387, %v4389
        %v4391 = vrot.slane %v4361, 2
        %v4392 = vrot.slane %v4362, 2
        %v4393 = vsel %vm3799, %v4391, %v4392
        %v4394 = vrot.slane %v4363, 2
        %v4395 = vsel %vm3799, %v4392, %v4394
        %4396 = vrot.lane.b32.xlu0 %v4378, 124
        %v4397 = vpop.permute.xlu0 %4396
        %4398 = vrot.lane.b32.xlu0 %v4380, 124
        %v4399 = vpop.permute.xlu0 %4398
        %4400 = vrot.lane.b32.xlu0 %v4383, 124
        %v4401 = vpop.permute.xlu0 %4400
        %4402 = vrot.lane.b32.xlu0 %v4385, 124
        %v4403 = vpop.permute.xlu0 %4402
        %4404 = vrot.lane.b32.xlu0 %v4388, 124
        %v4405 = vpop.permute.xlu0 %4404
        %4406 = vrot.lane.b32.xlu0 %v4390, 124
        %v4407 = vpop.permute.xlu0 %4406
        %4408 = vrot.lane.b32.xlu0 %v4393, 124
        %v4409 = vpop.permute.xlu0 %4408
        %4410 = vrot.lane.b32.xlu0 %v4395, 124
        %v4411 = vpop.permute.xlu0 %4410
        %v4420 = vadd.f32 %v4344, %v4397
        %v4421 = vadd.f32 %v4345, %v4399
        %v4422 = vadd.f32 %v4346, %v4401
        %v4423 = vadd.f32 %v4347, %v4403
        %v4424 = vadd.f32 %v4348, %v4405
        %v4425 = vadd.f32 %v4349, %v4407
        %v4426 = vadd.f32 %v4350, %v4409
        %v4427 = vadd.f32 %v4351, %v4411
        %v4428 = vmul.f32 %v2039, %v1042
        %v4429 = vmul.f32 %v2039, %v1004
        %v4430 = vmul.f32 %v2039, %v1050
        %v4431 = vmul.f32 %v2043, %v1043
        %v4432 = vmul.f32 %v2043, %v1007
        %v4433 = vmul.f32 %v2043, %v1051
        %v4434 = vmul.f32 %v2047, %v1044
        %v4435 = vmul.f32 %v2047, %v1010
        %v4436 = vmul.f32 %v2047, %v1052
        %v4437 = vmul.f32 %v2051, %v1045
        %v4438 = vmul.f32 %v2051, %v1013
        %v4439 = vmul.f32 %v2051, %v1053
        %v4452 = vrot.slane %v4428, 2
        %v4453 = vrot.slane %v4429, 2
        %v4454 = vsel %vm3799, %v4452, %v4453
        %v4455 = vrot.slane %v4430, 2
        %v4456 = vsel %vm3799, %v4453, %v4455
        %v4457 = vrot.slane %v4431, 2
        %v4458 = vrot.slane %v4432, 2
        %v4459 = vsel %vm3799, %v4457, %v4458
        %v4460 = vrot.slane %v4433, 2
        %v4461 = vsel %vm3799, %v4458, %v4460
        %v4462 = vrot.slane %v4434, 2
        %v4463 = vrot.slane %v4435, 2
        %v4464 = vsel %vm3799, %v4462, %v4463
        %v4465 = vrot.slane %v4436, 2
        %v4466 = vsel %vm3799, %v4463, %v4465
        %v4467 = vrot.slane %v4437, 2
        %v4468 = vrot.slane %v4438, 2
        %v4469 = vsel %vm3799, %v4467, %v4468
        %v4470 = vrot.slane %v4439, 2
        %v4471 = vsel %vm3799, %v4468, %v4470
        %4472 = vrot.lane.b32.xlu0 %v4454, 124
        %v4473 = vpop.permute.xlu0 %4472
        %4474 = vrot.lane.b32.xlu0 %v4456, 124
        %v4475 = vpop.permute.xlu0 %4474
        %4476 = vrot.lane.b32.xlu0 %v4459, 124
        %v4477 = vpop.permute.xlu0 %4476
        %4478 = vrot.lane.b32.xlu0 %v4461, 124
        %v4479 = vpop.permute.xlu0 %4478
        %4480 = vrot.lane.b32.xlu0 %v4464, 124
        %v4481 = vpop.permute.xlu0 %4480
        %4482 = vrot.lane.b32.xlu0 %v4466, 124
        %v4483 = vpop.permute.xlu0 %4482
        %4484 = vrot.lane.b32.xlu0 %v4469, 124
        %v4485 = vpop.permute.xlu0 %4484
        %4486 = vrot.lane.b32.xlu0 %v4471, 124
        %v4487 = vpop.permute.xlu0 %4486
        %v4496 = vadd.f32 %v4420, %v4473
        %v4497 = vadd.f32 %v4421, %v4475
        %v4498 = vadd.f32 %v4422, %v4477
        %v4499 = vadd.f32 %v4423, %v4479
        %v4500 = vadd.f32 %v4424, %v4481
        %v4501 = vadd.f32 %v4425, %v4483
        %v4502 = vadd.f32 %v4426, %v4485
        %v4503 = vadd.f32 %v4427, %v4487
        %v4504 = vmul.f32 %v1476, %v1038
        %v4505 = vmul.f32 %v1476, %v992
        %v4506 = vmul.f32 %v1476, %v1046
        %v4507 = vmul.f32 %v1480, %v1039
        %v4508 = vmul.f32 %v1480, %v995
        %v4509 = vmul.f32 %v1480, %v1047
        %v4510 = vmul.f32 %v1484, %v1040
        %v4511 = vmul.f32 %v1484, %v998
        %v4512 = vmul.f32 %v1484, %v1048
        %v4513 = vmul.f32 %v1488, %v1041
        %v4514 = vmul.f32 %v1488, %v1001
        %v4515 = vmul.f32 %v1488, %v1049
        %vm4528 = vcmask 1044480
        %v4529 = vrot.slane %v4504, 3
        %v4530 = vrot.slane %v4505, 3
        %v4531 = vsel %vm4528, %v4529, %v4530
        %v4532 = vrot.slane %v4506, 3
        %v4533 = vsel %vm4528, %v4530, %v4532
        %v4534 = vrot.slane %v4507, 3
        %v4535 = vrot.slane %v4508, 3
        %v4536 = vsel %vm4528, %v4534, %v4535
        %v4537 = vrot.slane %v4509, 3
        %v4538 = vsel %vm4528, %v4535, %v4537
        %v4539 = vrot.slane %v4510, 3
        %v4540 = vrot.slane %v4511, 3
        %v4541 = vsel %vm4528, %v4539, %v4540
        %v4542 = vrot.slane %v4512, 3
        %v4543 = vsel %vm4528, %v4540, %v4542
        %v4544 = vrot.slane %v4513, 3
        %v4545 = vrot.slane %v4514, 3
        %v4546 = vsel %vm4528, %v4544, %v4545
        %v4547 = vrot.slane %v4515, 3
        %v4548 = vsel %vm4528, %v4545, %v4547
        %v4557 = vadd.f32 %v4496, %v4531
        %v4558 = vadd.f32 %v4497, %v4533
        %v4559 = vadd.f32 %v4498, %v4536
        %v4560 = vadd.f32 %v4499, %v4538
        %v4561 = vadd.f32 %v4500, %v4541
        %v4562 = vadd.f32 %v4501, %v4543
        %v4563 = vadd.f32 %v4502, %v4546
        %v4564 = vadd.f32 %v4503, %v4548
        %v4565 = vmul.f32 %v2055, %v1042
        %v4566 = vmul.f32 %v2055, %v1004
        %v4567 = vmul.f32 %v2055, %v1050
        %v4568 = vmul.f32 %v2059, %v1043
        %v4569 = vmul.f32 %v2059, %v1007
        %v4570 = vmul.f32 %v2059, %v1051
        %v4571 = vmul.f32 %v2063, %v1044
        %v4572 = vmul.f32 %v2063, %v1010
        %v4573 = vmul.f32 %v2063, %v1052
        %v4574 = vmul.f32 %v2067, %v1045
        %v4575 = vmul.f32 %v2067, %v1013
        %v4576 = vmul.f32 %v2067, %v1053
        %v4589 = vrot.slane %v4565, 3
        %v4590 = vrot.slane %v4566, 3
        %v4591 = vsel %vm4528, %v4589, %v4590
        %v4592 = vrot.slane %v4567, 3
        %v4593 = vsel %vm4528, %v4590, %v4592
        %v4594 = vrot.slane %v4568, 3
        %v4595 = vrot.slane %v4569, 3
        %v4596 = vsel %vm4528, %v4594, %v4595
        %v4597 = vrot.slane %v4570, 3
        %v4598 = vsel %vm4528, %v4595, %v4597
        %v4599 = vrot.slane %v4571, 3
        %v4600 = vrot.slane %v4572, 3
        %v4601 = vsel %vm4528, %v4599, %v4600
        %v4602 = vrot.slane %v4573, 3
        %v4603 = vsel %vm4528, %v4600, %v4602
        %v4604 = vrot.slane %v4574, 3
        %v4605 = vrot.slane %v4575, 3
        %v4606 = vsel %vm4528, %v4604, %v4605
        %v4607 = vrot.slane %v4576, 3
        %v4608 = vsel %vm4528, %v4605, %v4607
        %v4617 = vadd.f32 %v4557, %v4591
        %v4618 = vadd.f32 %v4558, %v4593
        %v4619 = vadd.f32 %v4559, %v4596
        %v4620 = vadd.f32 %v4560, %v4598
        %v4621 = vadd.f32 %v4561, %v4601
        %v4622 = vadd.f32 %v4562, %v4603
        %v4623 = vadd.f32 %v4563, %v4606
        %v4624 = vadd.f32 %v4564, %v4608
        %v4625 = vmul.f32 %v1492, %v1038
        %v4626 = vmul.f32 %v1492, %v992
        %v4627 = vmul.f32 %v1492, %v1046
        %v4628 = vmul.f32 %v1496, %v1039
        %v4629 = vmul.f32 %v1496, %v995
        %v4630 = vmul.f32 %v1496, %v1047
        %v4631 = vmul.f32 %v1500, %v1040
        %v4632 = vmul.f32 %v1500, %v998
        %v4633 = vmul.f32 %v1500, %v1048
        %v4634 = vmul.f32 %v1504, %v1041
        %v4635 = vmul.f32 %v1504, %v1001
        %v4636 = vmul.f32 %v1504, %v1049
        %v4649 = vrot.slane %v4625, 3
        %v4650 = vrot.slane %v4626, 3
        %v4651 = vsel %vm4528, %v4649, %v4650
        %v4652 = vrot.slane %v4627, 3
        %v4653 = vsel %vm4528, %v4650, %v4652
        %v4654 = vrot.slane %v4628, 3
        %v4655 = vrot.slane %v4629, 3
        %v4656 = vsel %vm4528, %v4654, %v4655
        %v4657 = vrot.slane %v4630, 3
        %v4658 = vsel %vm4528, %v4655, %v4657
        %v4659 = vrot.slane %v4631, 3
        %v4660 = vrot.slane %v4632, 3
        %v4661 = vsel %vm4528, %v4659, %v4660
        %v4662 = vrot.slane %v4633, 3
        %v4663 = vsel %vm4528, %v4660, %v4662
        %v4664 = vrot.slane %v4634, 3
        %v4665 = vrot.slane %v4635, 3
        %v4666 = vsel %vm4528, %v4664, %v4665
        %v4667 = vrot.slane %v4636, 3
        %v4668 = vsel %vm4528, %v4665, %v4667
        %4669 = vrot.lane.b32.xlu0 %v4651, 127
        %v4670 = vpop.permute.xlu0 %4669
        %4671 = vrot.lane.b32.xlu0 %v4653, 127
        %v4672 = vpop.permute.xlu0 %4671
        %4673 = vrot.lane.b32.xlu0 %v4656, 127
        %v4674 = vpop.permute.xlu0 %4673
        %4675 = vrot.lane.b32.xlu0 %v4658, 127
        %v4676 = vpop.permute.xlu0 %4675
        %4677 = vrot.lane.b32.xlu0 %v4661, 127
        %v4678 = vpop.permute.xlu0 %4677
        %4679 = vrot.lane.b32.xlu0 %v4663, 127
        %v4680 = vpop.permute.xlu0 %4679
        %4681 = vrot.lane.b32.xlu0 %v4666, 127
        %v4682 = vpop.permute.xlu0 %4681
        %4683 = vrot.lane.b32.xlu0 %v4668, 127
        %v4684 = vpop.permute.xlu0 %4683
        %v4693 = vadd.f32 %v4617, %v4670
        %v4694 = vadd.f32 %v4618, %v4672
        %v4695 = vadd.f32 %v4619, %v4674
        %v4696 = vadd.f32 %v4620, %v4676
        %v4697 = vadd.f32 %v4621, %v4678
        %v4698 = vadd.f32 %v4622, %v4680
        %v4699 = vadd.f32 %v4623, %v4682
        %v4700 = vadd.f32 %v4624, %v4684
        %v4701 = vmul.f32 %v2071, %v1042
        %v4702 = vmul.f32 %v2071, %v1004
        %v4703 = vmul.f32 %v2071, %v1050
        %v4704 = vmul.f32 %v2075, %v1043
        %v4705 = vmul.f32 %v2075, %v1007
        %v4706 = vmul.f32 %v2075, %v1051
        %v4707 = vmul.f32 %v2079, %v1044
        %v4708 = vmul.f32 %v2079, %v1010
        %v4709 = vmul.f32 %v2079, %v1052
        %v4710 = vmul.f32 %v2083, %v1045
        %v4711 = vmul.f32 %v2083, %v1013
        %v4712 = vmul.f32 %v2083, %v1053
        %v4725 = vrot.slane %v4701, 3
        %v4726 = vrot.slane %v4702, 3
        %v4727 = vsel %vm4528, %v4725, %v4726
        %v4728 = vrot.slane %v4703, 3
        %v4729 = vsel %vm4528, %v4726, %v4728
        %v4730 = vrot.slane %v4704, 3
        %v4731 = vrot.slane %v4705, 3
        %v4732 = vsel %vm4528, %v4730, %v4731
        %v4733 = vrot.slane %v4706, 3
        %v4734 = vsel %vm4528, %v4731, %v4733
        %v4735 = vrot.slane %v4707, 3
        %v4736 = vrot.slane %v4708, 3
        %v4737 = vsel %vm4528, %v4735, %v4736
        %v4738 = vrot.slane %v4709, 3
        %v4739 = vsel %vm4528, %v4736, %v4738
        %v4740 = vrot.slane %v4710, 3
        %v4741 = vrot.slane %v4711, 3
        %v4742 = vsel %vm4528, %v4740, %v4741
        %v4743 = vrot.slane %v4712, 3
        %v4744 = vsel %vm4528, %v4741, %v4743
        %4745 = vrot.lane.b32.xlu0 %v4727, 127
        %v4746 = vpop.permute.xlu0 %4745
        %4747 = vrot.lane.b32.xlu0 %v4729, 127
        %v4748 = vpop.permute.xlu0 %4747
        %4749 = vrot.lane.b32.xlu0 %v4732, 127
        %v4750 = vpop.permute.xlu0 %4749
        %4751 = vrot.lane.b32.xlu0 %v4734, 127
        %v4752 = vpop.permute.xlu0 %4751
        %4753 = vrot.lane.b32.xlu0 %v4737, 127
        %v4754 = vpop.permute.xlu0 %4753
        %4755 = vrot.lane.b32.xlu0 %v4739, 127
        %v4756 = vpop.permute.xlu0 %4755
        %4757 = vrot.lane.b32.xlu0 %v4742, 127
        %v4758 = vpop.permute.xlu0 %4757
        %4759 = vrot.lane.b32.xlu0 %v4744, 127
        %v4760 = vpop.permute.xlu0 %4759
        %v4769 = vadd.f32 %v4693, %v4746
        %v4770 = vadd.f32 %v4694, %v4748
        %v4771 = vadd.f32 %v4695, %v4750
        %v4772 = vadd.f32 %v4696, %v4752
        %v4773 = vadd.f32 %v4697, %v4754
        %v4774 = vadd.f32 %v4698, %v4756
        %v4775 = vadd.f32 %v4699, %v4758
        %v4776 = vadd.f32 %v4700, %v4760
        %v4777 = vmul.f32 %v1508, %v1038
        %v4778 = vmul.f32 %v1508, %v992
        %v4779 = vmul.f32 %v1508, %v1046
        %v4780 = vmul.f32 %v1512, %v1039
        %v4781 = vmul.f32 %v1512, %v995
        %v4782 = vmul.f32 %v1512, %v1047
        %v4783 = vmul.f32 %v1516, %v1040
        %v4784 = vmul.f32 %v1516, %v998
        %v4785 = vmul.f32 %v1516, %v1048
        %v4786 = vmul.f32 %v1520, %v1041
        %v4787 = vmul.f32 %v1520, %v1001
        %v4788 = vmul.f32 %v1520, %v1049
        %v4801 = vrot.slane %v4777, 3
        %v4802 = vrot.slane %v4778, 3
        %v4803 = vsel %vm4528, %v4801, %v4802
        %v4804 = vrot.slane %v4779, 3
        %v4805 = vsel %vm4528, %v4802, %v4804
        %v4806 = vrot.slane %v4780, 3
        %v4807 = vrot.slane %v4781, 3
        %v4808 = vsel %vm4528, %v4806, %v4807
        %v4809 = vrot.slane %v4782, 3
        %v4810 = vsel %vm4528, %v4807, %v4809
        %v4811 = vrot.slane %v4783, 3
        %v4812 = vrot.slane %v4784, 3
        %v4813 = vsel %vm4528, %v4811, %v4812
        %v4814 = vrot.slane %v4785, 3
        %v4815 = vsel %vm4528, %v4812, %v4814
        %v4816 = vrot.slane %v4786, 3
        %v4817 = vrot.slane %v4787, 3
        %v4818 = vsel %vm4528, %v4816, %v4817
        %v4819 = vrot.slane %v4788, 3
        %v4820 = vsel %vm4528, %v4817, %v4819
        %4821 = vrot.lane.b32.xlu0 %v4803, 126
        %v4822 = vpop.permute.xlu0 %4821
        %4823 = vrot.lane.b32.xlu0 %v4805, 126
        %v4824 = vpop.permute.xlu0 %4823
        %4825 = vrot.lane.b32.xlu0 %v4808, 126
        %v4826 = vpop.permute.xlu0 %4825
        %4827 = vrot.lane.b32.xlu0 %v4810, 126
        %v4828 = vpop.permute.xlu0 %4827
        %4829 = vrot.lane.b32.xlu0 %v4813, 126
        %v4830 = vpop.permute.xlu0 %4829
        %4831 = vrot.lane.b32.xlu0 %v4815, 126
        %v4832 = vpop.permute.xlu0 %4831
        %4833 = vrot.lane.b32.xlu0 %v4818, 126
        %v4834 = vpop.permute.xlu0 %4833
        %4835 = vrot.lane.b32.xlu0 %v4820, 126
        %v4836 = vpop.permute.xlu0 %4835
        %v4845 = vadd.f32 %v4769, %v4822
        %v4846 = vadd.f32 %v4770, %v4824
        %v4847 = vadd.f32 %v4771, %v4826
        %v4848 = vadd.f32 %v4772, %v4828
        %v4849 = vadd.f32 %v4773, %v4830
        %v4850 = vadd.f32 %v4774, %v4832
        %v4851 = vadd.f32 %v4775, %v4834
        %v4852 = vadd.f32 %v4776, %v4836
        %v4853 = vmul.f32 %v2087, %v1042
        %v4854 = vmul.f32 %v2087, %v1004
        %v4855 = vmul.f32 %v2087, %v1050
        %v4856 = vmul.f32 %v2091, %v1043
        %v4857 = vmul.f32 %v2091, %v1007
        %v4858 = vmul.f32 %v2091, %v1051
        %v4859 = vmul.f32 %v2095, %v1044
        %v4860 = vmul.f32 %v2095, %v1010
        %v4861 = vmul.f32 %v2095, %v1052
        %v4862 = vmul.f32 %v2099, %v1045
        %v4863 = vmul.f32 %v2099, %v1013
        %v4864 = vmul.f32 %v2099, %v1053
        %v4877 = vrot.slane %v4853, 3
        %v4878 = vrot.slane %v4854, 3
        %v4879 = vsel %vm4528, %v4877, %v4878
        %v4880 = vrot.slane %v4855, 3
        %v4881 = vsel %vm4528, %v4878, %v4880
        %v4882 = vrot.slane %v4856, 3
        %v4883 = vrot.slane %v4857, 3
        %v4884 = vsel %vm4528, %v4882, %v4883
        %v4885 = vrot.slane %v4858, 3
        %v4886 = vsel %vm4528, %v4883, %v4885
        %v4887 = vrot.slane %v4859, 3
        %v4888 = vrot.slane %v4860, 3
        %v4889 = vsel %vm4528, %v4887, %v4888
        %v4890 = vrot.slane %v4861, 3
        %v4891 = vsel %vm4528, %v4888, %v4890
        %v4892 = vrot.slane %v4862, 3
        %v4893 = vrot.slane %v4863, 3
        %v4894 = vsel %vm4528, %v4892, %v4893
        %v4895 = vrot.slane %v4864, 3
        %v4896 = vsel %vm4528, %v4893, %v4895
        %4897 = vrot.lane.b32.xlu0 %v4879, 126
        %v4898 = vpop.permute.xlu0 %4897
        %4899 = vrot.lane.b32.xlu0 %v4881, 126
        %v4900 = vpop.permute.xlu0 %4899
        %4901 = vrot.lane.b32.xlu0 %v4884, 126
        %v4902 = vpop.permute.xlu0 %4901
        %4903 = vrot.lane.b32.xlu0 %v4886, 126
        %v4904 = vpop.permute.xlu0 %4903
        %4905 = vrot.lane.b32.xlu0 %v4889, 126
        %v4906 = vpop.permute.xlu0 %4905
        %4907 = vrot.lane.b32.xlu0 %v4891, 126
        %v4908 = vpop.permute.xlu0 %4907
        %4909 = vrot.lane.b32.xlu0 %v4894, 126
        %v4910 = vpop.permute.xlu0 %4909
        %4911 = vrot.lane.b32.xlu0 %v4896, 126
        %v4912 = vpop.permute.xlu0 %4911
        %v4921 = vadd.f32 %v4845, %v4898
        %v4922 = vadd.f32 %v4846, %v4900
        %v4923 = vadd.f32 %v4847, %v4902
        %v4924 = vadd.f32 %v4848, %v4904
        %v4925 = vadd.f32 %v4849, %v4906
        %v4926 = vadd.f32 %v4850, %v4908
        %v4927 = vadd.f32 %v4851, %v4910
        %v4928 = vadd.f32 %v4852, %v4912
        %v4929 = vmul.f32 %v1524, %v1038
        %v4930 = vmul.f32 %v1524, %v992
        %v4931 = vmul.f32 %v1524, %v1046
        %v4932 = vmul.f32 %v1528, %v1039
        %v4933 = vmul.f32 %v1528, %v995
        %v4934 = vmul.f32 %v1528, %v1047
        %v4935 = vmul.f32 %v1532, %v1040
        %v4936 = vmul.f32 %v1532, %v998
        %v4937 = vmul.f32 %v1532, %v1048
        %v4938 = vmul.f32 %v1536, %v1041
        %v4939 = vmul.f32 %v1536, %v1001
        %v4940 = vmul.f32 %v1536, %v1049
        %v4953 = vrot.slane %v4929, 3
        %v4954 = vrot.slane %v4930, 3
        %v4955 = vsel %vm4528, %v4953, %v4954
        %v4956 = vrot.slane %v4931, 3
        %v4957 = vsel %vm4528, %v4954, %v4956
        %v4958 = vrot.slane %v4932, 3
        %v4959 = vrot.slane %v4933, 3
        %v4960 = vsel %vm4528, %v4958, %v4959
        %v4961 = vrot.slane %v4934, 3
        %v4962 = vsel %vm4528, %v4959, %v4961
        %v4963 = vrot.slane %v4935, 3
        %v4964 = vrot.slane %v4936, 3
        %v4965 = vsel %vm4528, %v4963, %v4964
        %v4966 = vrot.slane %v4937, 3
        %v4967 = vsel %vm4528, %v4964, %v4966
        %v4968 = vrot.slane %v4938, 3
        %v4969 = vrot.slane %v4939, 3
        %v4970 = vsel %vm4528, %v4968, %v4969
        %v4971 = vrot.slane %v4940, 3
        %v4972 = vsel %vm4528, %v4969, %v4971
        %4973 = vrot.lane.b32.xlu0 %v4955, 125
        %v4974 = vpop.permute.xlu0 %4973
        %4975 = vrot.lane.b32.xlu0 %v4957, 125
        %v4976 = vpop.permute.xlu0 %4975
        %4977 = vrot.lane.b32.xlu0 %v4960, 125
        %v4978 = vpop.permute.xlu0 %4977
        %4979 = vrot.lane.b32.xlu0 %v4962, 125
        %v4980 = vpop.permute.xlu0 %4979
        %4981 = vrot.lane.b32.xlu0 %v4965, 125
        %v4982 = vpop.permute.xlu0 %4981
        %4983 = vrot.lane.b32.xlu0 %v4967, 125
        %v4984 = vpop.permute.xlu0 %4983
        %4985 = vrot.lane.b32.xlu0 %v4970, 125
        %v4986 = vpop.permute.xlu0 %4985
        %4987 = vrot.lane.b32.xlu0 %v4972, 125
        %v4988 = vpop.permute.xlu0 %4987
        %v4997 = vadd.f32 %v4921, %v4974
        %v4998 = vadd.f32 %v4922, %v4976
        %v4999 = vadd.f32 %v4923, %v4978
        %v5000 = vadd.f32 %v4924, %v4980
        %v5001 = vadd.f32 %v4925, %v4982
        %v5002 = vadd.f32 %v4926, %v4984
        %v5003 = vadd.f32 %v4927, %v4986
        %v5004 = vadd.f32 %v4928, %v4988
        %v5005 = vmul.f32 %v2103, %v1042
        %v5006 = vmul.f32 %v2103, %v1004
        %v5007 = vmul.f32 %v2103, %v1050
        %v5008 = vmul.f32 %v2107, %v1043
        %v5009 = vmul.f32 %v2107, %v1007
        %v5010 = vmul.f32 %v2107, %v1051
        %v5011 = vmul.f32 %v2111, %v1044
        %v5012 = vmul.f32 %v2111, %v1010
        %v5013 = vmul.f32 %v2111, %v1052
        %v5014 = vmul.f32 %v2115, %v1045
        %v5015 = vmul.f32 %v2115, %v1013
        %v5016 = vmul.f32 %v2115, %v1053
        %v5029 = vrot.slane %v5005, 3
        %v5030 = vrot.slane %v5006, 3
        %v5031 = vsel %vm4528, %v5029, %v5030
        %v5032 = vrot.slane %v5007, 3
        %v5033 = vsel %vm4528, %v5030, %v5032
        %v5034 = vrot.slane %v5008, 3
        %v5035 = vrot.slane %v5009, 3
        %v5036 = vsel %vm4528, %v5034, %v5035
        %v5037 = vrot.slane %v5010, 3
        %v5038 = vsel %vm4528, %v5035, %v5037
        %v5039 = vrot.slane %v5011, 3
        %v5040 = vrot.slane %v5012, 3
        %v5041 = vsel %vm4528, %v5039, %v5040
        %v5042 = vrot.slane %v5013, 3
        %v5043 = vsel %vm4528, %v5040, %v5042
        %v5044 = vrot.slane %v5014, 3
        %v5045 = vrot.slane %v5015, 3
        %v5046 = vsel %vm4528, %v5044, %v5045
        %v5047 = vrot.slane %v5016, 3
        %v5048 = vsel %vm4528, %v5045, %v5047
        %5049 = vrot.lane.b32.xlu0 %v5031, 125
        %v5050 = vpop.permute.xlu0 %5049
        %5051 = vrot.lane.b32.xlu0 %v5033, 125
        %v5052 = vpop.permute.xlu0 %5051
        %5053 = vrot.lane.b32.xlu0 %v5036, 125
        %v5054 = vpop.permute.xlu0 %5053
        %5055 = vrot.lane.b32.xlu0 %v5038, 125
        %v5056 = vpop.permute.xlu0 %5055
        %5057 = vrot.lane.b32.xlu0 %v5041, 125
        %v5058 = vpop.permute.xlu0 %5057
        %5059 = vrot.lane.b32.xlu0 %v5043, 125
        %v5060 = vpop.permute.xlu0 %5059
        %5061 = vrot.lane.b32.xlu0 %v5046, 125
        %v5062 = vpop.permute.xlu0 %5061
        %5063 = vrot.lane.b32.xlu0 %v5048, 125
        %v5064 = vpop.permute.xlu0 %5063
        %v5073 = vadd.f32 %v4997, %v5050
        %v5074 = vadd.f32 %v4998, %v5052
        %v5075 = vadd.f32 %v4999, %v5054
        %v5076 = vadd.f32 %v5000, %v5056
        %v5077 = vadd.f32 %v5001, %v5058
        %v5078 = vadd.f32 %v5002, %v5060
        %v5079 = vadd.f32 %v5003, %v5062
        %v5080 = vadd.f32 %v5004, %v5064
        %v5081 = vmul.f32 %v1540, %v1038
        %v5082 = vmul.f32 %v1540, %v992
        %v5083 = vmul.f32 %v1540, %v1046
        %v5084 = vmul.f32 %v1544, %v1039
        %v5085 = vmul.f32 %v1544, %v995
        %v5086 = vmul.f32 %v1544, %v1047
        %v5087 = vmul.f32 %v1548, %v1040
        %v5088 = vmul.f32 %v1548, %v998
        %v5089 = vmul.f32 %v1548, %v1048
        %v5090 = vmul.f32 %v1552, %v1041
        %v5091 = vmul.f32 %v1552, %v1001
        %v5092 = vmul.f32 %v1552, %v1049
        %v5105 = vrot.slane %v5081, 3
        %v5106 = vrot.slane %v5082, 3
        %v5107 = vsel %vm4528, %v5105, %v5106
        %v5108 = vrot.slane %v5083, 3
        %v5109 = vsel %vm4528, %v5106, %v5108
        %v5110 = vrot.slane %v5084, 3
        %v5111 = vrot.slane %v5085, 3
        %v5112 = vsel %vm4528, %v5110, %v5111
        %v5113 = vrot.slane %v5086, 3
        %v5114 = vsel %vm4528, %v5111, %v5113
        %v5115 = vrot.slane %v5087, 3
        %v5116 = vrot.slane %v5088, 3
        %v5117 = vsel %vm4528, %v5115, %v5116
        %v5118 = vrot.slane %v5089, 3
        %v5119 = vsel %vm4528, %v5116, %v5118
        %v5120 = vrot.slane %v5090, 3
        %v5121 = vrot.slane %v5091, 3
        %v5122 = vsel %vm4528, %v5120, %v5121
        %v5123 = vrot.slane %v5092, 3
        %v5124 = vsel %vm4528, %v5121, %v5123
        %5125 = vrot.lane.b32.xlu0 %v5107, 124
        %v5126 = vpop.permute.xlu0 %5125
        %5127 = vrot.lane.b32.xlu0 %v5109, 124
        %v5128 = vpop.permute.xlu0 %5127
        %5129 = vrot.lane.b32.xlu0 %v5112, 124
        %v5130 = vpop.permute.xlu0 %5129
        %5131 = vrot.lane.b32.xlu0 %v5114, 124
        %v5132 = vpop.permute.xlu0 %5131
        %5133 = vrot.lane.b32.xlu0 %v5117, 124
        %v5134 = vpop.permute.xlu0 %5133
        %5135 = vrot.lane.b32.xlu0 %v5119, 124
        %v5136 = vpop.permute.xlu0 %5135
        %5137 = vrot.lane.b32.xlu0 %v5122, 124
        %v5138 = vpop.permute.xlu0 %5137
        %5139 = vrot.lane.b32.xlu0 %v5124, 124
        %v5140 = vpop.permute.xlu0 %5139
        %v5149 = vadd.f32 %v5073, %v5126
        %v5150 = vadd.f32 %v5074, %v5128
        %v5151 = vadd.f32 %v5075, %v5130
        %v5152 = vadd.f32 %v5076, %v5132
        %v5153 = vadd.f32 %v5077, %v5134
        %v5154 = vadd.f32 %v5078, %v5136
        %v5155 = vadd.f32 %v5079, %v5138
        %v5156 = vadd.f32 %v5080, %v5140
        %v5157 = vmul.f32 %v2119, %v1042
        %v5158 = vmul.f32 %v2119, %v1004
        %v5159 = vmul.f32 %v2119, %v1050
        %v5160 = vmul.f32 %v2123, %v1043
        %v5161 = vmul.f32 %v2123, %v1007
        %v5162 = vmul.f32 %v2123, %v1051
        %v5163 = vmul.f32 %v2127, %v1044
        %v5164 = vmul.f32 %v2127, %v1010
        %v5165 = vmul.f32 %v2127, %v1052
        %v5166 = vmul.f32 %v2131, %v1045
        %v5167 = vmul.f32 %v2131, %v1013
        %v5168 = vmul.f32 %v2131, %v1053
        %v5181 = vrot.slane %v5157, 3
        %v5182 = vrot.slane %v5158, 3
        %v5183 = vsel %vm4528, %v5181, %v5182
        %v5184 = vrot.slane %v5159, 3
        %v5185 = vsel %vm4528, %v5182, %v5184
        %v5186 = vrot.slane %v5160, 3
        %v5187 = vrot.slane %v5161, 3
        %v5188 = vsel %vm4528, %v5186, %v5187
        %v5189 = vrot.slane %v5162, 3
        %v5190 = vsel %vm4528, %v5187, %v5189
        %v5191 = vrot.slane %v5163, 3
        %v5192 = vrot.slane %v5164, 3
        %v5193 = vsel %vm4528, %v5191, %v5192
        %v5194 = vrot.slane %v5165, 3
        %v5195 = vsel %vm4528, %v5192, %v5194
        %v5196 = vrot.slane %v5166, 3
        %v5197 = vrot.slane %v5167, 3
        %v5198 = vsel %vm4528, %v5196, %v5197
        %v5199 = vrot.slane %v5168, 3
        %v5200 = vsel %vm4528, %v5197, %v5199
        %5201 = vrot.lane.b32.xlu0 %v5183, 124
        %v5202 = vpop.permute.xlu0 %5201
        %5203 = vrot.lane.b32.xlu0 %v5185, 124
        %v5204 = vpop.permute.xlu0 %5203
        %5205 = vrot.lane.b32.xlu0 %v5188, 124
        %v5206 = vpop.permute.xlu0 %5205
        %5207 = vrot.lane.b32.xlu0 %v5190, 124
        %v5208 = vpop.permute.xlu0 %5207
        %5209 = vrot.lane.b32.xlu0 %v5193, 124
        %v5210 = vpop.permute.xlu0 %5209
        %5211 = vrot.lane.b32.xlu0 %v5195, 124
        %v5212 = vpop.permute.xlu0 %5211
        %5213 = vrot.lane.b32.xlu0 %v5198, 124
        %v5214 = vpop.permute.xlu0 %5213
        %5215 = vrot.lane.b32.xlu0 %v5200, 124
        %v5216 = vpop.permute.xlu0 %5215
        %v5225 = vadd.f32 %v5149, %v5202
        %v5226 = vadd.f32 %v5150, %v5204
        %v5227 = vadd.f32 %v5151, %v5206
        %v5228 = vadd.f32 %v5152, %v5208
        %v5229 = vadd.f32 %v5153, %v5210
        %v5230 = vadd.f32 %v5154, %v5212
        %v5231 = vadd.f32 %v5155, %v5214
        %v5232 = vadd.f32 %v5156, %v5216
        %v5233 = vmul.f32 %v1556, %v1038
        %v5234 = vmul.f32 %v1556, %v992
        %v5235 = vmul.f32 %v1556, %v1046
        %v5236 = vmul.f32 %v1560, %v1039
        %v5237 = vmul.f32 %v1560, %v995
        %v5238 = vmul.f32 %v1560, %v1047
        %v5239 = vmul.f32 %v1564, %v1040
        %v5240 = vmul.f32 %v1564, %v998
        %v5241 = vmul.f32 %v1564, %v1048
        %v5242 = vmul.f32 %v1568, %v1041
        %v5243 = vmul.f32 %v1568, %v1001
        %v5244 = vmul.f32 %v1568, %v1049
        %vm5257 = vcmask 1043456
        %v5258 = vrot.slane %v5233, 4
        %v5259 = vrot.slane %v5234, 4
        %v5260 = vsel %vm5257, %v5258, %v5259
        %v5261 = vrot.slane %v5235, 4
        %v5262 = vsel %vm5257, %v5259, %v5261
        %v5263 = vrot.slane %v5236, 4
        %v5264 = vrot.slane %v5237, 4
        %v5265 = vsel %vm5257, %v5263, %v5264
        %v5266 = vrot.slane %v5238, 4
        %v5267 = vsel %vm5257, %v5264, %v5266
        %v5268 = vrot.slane %v5239, 4
        %v5269 = vrot.slane %v5240, 4
        %v5270 = vsel %vm5257, %v5268, %v5269
        %v5271 = vrot.slane %v5241, 4
        %v5272 = vsel %vm5257, %v5269, %v5271
        %v5273 = vrot.slane %v5242, 4
        %v5274 = vrot.slane %v5243, 4
        %v5275 = vsel %vm5257, %v5273, %v5274
        %v5276 = vrot.slane %v5244, 4
        %v5277 = vsel %vm5257, %v5274, %v5276
        %v5286 = vadd.f32 %v5225, %v5260
        %v5287 = vadd.f32 %v5226, %v5262
        %v5288 = vadd.f32 %v5227, %v5265
        %v5289 = vadd.f32 %v5228, %v5267
        %v5290 = vadd.f32 %v5229, %v5270
        %v5291 = vadd.f32 %v5230, %v5272
        %v5292 = vadd.f32 %v5231, %v5275
        %v5293 = vadd.f32 %v5232, %v5277
        %v5294 = vmul.f32 %v2135, %v1042
        %v5295 = vmul.f32 %v2135, %v1004
        %v5296 = vmul.f32 %v2135, %v1050
        %v5297 = vmul.f32 %v2139, %v1043
        %v5298 = vmul.f32 %v2139, %v1007
        %v5299 = vmul.f32 %v2139, %v1051
        %v5300 = vmul.f32 %v2143, %v1044
        %v5301 = vmul.f32 %v2143, %v1010
        %v5302 = vmul.f32 %v2143, %v1052
        %v5303 = vmul.f32 %v2147, %v1045
        %v5304 = vmul.f32 %v2147, %v1013
        %v5305 = vmul.f32 %v2147, %v1053
        %v5318 = vrot.slane %v5294, 4
        %v5319 = vrot.slane %v5295, 4
        %v5320 = vsel %vm5257, %v5318, %v5319
        %v5321 = vrot.slane %v5296, 4
        %v5322 = vsel %vm5257, %v5319, %v5321
        %v5323 = vrot.slane %v5297, 4
        %v5324 = vrot.slane %v5298, 4
        %v5325 = vsel %vm5257, %v5323, %v5324
        %v5326 = vrot.slane %v5299, 4
        %v5327 = vsel %vm5257, %v5324, %v5326
        %v5328 = vrot.slane %v5300, 4
        %v5329 = vrot.slane %v5301, 4
        %v5330 = vsel %vm5257, %v5328, %v5329
        %v5331 = vrot.slane %v5302, 4
        %v5332 = vsel %vm5257, %v5329, %v5331
        %v5333 = vrot.slane %v5303, 4
        %v5334 = vrot.slane %v5304, 4
        %v5335 = vsel %vm5257, %v5333, %v5334
        %v5336 = vrot.slane %v5305, 4
        %v5337 = vsel %vm5257, %v5334, %v5336
        %v5346 = vadd.f32 %v5286, %v5320
        %v5347 = vadd.f32 %v5287, %v5322
        %v5348 = vadd.f32 %v5288, %v5325
        %v5349 = vadd.f32 %v5289, %v5327
        %v5350 = vadd.f32 %v5290, %v5330
        %v5351 = vadd.f32 %v5291, %v5332
        %v5352 = vadd.f32 %v5292, %v5335
        %v5353 = vadd.f32 %v5293, %v5337
        %v5354 = vmul.f32 %v1572, %v1038
        %v5355 = vmul.f32 %v1572, %v992
        %v5356 = vmul.f32 %v1572, %v1046
        %v5357 = vmul.f32 %v1576, %v1039
        %v5358 = vmul.f32 %v1576, %v995
        %v5359 = vmul.f32 %v1576, %v1047
        %v5360 = vmul.f32 %v1580, %v1040
        %v5361 = vmul.f32 %v1580, %v998
        %v5362 = vmul.f32 %v1580, %v1048
        %v5363 = vmul.f32 %v1584, %v1041
        %v5364 = vmul.f32 %v1584, %v1001
        %v5365 = vmul.f32 %v1584, %v1049
        %v5378 = vrot.slane %v5354, 4
        %v5379 = vrot.slane %v5355, 4
        %v5380 = vsel %vm5257, %v5378, %v5379
        %v5381 = vrot.slane %v5356, 4
        %v5382 = vsel %vm5257, %v5379, %v5381
        %v5383 = vrot.slane %v5357, 4
        %v5384 = vrot.slane %v5358, 4
        %v5385 = vsel %vm5257, %v5383, %v5384
        %v5386 = vrot.slane %v5359, 4
        %v5387 = vsel %vm5257, %v5384, %v5386
        %v5388 = vrot.slane %v5360, 4
        %v5389 = vrot.slane %v5361, 4
        %v5390 = vsel %vm5257, %v5388, %v5389
        %v5391 = vrot.slane %v5362, 4
        %v5392 = vsel %vm5257, %v5389, %v5391
        %v5393 = vrot.slane %v5363, 4
        %v5394 = vrot.slane %v5364, 4
        %v5395 = vsel %vm5257, %v5393, %v5394
        %v5396 = vrot.slane %v5365, 4
        %v5397 = vsel %vm5257, %v5394, %v5396
        %5398 = vrot.lane.b32.xlu0 %v5380, 127
        %v5399 = vpop.permute.xlu0 %5398
        %5400 = vrot.lane.b32.xlu0 %v5382, 127
        %v5401 = vpop.permute.xlu0 %5400
        %5402 = vrot.lane.b32.xlu0 %v5385, 127
        %v5403 = vpop.permute.xlu0 %5402
        %5404 = vrot.lane.b32.xlu0 %v5387, 127
        %v5405 = vpop.permute.xlu0 %5404
        %5406 = vrot.lane.b32.xlu0 %v5390, 127
        %v5407 = vpop.permute.xlu0 %5406
        %5408 = vrot.lane.b32.xlu0 %v5392, 127
        %v5409 = vpop.permute.xlu0 %5408
        %5410 = vrot.lane.b32.xlu0 %v5395, 127
        %v5411 = vpop.permute.xlu0 %5410
        %5412 = vrot.lane.b32.xlu0 %v5397, 127
        %v5413 = vpop.permute.xlu0 %5412
        %v5422 = vadd.f32 %v5346, %v5399
        %v5423 = vadd.f32 %v5347, %v5401
        %v5424 = vadd.f32 %v5348, %v5403
        %v5425 = vadd.f32 %v5349, %v5405
        %v5426 = vadd.f32 %v5350, %v5407
        %v5427 = vadd.f32 %v5351, %v5409
        %v5428 = vadd.f32 %v5352, %v5411
        %v5429 = vadd.f32 %v5353, %v5413
        %v5430 = vmul.f32 %v2151, %v1042
        %v5431 = vmul.f32 %v2151, %v1004
        %v5432 = vmul.f32 %v2151, %v1050
        %v5433 = vmul.f32 %v2155, %v1043
        %v5434 = vmul.f32 %v2155, %v1007
        %v5435 = vmul.f32 %v2155, %v1051
        %v5436 = vmul.f32 %v2159, %v1044
        %v5437 = vmul.f32 %v2159, %v1010
        %v5438 = vmul.f32 %v2159, %v1052
        %v5439 = vmul.f32 %v2163, %v1045
        %v5440 = vmul.f32 %v2163, %v1013
        %v5441 = vmul.f32 %v2163, %v1053
        %v5454 = vrot.slane %v5430, 4
        %v5455 = vrot.slane %v5431, 4
        %v5456 = vsel %vm5257, %v5454, %v5455
        %v5457 = vrot.slane %v5432, 4
        %v5458 = vsel %vm5257, %v5455, %v5457
        %v5459 = vrot.slane %v5433, 4
        %v5460 = vrot.slane %v5434, 4
        %v5461 = vsel %vm5257, %v5459, %v5460
        %v5462 = vrot.slane %v5435, 4
        %v5463 = vsel %vm5257, %v5460, %v5462
        %v5464 = vrot.slane %v5436, 4
        %v5465 = vrot.slane %v5437, 4
        %v5466 = vsel %vm5257, %v5464, %v5465
        %v5467 = vrot.slane %v5438, 4
        %v5468 = vsel %vm5257, %v5465, %v5467
        %v5469 = vrot.slane %v5439, 4
        %v5470 = vrot.slane %v5440, 4
        %v5471 = vsel %vm5257, %v5469, %v5470
        %v5472 = vrot.slane %v5441, 4
        %v5473 = vsel %vm5257, %v5470, %v5472
        %5474 = vrot.lane.b32.xlu0 %v5456, 127
        %v5475 = vpop.permute.xlu0 %5474
        %5476 = vrot.lane.b32.xlu0 %v5458, 127
        %v5477 = vpop.permute.xlu0 %5476
        %5478 = vrot.lane.b32.xlu0 %v5461, 127
        %v5479 = vpop.permute.xlu0 %5478
        %5480 = vrot.lane.b32.xlu0 %v5463, 127
        %v5481 = vpop.permute.xlu0 %5480
        %5482 = vrot.lane.b32.xlu0 %v5466, 127
        %v5483 = vpop.permute.xlu0 %5482
        %5484 = vrot.lane.b32.xlu0 %v5468, 127
        %v5485 = vpop.permute.xlu0 %5484
        %5486 = vrot.lane.b32.xlu0 %v5471, 127
        %v5487 = vpop.permute.xlu0 %5486
        %5488 = vrot.lane.b32.xlu0 %v5473, 127
        %v5489 = vpop.permute.xlu0 %5488
        %v5498 = vadd.f32 %v5422, %v5475
        %v5499 = vadd.f32 %v5423, %v5477
        %v5500 = vadd.f32 %v5424, %v5479
        %v5501 = vadd.f32 %v5425, %v5481
        %v5502 = vadd.f32 %v5426, %v5483
        %v5503 = vadd.f32 %v5427, %v5485
        %v5504 = vadd.f32 %v5428, %v5487
        %v5505 = vadd.f32 %v5429, %v5489
        %v5506 = vmul.f32 %v1588, %v1038
        %v5507 = vmul.f32 %v1588, %v992
        %v5508 = vmul.f32 %v1588, %v1046
        %v5509 = vmul.f32 %v1592, %v1039
        %v5510 = vmul.f32 %v1592, %v995
        %v5511 = vmul.f32 %v1592, %v1047
        %v5512 = vmul.f32 %v1596, %v1040
        %v5513 = vmul.f32 %v1596, %v998
        %v5514 = vmul.f32 %v1596, %v1048
        %v5515 = vmul.f32 %v1600, %v1041
        %v5516 = vmul.f32 %v1600, %v1001
        %v5517 = vmul.f32 %v1600, %v1049
        %v5530 = vrot.slane %v5506, 4
        %v5531 = vrot.slane %v5507, 4
        %v5532 = vsel %vm5257, %v5530, %v5531
        %v5533 = vrot.slane %v5508, 4
        %v5534 = vsel %vm5257, %v5531, %v5533
        %v5535 = vrot.slane %v5509, 4
        %v5536 = vrot.slane %v5510, 4
        %v5537 = vsel %vm5257, %v5535, %v5536
        %v5538 = vrot.slane %v5511, 4
        %v5539 = vsel %vm5257, %v5536, %v5538
        %v5540 = vrot.slane %v5512, 4
        %v5541 = vrot.slane %v5513, 4
        %v5542 = vsel %vm5257, %v5540, %v5541
        %v5543 = vrot.slane %v5514, 4
        %v5544 = vsel %vm5257, %v5541, %v5543
        %v5545 = vrot.slane %v5515, 4
        %v5546 = vrot.slane %v5516, 4
        %v5547 = vsel %vm5257, %v5545, %v5546
        %v5548 = vrot.slane %v5517, 4
        %v5549 = vsel %vm5257, %v5546, %v5548
        %5550 = vrot.lane.b32.xlu0 %v5532, 126
        %v5551 = vpop.permute.xlu0 %5550
        %5552 = vrot.lane.b32.xlu0 %v5534, 126
        %v5553 = vpop.permute.xlu0 %5552
        %5554 = vrot.lane.b32.xlu0 %v5537, 126
        %v5555 = vpop.permute.xlu0 %5554
        %5556 = vrot.lane.b32.xlu0 %v5539, 126
        %v5557 = vpop.permute.xlu0 %5556
        %5558 = vrot.lane.b32.xlu0 %v5542, 126
        %v5559 = vpop.permute.xlu0 %5558
        %5560 = vrot.lane.b32.xlu0 %v5544, 126
        %v5561 = vpop.permute.xlu0 %5560
        %5562 = vrot.lane.b32.xlu0 %v5547, 126
        %v5563 = vpop.permute.xlu0 %5562
        %5564 = vrot.lane.b32.xlu0 %v5549, 126
        %v5565 = vpop.permute.xlu0 %5564
        %v5574 = vadd.f32 %v5498, %v5551
        %v5575 = vadd.f32 %v5499, %v5553
        %v5576 = vadd.f32 %v5500, %v5555
        %v5577 = vadd.f32 %v5501, %v5557
        %v5578 = vadd.f32 %v5502, %v5559
        %v5579 = vadd.f32 %v5503, %v5561
        %v5580 = vadd.f32 %v5504, %v5563
        %v5581 = vadd.f32 %v5505, %v5565
        %v5582 = vmul.f32 %v2167, %v1042
        %v5583 = vmul.f32 %v2167, %v1004
        %v5584 = vmul.f32 %v2167, %v1050
        %v5585 = vmul.f32 %v2171, %v1043
        %v5586 = vmul.f32 %v2171, %v1007
        %v5587 = vmul.f32 %v2171, %v1051
        %v5588 = vmul.f32 %v2175, %v1044
        %v5589 = vmul.f32 %v2175, %v1010
        %v5590 = vmul.f32 %v2175, %v1052
        %v5591 = vmul.f32 %v2179, %v1045
        %v5592 = vmul.f32 %v2179, %v1013
        %v5593 = vmul.f32 %v2179, %v1053
        %v5606 = vrot.slane %v5582, 4
        %v5607 = vrot.slane %v5583, 4
        %v5608 = vsel %vm5257, %v5606, %v5607
        %v5609 = vrot.slane %v5584, 4
        %v5610 = vsel %vm5257, %v5607, %v5609
        %v5611 = vrot.slane %v5585, 4
        %v5612 = vrot.slane %v5586, 4
        %v5613 = vsel %vm5257, %v5611, %v5612
        %v5614 = vrot.slane %v5587, 4
        %v5615 = vsel %vm5257, %v5612, %v5614
        %v5616 = vrot.slane %v5588, 4
        %v5617 = vrot.slane %v5589, 4
        %v5618 = vsel %vm5257, %v5616, %v5617
        %v5619 = vrot.slane %v5590, 4
        %v5620 = vsel %vm5257, %v5617, %v5619
        %v5621 = vrot.slane %v5591, 4
        %v5622 = vrot.slane %v5592, 4
        %v5623 = vsel %vm5257, %v5621, %v5622
        %v5624 = vrot.slane %v5593, 4
        %v5625 = vsel %vm5257, %v5622, %v5624
        %5626 = vrot.lane.b32.xlu0 %v5608, 126
        %v5627 = vpop.permute.xlu0 %5626
        %5628 = vrot.lane.b32.xlu0 %v5610, 126
        %v5629 = vpop.permute.xlu0 %5628
        %5630 = vrot.lane.b32.xlu0 %v5613, 126
        %v5631 = vpop.permute.xlu0 %5630
        %5632 = vrot.lane.b32.xlu0 %v5615, 126
        %v5633 = vpop.permute.xlu0 %5632
        %5634 = vrot.lane.b32.xlu0 %v5618, 126
        %v5635 = vpop.permute.xlu0 %5634
        %5636 = vrot.lane.b32.xlu0 %v5620, 126
        %v5637 = vpop.permute.xlu0 %5636
        %5638 = vrot.lane.b32.xlu0 %v5623, 126
        %v5639 = vpop.permute.xlu0 %5638
        %5640 = vrot.lane.b32.xlu0 %v5625, 126
        %v5641 = vpop.permute.xlu0 %5640
        %v5650 = vadd.f32 %v5574, %v5627
        %v5651 = vadd.f32 %v5575, %v5629
        %v5652 = vadd.f32 %v5576, %v5631
        %v5653 = vadd.f32 %v5577, %v5633
        %v5654 = vadd.f32 %v5578, %v5635
        %v5655 = vadd.f32 %v5579, %v5637
        %v5656 = vadd.f32 %v5580, %v5639
        %v5657 = vadd.f32 %v5581, %v5641
        %v5658 = vmul.f32 %v1604, %v1038
        %v5659 = vmul.f32 %v1604, %v992
        %v5660 = vmul.f32 %v1604, %v1046
        %v5661 = vmul.f32 %v1608, %v1039
        %v5662 = vmul.f32 %v1608, %v995
        %v5663 = vmul.f32 %v1608, %v1047
        %v5664 = vmul.f32 %v1612, %v1040
        %v5665 = vmul.f32 %v1612, %v998
        %v5666 = vmul.f32 %v1612, %v1048
        %v5667 = vmul.f32 %v1616, %v1041
        %v5668 = vmul.f32 %v1616, %v1001
        %v5669 = vmul.f32 %v1616, %v1049
        %v5682 = vrot.slane %v5658, 4
        %v5683 = vrot.slane %v5659, 4
        %v5684 = vsel %vm5257, %v5682, %v5683
        %v5685 = vrot.slane %v5660, 4
        %v5686 = vsel %vm5257, %v5683, %v5685
        %v5687 = vrot.slane %v5661, 4
        %v5688 = vrot.slane %v5662, 4
        %v5689 = vsel %vm5257, %v5687, %v5688
        %v5690 = vrot.slane %v5663, 4
        %v5691 = vsel %vm5257, %v5688, %v5690
        %v5692 = vrot.slane %v5664, 4
        %v5693 = vrot.slane %v5665, 4
        %v5694 = vsel %vm5257, %v5692, %v5693
        %v5695 = vrot.slane %v5666, 4
        %v5696 = vsel %vm5257, %v5693, %v5695
        %v5697 = vrot.slane %v5667, 4
        %v5698 = vrot.slane %v5668, 4
        %v5699 = vsel %vm5257, %v5697, %v5698
        %v5700 = vrot.slane %v5669, 4
        %v5701 = vsel %vm5257, %v5698, %v5700
        %5702 = vrot.lane.b32.xlu0 %v5684, 125
        %v5703 = vpop.permute.xlu0 %5702
        %5704 = vrot.lane.b32.xlu0 %v5686, 125
        %v5705 = vpop.permute.xlu0 %5704
        %5706 = vrot.lane.b32.xlu0 %v5689, 125
        %v5707 = vpop.permute.xlu0 %5706
        %5708 = vrot.lane.b32.xlu0 %v5691, 125
        %v5709 = vpop.permute.xlu0 %5708
        %5710 = vrot.lane.b32.xlu0 %v5694, 125
        %v5711 = vpop.permute.xlu0 %5710
        %5712 = vrot.lane.b32.xlu0 %v5696, 125
        %v5713 = vpop.permute.xlu0 %5712
        %5714 = vrot.lane.b32.xlu0 %v5699, 125
        %v5715 = vpop.permute.xlu0 %5714
        %5716 = vrot.lane.b32.xlu0 %v5701, 125
        %v5717 = vpop.permute.xlu0 %5716
        %v5726 = vadd.f32 %v5650, %v5703
        %v5727 = vadd.f32 %v5651, %v5705
        %v5728 = vadd.f32 %v5652, %v5707
        %v5729 = vadd.f32 %v5653, %v5709
        %v5730 = vadd.f32 %v5654, %v5711
        %v5731 = vadd.f32 %v5655, %v5713
        %v5732 = vadd.f32 %v5656, %v5715
        %v5733 = vadd.f32 %v5657, %v5717
        %v5734 = vmul.f32 %v2183, %v1042
        %v5735 = vmul.f32 %v2183, %v1004
        %v5736 = vmul.f32 %v2183, %v1050
        %v5737 = vmul.f32 %v2187, %v1043
        %v5738 = vmul.f32 %v2187, %v1007
        %v5739 = vmul.f32 %v2187, %v1051
        %v5740 = vmul.f32 %v2191, %v1044
        %v5741 = vmul.f32 %v2191, %v1010
        %v5742 = vmul.f32 %v2191, %v1052
        %v5743 = vmul.f32 %v2195, %v1045
        %v5744 = vmul.f32 %v2195, %v1013
        %v5745 = vmul.f32 %v2195, %v1053
        %v5758 = vrot.slane %v5734, 4
        %v5759 = vrot.slane %v5735, 4
        %v5760 = vsel %vm5257, %v5758, %v5759
        %v5761 = vrot.slane %v5736, 4
        %v5762 = vsel %vm5257, %v5759, %v5761
        %v5763 = vrot.slane %v5737, 4
        %v5764 = vrot.slane %v5738, 4
        %v5765 = vsel %vm5257, %v5763, %v5764
        %v5766 = vrot.slane %v5739, 4
        %v5767 = vsel %vm5257, %v5764, %v5766
        %v5768 = vrot.slane %v5740, 4
        %v5769 = vrot.slane %v5741, 4
        %v5770 = vsel %vm5257, %v5768, %v5769
        %v5771 = vrot.slane %v5742, 4
        %v5772 = vsel %vm5257, %v5769, %v5771
        %v5773 = vrot.slane %v5743, 4
        %v5774 = vrot.slane %v5744, 4
        %v5775 = vsel %vm5257, %v5773, %v5774
        %v5776 = vrot.slane %v5745, 4
        %v5777 = vsel %vm5257, %v5774, %v5776
        %5778 = vrot.lane.b32.xlu0 %v5760, 125
        %v5779 = vpop.permute.xlu0 %5778
        %5780 = vrot.lane.b32.xlu0 %v5762, 125
        %v5781 = vpop.permute.xlu0 %5780
        %5782 = vrot.lane.b32.xlu0 %v5765, 125
        %v5783 = vpop.permute.xlu0 %5782
        %5784 = vrot.lane.b32.xlu0 %v5767, 125
        %v5785 = vpop.permute.xlu0 %5784
        %5786 = vrot.lane.b32.xlu0 %v5770, 125
        %v5787 = vpop.permute.xlu0 %5786
        %5788 = vrot.lane.b32.xlu0 %v5772, 125
        %v5789 = vpop.permute.xlu0 %5788
        %5790 = vrot.lane.b32.xlu0 %v5775, 125
        %v5791 = vpop.permute.xlu0 %5790
        %5792 = vrot.lane.b32.xlu0 %v5777, 125
        %v5793 = vpop.permute.xlu0 %5792
        %v5802 = vadd.f32 %v5726, %v5779
        %v5803 = vadd.f32 %v5727, %v5781
        %v5804 = vadd.f32 %v5728, %v5783
        %v5805 = vadd.f32 %v5729, %v5785
        %v5806 = vadd.f32 %v5730, %v5787
        %v5807 = vadd.f32 %v5731, %v5789
        %v5808 = vadd.f32 %v5732, %v5791
        %v5809 = vadd.f32 %v5733, %v5793
        %v5810 = vmul.f32 %v1620, %v1038
        %v5811 = vmul.f32 %v1620, %v992
        %v5812 = vmul.f32 %v1620, %v1046
        %v5813 = vmul.f32 %v1624, %v1039
        %v5814 = vmul.f32 %v1624, %v995
        %v5815 = vmul.f32 %v1624, %v1047
        %v5816 = vmul.f32 %v1628, %v1040
        %v5817 = vmul.f32 %v1628, %v998
        %v5818 = vmul.f32 %v1628, %v1048
        %v5819 = vmul.f32 %v1632, %v1041
        %v5820 = vmul.f32 %v1632, %v1001
        %v5821 = vmul.f32 %v1632, %v1049
        %v5834 = vrot.slane %v5810, 4
        %v5835 = vrot.slane %v5811, 4
        %v5836 = vsel %vm5257, %v5834, %v5835
        %v5837 = vrot.slane %v5812, 4
        %v5838 = vsel %vm5257, %v5835, %v5837
        %v5839 = vrot.slane %v5813, 4
        %v5840 = vrot.slane %v5814, 4
        %v5841 = vsel %vm5257, %v5839, %v5840
        %v5842 = vrot.slane %v5815, 4
        %v5843 = vsel %vm5257, %v5840, %v5842
        %v5844 = vrot.slane %v5816, 4
        %v5845 = vrot.slane %v5817, 4
        %v5846 = vsel %vm5257, %v5844, %v5845
        %v5847 = vrot.slane %v5818, 4
        %v5848 = vsel %vm5257, %v5845, %v5847
        %v5849 = vrot.slane %v5819, 4
        %v5850 = vrot.slane %v5820, 4
        %v5851 = vsel %vm5257, %v5849, %v5850
        %v5852 = vrot.slane %v5821, 4
        %v5853 = vsel %vm5257, %v5850, %v5852
        %5854 = vrot.lane.b32.xlu0 %v5836, 124
        %v5855 = vpop.permute.xlu0 %5854
        %5856 = vrot.lane.b32.xlu0 %v5838, 124
        %v5857 = vpop.permute.xlu0 %5856
        %5858 = vrot.lane.b32.xlu0 %v5841, 124
        %v5859 = vpop.permute.xlu0 %5858
        %5860 = vrot.lane.b32.xlu0 %v5843, 124
        %v5861 = vpop.permute.xlu0 %5860
        %5862 = vrot.lane.b32.xlu0 %v5846, 124
        %v5863 = vpop.permute.xlu0 %5862
        %5864 = vrot.lane.b32.xlu0 %v5848, 124
        %v5865 = vpop.permute.xlu0 %5864
        %5866 = vrot.lane.b32.xlu0 %v5851, 124
        %v5867 = vpop.permute.xlu0 %5866
        %5868 = vrot.lane.b32.xlu0 %v5853, 124
        %v5869 = vpop.permute.xlu0 %5868
        %v5878 = vadd.f32 %v5802, %v5855
        %v5879 = vadd.f32 %v5803, %v5857
        %v5880 = vadd.f32 %v5804, %v5859
        %v5881 = vadd.f32 %v5805, %v5861
        %v5882 = vadd.f32 %v5806, %v5863
        %v5883 = vadd.f32 %v5807, %v5865
        %v5884 = vadd.f32 %v5808, %v5867
        %v5885 = vadd.f32 %v5809, %v5869
        %v5886 = vmul.f32 %v2199, %v1042
        %v5887 = vmul.f32 %v2199, %v1004
        %v5888 = vmul.f32 %v2199, %v1050
        %v5889 = vmul.f32 %v2203, %v1043
        %v5890 = vmul.f32 %v2203, %v1007
        %v5891 = vmul.f32 %v2203, %v1051
        %v5892 = vmul.f32 %v2207, %v1044
        %v5893 = vmul.f32 %v2207, %v1010
        %v5894 = vmul.f32 %v2207, %v1052
        %v5895 = vmul.f32 %v2211, %v1045
        %v5896 = vmul.f32 %v2211, %v1013
        %v5897 = vmul.f32 %v2211, %v1053
        %v5910 = vrot.slane %v5886, 4
        %v5911 = vrot.slane %v5887, 4
        %v5912 = vsel %vm5257, %v5910, %v5911
        %v5913 = vrot.slane %v5888, 4
        %v5914 = vsel %vm5257, %v5911, %v5913
        %v5915 = vrot.slane %v5889, 4
        %v5916 = vrot.slane %v5890, 4
        %v5917 = vsel %vm5257, %v5915, %v5916
        %v5918 = vrot.slane %v5891, 4
        %v5919 = vsel %vm5257, %v5916, %v5918
        %v5920 = vrot.slane %v5892, 4
        %v5921 = vrot.slane %v5893, 4
        %v5922 = vsel %vm5257, %v5920, %v5921
        %v5923 = vrot.slane %v5894, 4
        %v5924 = vsel %vm5257, %v5921, %v5923
        %v5925 = vrot.slane %v5895, 4
        %v5926 = vrot.slane %v5896, 4
        %v5927 = vsel %vm5257, %v5925, %v5926
        %v5928 = vrot.slane %v5897, 4
        %v5929 = vsel %vm5257, %v5926, %v5928
        %5930 = vrot.lane.b32.xlu0 %v5912, 124
        %v5931 = vpop.permute.xlu0 %5930
        %5932 = vrot.lane.b32.xlu0 %v5914, 124
        %v5933 = vpop.permute.xlu0 %5932
        %5934 = vrot.lane.b32.xlu0 %v5917, 124
        %v5935 = vpop.permute.xlu0 %5934
        %5936 = vrot.lane.b32.xlu0 %v5919, 124
        %v5937 = vpop.permute.xlu0 %5936
        %5938 = vrot.lane.b32.xlu0 %v5922, 124
        %v5939 = vpop.permute.xlu0 %5938
        %5940 = vrot.lane.b32.xlu0 %v5924, 124
        %v5941 = vpop.permute.xlu0 %5940
        %5942 = vrot.lane.b32.xlu0 %v5927, 124
        %v5943 = vpop.permute.xlu0 %5942
        %5944 = vrot.lane.b32.xlu0 %v5929, 124
        %v5945 = vpop.permute.xlu0 %5944
        %v5954 = vadd.f32 %v5878, %v5931
        %v5955 = vadd.f32 %v5879, %v5933
        %v5956 = vadd.f32 %v5880, %v5935
        %v5957 = vadd.f32 %v5881, %v5937
        %v5958 = vadd.f32 %v5882, %v5939
        %v5959 = vadd.f32 %v5883, %v5941
        %v5960 = vadd.f32 %v5884, %v5943
        %v5961 = vadd.f32 %v5885, %v5945
        %v5962 = vcombine.low %v5954, %v5958
        %v5963 = vcombine.high %v5954, %v5958
        %v5965 = vunpack.c.l.s4 1983009808
        %v5966 = vunpack.c.0.s8 %v5965
        %v5967 = vlaneseq
        %v5968 = vshrl.u32 %v5967, 7
        %v5969 = vsub.s32 %v5966, %v5968
        %v5970 = vrot.slane %v5962, %v5969
        %v5972 = vunpack.c.l.s4 1983009808
        %v5973 = vunpack.c.0.s8 %v5972
        %v5974 = vlaneseq
        %v5975 = vshrl.u32 %v5974, 7
        %v5976 = vsub.s32 %v5973, %v5975
        %v5977 = vrot.slane %v5963, %v5976
        %v5978 = vcombine.low %v5956, %v5960
        %v5979 = vcombine.high %v5956, %v5960
        %v5981 = vunpack.c.l.s4 1983009808
        %v5982 = vunpack.c.0.s8 %v5981
        %v5983 = vlaneseq
        %v5984 = vshrl.u32 %v5983, 7
        %v5985 = vsub.s32 %v5982, %v5984
        %v5986 = vrot.slane %v5978, %v5985
        %v5988 = vunpack.c.l.s4 1983009808
        %v5989 = vunpack.c.0.s8 %v5988
        %v5990 = vlaneseq
        %v5991 = vshrl.u32 %v5990, 7
        %v5992 = vsub.s32 %v5989, %v5991
        %v5993 = vrot.slane %v5979, %v5992
        %v5994 = vcombine.low %v5970, %v5986
        %v5995 = vcombine.high %v5970, %v5986
        %v5997 = vunpack.c.l.s4 1934713408
        %v5998 = vunpack.c.0.s8 %v5997
        %v5999 = vlaneseq
        %v6000 = vshrl.u32 %v5999, 7
        %v6001 = vsub.s32 %v5998, %v6000
        %v6002 = vrot.slane %v5994, %v6001
        %v6004 = vunpack.c.l.s4 1934713408
        %v6005 = vunpack.c.0.s8 %v6004
        %v6006 = vlaneseq
        %v6007 = vshrl.u32 %v6006, 7
        %v6008 = vsub.s32 %v6005, %v6007
        %v6009 = vrot.slane %v5995, %v6008
        %v6010 = vcombine.low %v5977, %v5993
        %v6011 = vcombine.high %v5977, %v5993
        %v6013 = vunpack.c.l.s4 1934713408
        %v6014 = vunpack.c.0.s8 %v6013
        %v6015 = vlaneseq
        %v6016 = vshrl.u32 %v6015, 7
        %v6017 = vsub.s32 %v6014, %v6016
        %v6018 = vrot.slane %v6010, %v6017
        %v6020 = vunpack.c.l.s4 1934713408
        %v6021 = vunpack.c.0.s8 %v6020
        %v6022 = vlaneseq
        %v6023 = vshrl.u32 %v6022, 7
        %v6024 = vsub.s32 %v6021, %v6023
        %v6025 = vrot.slane %v6011, %v6024
        %v6026 = vcombine.high %v6002, 0.0
        %v6027 = vcombine.high %v6009, 0.0
        %v6028 = vcombine.high %v6018, 0.0
        %v6029 = vcombine.high %v6025, 0.0
        %v6030 = vcombine.low %v5955, %v5959
        %v6031 = vcombine.high %v5955, %v5959
        %v6033 = vunpack.c.l.s4 1983009808
        %v6034 = vunpack.c.0.s8 %v6033
        %v6035 = vlaneseq
        %v6036 = vshrl.u32 %v6035, 7
        %v6037 = vsub.s32 %v6034, %v6036
        %v6038 = vrot.slane %v6030, %v6037
        %v6040 = vunpack.c.l.s4 1983009808
        %v6041 = vunpack.c.0.s8 %v6040
        %v6042 = vlaneseq
        %v6043 = vshrl.u32 %v6042, 7
        %v6044 = vsub.s32 %v6041, %v6043
        %v6045 = vrot.slane %v6031, %v6044
        %v6046 = vcombine.low %v5957, %v5961
        %v6047 = vcombine.high %v5957, %v5961
        %v6049 = vunpack.c.l.s4 1983009808
        %v6050 = vunpack.c.0.s8 %v6049
        %v6051 = vlaneseq
        %v6052 = vshrl.u32 %v6051, 7
        %v6053 = vsub.s32 %v6050, %v6052
        %v6054 = vrot.slane %v6046, %v6053
        %v6056 = vunpack.c.l.s4 1983009808
        %v6057 = vunpack.c.0.s8 %v6056
        %v6058 = vlaneseq
        %v6059 = vshrl.u32 %v6058, 7
        %v6060 = vsub.s32 %v6057, %v6059
        %v6061 = vrot.slane %v6047, %v6060
        %v6062 = vcombine.low %v6038, %v6054
        %v6063 = vcombine.high %v6038, %v6054
        %v6065 = vunpack.c.l.s4 1934713408
        %v6066 = vunpack.c.0.s8 %v6065
        %v6067 = vlaneseq
        %v6068 = vshrl.u32 %v6067, 7
        %v6069 = vsub.s32 %v6066, %v6068
        %v6070 = vrot.slane %v6062, %v6069
        %v6072 = vunpack.c.l.s4 1934713408
        %v6073 = vunpack.c.0.s8 %v6072
        %v6074 = vlaneseq
        %v6075 = vshrl.u32 %v6074, 7
        %v6076 = vsub.s32 %v6073, %v6075
        %v6077 = vrot.slane %v6063, %v6076
        %v6078 = vcombine.low %v6045, %v6061
        %v6079 = vcombine.high %v6045, %v6061
        %v6081 = vunpack.c.l.s4 1934713408
        %v6082 = vunpack.c.0.s8 %v6081
        %v6083 = vlaneseq
        %v6084 = vshrl.u32 %v6083, 7
        %v6085 = vsub.s32 %v6082, %v6084
        %v6086 = vrot.slane %v6078, %v6085
        %v6088 = vunpack.c.l.s4 1934713408
        %v6089 = vunpack.c.0.s8 %v6088
        %v6090 = vlaneseq
        %v6091 = vshrl.u32 %v6090, 7
        %v6092 = vsub.s32 %v6089, %v6091
        %v6093 = vrot.slane %v6079, %v6092
        %v6094 = vcombine.high %v6070, 0.0
        %v6095 = vcombine.high %v6077, 0.0
        %v6096 = vcombine.high %v6086, 0.0
        %v6097 = vcombine.high %v6093, 0.0
        %6099 = vrot.lane.b32.xlu0 %v6026, 16
        %v6100 = vpop.permute.xlu0 %6099
        %6103 = vrot.lane.b32.xlu0 %v6009, 32
        %v6104 = vpop.permute.xlu0 %6103
        %6107 = vrot.lane.b32.xlu0 %v6027, 48
        %v6108 = vpop.permute.xlu0 %6107
        %6111 = vrot.lane.b32.xlu0 %v6018, 64
        %v6112 = vpop.permute.xlu0 %6111
        %6115 = vrot.lane.b32.xlu0 %v6028, 80
        %v6116 = vpop.permute.xlu0 %6115
        %6119 = vrot.lane.b32.xlu0 %v6025, 96
        %v6120 = vpop.permute.xlu0 %6119
        %6123 = vrot.lane.b32.xlu0 %v6029, 112
        %v6124 = vpop.permute.xlu0 %6123
        %6127 = vrot.lane.b32.xlu0 %v6094, 16
        %v6128 = vpop.permute.xlu0 %6127
        %6131 = vrot.lane.b32.xlu0 %v6077, 32
        %v6132 = vpop.permute.xlu0 %6131
        %6135 = vrot.lane.b32.xlu0 %v6095, 48
        %v6136 = vpop.permute.xlu0 %6135
        %6139 = vrot.lane.b32.xlu0 %v6086, 64
        %v6140 = vpop.permute.xlu0 %6139
        %6143 = vrot.lane.b32.xlu0 %v6096, 80
        %v6144 = vpop.permute.xlu0 %6143
        %6147 = vrot.lane.b32.xlu0 %v6093, 96
        %v6148 = vpop.permute.xlu0 %6147
        %6151 = vrot.lane.b32.xlu0 %v6097, 112
        %v6152 = vpop.permute.xlu0 %6151
        %vm6154 = vcmask 130048
        %v6155 = vsel %vm6154, %v6002, %v6100
        %vm6156 = vcmask 261120
        %v6157 = vsel %vm6156, %v6155, %v6104
        %vm6158 = vcmask 392192
        %v6159 = vsel %vm6158, %v6157, %v6108
        %vm6160 = vcmask 523264
        %v6161 = vsel %vm6160, %v6159, %v6112
        %vm6162 = vcmask 654336
        %v6163 = vsel %vm6162, %v6161, %v6116
        %vm6164 = vcmask 785408
        %v6165 = vsel %vm6164, %v6163, %v6120
        %vm6166 = vcmask 916480
        %v6167 = vsel %vm6166, %v6165, %v6124
        %v6168 = vsel %vm6154, %v6070, %v6128
        %v6169 = vsel %vm6156, %v6168, %v6132
        %v6170 = vsel %vm6158, %v6169, %v6136
        %v6171 = vsel %vm6160, %v6170, %v6140
        %v6172 = vsel %vm6162, %v6171, %v6144
        %v6173 = vsel %vm6164, %v6172, %v6148
        %v6174 = vsel %vm6166, %v6173, %v6152
        %v6175 = vld [vmem:[#allocation11] sm:$0xf]
        %6177 = vset.pattern.permute.xlu0 0
        %6178 = vperm.xlu0 %6177, %v6175
        %v6179 = vpop.permute.xlu0 %6178
        %v6181 = vadd.f32 %v6167, %v6179
        %v6182 = vadd.f32 %v6174, %v6179
        %v6183 = vmin.f32 %v6181, 20.0
        %v6184 = vmin.f32 %v6182, 20.0
        %v6185 = vmul.f32 %v6183, 1.442695
        %v6186 = vpow.pop %v6185
        %v6187 = vmul.f32 %v6184, 1.442695
        %v6188 = vpow.pop %v6187
        %v6189 = vadd.f32 %v6186, 2.0
        %v6190 = vadd.f32 %v6188, 2.0
        %v6191 = vmul.f32 %v6186, %v6189
        %v6192 = vmul.f32 %v6188, %v6190
        %v6193 = vmul.f32 %v6181, %v6191
        %v6194 = vmul.f32 %v6182, %v6192
        %v6195 = vadd.f32 %v6191, 2.0
        %v6196 = vadd.f32 %v6192, 2.0
        %v6197 = vrcp.pop %v6195
        %v6198 = vmul.f32 %v6193, %v6197
        %v6199 = vrcp.pop %v6196
        %v6200 = vmul.f32 %v6194, %v6199
        %v6201 = vmul.f32 %v2280, %v1038
        %v6202 = vmul.f32 %v2280, %v992
        %v6203 = vmul.f32 %v2280, %v1046
        %v6204 = vmul.f32 %v2284, %v1039
        %v6205 = vmul.f32 %v2284, %v995
        %v6206 = vmul.f32 %v2284, %v1047
        %v6207 = vmul.f32 %v2288, %v1040
        %v6208 = vmul.f32 %v2288, %v998
        %v6209 = vmul.f32 %v2288, %v1048
        %v6210 = vmul.f32 %v2292, %v1041
        %v6211 = vmul.f32 %v2292, %v1001
        %v6212 = vmul.f32 %v2292, %v1049
        %v6213 = vadd.f32 %v6201, 0.0
        %v6214 = vadd.f32 %v6202, 0.0
        %v6215 = vadd.f32 %v6203, 0.0
        %v6216 = vadd.f32 %v6204, 0.0
        %v6217 = vadd.f32 %v6205, 0.0
        %v6218 = vadd.f32 %v6206, 0.0
        %v6219 = vadd.f32 %v6207, 0.0
        %v6220 = vadd.f32 %v6208, 0.0
        %v6221 = vadd.f32 %v6209, 0.0
        %v6222 = vadd.f32 %v6210, 0.0
        %v6223 = vadd.f32 %v6211, 0.0
        %v6224 = vadd.f32 %v6212, 0.0
        %v6225 = vmul.f32 %v2489, %v1042
        %v6226 = vmul.f32 %v2489, %v1004
        %v6227 = vmul.f32 %v2489, %v1050
        %v6228 = vmul.f32 %v2493, %v1043
        %v6229 = vmul.f32 %v2493, %v1007
        %v6230 = vmul.f32 %v2493, %v1051
        %v6231 = vmul.f32 %v2497, %v1044
        %v6232 = vmul.f32 %v2497, %v1010
        %v6233 = vmul.f32 %v2497, %v1052
        %v6234 = vmul.f32 %v2501, %v1045
        %v6235 = vmul.f32 %v2501, %v1013
        %v6236 = vmul.f32 %v2501, %v1053
        %v6237 = vadd.f32 %v6213, %v6225
        %v6238 = vadd.f32 %v6214, %v6226
        %v6239 = vadd.f32 %v6215, %v6227
        %v6240 = vadd.f32 %v6216, %v6228
        %v6241 = vadd.f32 %v6217, %v6229
        %v6242 = vadd.f32 %v6218, %v6230
        %v6243 = vadd.f32 %v6219, %v6231
        %v6244 = vadd.f32 %v6220, %v6232
        %v6245 = vadd.f32 %v6221, %v6233
        %v6246 = vadd.f32 %v6222, %v6234
        %v6247 = vadd.f32 %v6223, %v6235
        %v6248 = vadd.f32 %v6224, %v6236
        %v6249 = vmul.f32 %v2296, %v1038
        %v6250 = vmul.f32 %v2296, %v992
        %v6251 = vmul.f32 %v2296, %v1046
        %v6252 = vmul.f32 %v2300, %v1039
        %v6253 = vmul.f32 %v2300, %v995
        %v6254 = vmul.f32 %v2300, %v1047
        %v6255 = vmul.f32 %v2304, %v1040
        %v6256 = vmul.f32 %v2304, %v998
        %v6257 = vmul.f32 %v2304, %v1048
        %v6258 = vmul.f32 %v2308, %v1041
        %v6259 = vmul.f32 %v2308, %v1001
        %v6260 = vmul.f32 %v2308, %v1049
        %6273 = vrot.lane.b32.xlu0 %v6249, 127
        %v6274 = vpop.permute.xlu0 %6273
        %6275 = vrot.lane.b32.xlu0 %v6250, 127
        %v6276 = vpop.permute.xlu0 %6275
        %6277 = vrot.lane.b32.xlu0 %v6251, 127
        %v6278 = vpop.permute.xlu0 %6277
        %6279 = vrot.lane.b32.xlu0 %v6252, 127
        %v6280 = vpop.permute.xlu0 %6279
        %6281 = vrot.lane.b32.xlu0 %v6253, 127
        %v6282 = vpop.permute.xlu0 %6281
        %6283 = vrot.lane.b32.xlu0 %v6254, 127
        %v6284 = vpop.permute.xlu0 %6283
        %6285 = vrot.lane.b32.xlu0 %v6255, 127
        %v6286 = vpop.permute.xlu0 %6285
        %6287 = vrot.lane.b32.xlu0 %v6256, 127
        %v6288 = vpop.permute.xlu0 %6287
        %6289 = vrot.lane.b32.xlu0 %v6257, 127
        %v6290 = vpop.permute.xlu0 %6289
        %6291 = vrot.lane.b32.xlu0 %v6258, 127
        %v6292 = vpop.permute.xlu0 %6291
        %6293 = vrot.lane.b32.xlu0 %v6259, 127
        %v6294 = vpop.permute.xlu0 %6293
        %6295 = vrot.lane.b32.xlu0 %v6260, 127
        %v6296 = vpop.permute.xlu0 %6295
        %v6309 = vadd.f32 %v6237, %v6274
        %v6310 = vadd.f32 %v6238, %v6276
        %v6311 = vadd.f32 %v6239, %v6278
        %v6312 = vadd.f32 %v6240, %v6280
        %v6313 = vadd.f32 %v6241, %v6282
        %v6314 = vadd.f32 %v6242, %v6284
        %v6315 = vadd.f32 %v6243, %v6286
        %v6316 = vadd.f32 %v6244, %v6288
        %v6317 = vadd.f32 %v6245, %v6290
        %v6318 = vadd.f32 %v6246, %v6292
        %v6319 = vadd.f32 %v6247, %v6294
        %v6320 = vadd.f32 %v6248, %v6296
        %v6321 = vmul.f32 %v2505, %v1042
        %v6322 = vmul.f32 %v2505, %v1004
        %v6323 = vmul.f32 %v2505, %v1050
        %v6324 = vmul.f32 %v2509, %v1043
        %v6325 = vmul.f32 %v2509, %v1007
        %v6326 = vmul.f32 %v2509, %v1051
        %v6327 = vmul.f32 %v2513, %v1044
        %v6328 = vmul.f32 %v2513, %v1010
        %v6329 = vmul.f32 %v2513, %v1052
        %v6330 = vmul.f32 %v2517, %v1045
        %v6331 = vmul.f32 %v2517, %v1013
        %v6332 = vmul.f32 %v2517, %v1053
        %6345 = vrot.lane.b32.xlu0 %v6321, 127
        %v6346 = vpop.permute.xlu0 %6345
        %6347 = vrot.lane.b32.xlu0 %v6322, 127
        %v6348 = vpop.permute.xlu0 %6347
        %6349 = vrot.lane.b32.xlu0 %v6323, 127
        %v6350 = vpop.permute.xlu0 %6349
        %6351 = vrot.lane.b32.xlu0 %v6324, 127
        %v6352 = vpop.permute.xlu0 %6351
        %6353 = vrot.lane.b32.xlu0 %v6325, 127
        %v6354 = vpop.permute.xlu0 %6353
        %6355 = vrot.lane.b32.xlu0 %v6326, 127
        %v6356 = vpop.permute.xlu0 %6355
        %6357 = vrot.lane.b32.xlu0 %v6327, 127
        %v6358 = vpop.permute.xlu0 %6357
        %6359 = vrot.lane.b32.xlu0 %v6328, 127
        %v6360 = vpop.permute.xlu0 %6359
        %6361 = vrot.lane.b32.xlu0 %v6329, 127
        %v6362 = vpop.permute.xlu0 %6361
        %6363 = vrot.lane.b32.xlu0 %v6330, 127
        %v6364 = vpop.permute.xlu0 %6363
        %6365 = vrot.lane.b32.xlu0 %v6331, 127
        %v6366 = vpop.permute.xlu0 %6365
        %6367 = vrot.lane.b32.xlu0 %v6332, 127
        %v6368 = vpop.permute.xlu0 %6367
        %v6381 = vadd.f32 %v6309, %v6346
        %v6382 = vadd.f32 %v6310, %v6348
        %v6383 = vadd.f32 %v6311, %v6350
        %v6384 = vadd.f32 %v6312, %v6352
        %v6385 = vadd.f32 %v6313, %v6354
        %v6386 = vadd.f32 %v6314, %v6356
        %v6387 = vadd.f32 %v6315, %v6358
        %v6388 = vadd.f32 %v6316, %v6360
        %v6389 = vadd.f32 %v6317, %v6362
        %v6390 = vadd.f32 %v6318, %v6364
        %v6391 = vadd.f32 %v6319, %v6366
        %v6392 = vadd.f32 %v6320, %v6368
        %v6393 = vmul.f32 %v2312, %v1038
        %v6394 = vmul.f32 %v2312, %v992
        %v6395 = vmul.f32 %v2312, %v1046
        %v6396 = vmul.f32 %v2316, %v1039
        %v6397 = vmul.f32 %v2316, %v995
        %v6398 = vmul.f32 %v2316, %v1047
        %v6399 = vmul.f32 %v2320, %v1040
        %v6400 = vmul.f32 %v2320, %v998
        %v6401 = vmul.f32 %v2320, %v1048
        %v6402 = vmul.f32 %v2324, %v1041
        %v6403 = vmul.f32 %v2324, %v1001
        %v6404 = vmul.f32 %v2324, %v1049
        %6417 = vrot.lane.b32.xlu0 %v6393, 126
        %v6418 = vpop.permute.xlu0 %6417
        %6419 = vrot.lane.b32.xlu0 %v6394, 126
        %v6420 = vpop.permute.xlu0 %6419
        %6421 = vrot.lane.b32.xlu0 %v6395, 126
        %v6422 = vpop.permute.xlu0 %6421
        %6423 = vrot.lane.b32.xlu0 %v6396, 126
        %v6424 = vpop.permute.xlu0 %6423
        %6425 = vrot.lane.b32.xlu0 %v6397, 126
        %v6426 = vpop.permute.xlu0 %6425
        %6427 = vrot.lane.b32.xlu0 %v6398, 126
        %v6428 = vpop.permute.xlu0 %6427
        %6429 = vrot.lane.b32.xlu0 %v6399, 126
        %v6430 = vpop.permute.xlu0 %6429
        %6431 = vrot.lane.b32.xlu0 %v6400, 126
        %v6432 = vpop.permute.xlu0 %6431
        %6433 = vrot.lane.b32.xlu0 %v6401, 126
        %v6434 = vpop.permute.xlu0 %6433
        %6435 = vrot.lane.b32.xlu0 %v6402, 126
        %v6436 = vpop.permute.xlu0 %6435
        %6437 = vrot.lane.b32.xlu0 %v6403, 126
        %v6438 = vpop.permute.xlu0 %6437
        %6439 = vrot.lane.b32.xlu0 %v6404, 126
        %v6440 = vpop.permute.xlu0 %6439
        %v6453 = vadd.f32 %v6381, %v6418
        %v6454 = vadd.f32 %v6382, %v6420
        %v6455 = vadd.f32 %v6383, %v6422
        %v6456 = vadd.f32 %v6384, %v6424
        %v6457 = vadd.f32 %v6385, %v6426
        %v6458 = vadd.f32 %v6386, %v6428
        %v6459 = vadd.f32 %v6387, %v6430
        %v6460 = vadd.f32 %v6388, %v6432
        %v6461 = vadd.f32 %v6389, %v6434
        %v6462 = vadd.f32 %v6390, %v6436
        %v6463 = vadd.f32 %v6391, %v6438
        %v6464 = vadd.f32 %v6392, %v6440
        %v6465 = vmul.f32 %v2521, %v1042
        %v6466 = vmul.f32 %v2521, %v1004
        %v6467 = vmul.f32 %v2521, %v1050
        %v6468 = vmul.f32 %v2525, %v1043
        %v6469 = vmul.f32 %v2525, %v1007
        %v6470 = vmul.f32 %v2525, %v1051
        %v6471 = vmul.f32 %v2529, %v1044
        %v6472 = vmul.f32 %v2529, %v1010
        %v6473 = vmul.f32 %v2529, %v1052
        %v6474 = vmul.f32 %v2533, %v1045
        %v6475 = vmul.f32 %v2533, %v1013
        %v6476 = vmul.f32 %v2533, %v1053
        %6489 = vrot.lane.b32.xlu0 %v6465, 126
        %v6490 = vpop.permute.xlu0 %6489
        %6491 = vrot.lane.b32.xlu0 %v6466, 126
        %v6492 = vpop.permute.xlu0 %6491
        %6493 = vrot.lane.b32.xlu0 %v6467, 126
        %v6494 = vpop.permute.xlu0 %6493
        %6495 = vrot.lane.b32.xlu0 %v6468, 126
        %v6496 = vpop.permute.xlu0 %6495
        %6497 = vrot.lane.b32.xlu0 %v6469, 126
        %v6498 = vpop.permute.xlu0 %6497
        %6499 = vrot.lane.b32.xlu0 %v6470, 126
        %v6500 = vpop.permute.xlu0 %6499
        %6501 = vrot.lane.b32.xlu0 %v6471, 126
        %v6502 = vpop.permute.xlu0 %6501
        %6503 = vrot.lane.b32.xlu0 %v6472, 126
        %v6504 = vpop.permute.xlu0 %6503
        %6505 = vrot.lane.b32.xlu0 %v6473, 126
        %v6506 = vpop.permute.xlu0 %6505
        %6507 = vrot.lane.b32.xlu0 %v6474, 126
        %v6508 = vpop.permute.xlu0 %6507
        %6509 = vrot.lane.b32.xlu0 %v6475, 126
        %v6510 = vpop.permute.xlu0 %6509
        %6511 = vrot.lane.b32.xlu0 %v6476, 126
        %v6512 = vpop.permute.xlu0 %6511
        %v6525 = vadd.f32 %v6453, %v6490
        %v6526 = vadd.f32 %v6454, %v6492
        %v6527 = vadd.f32 %v6455, %v6494
        %v6528 = vadd.f32 %v6456, %v6496
        %v6529 = vadd.f32 %v6457, %v6498
        %v6530 = vadd.f32 %v6458, %v6500
        %v6531 = vadd.f32 %v6459, %v6502
        %v6532 = vadd.f32 %v6460, %v6504
        %v6533 = vadd.f32 %v6461, %v6506
        %v6534 = vadd.f32 %v6462, %v6508
        %v6535 = vadd.f32 %v6463, %v6510
        %v6536 = vadd.f32 %v6464, %v6512
        %v6537 = vmul.f32 %v2328, %v1038
        %v6538 = vmul.f32 %v2328, %v992
        %v6539 = vmul.f32 %v2328, %v1046
        %v6540 = vmul.f32 %v2332, %v1039
        %v6541 = vmul.f32 %v2332, %v995
        %v6542 = vmul.f32 %v2332, %v1047
        %v6543 = vmul.f32 %v2336, %v1040
        %v6544 = vmul.f32 %v2336, %v998
        %v6545 = vmul.f32 %v2336, %v1048
        %v6546 = vmul.f32 %v2340, %v1041
        %v6547 = vmul.f32 %v2340, %v1001
        %v6548 = vmul.f32 %v2340, %v1049
        %v6561 = vrot.slane %v6537, 1
        %v6562 = vrot.slane %v6538, 1
        %v6563 = vsel %vm3070, %v6561, %v6562
        %v6564 = vrot.slane %v6539, 1
        %v6565 = vsel %vm3070, %v6562, %v6564
        %v6566 = vrot.slane %v6540, 1
        %v6567 = vrot.slane %v6541, 1
        %v6568 = vsel %vm3070, %v6566, %v6567
        %v6569 = vrot.slane %v6542, 1
        %v6570 = vsel %vm3070, %v6567, %v6569
        %v6571 = vrot.slane %v6543, 1
        %v6572 = vrot.slane %v6544, 1
        %v6573 = vsel %vm3070, %v6571, %v6572
        %v6574 = vrot.slane %v6545, 1
        %v6575 = vsel %vm3070, %v6572, %v6574
        %v6576 = vrot.slane %v6546, 1
        %v6577 = vrot.slane %v6547, 1
        %v6578 = vsel %vm3070, %v6576, %v6577
        %v6579 = vrot.slane %v6548, 1
        %v6580 = vsel %vm3070, %v6577, %v6579
        %v6593 = vadd.f32 %v6525, %v6563
        %v6594 = vadd.f32 %v6526, %v6565
        %v6595 = vadd.f32 %v6527, %v6564
        %v6596 = vadd.f32 %v6528, %v6568
        %v6597 = vadd.f32 %v6529, %v6570
        %v6598 = vadd.f32 %v6530, %v6569
        %v6599 = vadd.f32 %v6531, %v6573
        %v6600 = vadd.f32 %v6532, %v6575
        %v6601 = vadd.f32 %v6533, %v6574
        %v6602 = vadd.f32 %v6534, %v6578
        %v6603 = vadd.f32 %v6535, %v6580
        %v6604 = vadd.f32 %v6536, %v6579
        %v6605 = vmul.f32 %v2537, %v1042
        %v6606 = vmul.f32 %v2537, %v1004
        %v6607 = vmul.f32 %v2537, %v1050
        %v6608 = vmul.f32 %v2541, %v1043
        %v6609 = vmul.f32 %v2541, %v1007
        %v6610 = vmul.f32 %v2541, %v1051
        %v6611 = vmul.f32 %v2545, %v1044
        %v6612 = vmul.f32 %v2545, %v1010
        %v6613 = vmul.f32 %v2545, %v1052
        %v6614 = vmul.f32 %v2549, %v1045
        %v6615 = vmul.f32 %v2549, %v1013
        %v6616 = vmul.f32 %v2549, %v1053
        %v6629 = vrot.slane %v6605, 1
        %v6630 = vrot.slane %v6606, 1
        %v6631 = vsel %vm3070, %v6629, %v6630
        %v6632 = vrot.slane %v6607, 1
        %v6633 = vsel %vm3070, %v6630, %v6632
        %v6634 = vrot.slane %v6608, 1
        %v6635 = vrot.slane %v6609, 1
        %v6636 = vsel %vm3070, %v6634, %v6635
        %v6637 = vrot.slane %v6610, 1
        %v6638 = vsel %vm3070, %v6635, %v6637
        %v6639 = vrot.slane %v6611, 1
        %v6640 = vrot.slane %v6612, 1
        %v6641 = vsel %vm3070, %v6639, %v6640
        %v6642 = vrot.slane %v6613, 1
        %v6643 = vsel %vm3070, %v6640, %v6642
        %v6644 = vrot.slane %v6614, 1
        %v6645 = vrot.slane %v6615, 1
        %v6646 = vsel %vm3070, %v6644, %v6645
        %v6647 = vrot.slane %v6616, 1
        %v6648 = vsel %vm3070, %v6645, %v6647
        %v6661 = vadd.f32 %v6593, %v6631
        %v6662 = vadd.f32 %v6594, %v6633
        %v6663 = vadd.f32 %v6595, %v6632
        %v6664 = vadd.f32 %v6596, %v6636
        %v6665 = vadd.f32 %v6597, %v6638
        %v6666 = vadd.f32 %v6598, %v6637
        %v6667 = vadd.f32 %v6599, %v6641
        %v6668 = vadd.f32 %v6600, %v6643
        %v6669 = vadd.f32 %v6601, %v6642
        %v6670 = vadd.f32 %v6602, %v6646
        %v6671 = vadd.f32 %v6603, %v6648
        %v6672 = vadd.f32 %v6604, %v6647
        %v6673 = vmul.f32 %v2344, %v1038
        %v6674 = vmul.f32 %v2344, %v992
        %v6675 = vmul.f32 %v2344, %v1046
        %v6676 = vmul.f32 %v2348, %v1039
        %v6677 = vmul.f32 %v2348, %v995
        %v6678 = vmul.f32 %v2348, %v1047
        %v6679 = vmul.f32 %v2352, %v1040
        %v6680 = vmul.f32 %v2352, %v998
        %v6681 = vmul.f32 %v2352, %v1048
        %v6682 = vmul.f32 %v2356, %v1041
        %v6683 = vmul.f32 %v2356, %v1001
        %v6684 = vmul.f32 %v2356, %v1049
        %v6697 = vrot.slane %v6673, 1
        %v6698 = vrot.slane %v6674, 1
        %v6699 = vsel %vm3070, %v6697, %v6698
        %v6700 = vrot.slane %v6675, 1
        %v6701 = vsel %vm3070, %v6698, %v6700
        %v6702 = vrot.slane %v6676, 1
        %v6703 = vrot.slane %v6677, 1
        %v6704 = vsel %vm3070, %v6702, %v6703
        %v6705 = vrot.slane %v6678, 1
        %v6706 = vsel %vm3070, %v6703, %v6705
        %v6707 = vrot.slane %v6679, 1
        %v6708 = vrot.slane %v6680, 1
        %v6709 = vsel %vm3070, %v6707, %v6708
        %v6710 = vrot.slane %v6681, 1
        %v6711 = vsel %vm3070, %v6708, %v6710
        %v6712 = vrot.slane %v6682, 1
        %v6713 = vrot.slane %v6683, 1
        %v6714 = vsel %vm3070, %v6712, %v6713
        %v6715 = vrot.slane %v6684, 1
        %v6716 = vsel %vm3070, %v6713, %v6715
        %6717 = vrot.lane.b32.xlu0 %v6699, 127
        %v6718 = vpop.permute.xlu0 %6717
        %6719 = vrot.lane.b32.xlu0 %v6701, 127
        %v6720 = vpop.permute.xlu0 %6719
        %6721 = vrot.lane.b32.xlu0 %v6700, 127
        %v6722 = vpop.permute.xlu0 %6721
        %6723 = vrot.lane.b32.xlu0 %v6704, 127
        %v6724 = vpop.permute.xlu0 %6723
        %6725 = vrot.lane.b32.xlu0 %v6706, 127
        %v6726 = vpop.permute.xlu0 %6725
        %6727 = vrot.lane.b32.xlu0 %v6705, 127
        %v6728 = vpop.permute.xlu0 %6727
        %6729 = vrot.lane.b32.xlu0 %v6709, 127
        %v6730 = vpop.permute.xlu0 %6729
        %6731 = vrot.lane.b32.xlu0 %v6711, 127
        %v6732 = vpop.permute.xlu0 %6731
        %6733 = vrot.lane.b32.xlu0 %v6710, 127
        %v6734 = vpop.permute.xlu0 %6733
        %6735 = vrot.lane.b32.xlu0 %v6714, 127
        %v6736 = vpop.permute.xlu0 %6735
        %6737 = vrot.lane.b32.xlu0 %v6716, 127
        %v6738 = vpop.permute.xlu0 %6737
        %6739 = vrot.lane.b32.xlu0 %v6715, 127
        %v6740 = vpop.permute.xlu0 %6739
        %v6753 = vadd.f32 %v6661, %v6718
        %v6754 = vadd.f32 %v6662, %v6720
        %v6755 = vadd.f32 %v6663, %v6722
        %v6756 = vadd.f32 %v6664, %v6724
        %v6757 = vadd.f32 %v6665, %v6726
        %v6758 = vadd.f32 %v6666, %v6728
        %v6759 = vadd.f32 %v6667, %v6730
        %v6760 = vadd.f32 %v6668, %v6732
        %v6761 = vadd.f32 %v6669, %v6734
        %v6762 = vadd.f32 %v6670, %v6736
        %v6763 = vadd.f32 %v6671, %v6738
        %v6764 = vadd.f32 %v6672, %v6740
        %v6765 = vmul.f32 %v2553, %v1042
        %v6766 = vmul.f32 %v2553, %v1004
        %v6767 = vmul.f32 %v2553, %v1050
        %v6768 = vmul.f32 %v2557, %v1043
        %v6769 = vmul.f32 %v2557, %v1007
        %v6770 = vmul.f32 %v2557, %v1051
        %v6771 = vmul.f32 %v2561, %v1044
        %v6772 = vmul.f32 %v2561, %v1010
        %v6773 = vmul.f32 %v2561, %v1052
        %v6774 = vmul.f32 %v2565, %v1045
        %v6775 = vmul.f32 %v2565, %v1013
        %v6776 = vmul.f32 %v2565, %v1053
        %v6789 = vrot.slane %v6765, 1
        %v6790 = vrot.slane %v6766, 1
        %v6791 = vsel %vm3070, %v6789, %v6790
        %v6792 = vrot.slane %v6767, 1
        %v6793 = vsel %vm3070, %v6790, %v6792
        %v6794 = vrot.slane %v6768, 1
        %v6795 = vrot.slane %v6769, 1
        %v6796 = vsel %vm3070, %v6794, %v6795
        %v6797 = vrot.slane %v6770, 1
        %v6798 = vsel %vm3070, %v6795, %v6797
        %v6799 = vrot.slane %v6771, 1
        %v6800 = vrot.slane %v6772, 1
        %v6801 = vsel %vm3070, %v6799, %v6800
        %v6802 = vrot.slane %v6773, 1
        %v6803 = vsel %vm3070, %v6800, %v6802
        %v6804 = vrot.slane %v6774, 1
        %v6805 = vrot.slane %v6775, 1
        %v6806 = vsel %vm3070, %v6804, %v6805
        %v6807 = vrot.slane %v6776, 1
        %v6808 = vsel %vm3070, %v6805, %v6807
        %6809 = vrot.lane.b32.xlu0 %v6791, 127
        %v6810 = vpop.permute.xlu0 %6809
        %6811 = vrot.lane.b32.xlu0 %v6793, 127
        %v6812 = vpop.permute.xlu0 %6811
        %6813 = vrot.lane.b32.xlu0 %v6792, 127
        %v6814 = vpop.permute.xlu0 %6813
        %6815 = vrot.lane.b32.xlu0 %v6796, 127
        %v6816 = vpop.permute.xlu0 %6815
        %6817 = vrot.lane.b32.xlu0 %v6798, 127
        %v6818 = vpop.permute.xlu0 %6817
        %6819 = vrot.lane.b32.xlu0 %v6797, 127
        %v6820 = vpop.permute.xlu0 %6819
        %6821 = vrot.lane.b32.xlu0 %v6801, 127
        %v6822 = vpop.permute.xlu0 %6821
        %6823 = vrot.lane.b32.xlu0 %v6803, 127
        %v6824 = vpop.permute.xlu0 %6823
        %6825 = vrot.lane.b32.xlu0 %v6802, 127
        %v6826 = vpop.permute.xlu0 %6825
        %6827 = vrot.lane.b32.xlu0 %v6806, 127
        %v6828 = vpop.permute.xlu0 %6827
        %6829 = vrot.lane.b32.xlu0 %v6808, 127
        %v6830 = vpop.permute.xlu0 %6829
        %6831 = vrot.lane.b32.xlu0 %v6807, 127
        %v6832 = vpop.permute.xlu0 %6831
        %v6845 = vadd.f32 %v6753, %v6810
        %v6846 = vadd.f32 %v6754, %v6812
        %v6847 = vadd.f32 %v6755, %v6814
        %v6848 = vadd.f32 %v6756, %v6816
        %v6849 = vadd.f32 %v6757, %v6818
        %v6850 = vadd.f32 %v6758, %v6820
        %v6851 = vadd.f32 %v6759, %v6822
        %v6852 = vadd.f32 %v6760, %v6824
        %v6853 = vadd.f32 %v6761, %v6826
        %v6854 = vadd.f32 %v6762, %v6828
        %v6855 = vadd.f32 %v6763, %v6830
        %v6856 = vadd.f32 %v6764, %v6832
        %v6857 = vmul.f32 %v2360, %v1038
        %v6858 = vmul.f32 %v2360, %v992
        %v6859 = vmul.f32 %v2360, %v1046
        %v6860 = vmul.f32 %v2364, %v1039
        %v6861 = vmul.f32 %v2364, %v995
        %v6862 = vmul.f32 %v2364, %v1047
        %v6863 = vmul.f32 %v2368, %v1040
        %v6864 = vmul.f32 %v2368, %v998
        %v6865 = vmul.f32 %v2368, %v1048
        %v6866 = vmul.f32 %v2372, %v1041
        %v6867 = vmul.f32 %v2372, %v1001
        %v6868 = vmul.f32 %v2372, %v1049
        %v6881 = vrot.slane %v6857, 1
        %v6882 = vrot.slane %v6858, 1
        %v6883 = vsel %vm3070, %v6881, %v6882
        %v6884 = vrot.slane %v6859, 1
        %v6885 = vsel %vm3070, %v6882, %v6884
        %v6886 = vrot.slane %v6860, 1
        %v6887 = vrot.slane %v6861, 1
        %v6888 = vsel %vm3070, %v6886, %v6887
        %v6889 = vrot.slane %v6862, 1
        %v6890 = vsel %vm3070, %v6887, %v6889
        %v6891 = vrot.slane %v6863, 1
        %v6892 = vrot.slane %v6864, 1
        %v6893 = vsel %vm3070, %v6891, %v6892
        %v6894 = vrot.slane %v6865, 1
        %v6895 = vsel %vm3070, %v6892, %v6894
        %v6896 = vrot.slane %v6866, 1
        %v6897 = vrot.slane %v6867, 1
        %v6898 = vsel %vm3070, %v6896, %v6897
        %v6899 = vrot.slane %v6868, 1
        %v6900 = vsel %vm3070, %v6897, %v6899
        %6901 = vrot.lane.b32.xlu0 %v6883, 126
        %v6902 = vpop.permute.xlu0 %6901
        %6903 = vrot.lane.b32.xlu0 %v6885, 126
        %v6904 = vpop.permute.xlu0 %6903
        %6905 = vrot.lane.b32.xlu0 %v6884, 126
        %v6906 = vpop.permute.xlu0 %6905
        %6907 = vrot.lane.b32.xlu0 %v6888, 126
        %v6908 = vpop.permute.xlu0 %6907
        %6909 = vrot.lane.b32.xlu0 %v6890, 126
        %v6910 = vpop.permute.xlu0 %6909
        %6911 = vrot.lane.b32.xlu0 %v6889, 126
        %v6912 = vpop.permute.xlu0 %6911
        %6913 = vrot.lane.b32.xlu0 %v6893, 126
        %v6914 = vpop.permute.xlu0 %6913
        %6915 = vrot.lane.b32.xlu0 %v6895, 126
        %v6916 = vpop.permute.xlu0 %6915
        %6917 = vrot.lane.b32.xlu0 %v6894, 126
        %v6918 = vpop.permute.xlu0 %6917
        %6919 = vrot.lane.b32.xlu0 %v6898, 126
        %v6920 = vpop.permute.xlu0 %6919
        %6921 = vrot.lane.b32.xlu0 %v6900, 126
        %v6922 = vpop.permute.xlu0 %6921
        %6923 = vrot.lane.b32.xlu0 %v6899, 126
        %v6924 = vpop.permute.xlu0 %6923
        %v6937 = vadd.f32 %v6845, %v6902
        %v6938 = vadd.f32 %v6846, %v6904
        %v6939 = vadd.f32 %v6847, %v6906
        %v6940 = vadd.f32 %v6848, %v6908
        %v6941 = vadd.f32 %v6849, %v6910
        %v6942 = vadd.f32 %v6850, %v6912
        %v6943 = vadd.f32 %v6851, %v6914
        %v6944 = vadd.f32 %v6852, %v6916
        %v6945 = vadd.f32 %v6853, %v6918
        %v6946 = vadd.f32 %v6854, %v6920
        %v6947 = vadd.f32 %v6855, %v6922
        %v6948 = vadd.f32 %v6856, %v6924
        %v6949 = vmul.f32 %v2569, %v1042
        %v6950 = vmul.f32 %v2569, %v1004
        %v6951 = vmul.f32 %v2569, %v1050
        %v6952 = vmul.f32 %v2573, %v1043
        %v6953 = vmul.f32 %v2573, %v1007
        %v6954 = vmul.f32 %v2573, %v1051
        %v6955 = vmul.f32 %v2577, %v1044
        %v6956 = vmul.f32 %v2577, %v1010
        %v6957 = vmul.f32 %v2577, %v1052
        %v6958 = vmul.f32 %v2581, %v1045
        %v6959 = vmul.f32 %v2581, %v1013
        %v6960 = vmul.f32 %v2581, %v1053
        %v6973 = vrot.slane %v6949, 1
        %v6974 = vrot.slane %v6950, 1
        %v6975 = vsel %vm3070, %v6973, %v6974
        %v6976 = vrot.slane %v6951, 1
        %v6977 = vsel %vm3070, %v6974, %v6976
        %v6978 = vrot.slane %v6952, 1
        %v6979 = vrot.slane %v6953, 1
        %v6980 = vsel %vm3070, %v6978, %v6979
        %v6981 = vrot.slane %v6954, 1
        %v6982 = vsel %vm3070, %v6979, %v6981
        %v6983 = vrot.slane %v6955, 1
        %v6984 = vrot.slane %v6956, 1
        %v6985 = vsel %vm3070, %v6983, %v6984
        %v6986 = vrot.slane %v6957, 1
        %v6987 = vsel %vm3070, %v6984, %v6986
        %v6988 = vrot.slane %v6958, 1
        %v6989 = vrot.slane %v6959, 1
        %v6990 = vsel %vm3070, %v6988, %v6989
        %v6991 = vrot.slane %v6960, 1
        %v6992 = vsel %vm3070, %v6989, %v6991
        %6993 = vrot.lane.b32.xlu0 %v6975, 126
        %v6994 = vpop.permute.xlu0 %6993
        %6995 = vrot.lane.b32.xlu0 %v6977, 126
        %v6996 = vpop.permute.xlu0 %6995
        %6997 = vrot.lane.b32.xlu0 %v6976, 126
        %v6998 = vpop.permute.xlu0 %6997
        %6999 = vrot.lane.b32.xlu0 %v6980, 126
        %v7000 = vpop.permute.xlu0 %6999
        %7001 = vrot.lane.b32.xlu0 %v6982, 126
        %v7002 = vpop.permute.xlu0 %7001
        %7003 = vrot.lane.b32.xlu0 %v6981, 126
        %v7004 = vpop.permute.xlu0 %7003
        %7005 = vrot.lane.b32.xlu0 %v6985, 126
        %v7006 = vpop.permute.xlu0 %7005
        %7007 = vrot.lane.b32.xlu0 %v6987, 126
        %v7008 = vpop.permute.xlu0 %7007
        %7009 = vrot.lane.b32.xlu0 %v6986, 126
        %v7010 = vpop.permute.xlu0 %7009
        %7011 = vrot.lane.b32.xlu0 %v6990, 126
        %v7012 = vpop.permute.xlu0 %7011
        %7013 = vrot.lane.b32.xlu0 %v6992, 126
        %v7014 = vpop.permute.xlu0 %7013
        %7015 = vrot.lane.b32.xlu0 %v6991, 126
        %v7016 = vpop.permute.xlu0 %7015
        %v7029 = vadd.f32 %v6937, %v6994
        %v7030 = vadd.f32 %v6938, %v6996
        %v7031 = vadd.f32 %v6939, %v6998
        %v7032 = vadd.f32 %v6940, %v7000
        %v7033 = vadd.f32 %v6941, %v7002
        %v7034 = vadd.f32 %v6942, %v7004
        %v7035 = vadd.f32 %v6943, %v7006
        %v7036 = vadd.f32 %v6944, %v7008
        %v7037 = vadd.f32 %v6945, %v7010
        %v7038 = vadd.f32 %v6946, %v7012
        %v7039 = vadd.f32 %v6947, %v7014
        %v7040 = vadd.f32 %v6948, %v7016
        %v7041 = vmul.f32 %v2376, %v1038
        %v7042 = vmul.f32 %v2376, %v992
        %v7043 = vmul.f32 %v2376, %v1046
        %v7044 = vmul.f32 %v2380, %v1039
        %v7045 = vmul.f32 %v2380, %v995
        %v7046 = vmul.f32 %v2380, %v1047
        %v7047 = vmul.f32 %v2384, %v1040
        %v7048 = vmul.f32 %v2384, %v998
        %v7049 = vmul.f32 %v2384, %v1048
        %v7050 = vmul.f32 %v2388, %v1041
        %v7051 = vmul.f32 %v2388, %v1001
        %v7052 = vmul.f32 %v2388, %v1049
        %v7065 = vrot.slane %v7041, 2
        %v7066 = vrot.slane %v7042, 2
        %v7067 = vsel %vm3799, %v7065, %v7066
        %v7068 = vrot.slane %v7043, 2
        %v7069 = vsel %vm3799, %v7066, %v7068
        %v7070 = vrot.slane %v7044, 2
        %v7071 = vrot.slane %v7045, 2
        %v7072 = vsel %vm3799, %v7070, %v7071
        %v7073 = vrot.slane %v7046, 2
        %v7074 = vsel %vm3799, %v7071, %v7073
        %v7075 = vrot.slane %v7047, 2
        %v7076 = vrot.slane %v7048, 2
        %v7077 = vsel %vm3799, %v7075, %v7076
        %v7078 = vrot.slane %v7049, 2
        %v7079 = vsel %vm3799, %v7076, %v7078
        %v7080 = vrot.slane %v7050, 2
        %v7081 = vrot.slane %v7051, 2
        %v7082 = vsel %vm3799, %v7080, %v7081
        %v7083 = vrot.slane %v7052, 2
        %v7084 = vsel %vm3799, %v7081, %v7083
        %v7097 = vadd.f32 %v7029, %v7067
        %v7098 = vadd.f32 %v7030, %v7069
        %v7099 = vadd.f32 %v7031, %v7068
        %v7100 = vadd.f32 %v7032, %v7072
        %v7101 = vadd.f32 %v7033, %v7074
        %v7102 = vadd.f32 %v7034, %v7073
        %v7103 = vadd.f32 %v7035, %v7077
        %v7104 = vadd.f32 %v7036, %v7079
        %v7105 = vadd.f32 %v7037, %v7078
        %v7106 = vadd.f32 %v7038, %v7082
        %v7107 = vadd.f32 %v7039, %v7084
        %v7108 = vadd.f32 %v7040, %v7083
        %v7109 = vmul.f32 %v2585, %v1042
        %v7110 = vmul.f32 %v2585, %v1004
        %v7111 = vmul.f32 %v2585, %v1050
        %v7112 = vmul.f32 %v2589, %v1043
        %v7113 = vmul.f32 %v2589, %v1007
        %v7114 = vmul.f32 %v2589, %v1051
        %v7115 = vmul.f32 %v2593, %v1044
        %v7116 = vmul.f32 %v2593, %v1010
        %v7117 = vmul.f32 %v2593, %v1052
        %v7118 = vmul.f32 %v2597, %v1045
        %v7119 = vmul.f32 %v2597, %v1013
        %v7120 = vmul.f32 %v2597, %v1053
        %v7133 = vrot.slane %v7109, 2
        %v7134 = vrot.slane %v7110, 2
        %v7135 = vsel %vm3799, %v7133, %v7134
        %v7136 = vrot.slane %v7111, 2
        %v7137 = vsel %vm3799, %v7134, %v7136
        %v7138 = vrot.slane %v7112, 2
        %v7139 = vrot.slane %v7113, 2
        %v7140 = vsel %vm3799, %v7138, %v7139
        %v7141 = vrot.slane %v7114, 2
        %v7142 = vsel %vm3799, %v7139, %v7141
        %v7143 = vrot.slane %v7115, 2
        %v7144 = vrot.slane %v7116, 2
        %v7145 = vsel %vm3799, %v7143, %v7144
        %v7146 = vrot.slane %v7117, 2
        %v7147 = vsel %vm3799, %v7144, %v7146
        %v7148 = vrot.slane %v7118, 2
        %v7149 = vrot.slane %v7119, 2
        %v7150 = vsel %vm3799, %v7148, %v7149
        %v7151 = vrot.slane %v7120, 2
        %v7152 = vsel %vm3799, %v7149, %v7151
        %v7165 = vadd.f32 %v7097, %v7135
        %v7166 = vadd.f32 %v7098, %v7137
        %v7167 = vadd.f32 %v7099, %v7136
        %v7168 = vadd.f32 %v7100, %v7140
        %v7169 = vadd.f32 %v7101, %v7142
        %v7170 = vadd.f32 %v7102, %v7141
        %v7171 = vadd.f32 %v7103, %v7145
        %v7172 = vadd.f32 %v7104, %v7147
        %v7173 = vadd.f32 %v7105, %v7146
        %v7174 = vadd.f32 %v7106, %v7150
        %v7175 = vadd.f32 %v7107, %v7152
        %v7176 = vadd.f32 %v7108, %v7151
        %v7177 = vmul.f32 %v2392, %v1038
        %v7178 = vmul.f32 %v2392, %v992
        %v7179 = vmul.f32 %v2392, %v1046
        %v7180 = vmul.f32 %v2396, %v1039
        %v7181 = vmul.f32 %v2396, %v995
        %v7182 = vmul.f32 %v2396, %v1047
        %v7183 = vmul.f32 %v2400, %v1040
        %v7184 = vmul.f32 %v2400, %v998
        %v7185 = vmul.f32 %v2400, %v1048
        %v7186 = vmul.f32 %v2404, %v1041
        %v7187 = vmul.f32 %v2404, %v1001
        %v7188 = vmul.f32 %v2404, %v1049
        %v7201 = vrot.slane %v7177, 2
        %v7202 = vrot.slane %v7178, 2
        %v7203 = vsel %vm3799, %v7201, %v7202
        %v7204 = vrot.slane %v7179, 2
        %v7205 = vsel %vm3799, %v7202, %v7204
        %v7206 = vrot.slane %v7180, 2
        %v7207 = vrot.slane %v7181, 2
        %v7208 = vsel %vm3799, %v7206, %v7207
        %v7209 = vrot.slane %v7182, 2
        %v7210 = vsel %vm3799, %v7207, %v7209
        %v7211 = vrot.slane %v7183, 2
        %v7212 = vrot.slane %v7184, 2
        %v7213 = vsel %vm3799, %v7211, %v7212
        %v7214 = vrot.slane %v7185, 2
        %v7215 = vsel %vm3799, %v7212, %v7214
        %v7216 = vrot.slane %v7186, 2
        %v7217 = vrot.slane %v7187, 2
        %v7218 = vsel %vm3799, %v7216, %v7217
        %v7219 = vrot.slane %v7188, 2
        %v7220 = vsel %vm3799, %v7217, %v7219
        %7221 = vrot.lane.b32.xlu0 %v7203, 127
        %v7222 = vpop.permute.xlu0 %7221
        %7223 = vrot.lane.b32.xlu0 %v7205, 127
        %v7224 = vpop.permute.xlu0 %7223
        %7225 = vrot.lane.b32.xlu0 %v7204, 127
        %v7226 = vpop.permute.xlu0 %7225
        %7227 = vrot.lane.b32.xlu0 %v7208, 127
        %v7228 = vpop.permute.xlu0 %7227
        %7229 = vrot.lane.b32.xlu0 %v7210, 127
        %v7230 = vpop.permute.xlu0 %7229
        %7231 = vrot.lane.b32.xlu0 %v7209, 127
        %v7232 = vpop.permute.xlu0 %7231
        %7233 = vrot.lane.b32.xlu0 %v7213, 127
        %v7234 = vpop.permute.xlu0 %7233
        %7235 = vrot.lane.b32.xlu0 %v7215, 127
        %v7236 = vpop.permute.xlu0 %7235
        %7237 = vrot.lane.b32.xlu0 %v7214, 127
        %v7238 = vpop.permute.xlu0 %7237
        %7239 = vrot.lane.b32.xlu0 %v7218, 127
        %v7240 = vpop.permute.xlu0 %7239
        %7241 = vrot.lane.b32.xlu0 %v7220, 127
        %v7242 = vpop.permute.xlu0 %7241
        %7243 = vrot.lane.b32.xlu0 %v7219, 127
        %v7244 = vpop.permute.xlu0 %7243
        %v7257 = vadd.f32 %v7165, %v7222
        %v7258 = vadd.f32 %v7166, %v7224
        %v7259 = vadd.f32 %v7167, %v7226
        %v7260 = vadd.f32 %v7168, %v7228
        %v7261 = vadd.f32 %v7169, %v7230
        %v7262 = vadd.f32 %v7170, %v7232
        %v7263 = vadd.f32 %v7171, %v7234
        %v7264 = vadd.f32 %v7172, %v7236
        %v7265 = vadd.f32 %v7173, %v7238
        %v7266 = vadd.f32 %v7174, %v7240
        %v7267 = vadd.f32 %v7175, %v7242
        %v7268 = vadd.f32 %v7176, %v7244
        %v7269 = vmul.f32 %v2601, %v1042
        %v7270 = vmul.f32 %v2601, %v1004
        %v7271 = vmul.f32 %v2601, %v1050
        %v7272 = vmul.f32 %v2605, %v1043
        %v7273 = vmul.f32 %v2605, %v1007
        %v7274 = vmul.f32 %v2605, %v1051
        %v7275 = vmul.f32 %v2609, %v1044
        %v7276 = vmul.f32 %v2609, %v1010
        %v7277 = vmul.f32 %v2609, %v1052
        %v7278 = vmul.f32 %v2613, %v1045
        %v7279 = vmul.f32 %v2613, %v1013
        %v7280 = vmul.f32 %v2613, %v1053
        %v7293 = vrot.slane %v7269, 2
        %v7294 = vrot.slane %v7270, 2
        %v7295 = vsel %vm3799, %v7293, %v7294
        %v7296 = vrot.slane %v7271, 2
        %v7297 = vsel %vm3799, %v7294, %v7296
        %v7298 = vrot.slane %v7272, 2
        %v7299 = vrot.slane %v7273, 2
        %v7300 = vsel %vm3799, %v7298, %v7299
        %v7301 = vrot.slane %v7274, 2
        %v7302 = vsel %vm3799, %v7299, %v7301
        %v7303 = vrot.slane %v7275, 2
        %v7304 = vrot.slane %v7276, 2
        %v7305 = vsel %vm3799, %v7303, %v7304
        %v7306 = vrot.slane %v7277, 2
        %v7307 = vsel %vm3799, %v7304, %v7306
        %v7308 = vrot.slane %v7278, 2
        %v7309 = vrot.slane %v7279, 2
        %v7310 = vsel %vm3799, %v7308, %v7309
        %v7311 = vrot.slane %v7280, 2
        %v7312 = vsel %vm3799, %v7309, %v7311
        %7313 = vrot.lane.b32.xlu0 %v7295, 127
        %v7314 = vpop.permute.xlu0 %7313
        %7315 = vrot.lane.b32.xlu0 %v7297, 127
        %v7316 = vpop.permute.xlu0 %7315
        %7317 = vrot.lane.b32.xlu0 %v7296, 127
        %v7318 = vpop.permute.xlu0 %7317
        %7319 = vrot.lane.b32.xlu0 %v7300, 127
        %v7320 = vpop.permute.xlu0 %7319
        %7321 = vrot.lane.b32.xlu0 %v7302, 127
        %v7322 = vpop.permute.xlu0 %7321
        %7323 = vrot.lane.b32.xlu0 %v7301, 127
        %v7324 = vpop.permute.xlu0 %7323
        %7325 = vrot.lane.b32.xlu0 %v7305, 127
        %v7326 = vpop.permute.xlu0 %7325
        %7327 = vrot.lane.b32.xlu0 %v7307, 127
        %v7328 = vpop.permute.xlu0 %7327
        %7329 = vrot.lane.b32.xlu0 %v7306, 127
        %v7330 = vpop.permute.xlu0 %7329
        %7331 = vrot.lane.b32.xlu0 %v7310, 127
        %v7332 = vpop.permute.xlu0 %7331
        %7333 = vrot.lane.b32.xlu0 %v7312, 127
        %v7334 = vpop.permute.xlu0 %7333
        %7335 = vrot.lane.b32.xlu0 %v7311, 127
        %v7336 = vpop.permute.xlu0 %7335
        %v7349 = vadd.f32 %v7257, %v7314
        %v7350 = vadd.f32 %v7258, %v7316
        %v7351 = vadd.f32 %v7259, %v7318
        %v7352 = vadd.f32 %v7260, %v7320
        %v7353 = vadd.f32 %v7261, %v7322
        %v7354 = vadd.f32 %v7262, %v7324
        %v7355 = vadd.f32 %v7263, %v7326
        %v7356 = vadd.f32 %v7264, %v7328
        %v7357 = vadd.f32 %v7265, %v7330
        %v7358 = vadd.f32 %v7266, %v7332
        %v7359 = vadd.f32 %v7267, %v7334
        %v7360 = vadd.f32 %v7268, %v7336
        %v7361 = vmul.f32 %v2408, %v1038
        %v7362 = vmul.f32 %v2408, %v992
        %v7363 = vmul.f32 %v2408, %v1046
        %v7364 = vmul.f32 %v2412, %v1039
        %v7365 = vmul.f32 %v2412, %v995
        %v7366 = vmul.f32 %v2412, %v1047
        %v7367 = vmul.f32 %v2416, %v1040
        %v7368 = vmul.f32 %v2416, %v998
        %v7369 = vmul.f32 %v2416, %v1048
        %v7370 = vmul.f32 %v2420, %v1041
        %v7371 = vmul.f32 %v2420, %v1001
        %v7372 = vmul.f32 %v2420, %v1049
        %v7385 = vrot.slane %v7361, 2
        %v7386 = vrot.slane %v7362, 2
        %v7387 = vsel %vm3799, %v7385, %v7386
        %v7388 = vrot.slane %v7363, 2
        %v7389 = vsel %vm3799, %v7386, %v7388
        %v7390 = vrot.slane %v7364, 2
        %v7391 = vrot.slane %v7365, 2
        %v7392 = vsel %vm3799, %v7390, %v7391
        %v7393 = vrot.slane %v7366, 2
        %v7394 = vsel %vm3799, %v7391, %v7393
        %v7395 = vrot.slane %v7367, 2
        %v7396 = vrot.slane %v7368, 2
        %v7397 = vsel %vm3799, %v7395, %v7396
        %v7398 = vrot.slane %v7369, 2
        %v7399 = vsel %vm3799, %v7396, %v7398
        %v7400 = vrot.slane %v7370, 2
        %v7401 = vrot.slane %v7371, 2
        %v7402 = vsel %vm3799, %v7400, %v7401
        %v7403 = vrot.slane %v7372, 2
        %v7404 = vsel %vm3799, %v7401, %v7403
        %7405 = vrot.lane.b32.xlu0 %v7387, 126
        %v7406 = vpop.permute.xlu0 %7405
        %7407 = vrot.lane.b32.xlu0 %v7389, 126
        %v7408 = vpop.permute.xlu0 %7407
        %7409 = vrot.lane.b32.xlu0 %v7388, 126
        %v7410 = vpop.permute.xlu0 %7409
        %7411 = vrot.lane.b32.xlu0 %v7392, 126
        %v7412 = vpop.permute.xlu0 %7411
        %7413 = vrot.lane.b32.xlu0 %v7394, 126
        %v7414 = vpop.permute.xlu0 %7413
        %7415 = vrot.lane.b32.xlu0 %v7393, 126
        %v7416 = vpop.permute.xlu0 %7415
        %7417 = vrot.lane.b32.xlu0 %v7397, 126
        %v7418 = vpop.permute.xlu0 %7417
        %7419 = vrot.lane.b32.xlu0 %v7399, 126
        %v7420 = vpop.permute.xlu0 %7419
        %7421 = vrot.lane.b32.xlu0 %v7398, 126
        %v7422 = vpop.permute.xlu0 %7421
        %7423 = vrot.lane.b32.xlu0 %v7402, 126
        %v7424 = vpop.permute.xlu0 %7423
        %7425 = vrot.lane.b32.xlu0 %v7404, 126
        %v7426 = vpop.permute.xlu0 %7425
        %7427 = vrot.lane.b32.xlu0 %v7403, 126
        %v7428 = vpop.permute.xlu0 %7427
        %v7441 = vadd.f32 %v7349, %v7406
        %v7442 = vadd.f32 %v7350, %v7408
        %v7443 = vadd.f32 %v7351, %v7410
        %v7444 = vadd.f32 %v7352, %v7412
        %v7445 = vadd.f32 %v7353, %v7414
        %v7446 = vadd.f32 %v7354, %v7416
        %v7447 = vadd.f32 %v7355, %v7418
        %v7448 = vadd.f32 %v7356, %v7420
        %v7449 = vadd.f32 %v7357, %v7422
        %v7450 = vadd.f32 %v7358, %v7424
        %v7451 = vadd.f32 %v7359, %v7426
        %v7452 = vadd.f32 %v7360, %v7428
        %v7453 = vmul.f32 %v2617, %v1042
        %v7454 = vmul.f32 %v2617, %v1004
        %v7455 = vmul.f32 %v2617, %v1050
        %v7456 = vmul.f32 %v2621, %v1043
        %v7457 = vmul.f32 %v2621, %v1007
        %v7458 = vmul.f32 %v2621, %v1051
        %v7459 = vmul.f32 %v2625, %v1044
        %v7460 = vmul.f32 %v2625, %v1010
        %v7461 = vmul.f32 %v2625, %v1052
        %v7462 = vmul.f32 %v2629, %v1045
        %v7463 = vmul.f32 %v2629, %v1013
        %v7464 = vmul.f32 %v2629, %v1053
        %v7477 = vrot.slane %v7453, 2
        %v7478 = vrot.slane %v7454, 2
        %v7479 = vsel %vm3799, %v7477, %v7478
        %v7480 = vrot.slane %v7455, 2
        %v7481 = vsel %vm3799, %v7478, %v7480
        %v7482 = vrot.slane %v7456, 2
        %v7483 = vrot.slane %v7457, 2
        %v7484 = vsel %vm3799, %v7482, %v7483
        %v7485 = vrot.slane %v7458, 2
        %v7486 = vsel %vm3799, %v7483, %v7485
        %v7487 = vrot.slane %v7459, 2
        %v7488 = vrot.slane %v7460, 2
        %v7489 = vsel %vm3799, %v7487, %v7488
        %v7490 = vrot.slane %v7461, 2
        %v7491 = vsel %vm3799, %v7488, %v7490
        %v7492 = vrot.slane %v7462, 2
        %v7493 = vrot.slane %v7463, 2
        %v7494 = vsel %vm3799, %v7492, %v7493
        %v7495 = vrot.slane %v7464, 2
        %v7496 = vsel %vm3799, %v7493, %v7495
        %7497 = vrot.lane.b32.xlu0 %v7479, 126
        %v7498 = vpop.permute.xlu0 %7497
        %7499 = vrot.lane.b32.xlu0 %v7481, 126
        %v7500 = vpop.permute.xlu0 %7499
        %7501 = vrot.lane.b32.xlu0 %v7480, 126
        %v7502 = vpop.permute.xlu0 %7501
        %7503 = vrot.lane.b32.xlu0 %v7484, 126
        %v7504 = vpop.permute.xlu0 %7503
        %7505 = vrot.lane.b32.xlu0 %v7486, 126
        %v7506 = vpop.permute.xlu0 %7505
        %7507 = vrot.lane.b32.xlu0 %v7485, 126
        %v7508 = vpop.permute.xlu0 %7507
        %7509 = vrot.lane.b32.xlu0 %v7489, 126
        %v7510 = vpop.permute.xlu0 %7509
        %7511 = vrot.lane.b32.xlu0 %v7491, 126
        %v7512 = vpop.permute.xlu0 %7511
        %7513 = vrot.lane.b32.xlu0 %v7490, 126
        %v7514 = vpop.permute.xlu0 %7513
        %7515 = vrot.lane.b32.xlu0 %v7494, 126
        %v7516 = vpop.permute.xlu0 %7515
        %7517 = vrot.lane.b32.xlu0 %v7496, 126
        %v7518 = vpop.permute.xlu0 %7517
        %7519 = vrot.lane.b32.xlu0 %v7495, 126
        %v7520 = vpop.permute.xlu0 %7519
        %v7533 = vadd.f32 %v7441, %v7498
        %v7534 = vadd.f32 %v7442, %v7500
        %v7535 = vadd.f32 %v7443, %v7502
        %v7536 = vadd.f32 %v7444, %v7504
        %v7537 = vadd.f32 %v7445, %v7506
        %v7538 = vadd.f32 %v7446, %v7508
        %v7539 = vadd.f32 %v7447, %v7510
        %v7540 = vadd.f32 %v7448, %v7512
        %v7541 = vadd.f32 %v7449, %v7514
        %v7542 = vadd.f32 %v7450, %v7516
        %v7543 = vadd.f32 %v7451, %v7518
        %v7544 = vadd.f32 %v7452, %v7520
        %v7557 = vrot.slane %v7533, 1
        %v7558 = vrot.slane %v7534, 1
        %v7559 = vsel %vm3070, %v7557, %v7558
        %v7560 = vrot.slane %v7535, 1
        %v7561 = vsel %vm3070, %v7558, %v7560
        %v7562 = vrot.slane %v7536, 1
        %v7563 = vrot.slane %v7537, 1
        %v7564 = vsel %vm3070, %v7562, %v7563
        %v7565 = vrot.slane %v7538, 1
        %v7566 = vsel %vm3070, %v7563, %v7565
        %v7567 = vrot.slane %v7539, 1
        %v7568 = vrot.slane %v7540, 1
        %v7569 = vsel %vm3070, %v7567, %v7568
        %v7570 = vrot.slane %v7541, 1
        %v7571 = vsel %vm3070, %v7568, %v7570
        %v7572 = vrot.slane %v7542, 1
        %v7573 = vrot.slane %v7543, 1
        %v7574 = vsel %vm3070, %v7572, %v7573
        %v7575 = vrot.slane %v7544, 1
        %v7576 = vsel %vm3070, %v7573, %v7575
        %7577 = vrot.lane.b32.xlu0 %v7559, 127
        %v7578 = vpop.permute.xlu0 %7577
        %7579 = vrot.lane.b32.xlu0 %v7561, 127
        %v7580 = vpop.permute.xlu0 %7579
        %7581 = vrot.lane.b32.xlu0 %v7564, 127
        %v7582 = vpop.permute.xlu0 %7581
        %7583 = vrot.lane.b32.xlu0 %v7566, 127
        %v7584 = vpop.permute.xlu0 %7583
        %7585 = vrot.lane.b32.xlu0 %v7569, 127
        %v7586 = vpop.permute.xlu0 %7585
        %7587 = vrot.lane.b32.xlu0 %v7571, 127
        %v7588 = vpop.permute.xlu0 %7587
        %7589 = vrot.lane.b32.xlu0 %v7574, 127
        %v7590 = vpop.permute.xlu0 %7589
        %7591 = vrot.lane.b32.xlu0 %v7576, 127
        %v7592 = vpop.permute.xlu0 %7591
        %v7601 = vcombine.low %v7578, %v7586
        %v7602 = vcombine.high %v7578, %v7586
        %v7604 = vunpack.c.l.s4 1983009808
        %v7605 = vunpack.c.0.s8 %v7604
        %v7606 = vlaneseq
        %v7607 = vshrl.u32 %v7606, 7
        %v7608 = vsub.s32 %v7605, %v7607
        %v7609 = vrot.slane %v7601, %v7608
        %v7611 = vunpack.c.l.s4 1983009808
        %v7612 = vunpack.c.0.s8 %v7611
        %v7613 = vlaneseq
        %v7614 = vshrl.u32 %v7613, 7
        %v7615 = vsub.s32 %v7612, %v7614
        %v7616 = vrot.slane %v7602, %v7615
        %v7617 = vcombine.low %v7582, %v7590
        %v7618 = vcombine.high %v7582, %v7590
        %v7620 = vunpack.c.l.s4 1983009808
        %v7621 = vunpack.c.0.s8 %v7620
        %v7622 = vlaneseq
        %v7623 = vshrl.u32 %v7622, 7
        %v7624 = vsub.s32 %v7621, %v7623
        %v7625 = vrot.slane %v7617, %v7624
        %v7627 = vunpack.c.l.s4 1983009808
        %v7628 = vunpack.c.0.s8 %v7627
        %v7629 = vlaneseq
        %v7630 = vshrl.u32 %v7629, 7
        %v7631 = vsub.s32 %v7628, %v7630
        %v7632 = vrot.slane %v7618, %v7631
        %v7633 = vcombine.low %v7609, %v7625
        %v7634 = vcombine.high %v7609, %v7625
        %v7636 = vunpack.c.l.s4 1934713408
        %v7637 = vunpack.c.0.s8 %v7636
        %v7638 = vlaneseq
        %v7639 = vshrl.u32 %v7638, 7
        %v7640 = vsub.s32 %v7637, %v7639
        %v7641 = vrot.slane %v7633, %v7640
        %v7643 = vunpack.c.l.s4 1934713408
        %v7644 = vunpack.c.0.s8 %v7643
        %v7645 = vlaneseq
        %v7646 = vshrl.u32 %v7645, 7
        %v7647 = vsub.s32 %v7644, %v7646
        %v7648 = vrot.slane %v7634, %v7647
        %v7649 = vcombine.low %v7616, %v7632
        %v7650 = vcombine.high %v7616, %v7632
        %v7652 = vunpack.c.l.s4 1934713408
        %v7653 = vunpack.c.0.s8 %v7652
        %v7654 = vlaneseq
        %v7655 = vshrl.u32 %v7654, 7
        %v7656 = vsub.s32 %v7653, %v7655
        %v7657 = vrot.slane %v7649, %v7656
        %v7659 = vunpack.c.l.s4 1934713408
        %v7660 = vunpack.c.0.s8 %v7659
        %v7661 = vlaneseq
        %v7662 = vshrl.u32 %v7661, 7
        %v7663 = vsub.s32 %v7660, %v7662
        %v7664 = vrot.slane %v7650, %v7663
        %v7665 = vcombine.high %v7641, 0.0
        %v7666 = vcombine.high %v7648, 0.0
        %v7667 = vcombine.high %v7657, 0.0
        %v7668 = vcombine.high %v7664, 0.0
        %v7669 = vcombine.low %v7580, %v7588
        %v7670 = vcombine.high %v7580, %v7588
        %v7672 = vunpack.c.l.s4 1983009808
        %v7673 = vunpack.c.0.s8 %v7672
        %v7674 = vlaneseq
        %v7675 = vshrl.u32 %v7674, 7
        %v7676 = vsub.s32 %v7673, %v7675
        %v7677 = vrot.slane %v7669, %v7676
        %v7679 = vunpack.c.l.s4 1983009808
        %v7680 = vunpack.c.0.s8 %v7679
        %v7681 = vlaneseq
        %v7682 = vshrl.u32 %v7681, 7
        %v7683 = vsub.s32 %v7680, %v7682
        %v7684 = vrot.slane %v7670, %v7683
        %v7685 = vcombine.low %v7584, %v7592
        %v7686 = vcombine.high %v7584, %v7592
        %v7688 = vunpack.c.l.s4 1983009808
        %v7689 = vunpack.c.0.s8 %v7688
        %v7690 = vlaneseq
        %v7691 = vshrl.u32 %v7690, 7
        %v7692 = vsub.s32 %v7689, %v7691
        %v7693 = vrot.slane %v7685, %v7692
        %v7695 = vunpack.c.l.s4 1983009808
        %v7696 = vunpack.c.0.s8 %v7695
        %v7697 = vlaneseq
        %v7698 = vshrl.u32 %v7697, 7
        %v7699 = vsub.s32 %v7696, %v7698
        %v7700 = vrot.slane %v7686, %v7699
        %v7701 = vcombine.low %v7677, %v7693
        %v7702 = vcombine.high %v7677, %v7693
        %v7704 = vunpack.c.l.s4 1934713408
        %v7705 = vunpack.c.0.s8 %v7704
        %v7706 = vlaneseq
        %v7707 = vshrl.u32 %v7706, 7
        %v7708 = vsub.s32 %v7705, %v7707
        %v7709 = vrot.slane %v7701, %v7708
        %v7711 = vunpack.c.l.s4 1934713408
        %v7712 = vunpack.c.0.s8 %v7711
        %v7713 = vlaneseq
        %v7714 = vshrl.u32 %v7713, 7
        %v7715 = vsub.s32 %v7712, %v7714
        %v7716 = vrot.slane %v7702, %v7715
        %v7717 = vcombine.low %v7684, %v7700
        %v7718 = vcombine.high %v7684, %v7700
        %v7720 = vunpack.c.l.s4 1934713408
        %v7721 = vunpack.c.0.s8 %v7720
        %v7722 = vlaneseq
        %v7723 = vshrl.u32 %v7722, 7
        %v7724 = vsub.s32 %v7721, %v7723
        %v7725 = vrot.slane %v7717, %v7724
        %v7727 = vunpack.c.l.s4 1934713408
        %v7728 = vunpack.c.0.s8 %v7727
        %v7729 = vlaneseq
        %v7730 = vshrl.u32 %v7729, 7
        %v7731 = vsub.s32 %v7728, %v7730
        %v7732 = vrot.slane %v7718, %v7731
        %v7733 = vcombine.high %v7709, 0.0
        %v7734 = vcombine.high %v7716, 0.0
        %v7735 = vcombine.high %v7725, 0.0
        %v7736 = vcombine.high %v7732, 0.0
        %7738 = vrot.lane.b32.xlu0 %v7665, 16
        %v7739 = vpop.permute.xlu0 %7738
        %7742 = vrot.lane.b32.xlu0 %v7648, 32
        %v7743 = vpop.permute.xlu0 %7742
        %7746 = vrot.lane.b32.xlu0 %v7666, 48
        %v7747 = vpop.permute.xlu0 %7746
        %7750 = vrot.lane.b32.xlu0 %v7657, 64
        %v7751 = vpop.permute.xlu0 %7750
        %7754 = vrot.lane.b32.xlu0 %v7667, 80
        %v7755 = vpop.permute.xlu0 %7754
        %7758 = vrot.lane.b32.xlu0 %v7664, 96
        %v7759 = vpop.permute.xlu0 %7758
        %7762 = vrot.lane.b32.xlu0 %v7668, 112
        %v7763 = vpop.permute.xlu0 %7762
        %7766 = vrot.lane.b32.xlu0 %v7733, 16
        %v7767 = vpop.permute.xlu0 %7766
        %7770 = vrot.lane.b32.xlu0 %v7716, 32
        %v7771 = vpop.permute.xlu0 %7770
        %7774 = vrot.lane.b32.xlu0 %v7734, 48
        %v7775 = vpop.permute.xlu0 %7774
        %7778 = vrot.lane.b32.xlu0 %v7725, 64
        %v7779 = vpop.permute.xlu0 %7778
        %7782 = vrot.lane.b32.xlu0 %v7735, 80
        %v7783 = vpop.permute.xlu0 %7782
        %7786 = vrot.lane.b32.xlu0 %v7732, 96
        %v7787 = vpop.permute.xlu0 %7786
        %7790 = vrot.lane.b32.xlu0 %v7736, 112
        %v7791 = vpop.permute.xlu0 %7790
        %v7793 = vsel %vm6154, %v7641, %v7739
        %v7794 = vsel %vm6156, %v7793, %v7743
        %v7795 = vsel %vm6158, %v7794, %v7747
        %v7796 = vsel %vm6160, %v7795, %v7751
        %v7797 = vsel %vm6162, %v7796, %v7755
        %v7798 = vsel %vm6164, %v7797, %v7759
        %v7799 = vsel %vm6166, %v7798, %v7763
        %v7800 = vsel %vm6154, %v7709, %v7767
        %v7801 = vsel %vm6156, %v7800, %v7771
        %v7802 = vsel %vm6158, %v7801, %v7775
        %v7803 = vsel %vm6160, %v7802, %v7779
        %v7804 = vsel %vm6162, %v7803, %v7783
        %v7805 = vsel %vm6164, %v7804, %v7787
        %v7806 = vsel %vm6166, %v7805, %v7791
        %v7807 = vld [vmem:[#allocation16] sm:$0xf]
        %7809 = vset.pattern.permute.xlu0 0
        %7810 = vperm.xlu0 %7809, %v7807
        %v7811 = vpop.permute.xlu0 %7810
        %v7813 = vadd.f32 %v7799, %v7811
        %v7814 = vadd.f32 %v7806, %v7811
        %v7815 = vmin.f32 %v7813, 20.0
        %v7816 = vmin.f32 %v7814, 20.0
        %v7817 = vmul.f32 %v7815, 1.442695
        %v7818 = vpow.pop %v7817
        %v7819 = vmul.f32 %v7816, 1.442695
        %v7820 = vpow.pop %v7819
        %v7821 = vadd.f32 %v7818, 2.0
        %v7822 = vadd.f32 %v7820, 2.0
        %v7823 = vmul.f32 %v7818, %v7821
        %v7824 = vmul.f32 %v7820, %v7822
        %v7825 = vmul.f32 %v7813, %v7823
        %v7826 = vmul.f32 %v7814, %v7824
        %v7827 = vadd.f32 %v7823, 2.0
        %v7828 = vadd.f32 %v7824, 2.0
        %v7829 = vrcp.pop %v7827
        %v7830 = vmul.f32 %v7825, %v7829
        %v7831 = vrcp.pop %v7828
        %v7832 = vmul.f32 %v7826, %v7831
        %v7835 = vrot.slane %v6198, 1
        %v7836 = vrot.slane %v6200, 1
        %v7841 = vrot.slane %v7830, 6
        %v7842 = vrot.slane %v7832, 6
        %v7845 = vrot.slane %v7830, 7
        %v7846 = vrot.slane %v7832, 7
        %vm7849 = vcmask 1040384
        %v7850 = vsel %vm7849, %v6198, %v7835
        %v7851 = vsel %vm7849, %v6200, %v7836
        %v7852 = vsel %vm989, %v7850, %v7841
        %v7853 = vsel %vm989, %v7851, %v7842
        %vm7854 = vcmask 1042432
        %v7855 = vsel %vm7854, %v7852, %v7845
        %v7856 = vsel %vm7854, %v7853, %v7846
        %v7857 = vrot.slane %v6198, 2
        %v7858 = vrot.slane %v6200, 2
        %v7861 = vsel %vm7849, %v7835, %v7857
        %v7862 = vsel %vm7849, %v7836, %v7858
        %v7863 = vsel %vm989, %v7861, %v7845
        %v7864 = vsel %vm989, %v7862, %v7846
        %v7865 = vsel %vm7854, %v7863, %v7830
        %v7866 = vsel %vm7854, %v7864, %v7832
        %7867 = vst [vmem:[%s456] sm:$0xf] %v556
        %7868 = vst [vmem:[%s456 + $0x8] sm:$0xf] %v558
        %v7871 = vrot.slane %v7855, 4
        %v7872 = vrot.slane %v7856, 4
        %7875 = vst [vmem:[%s456] sm:$0xf0] %v7871
        %7876 = vst [vmem:[%s456 + $0x8] sm:$0xf0] %v7872
        %v7877 = vrot.slane %v556, 4
        %v7878 = vrot.slane %v558, 4
        %7881 = vst [vmem:[%s456 + $0x10] sm:$0xf] %v7877
        %7882 = vst [vmem:[%s456 + $0x18] sm:$0xf] %v7878
        %v7885 = vrot.slane %v7865, 4
        %v7886 = vrot.slane %v7866, 4
        %7889 = vst [vmem:[%s456 + $0x10] sm:$0xf0] %v7885
        %7890 = vst [vmem:[%s456 + $0x18] sm:$0xf0] %v7886
        %s7891 = sand.u32 %s232, 1
        %s7892 = scalar_lea.sflag [#allocation4], %s7891
        %s7893 = sand.u32 %s232, 1
        %s7894 = smul.addr %s7893, 32
        %s7895 = scalar_lea.vmem [#allocation17], %s7894
        // Predicated region
        $region93: #{gsconv_pallas.1} parent=55 // pred_check
          %p7896 = pneg %p242
        $region94: #{gsconv_pallas.1} parent=55 // pred_check_branch
          %7898 = sbr.rel (%p7896) target = $region96
        $region95: #{gsconv_pallas.1} parent=55 // pred_region
          %s7900 = ssub.s32 512, 512
          %7901 = vsyncadd %s7892, %s7900
          %s7902 = smul.addr %s30, 4
          %s7903 = smul.addr %s7902, 128
          %s7904 = scalar_lea.hbm %s9, %s7903
          %s7905 = sshll.u32 %s7895, 4
          %s7906 = int_to_ptr.vmem [resolvable:$true] %s7905
          %7911 = dma.vmem_to_hbm [thread:$0]  %s7906, 512, %s7904, %s7892, 256, 256, 16
        $region96: #{gsconv_pallas.1} parent=55 // pred_fallthru
          _
      $region56: #{gsconv_pallas.1} parent=5 // pred_fallthru
        _
      %p7912 = scmp.le.s32.totalorder 2, %s25
      // Predicated region
      $region97: #{gsconv_pallas.1} parent=5 // pred_check
        %p7913 = pneg %p7912
      $region98: #{gsconv_pallas.1} parent=5 // pred_check_branch
        %7915 = sbr.rel (%p7913) target = $region100
      $region99: #{gsconv_pallas.1} parent=5 // pred_region
        %s7916 = ssub.s32 %s25, 2
        // Predicated region
        $region101: #{gsconv_pallas.1} parent=99 // pred_check
          %p7917 = pneg %p248
        $region102: #{gsconv_pallas.1} parent=99 // pred_check_branch
          %7919 = sbr.rel (%p7917) target = $region104
        $region103: #{gsconv_pallas.1} parent=99 // pred_region
          %s7920 = sand.u32 %s233, 1
          %s7921 = scalar_lea.sflag [#allocation4], %s7920
          %s7922 = sand.u32 %s233, 1
          %s7923 = smul.addr %s7922, 32
          %s7924 = scalar_lea.vmem [#allocation17], %s7923
          %7925 = dma.done %s7921, 512
        $region104: #{gsconv_pallas.1} parent=99 // pred_fallthru
          _
      $region100: #{gsconv_pallas.1} parent=5 // pred_fallthru
        _
    $region6: #{gsconv_pallas.1} parent=1 // loop_footer
      %s29 = sadd.s32 1, %s25
    $region7: #{gsconv_pallas.1} parent=1 // loop_footer_branch
      %24 = sbr.rel target = $region3
    $region8: #{gsconv_pallas.1} parent=1 // loop_exit
      _
    %7926 = vsyncpa [#allocation3], 1
    %s7927 = scalar_lea.sflag [#allocation3], 1
    %7928 = vsyncpa %s7927, 1
    %7929 = vsyncpa [#allocation6], 1
    %7930 = vsyncpa [#allocation9], 1
    %7931 = vsyncpa [#allocation12], 1
    %7932 = vsyncpa [#allocation15], 1
    %7933 = vsyncpa [#allocation4], 1
    %s7934 = scalar_lea.sflag [#allocation4], 1
    %7935 = vsyncpa %s7934, 1

</llo_original>
